<compile_context>
chip_gen: v7x
topology: tpu7x:2x2x1
jax: 0.10.0
libtpu: 0.0.40
codegen_flags: <defaults>
</compile_context>

<pallas_src>
import jax
import jax.numpy as jnp
from jax.experimental import pallas as pl
from jax.experimental.pallas import tpu as pltpu


def _make_kernel(TH, OW, KH, KW, stride, Cout_p):
    def kernel(x_ref, w_ref, b_ref, o_ref):
        # x_ref: (Hp_tot, Wp, Cin)     padded image for the current batch element
        # w_ref: (KH*KW, Cin, Cout_p)  conv weight with BN scale folded in (Cout padded)
        # b_ref: (1, Cout_p)           folded BN bias (padded with zeros)
        # o_ref: (TH, OW, Cout_p)      lane-dense output row tile
        t = pl.program_id(1)
        row0 = t * (TH * stride)
        bias = b_ref[...]                                  # (1, Cout_p)
        w = [w_ref[k] for k in range(KH * KW)]             # hoisted weight loads

        for r in range(TH):                                # static unroll over output rows
            base = row0 + r * stride
            acc = jnp.zeros((OW, Cout_p), jnp.float32)
            for kh in range(KH):
                for kw in range(KW):
                    if stride == 1:
                        patch = x_ref[base + kh, pl.ds(kw, OW), :]            # (OW, Cin)
                    else:
                        patch = x_ref[base + kh, pl.ds(kw, OW, stride), :]    # (OW, Cin)
                    acc = acc + jnp.dot(patch, w[kh * KW + kw],
                                        preferred_element_type=jnp.float32)
            y = jnp.maximum(acc + bias, 0.0)
            o_ref[r] = y.astype(o_ref.dtype)

    return kernel


def basic_conv2d(x_nchw, weight, gamma, beta, running_mean, running_var,
                 *, stride=1, padding=0, eps=1e-3):
    """x_nchw: (N, Cin, H, W) f32. weight: (Cout, Cin, KH, KW) as in PyTorch. Eval-mode BN."""
    N, Cin, H, W = x_nchw.shape
    Cout, _, KH, KW = weight.shape
    stride = int(stride)
    padding = int(padding)

    OH = (H + 2 * padding - KH) // stride + 1
    OW = (W + 2 * padding - KW) // stride + 1

    # --- tiling choices ---
    TH = max(1, min(OH, 8))                      # output rows per grid step (static unroll)
    OH_pad = pl.cdiv(OH, TH) * TH                # pad OH so every tile is full (no tm=M fallback)
    Cout_p = pl.cdiv(Cout, 128) * 128            # lane-dense output channels

    # --- glue: NCHW -> NHWC, zero-pad (conv padding + extra bottom rows for OH_pad) ---
    Hp = H + 2 * padding
    Wp = W + 2 * padding
    extra_rows = max(0, (OH_pad - 1) * stride + KH - Hp)
    Hp_tot = Hp + extra_rows

    x = jnp.transpose(x_nchw, (0, 2, 3, 1)).astype(jnp.float32)          # NHWC
    x = jnp.pad(x, ((0, 0), (padding, padding + extra_rows), (padding, padding), (0, 0)))
    x3 = x.reshape(N * Hp_tot, Wp, Cin)                                  # (N*Hp_tot, Wp, Cin)

    # --- fold BN (eval) into weight scale / bias ---
    scale = (gamma / jnp.sqrt(running_var + eps)).astype(jnp.float32)    # (Cout,)
    bias = (beta - running_mean * scale).astype(jnp.float32)             # (Cout,)

    # (Cout, Cin, KH, KW) -> (KH*KW, Cin, Cout), scaled, then Cout padded to Cout_p
    w = jnp.transpose(weight, (2, 3, 1, 0)).reshape(KH * KW, Cin, Cout).astype(jnp.float32)
    w = w * scale.reshape(1, 1, Cout)
    w = jnp.pad(w, ((0, 0), (0, 0), (0, Cout_p - Cout)))
    b = jnp.pad(bias.reshape(1, Cout), ((0, 0), (0, Cout_p - Cout)))

    grid = (N, OH_pad // TH)
    kernel = _make_kernel(TH, OW, KH, KW, stride, Cout_p)

    cost = pl.CostEstimate(
        flops=2 * N * OH * OW * KH * KW * Cin * Cout,
        transcendentals=0,
        bytes_accessed=4 * (N * Hp_tot * Wp * Cin
                            + KH * KW * Cin * Cout_p
                            + Cout_p
                            + N * OH_pad * OW * Cout_p),
    )

    out3 = pl.pallas_call(
        kernel,
        out_shape=jax.ShapeDtypeStruct((N * OH_pad, OW, Cout_p), jnp.float32),
        grid_spec=pltpu.PrefetchScalarGridSpec(
            num_scalar_prefetch=0,
            grid=grid,
            in_specs=[
                # full padded image of one batch element; same block index across the
                # row-tile axis -> fetched once per n, resident across t.
                pl.BlockSpec((Hp_tot, Wp, Cin), lambda n, t: (n, 0, 0)),
                pl.BlockSpec((KH * KW, Cin, Cout_p), lambda n, t: (0, 0, 0)),
                pl.BlockSpec((1, Cout_p), lambda n, t: (0, 0)),
            ],
            out_specs=pl.BlockSpec((TH, OW, Cout_p),
                                   lambda n, t: (n * (OH_pad // TH) + t, 0, 0)),
        ),
        compiler_params=pltpu.CompilerParams(
            dimension_semantics=("parallel", "parallel")),
        cost_estimate=cost,
    )(x3, w, b)

    out = out3.reshape(N, OH_pad, OW, Cout_p)[:, :OH, :, :Cout]
    return jnp.transpose(out, (0, 3, 1, 2))  # back to NCHW


def _reference(x_nchw, weight, gamma, beta, running_mean, running_var,
               *, stride=1, padding=0, eps=1e-3):
    y = jax.lax.conv_general_dilated(
        x_nchw, weight, window_strides=(stride, stride),
        padding=[(padding, padding), (padding, padding)],
        dimension_numbers=("NCHW", "OIHW", "NCHW"),
    )
    s = (gamma / jnp.sqrt(running_var + eps)).reshape(1, -1, 1, 1)
    b = (beta - running_mean * gamma / jnp.sqrt(running_var + eps)).reshape(1, -1, 1, 1)
    return jnp.maximum(y * s + b, 0.0)


if __name__ == "__main__":
    # Small shapes consistent with the module: BasicConv2d(4, 8, kernel_size=3, stride=1, padding=1)
    N, Cin, H, W = 2, 4, 16, 16
    Cout, KH, KW = 8, 3, 3
    stride, padding = 1, 1

    key = jax.random.PRNGKey(0)
    kx, kw_, km, kv = jax.random.split(key, 4)
    x = jax.random.normal(kx, (N, Cin, H, W), dtype=jnp.float32)
    weight = jax.random.normal(kw_, (Cout, Cin, KH, KW), dtype=jnp.float32) * 0.1
    gamma = jnp.ones((Cout,), jnp.float32)
    beta = jnp.zeros((Cout,), jnp.float32)
    running_mean = jax.random.normal(km, (Cout,), dtype=jnp.float32) * 0.05
    running_var = jnp.abs(jax.random.normal(kv, (Cout,), dtype=jnp.float32)) * 0.5 + 0.5

    out = basic_conv2d(x, weight, gamma, beta, running_mean, running_var,
                       stride=stride, padding=padding, eps=1e-3)
    out = jax.block_until_ready(out)

    ref = _reference(x, weight, gamma, beta, running_mean, running_var,
                     stride=stride, padding=padding, eps=1e-3)
    assert out.shape == (N, Cout, H, W)
    assert jnp.allclose(out, ref, atol=1e-4, rtol=1e-4), "mismatch vs reference conv+bn+relu"

    print("KERNEL_OK")
</pallas_src>

<mosaic_0001>
module attributes {stable_mosaic.version = 11 : i64} {
  func.func @kernel(%arg0: i32, %arg1: i32, %arg2: memref<18x18x4xf32, #tpu.memory_space<vmem>>, %arg3: memref<9x4x128xf32, #tpu.memory_space<vmem>>, %arg4: memref<1x128xf32, #tpu.memory_space<vmem>>, %arg5: memref<8x16x128xf32, #tpu.memory_space<vmem>>) attributes {dimension_semantics = [#tpu.dimension_semantics<parallel>, #tpu.dimension_semantics<parallel>], iteration_bounds = array<i64: 2, 2>, scalar_prefetch = 0 : i64, scratch_operands = 0 : i64, tpu.core_type = #tpu.core_type<tc>, window_params = [{transform_indices = @transform_0, window_bounds = array<i64: 18, 18, 4>}, {pipeline_mode = #tpu.pipeline_mode<synchronous>, transform_indices = @transform_1, window_bounds = array<i64: 9, 4, 128>}, {pipeline_mode = #tpu.pipeline_mode<synchronous>, transform_indices = @transform_2, window_bounds = array<i64: 1, 128>}, {transform_indices = @transform_3, window_bounds = array<i64: 8, 16, 128>}]} {
    %c8_i32 = arith.constant 8 : i32
    %0 = arith.muli %arg1, %c8_i32 : i32
    %c0 = arith.constant 0 : index
    %c0_0 = arith.constant 0 : index
    %1 = vector.load %arg4[%c0, %c0_0] : memref<1x128xf32, #tpu.memory_space<vmem>>, vector<1x128xf32>
    %c0_1 = arith.constant 0 : index
    %c0_2 = arith.constant 0 : index
    %c0_3 = arith.constant 0 : index
    %2 = vector.load %arg3[%c0_1, %c0_2, %c0_3] : memref<9x4x128xf32, #tpu.memory_space<vmem>>, vector<1x4x128xf32>
    %3 = vector.shape_cast %2 : vector<1x4x128xf32> to vector<4x128xf32>
    %c1 = arith.constant 1 : index
    %c0_4 = arith.constant 0 : index
    %c0_5 = arith.constant 0 : index
    %4 = vector.load %arg3[%c1, %c0_4, %c0_5] : memref<9x4x128xf32, #tpu.memory_space<vmem>>, vector<1x4x128xf32>
    %5 = vector.shape_cast %4 : vector<1x4x128xf32> to vector<4x128xf32>
    %c2 = arith.constant 2 : index
    %c0_6 = arith.constant 0 : index
    %c0_7 = arith.constant 0 : index
    %6 = vector.load %arg3[%c2, %c0_6, %c0_7] : memref<9x4x128xf32, #tpu.memory_space<vmem>>, vector<1x4x128xf32>
    %7 = vector.shape_cast %6 : vector<1x4x128xf32> to vector<4x128xf32>
    %c3 = arith.constant 3 : index
    %c0_8 = arith.constant 0 : index
    %c0_9 = arith.constant 0 : index
    %8 = vector.load %arg3[%c3, %c0_8, %c0_9] : memref<9x4x128xf32, #tpu.memory_space<vmem>>, vector<1x4x128xf32>
    %9 = vector.shape_cast %8 : vector<1x4x128xf32> to vector<4x128xf32>
    %c4 = arith.constant 4 : index
    %c0_10 = arith.constant 0 : index
    %c0_11 = arith.constant 0 : index
    %10 = vector.load %arg3[%c4, %c0_10, %c0_11] : memref<9x4x128xf32, #tpu.memory_space<vmem>>, vector<1x4x128xf32>
    %11 = vector.shape_cast %10 : vector<1x4x128xf32> to vector<4x128xf32>
    %c5 = arith.constant 5 : index
    %c0_12 = arith.constant 0 : index
    %c0_13 = arith.constant 0 : index
    %12 = vector.load %arg3[%c5, %c0_12, %c0_13] : memref<9x4x128xf32, #tpu.memory_space<vmem>>, vector<1x4x128xf32>
    %13 = vector.shape_cast %12 : vector<1x4x128xf32> to vector<4x128xf32>
    %c6 = arith.constant 6 : index
    %c0_14 = arith.constant 0 : index
    %c0_15 = arith.constant 0 : index
    %14 = vector.load %arg3[%c6, %c0_14, %c0_15] : memref<9x4x128xf32, #tpu.memory_space<vmem>>, vector<1x4x128xf32>
    %15 = vector.shape_cast %14 : vector<1x4x128xf32> to vector<4x128xf32>
    %c7 = arith.constant 7 : index
    %c0_16 = arith.constant 0 : index
    %c0_17 = arith.constant 0 : index
    %16 = vector.load %arg3[%c7, %c0_16, %c0_17] : memref<9x4x128xf32, #tpu.memory_space<vmem>>, vector<1x4x128xf32>
    %17 = vector.shape_cast %16 : vector<1x4x128xf32> to vector<4x128xf32>
    %c8 = arith.constant 8 : index
    %c0_18 = arith.constant 0 : index
    %c0_19 = arith.constant 0 : index
    %18 = vector.load %arg3[%c8, %c0_18, %c0_19] : memref<9x4x128xf32, #tpu.memory_space<vmem>>, vector<1x4x128xf32>
    %19 = vector.shape_cast %18 : vector<1x4x128xf32> to vector<4x128xf32>
    %c0_i32 = arith.constant 0 : i32
    %20 = arith.addi %0, %c0_i32 : i32
    %cst = arith.constant 0.000000e+00 : f32
    %21 = vector.broadcast %cst : f32 to vector<16x128xf32>
    %c0_i32_20 = arith.constant 0 : i32
    %22 = arith.addi %20, %c0_i32_20 : i32
    %23 = arith.index_cast %22 : i32 to index
    %c0_21 = arith.constant 0 : index
    %c0_22 = arith.constant 0 : index
    %24 = vector.load %arg2[%23, %c0_21, %c0_22] : memref<18x18x4xf32, #tpu.memory_space<vmem>>, vector<1x16x4xf32>
    %25 = vector.shape_cast %24 : vector<1x16x4xf32> to vector<16x4xf32>
    %cst_23 = arith.constant dense<0.000000e+00> : vector<16x128xf32>
    %26 = tpu.matmul %25, %3, %cst_23 {dimension_numbers = #tpu.dot_dimension_numbers<[1], [0], [0], [1], [0, 0, 1, 1], [], []>} : vector<16x4xf32>, vector<4x128xf32>, vector<16x128xf32> -> vector<16x128xf32>
    %27 = arith.addf %21, %26 : vector<16x128xf32>
    %c0_i32_24 = arith.constant 0 : i32
    %28 = arith.addi %20, %c0_i32_24 : i32
    %29 = arith.index_cast %28 : i32 to index
    %c1_25 = arith.constant 1 : index
    %c0_26 = arith.constant 0 : index
    %30 = vector.load %arg2[%29, %c1_25, %c0_26] : memref<18x18x4xf32, #tpu.memory_space<vmem>>, vector<1x16x4xf32>
    %31 = vector.shape_cast %30 : vector<1x16x4xf32> to vector<16x4xf32>
    %cst_27 = arith.constant dense<0.000000e+00> : vector<16x128xf32>
    %32 = tpu.matmul %31, %5, %cst_27 {dimension_numbers = #tpu.dot_dimension_numbers<[1], [0], [0], [1], [0, 0, 1, 1], [], []>} : vector<16x4xf32>, vector<4x128xf32>, vector<16x128xf32> -> vector<16x128xf32>
    %33 = arith.addf %27, %32 : vector<16x128xf32>
    %c0_i32_28 = arith.constant 0 : i32
    %34 = arith.addi %20, %c0_i32_28 : i32
    %35 = arith.index_cast %34 : i32 to index
    %c2_29 = arith.constant 2 : index
    %c0_30 = arith.constant 0 : index
    %36 = vector.load %arg2[%35, %c2_29, %c0_30] : memref<18x18x4xf32, #tpu.memory_space<vmem>>, vector<1x16x4xf32>
    %37 = vector.shape_cast %36 : vector<1x16x4xf32> to vector<16x4xf32>
    %cst_31 = arith.constant dense<0.000000e+00> : vector<16x128xf32>
    %38 = tpu.matmul %37, %7, %cst_31 {dimension_numbers = #tpu.dot_dimension_numbers<[1], [0], [0], [1], [0, 0, 1, 1], [], []>} : vector<16x4xf32>, vector<4x128xf32>, vector<16x128xf32> -> vector<16x128xf32>
    %39 = arith.addf %33, %38 : vector<16x128xf32>
    %c1_i32 = arith.constant 1 : i32
    %40 = arith.addi %20, %c1_i32 : i32
    %41 = arith.index_cast %40 : i32 to index
    %c0_32 = arith.constant 0 : index
    %c0_33 = arith.constant 0 : index
    %42 = vector.load %arg2[%41, %c0_32, %c0_33] : memref<18x18x4xf32, #tpu.memory_space<vmem>>, vector<1x16x4xf32>
    %43 = vector.shape_cast %42 : vector<1x16x4xf32> to vector<16x4xf32>
    %cst_34 = arith.constant dense<0.000000e+00> : vector<16x128xf32>
    %44 = tpu.matmul %43, %9, %cst_34 {dimension_numbers = #tpu.dot_dimension_numbers<[1], [0], [0], [1], [0, 0, 1, 1], [], []>} : vector<16x4xf32>, vector<4x128xf32>, vector<16x128xf32> -> vector<16x128xf32>
    %45 = arith.addf %39, %44 : vector<16x128xf32>
    %c1_i32_35 = arith.constant 1 : i32
    %46 = arith.addi %20, %c1_i32_35 : i32
    %47 = arith.index_cast %46 : i32 to index
    %c1_36 = arith.constant 1 : index
    %c0_37 = arith.constant 0 : index
    %48 = vector.load %arg2[%47, %c1_36, %c0_37] : memref<18x18x4xf32, #tpu.memory_space<vmem>>, vector<1x16x4xf32>
    %49 = vector.shape_cast %48 : vector<1x16x4xf32> to vector<16x4xf32>
    %cst_38 = arith.constant dense<0.000000e+00> : vector<16x128xf32>
    %50 = tpu.matmul %49, %11, %cst_38 {dimension_numbers = #tpu.dot_dimension_numbers<[1], [0], [0], [1], [0, 0, 1, 1], [], []>} : vector<16x4xf32>, vector<4x128xf32>, vector<16x128xf32> -> vector<16x128xf32>
    %51 = arith.addf %45, %50 : vector<16x128xf32>
    %c1_i32_39 = arith.constant 1 : i32
    %52 = arith.addi %20, %c1_i32_39 : i32
    %53 = arith.index_cast %52 : i32 to index
    %c2_40 = arith.constant 2 : index
    %c0_41 = arith.constant 0 : index
    %54 = vector.load %arg2[%53, %c2_40, %c0_41] : memref<18x18x4xf32, #tpu.memory_space<vmem>>, vector<1x16x4xf32>
    %55 = vector.shape_cast %54 : vector<1x16x4xf32> to vector<16x4xf32>
    %cst_42 = arith.constant dense<0.000000e+00> : vector<16x128xf32>
    %56 = tpu.matmul %55, %13, %cst_42 {dimension_numbers = #tpu.dot_dimension_numbers<[1], [0], [0], [1], [0, 0, 1, 1], [], []>} : vector<16x4xf32>, vector<4x128xf32>, vector<16x128xf32> -> vector<16x128xf32>
    %57 = arith.addf %51, %56 : vector<16x128xf32>
    %c2_i32 = arith.constant 2 : i32
    %58 = arith.addi %20, %c2_i32 : i32
    %59 = arith.index_cast %58 : i32 to index
    %c0_43 = arith.constant 0 : index
    %c0_44 = arith.constant 0 : index
    %60 = vector.load %arg2[%59, %c0_43, %c0_44] : memref<18x18x4xf32, #tpu.memory_space<vmem>>, vector<1x16x4xf32>
    %61 = vector.shape_cast %60 : vector<1x16x4xf32> to vector<16x4xf32>
    %cst_45 = arith.constant dense<0.000000e+00> : vector<16x128xf32>
    %62 = tpu.matmul %61, %15, %cst_45 {dimension_numbers = #tpu.dot_dimension_numbers<[1], [0], [0], [1], [0, 0, 1, 1], [], []>} : vector<16x4xf32>, vector<4x128xf32>, vector<16x128xf32> -> vector<16x128xf32>
    %63 = arith.addf %57, %62 : vector<16x128xf32>
    %c2_i32_46 = arith.constant 2 : i32
    %64 = arith.addi %20, %c2_i32_46 : i32
    %65 = arith.index_cast %64 : i32 to index
    %c1_47 = arith.constant 1 : index
    %c0_48 = arith.constant 0 : index
    %66 = vector.load %arg2[%65, %c1_47, %c0_48] : memref<18x18x4xf32, #tpu.memory_space<vmem>>, vector<1x16x4xf32>
    %67 = vector.shape_cast %66 : vector<1x16x4xf32> to vector<16x4xf32>
    %cst_49 = arith.constant dense<0.000000e+00> : vector<16x128xf32>
    %68 = tpu.matmul %67, %17, %cst_49 {dimension_numbers = #tpu.dot_dimension_numbers<[1], [0], [0], [1], [0, 0, 1, 1], [], []>} : vector<16x4xf32>, vector<4x128xf32>, vector<16x128xf32> -> vector<16x128xf32>
    %69 = arith.addf %63, %68 : vector<16x128xf32>
    %c2_i32_50 = arith.constant 2 : i32
    %70 = arith.addi %20, %c2_i32_50 : i32
    %71 = arith.index_cast %70 : i32 to index
    %c2_51 = arith.constant 2 : index
    %c0_52 = arith.constant 0 : index
    %72 = vector.load %arg2[%71, %c2_51, %c0_52] : memref<18x18x4xf32, #tpu.memory_space<vmem>>, vector<1x16x4xf32>
    %73 = vector.shape_cast %72 : vector<1x16x4xf32> to vector<16x4xf32>
    %cst_53 = arith.constant dense<0.000000e+00> : vector<16x128xf32>
    %74 = tpu.matmul %73, %19, %cst_53 {dimension_numbers = #tpu.dot_dimension_numbers<[1], [0], [0], [1], [0, 0, 1, 1], [], []>} : vector<16x4xf32>, vector<4x128xf32>, vector<16x128xf32> -> vector<16x128xf32>
    %75 = arith.addf %69, %74 : vector<16x128xf32>
    %76 = vector.broadcast %1 : vector<1x128xf32> to vector<16x128xf32>
    %77 = arith.addf %75, %76 : vector<16x128xf32>
    %cst_54 = arith.constant 0.000000e+00 : f32
    %78 = vector.broadcast %cst_54 : f32 to vector<16x128xf32>
    %79 = arith.maximumf %77, %78 : vector<16x128xf32>
    %c0_55 = arith.constant 0 : index
    %c0_56 = arith.constant 0 : index
    %c0_57 = arith.constant 0 : index
    %80 = vector.load %arg5[%c0_55, %c0_56, %c0_57] : memref<8x16x128xf32, #tpu.memory_space<vmem>>, vector<1x16x128xf32>
    %81 = vector.shape_cast %80 : vector<1x16x128xf32> to vector<16x128xf32>
    %82 = vector.shape_cast %79 : vector<16x128xf32> to vector<1x16x128xf32>
    tpu.vector_store %arg5[%c0_55, %c0_56, %c0_57], %82 {strides = array<i32>} : memref<8x16x128xf32, #tpu.memory_space<vmem>>, vector<1x16x128xf32>,
    %c1_i32_58 = arith.constant 1 : i32
    %83 = arith.addi %0, %c1_i32_58 : i32
    %cst_59 = arith.constant 0.000000e+00 : f32
    %84 = vector.broadcast %cst_59 : f32 to vector<16x128xf32>
    %c0_i32_60 = arith.constant 0 : i32
    %85 = arith.addi %83, %c0_i32_60 : i32
    %86 = arith.index_cast %85 : i32 to index
    %c0_61 = arith.constant 0 : index
    %c0_62 = arith.constant 0 : index
    %87 = vector.load %arg2[%86, %c0_61, %c0_62] : memref<18x18x4xf32, #tpu.memory_space<vmem>>, vector<1x16x4xf32>
    %88 = vector.shape_cast %87 : vector<1x16x4xf32> to vector<16x4xf32>
    %cst_63 = arith.constant dense<0.000000e+00> : vector<16x128xf32>
    %89 = tpu.matmul %88, %3, %cst_63 {dimension_numbers = #tpu.dot_dimension_numbers<[1], [0], [0], [1], [0, 0, 1, 1], [], []>} : vector<16x4xf32>, vector<4x128xf32>, vector<16x128xf32> -> vector<16x128xf32>
    %90 = arith.addf %84, %89 : vector<16x128xf32>
    %c0_i32_64 = arith.constant 0 : i32
    %91 = arith.addi %83, %c0_i32_64 : i32
    %92 = arith.index_cast %91 : i32 to index
    %c1_65 = arith.constant 1 : index
    %c0_66 = arith.constant 0 : index
    %93 = vector.load %arg2[%92, %c1_65, %c0_66] : memref<18x18x4xf32, #tpu.memory_space<vmem>>, vector<1x16x4xf32>
    %94 = vector.shape_cast %93 : vector<1x16x4xf32> to vector<16x4xf32>
    %cst_67 = arith.constant dense<0.000000e+00> : vector<16x128xf32>
    %95 = tpu.matmul %94, %5, %cst_67 {dimension_numbers = #tpu.dot_dimension_numbers<[1], [0], [0], [1], [0, 0, 1, 1], [], []>} : vector<16x4xf32>, vector<4x128xf32>, vector<16x128xf32> -> vector<16x128xf32>
    %96 = arith.addf %90, %95 : vector<16x128xf32>
    %c0_i32_68 = arith.constant 0 : i32
    %97 = arith.addi %83, %c0_i32_68 : i32
    %98 = arith.index_cast %97 : i32 to index
    %c2_69 = arith.constant 2 : index
    %c0_70 = arith.constant 0 : index
    %99 = vector.load %arg2[%98, %c2_69, %c0_70] : memref<18x18x4xf32, #tpu.memory_space<vmem>>, vector<1x16x4xf32>
    %100 = vector.shape_cast %99 : vector<1x16x4xf32> to vector<16x4xf32>
    %cst_71 = arith.constant dense<0.000000e+00> : vector<16x128xf32>
    %101 = tpu.matmul %100, %7, %cst_71 {dimension_numbers = #tpu.dot_dimension_numbers<[1], [0], [0], [1], [0, 0, 1, 1], [], []>} : vector<16x4xf32>, vector<4x128xf32>, vector<16x128xf32> -> vector<16x128xf32>
    %102 = arith.addf %96, %101 : vector<16x128xf32>
    %c1_i32_72 = arith.constant 1 : i32
    %103 = arith.addi %83, %c1_i32_72 : i32
    %104 = arith.index_cast %103 : i32 to index
    %c0_73 = arith.constant 0 : index
    %c0_74 = arith.constant 0 : index
    %105 = vector.load %arg2[%104, %c0_73, %c0_74] : memref<18x18x4xf32, #tpu.memory_space<vmem>>, vector<1x16x4xf32>
    %106 = vector.shape_cast %105 : vector<1x16x4xf32> to vector<16x4xf32>
    %cst_75 = arith.constant dense<0.000000e+00> : vector<16x128xf32>
    %107 = tpu.matmul %106, %9, %cst_75 {dimension_numbers = #tpu.dot_dimension_numbers<[1], [0], [0], [1], [0, 0, 1, 1], [], []>} : vector<16x4xf32>, vector<4x128xf32>, vector<16x128xf32> -> vector<16x128xf32>
    %108 = arith.addf %102, %107 : vector<16x128xf32>
    %c1_i32_76 = arith.constant 1 : i32
    %109 = arith.addi %83, %c1_i32_76 : i32
    %110 = arith.index_cast %109 : i32 to index
    %c1_77 = arith.constant 1 : index
    %c0_78 = arith.constant 0 : index
    %111 = vector.load %arg2[%110, %c1_77, %c0_78] : memref<18x18x4xf32, #tpu.memory_space<vmem>>, vector<1x16x4xf32>
    %112 = vector.shape_cast %111 : vector<1x16x4xf32> to vector<16x4xf32>
    %cst_79 = arith.constant dense<0.000000e+00> : vector<16x128xf32>
    %113 = tpu.matmul %112, %11, %cst_79 {dimension_numbers = #tpu.dot_dimension_numbers<[1], [0], [0], [1], [0, 0, 1, 1], [], []>} : vector<16x4xf32>, vector<4x128xf32>, vector<16x128xf32> -> vector<16x128xf32>
    %114 = arith.addf %108, %113 : vector<16x128xf32>
    %c1_i32_80 = arith.constant 1 : i32
    %115 = arith.addi %83, %c1_i32_80 : i32
    %116 = arith.index_cast %115 : i32 to index
    %c2_81 = arith.constant 2 : index
    %c0_82 = arith.constant 0 : index
    %117 = vector.load %arg2[%116, %c2_81, %c0_82] : memref<18x18x4xf32, #tpu.memory_space<vmem>>, vector<1x16x4xf32>
    %118 = vector.shape_cast %117 : vector<1x16x4xf32> to vector<16x4xf32>
    %cst_83 = arith.constant dense<0.000000e+00> : vector<16x128xf32>
    %119 = tpu.matmul %118, %13, %cst_83 {dimension_numbers = #tpu.dot_dimension_numbers<[1], [0], [0], [1], [0, 0, 1, 1], [], []>} : vector<16x4xf32>, vector<4x128xf32>, vector<16x128xf32> -> vector<16x128xf32>
    %120 = arith.addf %114, %119 : vector<16x128xf32>
    %c2_i32_84 = arith.constant 2 : i32
    %121 = arith.addi %83, %c2_i32_84 : i32
    %122 = arith.index_cast %121 : i32 to index
    %c0_85 = arith.constant 0 : index
    %c0_86 = arith.constant 0 : index
    %123 = vector.load %arg2[%122, %c0_85, %c0_86] : memref<18x18x4xf32, #tpu.memory_space<vmem>>, vector<1x16x4xf32>
    %124 = vector.shape_cast %123 : vector<1x16x4xf32> to vector<16x4xf32>
    %cst_87 = arith.constant dense<0.000000e+00> : vector<16x128xf32>
    %125 = tpu.matmul %124, %15, %cst_87 {dimension_numbers = #tpu.dot_dimension_numbers<[1], [0], [0], [1], [0, 0, 1, 1], [], []>} : vector<16x4xf32>, vector<4x128xf32>, vector<16x128xf32> -> vector<16x128xf32>
    %126 = arith.addf %120, %125 : vector<16x128xf32>
    %c2_i32_88 = arith.constant 2 : i32
    %127 = arith.addi %83, %c2_i32_88 : i32
    %128 = arith.index_cast %127 : i32 to index
    %c1_89 = arith.constant 1 : index
    %c0_90 = arith.constant 0 : index
    %129 = vector.load %arg2[%128, %c1_89, %c0_90] : memref<18x18x4xf32, #tpu.memory_space<vmem>>, vector<1x16x4xf32>
    %130 = vector.shape_cast %129 : vector<1x16x4xf32> to vector<16x4xf32>
    %cst_91 = arith.constant dense<0.000000e+00> : vector<16x128xf32>
    %131 = tpu.matmul %130, %17, %cst_91 {dimension_numbers = #tpu.dot_dimension_numbers<[1], [0], [0], [1], [0, 0, 1, 1], [], []>} : vector<16x4xf32>, vector<4x128xf32>, vector<16x128xf32> -> vector<16x128xf32>
    %132 = arith.addf %126, %131 : vector<16x128xf32>
    %c2_i32_92 = arith.constant 2 : i32
    %133 = arith.addi %83, %c2_i32_92 : i32
    %134 = arith.index_cast %133 : i32 to index
    %c2_93 = arith.constant 2 : index
    %c0_94 = arith.constant 0 : index
    %135 = vector.load %arg2[%134, %c2_93, %c0_94] : memref<18x18x4xf32, #tpu.memory_space<vmem>>, vector<1x16x4xf32>
    %136 = vector.shape_cast %135 : vector<1x16x4xf32> to vector<16x4xf32>
    %cst_95 = arith.constant dense<0.000000e+00> : vector<16x128xf32>
    %137 = tpu.matmul %136, %19, %cst_95 {dimension_numbers = #tpu.dot_dimension_numbers<[1], [0], [0], [1], [0, 0, 1, 1], [], []>} : vector<16x4xf32>, vector<4x128xf32>, vector<16x128xf32> -> vector<16x128xf32>
    %138 = arith.addf %132, %137 : vector<16x128xf32>
    %139 = vector.broadcast %1 : vector<1x128xf32> to vector<16x128xf32>
    %140 = arith.addf %138, %139 : vector<16x128xf32>
    %cst_96 = arith.constant 0.000000e+00 : f32
    %141 = vector.broadcast %cst_96 : f32 to vector<16x128xf32>
    %142 = arith.maximumf %140, %141 : vector<16x128xf32>
    %c1_97 = arith.constant 1 : index
    %c0_98 = arith.constant 0 : index
    %c0_99 = arith.constant 0 : index
    %143 = vector.load %arg5[%c1_97, %c0_98, %c0_99] : memref<8x16x128xf32, #tpu.memory_space<vmem>>, vector<1x16x128xf32>
    %144 = vector.shape_cast %143 : vector<1x16x128xf32> to vector<16x128xf32>
    %145 = vector.shape_cast %142 : vector<16x128xf32> to vector<1x16x128xf32>
    tpu.vector_store %arg5[%c1_97, %c0_98, %c0_99], %145 {strides = array<i32>} : memref<8x16x128xf32, #tpu.memory_space<vmem>>, vector<1x16x128xf32>,
    %c2_i32_100 = arith.constant 2 : i32
    %146 = arith.addi %0, %c2_i32_100 : i32
    %cst_101 = arith.constant 0.000000e+00 : f32
    %147 = vector.broadcast %cst_101 : f32 to vector<16x128xf32>
    %c0_i32_102 = arith.constant 0 : i32
    %148 = arith.addi %146, %c0_i32_102 : i32
    %149 = arith.index_cast %148 : i32 to index
    %c0_103 = arith.constant 0 : index
    %c0_104 = arith.constant 0 : index
    %150 = vector.load %arg2[%149, %c0_103, %c0_104] : memref<18x18x4xf32, #tpu.memory_space<vmem>>, vector<1x16x4xf32>
    %151 = vector.shape_cast %150 : vector<1x16x4xf32> to vector<16x4xf32>
    %cst_105 = arith.constant dense<0.000000e+00> : vector<16x128xf32>
    %152 = tpu.matmul %151, %3, %cst_105 {dimension_numbers = #tpu.dot_dimension_numbers<[1], [0], [0], [1], [0, 0, 1, 1], [], []>} : vector<16x4xf32>, vector<4x128xf32>, vector<16x128xf32> -> vector<16x128xf32>
    %153 = arith.addf %147, %152 : vector<16x128xf32>
    %c0_i32_106 = arith.constant 0 : i32
    %154 = arith.addi %146, %c0_i32_106 : i32
    %155 = arith.index_cast %154 : i32 to index
    %c1_107 = arith.constant 1 : index
    %c0_108 = arith.constant 0 : index
    %156 = vector.load %arg2[%155, %c1_107, %c0_108] : memref<18x18x4xf32, #tpu.memory_space<vmem>>, vector<1x16x4xf32>
    %157 = vector.shape_cast %156 : vector<1x16x4xf32> to vector<16x4xf32>
    %cst_109 = arith.constant dense<0.000000e+00> : vector<16x128xf32>
    %158 = tpu.matmul %157, %5, %cst_109 {dimension_numbers = #tpu.dot_dimension_numbers<[1], [0], [0], [1], [0, 0, 1, 1], [], []>} : vector<16x4xf32>, vector<4x128xf32>, vector<16x128xf32> -> vector<16x128xf32>
    %159 = arith.addf %153, %158 : vector<16x128xf32>
    %c0_i32_110 = arith.constant 0 : i32
    %160 = arith.addi %146, %c0_i32_110 : i32
    %161 = arith.index_cast %160 : i32 to index
    %c2_111 = arith.constant 2 : index
    %c0_112 = arith.constant 0 : index
    %162 = vector.load %arg2[%161, %c2_111, %c0_112] : memref<18x18x4xf32, #tpu.memory_space<vmem>>, vector<1x16x4xf32>
    %163 = vector.shape_cast %162 : vector<1x16x4xf32> to vector<16x4xf32>
    %cst_113 = arith.constant dense<0.000000e+00> : vector<16x128xf32>
    %164 = tpu.matmul %163, %7, %cst_113 {dimension_numbers = #tpu.dot_dimension_numbers<[1], [0], [0], [1], [0, 0, 1, 1], [], []>} : vector<16x4xf32>, vector<4x128xf32>, vector<16x128xf32> -> vector<16x128xf32>
    %165 = arith.addf %159, %164 : vector<16x128xf32>
    %c1_i32_114 = arith.constant 1 : i32
    %166 = arith.addi %146, %c1_i32_114 : i32
    %167 = arith.index_cast %166 : i32 to index
    %c0_115 = arith.constant 0 : index
    %c0_116 = arith.constant 0 : index
    %168 = vector.load %arg2[%167, %c0_115, %c0_116] : memref<18x18x4xf32, #tpu.memory_space<vmem>>, vector<1x16x4xf32>
    %169 = vector.shape_cast %168 : vector<1x16x4xf32> to vector<16x4xf32>
    %cst_117 = arith.constant dense<0.000000e+00> : vector<16x128xf32>
    %170 = tpu.matmul %169, %9, %cst_117 {dimension_numbers = #tpu.dot_dimension_numbers<[1], [0], [0], [1], [0, 0, 1, 1], [], []>} : vector<16x4xf32>, vector<4x128xf32>, vector<16x128xf32> -> vector<16x128xf32>
    %171 = arith.addf %165, %170 : vector<16x128xf32>
    %c1_i32_118 = arith.constant 1 : i32
    %172 = arith.addi %146, %c1_i32_118 : i32
    %173 = arith.index_cast %172 : i32 to index
    %c1_119 = arith.constant 1 : index
    %c0_120 = arith.constant 0 : index
    %174 = vector.load %arg2[%173, %c1_119, %c0_120] : memref<18x18x4xf32, #tpu.memory_space<vmem>>, vector<1x16x4xf32>
    %175 = vector.shape_cast %174 : vector<1x16x4xf32> to vector<16x4xf32>
    %cst_121 = arith.constant dense<0.000000e+00> : vector<16x128xf32>
    %176 = tpu.matmul %175, %11, %cst_121 {dimension_numbers = #tpu.dot_dimension_numbers<[1], [0], [0], [1], [0, 0, 1, 1], [], []>} : vector<16x4xf32>, vector<4x128xf32>, vector<16x128xf32> -> vector<16x128xf32>
    %177 = arith.addf %171, %176 : vector<16x128xf32>
    %c1_i32_122 = arith.constant 1 : i32
    %178 = arith.addi %146, %c1_i32_122 : i32
    %179 = arith.index_cast %178 : i32 to index
    %c2_123 = arith.constant 2 : index
    %c0_124 = arith.constant 0 : index
    %180 = vector.load %arg2[%179, %c2_123, %c0_124] : memref<18x18x4xf32, #tpu.memory_space<vmem>>, vector<1x16x4xf32>
    %181 = vector.shape_cast %180 : vector<1x16x4xf32> to vector<16x4xf32>
    %cst_125 = arith.constant dense<0.000000e+00> : vector<16x128xf32>
    %182 = tpu.matmul %181, %13, %cst_125 {dimension_numbers = #tpu.dot_dimension_numbers<[1], [0], [0], [1], [0, 0, 1, 1], [], []>} : vector<16x4xf32>, vector<4x128xf32>, vector<16x128xf32> -> vector<16x128xf32>
    %183 = arith.addf %177, %182 : vector<16x128xf32>
    %c2_i32_126 = arith.constant 2 : i32
    %184 = arith.addi %146, %c2_i32_126 : i32
    %185 = arith.index_cast %184 : i32 to index
    %c0_127 = arith.constant 0 : index
    %c0_128 = arith.constant 0 : index
    %186 = vector.load %arg2[%185, %c0_127, %c0_128] : memref<18x18x4xf32, #tpu.memory_space<vmem>>, vector<1x16x4xf32>
    %187 = vector.shape_cast %186 : vector<1x16x4xf32> to vector<16x4xf32>
    %cst_129 = arith.constant dense<0.000000e+00> : vector<16x128xf32>
    %188 = tpu.matmul %187, %15, %cst_129 {dimension_numbers = #tpu.dot_dimension_numbers<[1], [0], [0], [1], [0, 0, 1, 1], [], []>} : vector<16x4xf32>, vector<4x128xf32>, vector<16x128xf32> -> vector<16x128xf32>
    %189 = arith.addf %183, %188 : vector<16x128xf32>
    %c2_i32_130 = arith.constant 2 : i32
    %190 = arith.addi %146, %c2_i32_130 : i32
    %191 = arith.index_cast %190 : i32 to index
    %c1_131 = arith.constant 1 : index
    %c0_132 = arith.constant 0 : index
    %192 = vector.load %arg2[%191, %c1_131, %c0_132] : memref<18x18x4xf32, #tpu.memory_space<vmem>>, vector<1x16x4xf32>
    %193 = vector.shape_cast %192 : vector<1x16x4xf32> to vector<16x4xf32>
    %cst_133 = arith.constant dense<0.000000e+00> : vector<16x128xf32>
    %194 = tpu.matmul %193, %17, %cst_133 {dimension_numbers = #tpu.dot_dimension_numbers<[1], [0], [0], [1], [0, 0, 1, 1], [], []>} : vector<16x4xf32>, vector<4x128xf32>, vector<16x128xf32> -> vector<16x128xf32>
    %195 = arith.addf %189, %194 : vector<16x128xf32>
    %c2_i32_134 = arith.constant 2 : i32
    %196 = arith.addi %146, %c2_i32_134 : i32
    %197 = arith.index_cast %196 : i32 to index
    %c2_135 = arith.constant 2 : index
    %c0_136 = arith.constant 0 : index
    %198 = vector.load %arg2[%197, %c2_135, %c0_136] : memref<18x18x4xf32, #tpu.memory_space<vmem>>, vector<1x16x4xf32>
    %199 = vector.shape_cast %198 : vector<1x16x4xf32> to vector<16x4xf32>
    %cst_137 = arith.constant dense<0.000000e+00> : vector<16x128xf32>
    %200 = tpu.matmul %199, %19, %cst_137 {dimension_numbers = #tpu.dot_dimension_numbers<[1], [0], [0], [1], [0, 0, 1, 1], [], []>} : vector<16x4xf32>, vector<4x128xf32>, vector<16x128xf32> -> vector<16x128xf32>
    %201 = arith.addf %195, %200 : vector<16x128xf32>
    %202 = vector.broadcast %1 : vector<1x128xf32> to vector<16x128xf32>
    %203 = arith.addf %201, %202 : vector<16x128xf32>
    %cst_138 = arith.constant 0.000000e+00 : f32
    %204 = vector.broadcast %cst_138 : f32 to vector<16x128xf32>
    %205 = arith.maximumf %203, %204 : vector<16x128xf32>
    %c2_139 = arith.constant 2 : index
    %c0_140 = arith.constant 0 : index
    %c0_141 = arith.constant 0 : index
    %206 = vector.load %arg5[%c2_139, %c0_140, %c0_141] : memref<8x16x128xf32, #tpu.memory_space<vmem>>, vector<1x16x128xf32>
    %207 = vector.shape_cast %206 : vector<1x16x128xf32> to vector<16x128xf32>
    %208 = vector.shape_cast %205 : vector<16x128xf32> to vector<1x16x128xf32>
    tpu.vector_store %arg5[%c2_139, %c0_140, %c0_141], %208 {strides = array<i32>} : memref<8x16x128xf32, #tpu.memory_space<vmem>>, vector<1x16x128xf32>,
    %c3_i32 = arith.constant 3 : i32
    %209 = arith.addi %0, %c3_i32 : i32
    %cst_142 = arith.constant 0.000000e+00 : f32
    %210 = vector.broadcast %cst_142 : f32 to vector<16x128xf32>
    %c0_i32_143 = arith.constant 0 : i32
    %211 = arith.addi %209, %c0_i32_143 : i32
    %212 = arith.index_cast %211 : i32 to index
    %c0_144 = arith.constant 0 : index
    %c0_145 = arith.constant 0 : index
    %213 = vector.load %arg2[%212, %c0_144, %c0_145] : memref<18x18x4xf32, #tpu.memory_space<vmem>>, vector<1x16x4xf32>
    %214 = vector.shape_cast %213 : vector<1x16x4xf32> to vector<16x4xf32>
    %cst_146 = arith.constant dense<0.000000e+00> : vector<16x128xf32>
    %215 = tpu.matmul %214, %3, %cst_146 {dimension_numbers = #tpu.dot_dimension_numbers<[1], [0], [0], [1], [0, 0, 1, 1], [], []>} : vector<16x4xf32>, vector<4x128xf32>, vector<16x128xf32> -> vector<16x128xf32>
    %216 = arith.addf %210, %215 : vector<16x128xf32>
    %c0_i32_147 = arith.constant 0 : i32
    %217 = arith.addi %209, %c0_i32_147 : i32
    %218 = arith.index_cast %217 : i32 to index
    %c1_148 = arith.constant 1 : index
    %c0_149 = arith.constant 0 : index
    %219 = vector.load %arg2[%218, %c1_148, %c0_149] : memref<18x18x4xf32, #tpu.memory_space<vmem>>, vector<1x16x4xf32>
    %220 = vector.shape_cast %219 : vector<1x16x4xf32> to vector<16x4xf32>
    %cst_150 = arith.constant dense<0.000000e+00> : vector<16x128xf32>
    %221 = tpu.matmul %220, %5, %cst_150 {dimension_numbers = #tpu.dot_dimension_numbers<[1], [0], [0], [1], [0, 0, 1, 1], [], []>} : vector<16x4xf32>, vector<4x128xf32>, vector<16x128xf32> -> vector<16x128xf32>
    %222 = arith.addf %216, %221 : vector<16x128xf32>
    %c0_i32_151 = arith.constant 0 : i32
    %223 = arith.addi %209, %c0_i32_151 : i32
    %224 = arith.index_cast %223 : i32 to index
    %c2_152 = arith.constant 2 : index
    %c0_153 = arith.constant 0 : index
    %225 = vector.load %arg2[%224, %c2_152, %c0_153] : memref<18x18x4xf32, #tpu.memory_space<vmem>>, vector<1x16x4xf32>
    %226 = vector.shape_cast %225 : vector<1x16x4xf32> to vector<16x4xf32>
    %cst_154 = arith.constant dense<0.000000e+00> : vector<16x128xf32>
    %227 = tpu.matmul %226, %7, %cst_154 {dimension_numbers = #tpu.dot_dimension_numbers<[1], [0], [0], [1], [0, 0, 1, 1], [], []>} : vector<16x4xf32>, vector<4x128xf32>, vector<16x128xf32> -> vector<16x128xf32>
    %228 = arith.addf %222, %227 : vector<16x128xf32>
    %c1_i32_155 = arith.constant 1 : i32
    %229 = arith.addi %209, %c1_i32_155 : i32
    %230 = arith.index_cast %229 : i32 to index
    %c0_156 = arith.constant 0 : index
    %c0_157 = arith.constant 0 : index
    %231 = vector.load %arg2[%230, %c0_156, %c0_157] : memref<18x18x4xf32, #tpu.memory_space<vmem>>, vector<1x16x4xf32>
    %232 = vector.shape_cast %231 : vector<1x16x4xf32> to vector<16x4xf32>
    %cst_158 = arith.constant dense<0.000000e+00> : vector<16x128xf32>
    %233 = tpu.matmul %232, %9, %cst_158 {dimension_numbers = #tpu.dot_dimension_numbers<[1], [0], [0], [1], [0, 0, 1, 1], [], []>} : vector<16x4xf32>, vector<4x128xf32>, vector<16x128xf32> -> vector<16x128xf32>
    %234 = arith.addf %228, %233 : vector<16x128xf32>
    %c1_i32_159 = arith.constant 1 : i32
    %235 = arith.addi %209, %c1_i32_159 : i32
    %236 = arith.index_cast %235 : i32 to index
    %c1_160 = arith.constant 1 : index
    %c0_161 = arith.constant 0 : index
    %237 = vector.load %arg2[%236, %c1_160, %c0_161] : memref<18x18x4xf32, #tpu.memory_space<vmem>>, vector<1x16x4xf32>
    %238 = vector.shape_cast %237 : vector<1x16x4xf32> to vector<16x4xf32>
    %cst_162 = arith.constant dense<0.000000e+00> : vector<16x128xf32>
    %239 = tpu.matmul %238, %11, %cst_162 {dimension_numbers = #tpu.dot_dimension_numbers<[1], [0], [0], [1], [0, 0, 1, 1], [], []>} : vector<16x4xf32>, vector<4x128xf32>, vector<16x128xf32> -> vector<16x128xf32>
    %240 = arith.addf %234, %239 : vector<16x128xf32>
    %c1_i32_163 = arith.constant 1 : i32
    %241 = arith.addi %209, %c1_i32_163 : i32
    %242 = arith.index_cast %241 : i32 to index
    %c2_164 = arith.constant 2 : index
    %c0_165 = arith.constant 0 : index
    %243 = vector.load %arg2[%242, %c2_164, %c0_165] : memref<18x18x4xf32, #tpu.memory_space<vmem>>, vector<1x16x4xf32>
    %244 = vector.shape_cast %243 : vector<1x16x4xf32> to vector<16x4xf32>
    %cst_166 = arith.constant dense<0.000000e+00> : vector<16x128xf32>
    %245 = tpu.matmul %244, %13, %cst_166 {dimension_numbers = #tpu.dot_dimension_numbers<[1], [0], [0], [1], [0, 0, 1, 1], [], []>} : vector<16x4xf32>, vector<4x128xf32>, vector<16x128xf32> -> vector<16x128xf32>
    %246 = arith.addf %240, %245 : vector<16x128xf32>
    %c2_i32_167 = arith.constant 2 : i32
    %247 = arith.addi %209, %c2_i32_167 : i32
    %248 = arith.index_cast %247 : i32 to index
    %c0_168 = arith.constant 0 : index
    %c0_169 = arith.constant 0 : index
    %249 = vector.load %arg2[%248, %c0_168, %c0_169] : memref<18x18x4xf32, #tpu.memory_space<vmem>>, vector<1x16x4xf32>
    %250 = vector.shape_cast %249 : vector<1x16x4xf32> to vector<16x4xf32>
    %cst_170 = arith.constant dense<0.000000e+00> : vector<16x128xf32>
    %251 = tpu.matmul %250, %15, %cst_170 {dimension_numbers = #tpu.dot_dimension_numbers<[1], [0], [0], [1], [0, 0, 1, 1], [], []>} : vector<16x4xf32>, vector<4x128xf32>, vector<16x128xf32> -> vector<16x128xf32>
    %252 = arith.addf %246, %251 : vector<16x128xf32>
    %c2_i32_171 = arith.constant 2 : i32
    %253 = arith.addi %209, %c2_i32_171 : i32
    %254 = arith.index_cast %253 : i32 to index
    %c1_172 = arith.constant 1 : index
    %c0_173 = arith.constant 0 : index
    %255 = vector.load %arg2[%254, %c1_172, %c0_173] : memref<18x18x4xf32, #tpu.memory_space<vmem>>, vector<1x16x4xf32>
    %256 = vector.shape_cast %255 : vector<1x16x4xf32> to vector<16x4xf32>
    %cst_174 = arith.constant dense<0.000000e+00> : vector<16x128xf32>
    %257 = tpu.matmul %256, %17, %cst_174 {dimension_numbers = #tpu.dot_dimension_numbers<[1], [0], [0], [1], [0, 0, 1, 1], [], []>} : vector<16x4xf32>, vector<4x128xf32>, vector<16x128xf32> -> vector<16x128xf32>
    %258 = arith.addf %252, %257 : vector<16x128xf32>
    %c2_i32_175 = arith.constant 2 : i32
    %259 = arith.addi %209, %c2_i32_175 : i32
    %260 = arith.index_cast %259 : i32 to index
    %c2_176 = arith.constant 2 : index
    %c0_177 = arith.constant 0 : index
    %261 = vector.load %arg2[%260, %c2_176, %c0_177] : memref<18x18x4xf32, #tpu.memory_space<vmem>>, vector<1x16x4xf32>
    %262 = vector.shape_cast %261 : vector<1x16x4xf32> to vector<16x4xf32>
    %cst_178 = arith.constant dense<0.000000e+00> : vector<16x128xf32>
    %263 = tpu.matmul %262, %19, %cst_178 {dimension_numbers = #tpu.dot_dimension_numbers<[1], [0], [0], [1], [0, 0, 1, 1], [], []>} : vector<16x4xf32>, vector<4x128xf32>, vector<16x128xf32> -> vector<16x128xf32>
    %264 = arith.addf %258, %263 : vector<16x128xf32>
    %265 = vector.broadcast %1 : vector<1x128xf32> to vector<16x128xf32>
    %266 = arith.addf %264, %265 : vector<16x128xf32>
    %cst_179 = arith.constant 0.000000e+00 : f32
    %267 = vector.broadcast %cst_179 : f32 to vector<16x128xf32>
    %268 = arith.maximumf %266, %267 : vector<16x128xf32>
    %c3_180 = arith.constant 3 : index
    %c0_181 = arith.constant 0 : index
    %c0_182 = arith.constant 0 : index
    %269 = vector.load %arg5[%c3_180, %c0_181, %c0_182] : memref<8x16x128xf32, #tpu.memory_space<vmem>>, vector<1x16x128xf32>
    %270 = vector.shape_cast %269 : vector<1x16x128xf32> to vector<16x128xf32>
    %271 = vector.shape_cast %268 : vector<16x128xf32> to vector<1x16x128xf32>
    tpu.vector_store %arg5[%c3_180, %c0_181, %c0_182], %271 {strides = array<i32>} : memref<8x16x128xf32, #tpu.memory_space<vmem>>, vector<1x16x128xf32>,
    %c4_i32 = arith.constant 4 : i32
    %272 = arith.addi %0, %c4_i32 : i32
    %cst_183 = arith.constant 0.000000e+00 : f32
    %273 = vector.broadcast %cst_183 : f32 to vector<16x128xf32>
    %c0_i32_184 = arith.constant 0 : i32
    %274 = arith.addi %272, %c0_i32_184 : i32
    %275 = arith.index_cast %274 : i32 to index
    %c0_185 = arith.constant 0 : index
    %c0_186 = arith.constant 0 : index
    %276 = vector.load %arg2[%275, %c0_185, %c0_186] : memref<18x18x4xf32, #tpu.memory_space<vmem>>, vector<1x16x4xf32>
    %277 = vector.shape_cast %276 : vector<1x16x4xf32> to vector<16x4xf32>
    %cst_187 = arith.constant dense<0.000000e+00> : vector<16x128xf32>
    %278 = tpu.matmul %277, %3, %cst_187 {dimension_numbers = #tpu.dot_dimension_numbers<[1], [0], [0], [1], [0, 0, 1, 1], [], []>} : vector<16x4xf32>, vector<4x128xf32>, vector<16x128xf32> -> vector<16x128xf32>
    %279 = arith.addf %273, %278 : vector<16x128xf32>
    %c0_i32_188 = arith.constant 0 : i32
    %280 = arith.addi %272, %c0_i32_188 : i32
    %281 = arith.index_cast %280 : i32 to index
    %c1_189 = arith.constant 1 : index
    %c0_190 = arith.constant 0 : index
    %282 = vector.load %arg2[%281, %c1_189, %c0_190] : memref<18x18x4xf32, #tpu.memory_space<vmem>>, vector<1x16x4xf32>
    %283 = vector.shape_cast %282 : vector<1x16x4xf32> to vector<16x4xf32>
    %cst_191 = arith.constant dense<0.000000e+00> : vector<16x128xf32>
    %284 = tpu.matmul %283, %5, %cst_191 {dimension_numbers = #tpu.dot_dimension_numbers<[1], [0], [0], [1], [0, 0, 1, 1], [], []>} : vector<16x4xf32>, vector<4x128xf32>, vector<16x128xf32> -> vector<16x128xf32>
    %285 = arith.addf %279, %284 : vector<16x128xf32>
    %c0_i32_192 = arith.constant 0 : i32
    %286 = arith.addi %272, %c0_i32_192 : i32
    %287 = arith.index_cast %286 : i32 to index
    %c2_193 = arith.constant 2 : index
    %c0_194 = arith.constant 0 : index
    %288 = vector.load %arg2[%287, %c2_193, %c0_194] : memref<18x18x4xf32, #tpu.memory_space<vmem>>, vector<1x16x4xf32>
    %289 = vector.shape_cast %288 : vector<1x16x4xf32> to vector<16x4xf32>
    %cst_195 = arith.constant dense<0.000000e+00> : vector<16x128xf32>
    %290 = tpu.matmul %289, %7, %cst_195 {dimension_numbers = #tpu.dot_dimension_numbers<[1], [0], [0], [1], [0, 0, 1, 1], [], []>} : vector<16x4xf32>, vector<4x128xf32>, vector<16x128xf32> -> vector<16x128xf32>
    %291 = arith.addf %285, %290 : vector<16x128xf32>
    %c1_i32_196 = arith.constant 1 : i32
    %292 = arith.addi %272, %c1_i32_196 : i32
    %293 = arith.index_cast %292 : i32 to index
    %c0_197 = arith.constant 0 : index
    %c0_198 = arith.constant 0 : index
    %294 = vector.load %arg2[%293, %c0_197, %c0_198] : memref<18x18x4xf32, #tpu.memory_space<vmem>>, vector<1x16x4xf32>
    %295 = vector.shape_cast %294 : vector<1x16x4xf32> to vector<16x4xf32>
    %cst_199 = arith.constant dense<0.000000e+00> : vector<16x128xf32>
    %296 = tpu.matmul %295, %9, %cst_199 {dimension_numbers = #tpu.dot_dimension_numbers<[1], [0], [0], [1], [0, 0, 1, 1], [], []>} : vector<16x4xf32>, vector<4x128xf32>, vector<16x128xf32> -> vector<16x128xf32>
    %297 = arith.addf %291, %296 : vector<16x128xf32>
    %c1_i32_200 = arith.constant 1 : i32
    %298 = arith.addi %272, %c1_i32_200 : i32
    %299 = arith.index_cast %298 : i32 to index
    %c1_201 = arith.constant 1 : index
    %c0_202 = arith.constant 0 : index
    %300 = vector.load %arg2[%299, %c1_201, %c0_202] : memref<18x18x4xf32, #tpu.memory_space<vmem>>, vector<1x16x4xf32>
    %301 = vector.shape_cast %300 : vector<1x16x4xf32> to vector<16x4xf32>
    %cst_203 = arith.constant dense<0.000000e+00> : vector<16x128xf32>
    %302 = tpu.matmul %301, %11, %cst_203 {dimension_numbers = #tpu.dot_dimension_numbers<[1], [0], [0], [1], [0, 0, 1, 1], [], []>} : vector<16x4xf32>, vector<4x128xf32>, vector<16x128xf32> -> vector<16x128xf32>
    %303 = arith.addf %297, %302 : vector<16x128xf32>
    %c1_i32_204 = arith.constant 1 : i32
    %304 = arith.addi %272, %c1_i32_204 : i32
    %305 = arith.index_cast %304 : i32 to index
    %c2_205 = arith.constant 2 : index
    %c0_206 = arith.constant 0 : index
    %306 = vector.load %arg2[%305, %c2_205, %c0_206] : memref<18x18x4xf32, #tpu.memory_space<vmem>>, vector<1x16x4xf32>
    %307 = vector.shape_cast %306 : vector<1x16x4xf32> to vector<16x4xf32>
    %cst_207 = arith.constant dense<0.000000e+00> : vector<16x128xf32>
    %308 = tpu.matmul %307, %13, %cst_207 {dimension_numbers = #tpu.dot_dimension_numbers<[1], [0], [0], [1], [0, 0, 1, 1], [], []>} : vector<16x4xf32>, vector<4x128xf32>, vector<16x128xf32> -> vector<16x128xf32>
    %309 = arith.addf %303, %308 : vector<16x128xf32>
    %c2_i32_208 = arith.constant 2 : i32
    %310 = arith.addi %272, %c2_i32_208 : i32
    %311 = arith.index_cast %310 : i32 to index
    %c0_209 = arith.constant 0 : index
    %c0_210 = arith.constant 0 : index
    %312 = vector.load %arg2[%311, %c0_209, %c0_210] : memref<18x18x4xf32, #tpu.memory_space<vmem>>, vector<1x16x4xf32>
    %313 = vector.shape_cast %312 : vector<1x16x4xf32> to vector<16x4xf32>
    %cst_211 = arith.constant dense<0.000000e+00> : vector<16x128xf32>
    %314 = tpu.matmul %313, %15, %cst_211 {dimension_numbers = #tpu.dot_dimension_numbers<[1], [0], [0], [1], [0, 0, 1, 1], [], []>} : vector<16x4xf32>, vector<4x128xf32>, vector<16x128xf32> -> vector<16x128xf32>
    %315 = arith.addf %309, %314 : vector<16x128xf32>
    %c2_i32_212 = arith.constant 2 : i32
    %316 = arith.addi %272, %c2_i32_212 : i32
    %317 = arith.index_cast %316 : i32 to index
    %c1_213 = arith.constant 1 : index
    %c0_214 = arith.constant 0 : index
    %318 = vector.load %arg2[%317, %c1_213, %c0_214] : memref<18x18x4xf32, #tpu.memory_space<vmem>>, vector<1x16x4xf32>
    %319 = vector.shape_cast %318 : vector<1x16x4xf32> to vector<16x4xf32>
    %cst_215 = arith.constant dense<0.000000e+00> : vector<16x128xf32>
    %320 = tpu.matmul %319, %17, %cst_215 {dimension_numbers = #tpu.dot_dimension_numbers<[1], [0], [0], [1], [0, 0, 1, 1], [], []>} : vector<16x4xf32>, vector<4x128xf32>, vector<16x128xf32> -> vector<16x128xf32>
    %321 = arith.addf %315, %320 : vector<16x128xf32>
    %c2_i32_216 = arith.constant 2 : i32
    %322 = arith.addi %272, %c2_i32_216 : i32
    %323 = arith.index_cast %322 : i32 to index
    %c2_217 = arith.constant 2 : index
    %c0_218 = arith.constant 0 : index
    %324 = vector.load %arg2[%323, %c2_217, %c0_218] : memref<18x18x4xf32, #tpu.memory_space<vmem>>, vector<1x16x4xf32>
    %325 = vector.shape_cast %324 : vector<1x16x4xf32> to vector<16x4xf32>
    %cst_219 = arith.constant dense<0.000000e+00> : vector<16x128xf32>
    %326 = tpu.matmul %325, %19, %cst_219 {dimension_numbers = #tpu.dot_dimension_numbers<[1], [0], [0], [1], [0, 0, 1, 1], [], []>} : vector<16x4xf32>, vector<4x128xf32>, vector<16x128xf32> -> vector<16x128xf32>
    %327 = arith.addf %321, %326 : vector<16x128xf32>
    %328 = vector.broadcast %1 : vector<1x128xf32> to vector<16x128xf32>
    %329 = arith.addf %327, %328 : vector<16x128xf32>
    %cst_220 = arith.constant 0.000000e+00 : f32
    %330 = vector.broadcast %cst_220 : f32 to vector<16x128xf32>
    %331 = arith.maximumf %329, %330 : vector<16x128xf32>
    %c4_221 = arith.constant 4 : index
    %c0_222 = arith.constant 0 : index
    %c0_223 = arith.constant 0 : index
    %332 = vector.load %arg5[%c4_221, %c0_222, %c0_223] : memref<8x16x128xf32, #tpu.memory_space<vmem>>, vector<1x16x128xf32>
    %333 = vector.shape_cast %332 : vector<1x16x128xf32> to vector<16x128xf32>
    %334 = vector.shape_cast %331 : vector<16x128xf32> to vector<1x16x128xf32>
    tpu.vector_store %arg5[%c4_221, %c0_222, %c0_223], %334 {strides = array<i32>} : memref<8x16x128xf32, #tpu.memory_space<vmem>>, vector<1x16x128xf32>,
    %c5_i32 = arith.constant 5 : i32
    %335 = arith.addi %0, %c5_i32 : i32
    %cst_224 = arith.constant 0.000000e+00 : f32
    %336 = vector.broadcast %cst_224 : f32 to vector<16x128xf32>
    %c0_i32_225 = arith.constant 0 : i32
    %337 = arith.addi %335, %c0_i32_225 : i32
    %338 = arith.index_cast %337 : i32 to index
    %c0_226 = arith.constant 0 : index
    %c0_227 = arith.constant 0 : index
    %339 = vector.load %arg2[%338, %c0_226, %c0_227] : memref<18x18x4xf32, #tpu.memory_space<vmem>>, vector<1x16x4xf32>
    %340 = vector.shape_cast %339 : vector<1x16x4xf32> to vector<16x4xf32>
    %cst_228 = arith.constant dense<0.000000e+00> : vector<16x128xf32>
    %341 = tpu.matmul %340, %3, %cst_228 {dimension_numbers = #tpu.dot_dimension_numbers<[1], [0], [0], [1], [0, 0, 1, 1], [], []>} : vector<16x4xf32>, vector<4x128xf32>, vector<16x128xf32> -> vector<16x128xf32>
    %342 = arith.addf %336, %341 : vector<16x128xf32>
    %c0_i32_229 = arith.constant 0 : i32
    %343 = arith.addi %335, %c0_i32_229 : i32
    %344 = arith.index_cast %343 : i32 to index
    %c1_230 = arith.constant 1 : index
    %c0_231 = arith.constant 0 : index
    %345 = vector.load %arg2[%344, %c1_230, %c0_231] : memref<18x18x4xf32, #tpu.memory_space<vmem>>, vector<1x16x4xf32>
    %346 = vector.shape_cast %345 : vector<1x16x4xf32> to vector<16x4xf32>
    %cst_232 = arith.constant dense<0.000000e+00> : vector<16x128xf32>
    %347 = tpu.matmul %346, %5, %cst_232 {dimension_numbers = #tpu.dot_dimension_numbers<[1], [0], [0], [1], [0, 0, 1, 1], [], []>} : vector<16x4xf32>, vector<4x128xf32>, vector<16x128xf32> -> vector<16x128xf32>
    %348 = arith.addf %342, %347 : vector<16x128xf32>
    %c0_i32_233 = arith.constant 0 : i32
    %349 = arith.addi %335, %c0_i32_233 : i32
    %350 = arith.index_cast %349 : i32 to index
    %c2_234 = arith.constant 2 : index
    %c0_235 = arith.constant 0 : index
    %351 = vector.load %arg2[%350, %c2_234, %c0_235] : memref<18x18x4xf32, #tpu.memory_space<vmem>>, vector<1x16x4xf32>
    %352 = vector.shape_cast %351 : vector<1x16x4xf32> to vector<16x4xf32>
    %cst_236 = arith.constant dense<0.000000e+00> : vector<16x128xf32>
    %353 = tpu.matmul %352, %7, %cst_236 {dimension_numbers = #tpu.dot_dimension_numbers<[1], [0], [0], [1], [0, 0, 1, 1], [], []>} : vector<16x4xf32>, vector<4x128xf32>, vector<16x128xf32> -> vector<16x128xf32>
    %354 = arith.addf %348, %353 : vector<16x128xf32>
    %c1_i32_237 = arith.constant 1 : i32
    %355 = arith.addi %335, %c1_i32_237 : i32
    %356 = arith.index_cast %355 : i32 to index
    %c0_238 = arith.constant 0 : index
    %c0_239 = arith.constant 0 : index
    %357 = vector.load %arg2[%356, %c0_238, %c0_239] : memref<18x18x4xf32, #tpu.memory_space<vmem>>, vector<1x16x4xf32>
    %358 = vector.shape_cast %357 : vector<1x16x4xf32> to vector<16x4xf32>
    %cst_240 = arith.constant dense<0.000000e+00> : vector<16x128xf32>
    %359 = tpu.matmul %358, %9, %cst_240 {dimension_numbers = #tpu.dot_dimension_numbers<[1], [0], [0], [1], [0, 0, 1, 1], [], []>} : vector<16x4xf32>, vector<4x128xf32>, vector<16x128xf32> -> vector<16x128xf32>
    %360 = arith.addf %354, %359 : vector<16x128xf32>
    %c1_i32_241 = arith.constant 1 : i32
    %361 = arith.addi %335, %c1_i32_241 : i32
    %362 = arith.index_cast %361 : i32 to index
    %c1_242 = arith.constant 1 : index
    %c0_243 = arith.constant 0 : index
    %363 = vector.load %arg2[%362, %c1_242, %c0_243] : memref<18x18x4xf32, #tpu.memory_space<vmem>>, vector<1x16x4xf32>
    %364 = vector.shape_cast %363 : vector<1x16x4xf32> to vector<16x4xf32>
    %cst_244 = arith.constant dense<0.000000e+00> : vector<16x128xf32>
    %365 = tpu.matmul %364, %11, %cst_244 {dimension_numbers = #tpu.dot_dimension_numbers<[1], [0], [0], [1], [0, 0, 1, 1], [], []>} : vector<16x4xf32>, vector<4x128xf32>, vector<16x128xf32> -> vector<16x128xf32>
    %366 = arith.addf %360, %365 : vector<16x128xf32>
    %c1_i32_245 = arith.constant 1 : i32
    %367 = arith.addi %335, %c1_i32_245 : i32
    %368 = arith.index_cast %367 : i32 to index
    %c2_246 = arith.constant 2 : index
    %c0_247 = arith.constant 0 : index
    %369 = vector.load %arg2[%368, %c2_246, %c0_247] : memref<18x18x4xf32, #tpu.memory_space<vmem>>, vector<1x16x4xf32>
    %370 = vector.shape_cast %369 : vector<1x16x4xf32> to vector<16x4xf32>
    %cst_248 = arith.constant dense<0.000000e+00> : vector<16x128xf32>
    %371 = tpu.matmul %370, %13, %cst_248 {dimension_numbers = #tpu.dot_dimension_numbers<[1], [0], [0], [1], [0, 0, 1, 1], [], []>} : vector<16x4xf32>, vector<4x128xf32>, vector<16x128xf32> -> vector<16x128xf32>
    %372 = arith.addf %366, %371 : vector<16x128xf32>
    %c2_i32_249 = arith.constant 2 : i32
    %373 = arith.addi %335, %c2_i32_249 : i32
    %374 = arith.index_cast %373 : i32 to index
    %c0_250 = arith.constant 0 : index
    %c0_251 = arith.constant 0 : index
    %375 = vector.load %arg2[%374, %c0_250, %c0_251] : memref<18x18x4xf32, #tpu.memory_space<vmem>>, vector<1x16x4xf32>
    %376 = vector.shape_cast %375 : vector<1x16x4xf32> to vector<16x4xf32>
    %cst_252 = arith.constant dense<0.000000e+00> : vector<16x128xf32>
    %377 = tpu.matmul %376, %15, %cst_252 {dimension_numbers = #tpu.dot_dimension_numbers<[1], [0], [0], [1], [0, 0, 1, 1], [], []>} : vector<16x4xf32>, vector<4x128xf32>, vector<16x128xf32> -> vector<16x128xf32>
    %378 = arith.addf %372, %377 : vector<16x128xf32>
    %c2_i32_253 = arith.constant 2 : i32
    %379 = arith.addi %335, %c2_i32_253 : i32
    %380 = arith.index_cast %379 : i32 to index
    %c1_254 = arith.constant 1 : index
    %c0_255 = arith.constant 0 : index
    %381 = vector.load %arg2[%380, %c1_254, %c0_255] : memref<18x18x4xf32, #tpu.memory_space<vmem>>, vector<1x16x4xf32>
    %382 = vector.shape_cast %381 : vector<1x16x4xf32> to vector<16x4xf32>
    %cst_256 = arith.constant dense<0.000000e+00> : vector<16x128xf32>
    %383 = tpu.matmul %382, %17, %cst_256 {dimension_numbers = #tpu.dot_dimension_numbers<[1], [0], [0], [1], [0, 0, 1, 1], [], []>} : vector<16x4xf32>, vector<4x128xf32>, vector<16x128xf32> -> vector<16x128xf32>
    %384 = arith.addf %378, %383 : vector<16x128xf32>
    %c2_i32_257 = arith.constant 2 : i32
    %385 = arith.addi %335, %c2_i32_257 : i32
    %386 = arith.index_cast %385 : i32 to index
    %c2_258 = arith.constant 2 : index
    %c0_259 = arith.constant 0 : index
    %387 = vector.load %arg2[%386, %c2_258, %c0_259] : memref<18x18x4xf32, #tpu.memory_space<vmem>>, vector<1x16x4xf32>
    %388 = vector.shape_cast %387 : vector<1x16x4xf32> to vector<16x4xf32>
    %cst_260 = arith.constant dense<0.000000e+00> : vector<16x128xf32>
    %389 = tpu.matmul %388, %19, %cst_260 {dimension_numbers = #tpu.dot_dimension_numbers<[1], [0], [0], [1], [0, 0, 1, 1], [], []>} : vector<16x4xf32>, vector<4x128xf32>, vector<16x128xf32> -> vector<16x128xf32>
    %390 = arith.addf %384, %389 : vector<16x128xf32>
    %391 = vector.broadcast %1 : vector<1x128xf32> to vector<16x128xf32>
    %392 = arith.addf %390, %391 : vector<16x128xf32>
    %cst_261 = arith.constant 0.000000e+00 : f32
    %393 = vector.broadcast %cst_261 : f32 to vector<16x128xf32>
    %394 = arith.maximumf %392, %393 : vector<16x128xf32>
    %c5_262 = arith.constant 5 : index
    %c0_263 = arith.constant 0 : index
    %c0_264 = arith.constant 0 : index
    %395 = vector.load %arg5[%c5_262, %c0_263, %c0_264] : memref<8x16x128xf32, #tpu.memory_space<vmem>>, vector<1x16x128xf32>
    %396 = vector.shape_cast %395 : vector<1x16x128xf32> to vector<16x128xf32>
    %397 = vector.shape_cast %394 : vector<16x128xf32> to vector<1x16x128xf32>
    tpu.vector_store %arg5[%c5_262, %c0_263, %c0_264], %397 {strides = array<i32>} : memref<8x16x128xf32, #tpu.memory_space<vmem>>, vector<1x16x128xf32>,
    %c6_i32 = arith.constant 6 : i32
    %398 = arith.addi %0, %c6_i32 : i32
    %cst_265 = arith.constant 0.000000e+00 : f32
    %399 = vector.broadcast %cst_265 : f32 to vector<16x128xf32>
    %c0_i32_266 = arith.constant 0 : i32
    %400 = arith.addi %398, %c0_i32_266 : i32
    %401 = arith.index_cast %400 : i32 to index
    %c0_267 = arith.constant 0 : index
    %c0_268 = arith.constant 0 : index
    %402 = vector.load %arg2[%401, %c0_267, %c0_268] : memref<18x18x4xf32, #tpu.memory_space<vmem>>, vector<1x16x4xf32>
    %403 = vector.shape_cast %402 : vector<1x16x4xf32> to vector<16x4xf32>
    %cst_269 = arith.constant dense<0.000000e+00> : vector<16x128xf32>
    %404 = tpu.matmul %403, %3, %cst_269 {dimension_numbers = #tpu.dot_dimension_numbers<[1], [0], [0], [1], [0, 0, 1, 1], [], []>} : vector<16x4xf32>, vector<4x128xf32>, vector<16x128xf32> -> vector<16x128xf32>
    %405 = arith.addf %399, %404 : vector<16x128xf32>
    %c0_i32_270 = arith.constant 0 : i32
    %406 = arith.addi %398, %c0_i32_270 : i32
    %407 = arith.index_cast %406 : i32 to index
    %c1_271 = arith.constant 1 : index
    %c0_272 = arith.constant 0 : index
    %408 = vector.load %arg2[%407, %c1_271, %c0_272] : memref<18x18x4xf32, #tpu.memory_space<vmem>>, vector<1x16x4xf32>
    %409 = vector.shape_cast %408 : vector<1x16x4xf32> to vector<16x4xf32>
    %cst_273 = arith.constant dense<0.000000e+00> : vector<16x128xf32>
    %410 = tpu.matmul %409, %5, %cst_273 {dimension_numbers = #tpu.dot_dimension_numbers<[1], [0], [0], [1], [0, 0, 1, 1], [], []>} : vector<16x4xf32>, vector<4x128xf32>, vector<16x128xf32> -> vector<16x128xf32>
    %411 = arith.addf %405, %410 : vector<16x128xf32>
    %c0_i32_274 = arith.constant 0 : i32
    %412 = arith.addi %398, %c0_i32_274 : i32
    %413 = arith.index_cast %412 : i32 to index
    %c2_275 = arith.constant 2 : index
    %c0_276 = arith.constant 0 : index
    %414 = vector.load %arg2[%413, %c2_275, %c0_276] : memref<18x18x4xf32, #tpu.memory_space<vmem>>, vector<1x16x4xf32>
    %415 = vector.shape_cast %414 : vector<1x16x4xf32> to vector<16x4xf32>
    %cst_277 = arith.constant dense<0.000000e+00> : vector<16x128xf32>
    %416 = tpu.matmul %415, %7, %cst_277 {dimension_numbers = #tpu.dot_dimension_numbers<[1], [0], [0], [1], [0, 0, 1, 1], [], []>} : vector<16x4xf32>, vector<4x128xf32>, vector<16x128xf32> -> vector<16x128xf32>
    %417 = arith.addf %411, %416 : vector<16x128xf32>
    %c1_i32_278 = arith.constant 1 : i32
    %418 = arith.addi %398, %c1_i32_278 : i32
    %419 = arith.index_cast %418 : i32 to index
    %c0_279 = arith.constant 0 : index
    %c0_280 = arith.constant 0 : index
    %420 = vector.load %arg2[%419, %c0_279, %c0_280] : memref<18x18x4xf32, #tpu.memory_space<vmem>>, vector<1x16x4xf32>
    %421 = vector.shape_cast %420 : vector<1x16x4xf32> to vector<16x4xf32>
    %cst_281 = arith.constant dense<0.000000e+00> : vector<16x128xf32>
    %422 = tpu.matmul %421, %9, %cst_281 {dimension_numbers = #tpu.dot_dimension_numbers<[1], [0], [0], [1], [0, 0, 1, 1], [], []>} : vector<16x4xf32>, vector<4x128xf32>, vector<16x128xf32> -> vector<16x128xf32>
    %423 = arith.addf %417, %422 : vector<16x128xf32>
    %c1_i32_282 = arith.constant 1 : i32
    %424 = arith.addi %398, %c1_i32_282 : i32
    %425 = arith.index_cast %424 : i32 to index
    %c1_283 = arith.constant 1 : index
    %c0_284 = arith.constant 0 : index
    %426 = vector.load %arg2[%425, %c1_283, %c0_284] : memref<18x18x4xf32, #tpu.memory_space<vmem>>, vector<1x16x4xf32>
    %427 = vector.shape_cast %426 : vector<1x16x4xf32> to vector<16x4xf32>
    %cst_285 = arith.constant dense<0.000000e+00> : vector<16x128xf32>
    %428 = tpu.matmul %427, %11, %cst_285 {dimension_numbers = #tpu.dot_dimension_numbers<[1], [0], [0], [1], [0, 0, 1, 1], [], []>} : vector<16x4xf32>, vector<4x128xf32>, vector<16x128xf32> -> vector<16x128xf32>
    %429 = arith.addf %423, %428 : vector<16x128xf32>
    %c1_i32_286 = arith.constant 1 : i32
    %430 = arith.addi %398, %c1_i32_286 : i32
    %431 = arith.index_cast %430 : i32 to index
    %c2_287 = arith.constant 2 : index
    %c0_288 = arith.constant 0 : index
    %432 = vector.load %arg2[%431, %c2_287, %c0_288] : memref<18x18x4xf32, #tpu.memory_space<vmem>>, vector<1x16x4xf32>
    %433 = vector.shape_cast %432 : vector<1x16x4xf32> to vector<16x4xf32>
    %cst_289 = arith.constant dense<0.000000e+00> : vector<16x128xf32>
    %434 = tpu.matmul %433, %13, %cst_289 {dimension_numbers = #tpu.dot_dimension_numbers<[1], [0], [0], [1], [0, 0, 1, 1], [], []>} : vector<16x4xf32>, vector<4x128xf32>, vector<16x128xf32> -> vector<16x128xf32>
    %435 = arith.addf %429, %434 : vector<16x128xf32>
    %c2_i32_290 = arith.constant 2 : i32
    %436 = arith.addi %398, %c2_i32_290 : i32
    %437 = arith.index_cast %436 : i32 to index
    %c0_291 = arith.constant 0 : index
    %c0_292 = arith.constant 0 : index
    %438 = vector.load %arg2[%437, %c0_291, %c0_292] : memref<18x18x4xf32, #tpu.memory_space<vmem>>, vector<1x16x4xf32>
    %439 = vector.shape_cast %438 : vector<1x16x4xf32> to vector<16x4xf32>
    %cst_293 = arith.constant dense<0.000000e+00> : vector<16x128xf32>
    %440 = tpu.matmul %439, %15, %cst_293 {dimension_numbers = #tpu.dot_dimension_numbers<[1], [0], [0], [1], [0, 0, 1, 1], [], []>} : vector<16x4xf32>, vector<4x128xf32>, vector<16x128xf32> -> vector<16x128xf32>
    %441 = arith.addf %435, %440 : vector<16x128xf32>
    %c2_i32_294 = arith.constant 2 : i32
    %442 = arith.addi %398, %c2_i32_294 : i32
    %443 = arith.index_cast %442 : i32 to index
    %c1_295 = arith.constant 1 : index
    %c0_296 = arith.constant 0 : index
    %444 = vector.load %arg2[%443, %c1_295, %c0_296] : memref<18x18x4xf32, #tpu.memory_space<vmem>>, vector<1x16x4xf32>
    %445 = vector.shape_cast %444 : vector<1x16x4xf32> to vector<16x4xf32>
    %cst_297 = arith.constant dense<0.000000e+00> : vector<16x128xf32>
    %446 = tpu.matmul %445, %17, %cst_297 {dimension_numbers = #tpu.dot_dimension_numbers<[1], [0], [0], [1], [0, 0, 1, 1], [], []>} : vector<16x4xf32>, vector<4x128xf32>, vector<16x128xf32> -> vector<16x128xf32>
    %447 = arith.addf %441, %446 : vector<16x128xf32>
    %c2_i32_298 = arith.constant 2 : i32
    %448 = arith.addi %398, %c2_i32_298 : i32
    %449 = arith.index_cast %448 : i32 to index
    %c2_299 = arith.constant 2 : index
    %c0_300 = arith.constant 0 : index
    %450 = vector.load %arg2[%449, %c2_299, %c0_300] : memref<18x18x4xf32, #tpu.memory_space<vmem>>, vector<1x16x4xf32>
    %451 = vector.shape_cast %450 : vector<1x16x4xf32> to vector<16x4xf32>
    %cst_301 = arith.constant dense<0.000000e+00> : vector<16x128xf32>
    %452 = tpu.matmul %451, %19, %cst_301 {dimension_numbers = #tpu.dot_dimension_numbers<[1], [0], [0], [1], [0, 0, 1, 1], [], []>} : vector<16x4xf32>, vector<4x128xf32>, vector<16x128xf32> -> vector<16x128xf32>
    %453 = arith.addf %447, %452 : vector<16x128xf32>
    %454 = vector.broadcast %1 : vector<1x128xf32> to vector<16x128xf32>
    %455 = arith.addf %453, %454 : vector<16x128xf32>
    %cst_302 = arith.constant 0.000000e+00 : f32
    %456 = vector.broadcast %cst_302 : f32 to vector<16x128xf32>
    %457 = arith.maximumf %455, %456 : vector<16x128xf32>
    %c6_303 = arith.constant 6 : index
    %c0_304 = arith.constant 0 : index
    %c0_305 = arith.constant 0 : index
    %458 = vector.load %arg5[%c6_303, %c0_304, %c0_305] : memref<8x16x128xf32, #tpu.memory_space<vmem>>, vector<1x16x128xf32>
    %459 = vector.shape_cast %458 : vector<1x16x128xf32> to vector<16x128xf32>
    %460 = vector.shape_cast %457 : vector<16x128xf32> to vector<1x16x128xf32>
    tpu.vector_store %arg5[%c6_303, %c0_304, %c0_305], %460 {strides = array<i32>} : memref<8x16x128xf32, #tpu.memory_space<vmem>>, vector<1x16x128xf32>,
    %c7_i32 = arith.constant 7 : i32
    %461 = arith.addi %0, %c7_i32 : i32
    %cst_306 = arith.constant 0.000000e+00 : f32
    %462 = vector.broadcast %cst_306 : f32 to vector<16x128xf32>
    %c0_i32_307 = arith.constant 0 : i32
    %463 = arith.addi %461, %c0_i32_307 : i32
    %464 = arith.index_cast %463 : i32 to index
    %c0_308 = arith.constant 0 : index
    %c0_309 = arith.constant 0 : index
    %465 = vector.load %arg2[%464, %c0_308, %c0_309] : memref<18x18x4xf32, #tpu.memory_space<vmem>>, vector<1x16x4xf32>
    %466 = vector.shape_cast %465 : vector<1x16x4xf32> to vector<16x4xf32>
    %cst_310 = arith.constant dense<0.000000e+00> : vector<16x128xf32>
    %467 = tpu.matmul %466, %3, %cst_310 {dimension_numbers = #tpu.dot_dimension_numbers<[1], [0], [0], [1], [0, 0, 1, 1], [], []>} : vector<16x4xf32>, vector<4x128xf32>, vector<16x128xf32> -> vector<16x128xf32>
    %468 = arith.addf %462, %467 : vector<16x128xf32>
    %c0_i32_311 = arith.constant 0 : i32
    %469 = arith.addi %461, %c0_i32_311 : i32
    %470 = arith.index_cast %469 : i32 to index
    %c1_312 = arith.constant 1 : index
    %c0_313 = arith.constant 0 : index
    %471 = vector.load %arg2[%470, %c1_312, %c0_313] : memref<18x18x4xf32, #tpu.memory_space<vmem>>, vector<1x16x4xf32>
    %472 = vector.shape_cast %471 : vector<1x16x4xf32> to vector<16x4xf32>
    %cst_314 = arith.constant dense<0.000000e+00> : vector<16x128xf32>
    %473 = tpu.matmul %472, %5, %cst_314 {dimension_numbers = #tpu.dot_dimension_numbers<[1], [0], [0], [1], [0, 0, 1, 1], [], []>} : vector<16x4xf32>, vector<4x128xf32>, vector<16x128xf32> -> vector<16x128xf32>
    %474 = arith.addf %468, %473 : vector<16x128xf32>
    %c0_i32_315 = arith.constant 0 : i32
    %475 = arith.addi %461, %c0_i32_315 : i32
    %476 = arith.index_cast %475 : i32 to index
    %c2_316 = arith.constant 2 : index
    %c0_317 = arith.constant 0 : index
    %477 = vector.load %arg2[%476, %c2_316, %c0_317] : memref<18x18x4xf32, #tpu.memory_space<vmem>>, vector<1x16x4xf32>
    %478 = vector.shape_cast %477 : vector<1x16x4xf32> to vector<16x4xf32>
    %cst_318 = arith.constant dense<0.000000e+00> : vector<16x128xf32>
    %479 = tpu.matmul %478, %7, %cst_318 {dimension_numbers = #tpu.dot_dimension_numbers<[1], [0], [0], [1], [0, 0, 1, 1], [], []>} : vector<16x4xf32>, vector<4x128xf32>, vector<16x128xf32> -> vector<16x128xf32>
    %480 = arith.addf %474, %479 : vector<16x128xf32>
    %c1_i32_319 = arith.constant 1 : i32
    %481 = arith.addi %461, %c1_i32_319 : i32
    %482 = arith.index_cast %481 : i32 to index
    %c0_320 = arith.constant 0 : index
    %c0_321 = arith.constant 0 : index
    %483 = vector.load %arg2[%482, %c0_320, %c0_321] : memref<18x18x4xf32, #tpu.memory_space<vmem>>, vector<1x16x4xf32>
    %484 = vector.shape_cast %483 : vector<1x16x4xf32> to vector<16x4xf32>
    %cst_322 = arith.constant dense<0.000000e+00> : vector<16x128xf32>
    %485 = tpu.matmul %484, %9, %cst_322 {dimension_numbers = #tpu.dot_dimension_numbers<[1], [0], [0], [1], [0, 0, 1, 1], [], []>} : vector<16x4xf32>, vector<4x128xf32>, vector<16x128xf32> -> vector<16x128xf32>
    %486 = arith.addf %480, %485 : vector<16x128xf32>
    %c1_i32_323 = arith.constant 1 : i32
    %487 = arith.addi %461, %c1_i32_323 : i32
    %488 = arith.index_cast %487 : i32 to index
    %c1_324 = arith.constant 1 : index
    %c0_325 = arith.constant 0 : index
    %489 = vector.load %arg2[%488, %c1_324, %c0_325] : memref<18x18x4xf32, #tpu.memory_space<vmem>>, vector<1x16x4xf32>
    %490 = vector.shape_cast %489 : vector<1x16x4xf32> to vector<16x4xf32>
    %cst_326 = arith.constant dense<0.000000e+00> : vector<16x128xf32>
    %491 = tpu.matmul %490, %11, %cst_326 {dimension_numbers = #tpu.dot_dimension_numbers<[1], [0], [0], [1], [0, 0, 1, 1], [], []>} : vector<16x4xf32>, vector<4x128xf32>, vector<16x128xf32> -> vector<16x128xf32>
    %492 = arith.addf %486, %491 : vector<16x128xf32>
    %c1_i32_327 = arith.constant 1 : i32
    %493 = arith.addi %461, %c1_i32_327 : i32
    %494 = arith.index_cast %493 : i32 to index
    %c2_328 = arith.constant 2 : index
    %c0_329 = arith.constant 0 : index
    %495 = vector.load %arg2[%494, %c2_328, %c0_329] : memref<18x18x4xf32, #tpu.memory_space<vmem>>, vector<1x16x4xf32>
    %496 = vector.shape_cast %495 : vector<1x16x4xf32> to vector<16x4xf32>
    %cst_330 = arith.constant dense<0.000000e+00> : vector<16x128xf32>
    %497 = tpu.matmul %496, %13, %cst_330 {dimension_numbers = #tpu.dot_dimension_numbers<[1], [0], [0], [1], [0, 0, 1, 1], [], []>} : vector<16x4xf32>, vector<4x128xf32>, vector<16x128xf32> -> vector<16x128xf32>
    %498 = arith.addf %492, %497 : vector<16x128xf32>
    %c2_i32_331 = arith.constant 2 : i32
    %499 = arith.addi %461, %c2_i32_331 : i32
    %500 = arith.index_cast %499 : i32 to index
    %c0_332 = arith.constant 0 : index
    %c0_333 = arith.constant 0 : index
    %501 = vector.load %arg2[%500, %c0_332, %c0_333] : memref<18x18x4xf32, #tpu.memory_space<vmem>>, vector<1x16x4xf32>
    %502 = vector.shape_cast %501 : vector<1x16x4xf32> to vector<16x4xf32>
    %cst_334 = arith.constant dense<0.000000e+00> : vector<16x128xf32>
    %503 = tpu.matmul %502, %15, %cst_334 {dimension_numbers = #tpu.dot_dimension_numbers<[1], [0], [0], [1], [0, 0, 1, 1], [], []>} : vector<16x4xf32>, vector<4x128xf32>, vector<16x128xf32> -> vector<16x128xf32>
    %504 = arith.addf %498, %503 : vector<16x128xf32>
    %c2_i32_335 = arith.constant 2 : i32
    %505 = arith.addi %461, %c2_i32_335 : i32
    %506 = arith.index_cast %505 : i32 to index
    %c1_336 = arith.constant 1 : index
    %c0_337 = arith.constant 0 : index
    %507 = vector.load %arg2[%506, %c1_336, %c0_337] : memref<18x18x4xf32, #tpu.memory_space<vmem>>, vector<1x16x4xf32>
    %508 = vector.shape_cast %507 : vector<1x16x4xf32> to vector<16x4xf32>
    %cst_338 = arith.constant dense<0.000000e+00> : vector<16x128xf32>
    %509 = tpu.matmul %508, %17, %cst_338 {dimension_numbers = #tpu.dot_dimension_numbers<[1], [0], [0], [1], [0, 0, 1, 1], [], []>} : vector<16x4xf32>, vector<4x128xf32>, vector<16x128xf32> -> vector<16x128xf32>
    %510 = arith.addf %504, %509 : vector<16x128xf32>
    %c2_i32_339 = arith.constant 2 : i32
    %511 = arith.addi %461, %c2_i32_339 : i32
    %512 = arith.index_cast %511 : i32 to index
    %c2_340 = arith.constant 2 : index
    %c0_341 = arith.constant 0 : index
    %513 = vector.load %arg2[%512, %c2_340, %c0_341] : memref<18x18x4xf32, #tpu.memory_space<vmem>>, vector<1x16x4xf32>
    %514 = vector.shape_cast %513 : vector<1x16x4xf32> to vector<16x4xf32>
    %cst_342 = arith.constant dense<0.000000e+00> : vector<16x128xf32>
    %515 = tpu.matmul %514, %19, %cst_342 {dimension_numbers = #tpu.dot_dimension_numbers<[1], [0], [0], [1], [0, 0, 1, 1], [], []>} : vector<16x4xf32>, vector<4x128xf32>, vector<16x128xf32> -> vector<16x128xf32>
    %516 = arith.addf %510, %515 : vector<16x128xf32>
    %517 = vector.broadcast %1 : vector<1x128xf32> to vector<16x128xf32>
    %518 = arith.addf %516, %517 : vector<16x128xf32>
    %cst_343 = arith.constant 0.000000e+00 : f32
    %519 = vector.broadcast %cst_343 : f32 to vector<16x128xf32>
    %520 = arith.maximumf %518, %519 : vector<16x128xf32>
    %c7_344 = arith.constant 7 : index
    %c0_345 = arith.constant 0 : index
    %c0_346 = arith.constant 0 : index
    %521 = vector.load %arg5[%c7_344, %c0_345, %c0_346] : memref<8x16x128xf32, #tpu.memory_space<vmem>>, vector<1x16x128xf32>
    %522 = vector.shape_cast %521 : vector<1x16x128xf32> to vector<16x128xf32>
    %523 = vector.shape_cast %520 : vector<16x128xf32> to vector<1x16x128xf32>
    tpu.vector_store %arg5[%c7_344, %c0_345, %c0_346], %523 {strides = array<i32>} : memref<8x16x128xf32, #tpu.memory_space<vmem>>, vector<1x16x128xf32>,
    return
  }
  func.func @transform_0(%arg0: i32, %arg1: i32) -> (i32, i32, i32) {
    %c0_i32 = arith.constant 0 : i32
    %c0_i32_0 = arith.constant 0 : i32
    %c0_i32_1 = arith.constant 0 : i32
    return %arg0, %c0_i32, %c0_i32_0 : i32, i32, i32
  }
  func.func @transform_1(%arg0: i32, %arg1: i32) -> (i32, i32, i32) {
    %c0_i32 = arith.constant 0 : i32
    %c0_i32_0 = arith.constant 0 : i32
    %c0_i32_1 = arith.constant 0 : i32
    %c0_i32_2 = arith.constant 0 : i32
    return %c0_i32, %c0_i32_0, %c0_i32_1 : i32, i32, i32
  }
  func.func @transform_2(%arg0: i32, %arg1: i32) -> (i32, i32) {
    %c0_i32 = arith.constant 0 : i32
    %c0_i32_0 = arith.constant 0 : i32
    %c0_i32_1 = arith.constant 0 : i32
    return %c0_i32, %c0_i32_0 : i32, i32
  }
  func.func @transform_3(%arg0: i32, %arg1: i32) -> (i32, i32, i32) {
    %c2_i32 = arith.constant 2 : i32
    %0 = arith.muli %arg0, %c2_i32 : i32
    %1 = arith.addi %0, %arg1 : i32
    %c0_i32 = arith.constant 0 : i32
    %c0_i32_0 = arith.constant 0 : i32
    %c0_i32_1 = arith.constant 0 : i32
    return %1, %c0_i32, %c0_i32_0 : i32, i32, i32
  }
}

</mosaic_0001>

<llo_original>
// kernel: tpu_custom_call.1
$region0: #{tpu_custom_call.1}
  #allocation0 [shape = 'u32[]', space=smem, size = 0x4, offset = 0x4, fixed_abs, tag = 'smem constant byte address 0x4 - core index']
  #allocation1 [shape = 'u32[144,128]{1,0:T(1,128)}', space=vmem, size = 0x12000, scoped, tag = 'internal scratch']
  %s0 = inlined_call_operand.vmem [shape: f32[36,18,4], index: 0, kind: input, shape index: {}]
  %s1 = inlined_call_operand.vmem [shape: f32[9,4,128], index: 1, kind: input, shape index: {}]
  %s2 = inlined_call_operand.vmem [shape: f32[1,128], index: 2, kind: input, shape index: {}]
  %s3 = inlined_call_operand.hbm [shape: f32[32,16,128], index: 3, kind: output, shape index: {}]
  %s4 = sld [smem:[#allocation0]]
  $region45: #{tpu_custom_call.1} parent=0
    _
  %s6 = ssub.s32 1, %s4
  %s7 = scalar_select 0, %s6, %s4
  $region1: #{tpu_custom_call.1} parent=0
    #allocation2 [shape = 'u8[131072]{0}', space=vmem, size = 0x20000, scoped, tag = 'output window, operand 0']
    #allocation3 [shape = 's32[2]{0}', space=sflag, size = 0x8, scoped, tag = 'scoped memory for tpu_custom_call.1']
    %8 = vsyncpa [#allocation3], 0
    %s9 = scalar_lea.sflag [#allocation3], 1
    %10 = vsyncpa %s9, 0
    loop: start=0, step=1, limit=6
    $region2: #{tpu_custom_call.1} parent=1 // loop_pre_header
      _
    $region3: #{tpu_custom_call.1} parent=1 // loop_header
      %s12 = sphi 0, %s16
      %p13 = scmp.ge.s32.totalorder %s12, 6
      %s19 = sphi 0, %s31
      %s20 = sphi 0, %s27
      %s21 = sphi 0, %s19
      %s22 = sphi 0, %s20
      %s23 = sphi 0, %s21
      %s24 = sphi 0, %s22
      %s34 = sphi 0, %s36
      %s37 = sphi 0, %s34
      %s38 = sphi 0, %s37
      %s54 = sphi 0, %s38
      %s58 = sphi 0, %s58
      %s60 = sphi 0, %s58
      %s61 = sphi 0, %s60
      %s75 = sphi 0, %s61
      %s79 = sphi 0, %s79
      %s81 = sphi 0, %s79
      %s82 = sphi 0, %s81
      %s96 = sphi 0, %s82
      %s106 = sphi 0, %s108
      %s109 = sphi 0, %s106
      %s110 = sphi 0, %s109
      %s126 = sphi 0, %s110
    $region4: #{tpu_custom_call.1} parent=1 // loop_header_branch
      %15 = sbr.rel (%p13) target = $region8
    $region5: #{tpu_custom_call.1} parent=1 // loop_body
      %s17 = ssub.s32 %s12, 1
      %s18 = ssub.s32 %s12, 2
      %s25 = sadd.s32 1, %s20
      %p26 = scmp.ge.s32.totalorder %s25, 2
      %s27 = scalar_select %p26, 0, %s25
      %s28 = sadd.s32 1, %s19
      %s29 = scalar_select %p26, %s28, %s19
      %p30 = scmp.ge.s32.totalorder %s29, 2
      %s31 = scalar_select %p30, 0, %s29
      %s32 = ssub.s32 %s19, %s31
      %p33 = scmp.eq.s32.totalorder %s32, 0
      %s35 = sadd.s32 %s34, 1
      %s36 = scalar_select %p33, %s34, %s35
      %p39 = pneg %p33
      %p40 = scmp.eq.s32.totalorder %s12, 3
      %p41 = por %p39, %p40
      %p42 = scmp.ne.s32.totalorder %s34, %s37
      %p43 = scmp.eq.s32.totalorder %s12, 0
      %p44 = por %p42, %p43
      %p45 = scmp.ne.s32.totalorder %s34, %s37
      %p46 = scmp.eq.s32.totalorder %s17, 3
      %p47 = por %p45, %p46
      %p48 = scmp.ne.s32.totalorder %s37, %s38
      %p49 = scmp.eq.s32.totalorder %s17, 0
      %p50 = por %p48, %p49
      %p51 = scmp.ne.s32.totalorder %s37, %s38
      %p52 = scmp.eq.s32.totalorder %s18, 3
      %p53 = por %p51, %p52
      %p55 = scmp.ne.s32.totalorder %s38, %s54
      %p56 = scmp.eq.s32.totalorder %s18, 0
      %p57 = por %p55, %p56
      %s59 = sadd.s32 %s58, 1
      %p62 = scmp.eq.s32.totalorder %s12, 3
      %p63 = scmp.ne.s32.totalorder %s58, %s60
      %p64 = scmp.eq.s32.totalorder %s12, 0
      %p65 = por %p63, %p64
      %p66 = scmp.ne.s32.totalorder %s58, %s60
      %p67 = scmp.eq.s32.totalorder %s17, 3
      %p68 = por %p66, %p67
      %p69 = scmp.ne.s32.totalorder %s60, %s61
      %p70 = scmp.eq.s32.totalorder %s17, 0
      %p71 = por %p69, %p70
      %p72 = scmp.ne.s32.totalorder %s60, %s61
      %p73 = scmp.eq.s32.totalorder %s18, 3
      %p74 = por %p72, %p73
      %p76 = scmp.ne.s32.totalorder %s61, %s75
      %p77 = scmp.eq.s32.totalorder %s18, 0
      %p78 = por %p76, %p77
      %s80 = sadd.s32 %s79, 1
      %p83 = scmp.eq.s32.totalorder %s12, 3
      %p84 = scmp.ne.s32.totalorder %s79, %s81
      %p85 = scmp.eq.s32.totalorder %s12, 0
      %p86 = por %p84, %p85
      %p87 = scmp.ne.s32.totalorder %s79, %s81
      %p88 = scmp.eq.s32.totalorder %s17, 3
      %p89 = por %p87, %p88
      %p90 = scmp.ne.s32.totalorder %s81, %s82
      %p91 = scmp.eq.s32.totalorder %s17, 0
      %p92 = por %p90, %p91
      %p93 = scmp.ne.s32.totalorder %s81, %s82
      %p94 = scmp.eq.s32.totalorder %s18, 3
      %p95 = por %p93, %p94
      %p97 = scmp.ne.s32.totalorder %s82, %s96
      %p98 = scmp.eq.s32.totalorder %s18, 0
      %p99 = por %p97, %p98
      %s100 = smul.u32 %s19, 2
      %s101 = sadd.s32 %s100, %s20
      %s102 = smul.u32 %s31, 2
      %s103 = sadd.s32 %s102, %s27
      %s104 = ssub.s32 %s101, %s103
      %p105 = scmp.eq.s32.totalorder %s104, 0
      %s107 = sadd.s32 %s106, 1
      %s108 = scalar_select %p105, %s106, %s107
      %p111 = pneg %p105
      %p112 = scmp.eq.s32.totalorder %s12, 3
      %p113 = por %p111, %p112
      %p114 = scmp.ne.s32.totalorder %s106, %s109
      %p115 = scmp.eq.s32.totalorder %s12, 0
      %p116 = por %p114, %p115
      %p117 = scmp.ne.s32.totalorder %s106, %s109
      %p118 = scmp.eq.s32.totalorder %s17, 3
      %p119 = por %p117, %p118
      %p120 = scmp.ne.s32.totalorder %s109, %s110
      %p121 = scmp.eq.s32.totalorder %s17, 0
      %p122 = por %p120, %p121
      %p123 = scmp.ne.s32.totalorder %s109, %s110
      %p124 = scmp.eq.s32.totalorder %s18, 3
      %p125 = por %p123, %p124
      %p127 = scmp.ne.s32.totalorder %s110, %s126
      %p128 = scmp.eq.s32.totalorder %s18, 0
      %p129 = por %p127, %p128
      %p130 = scmp.le.s32.totalorder 1, %s12
      %p131 = scmp.lt.s32.totalorder %s12, 5
      %p132 = pnand %p130, %p131
      %p133 = pneg %p132
      // Predicated region
      $region9: #{tpu_custom_call.1} parent=5 // pred_check
        _
      $region10: #{tpu_custom_call.1} parent=5 // pred_check_branch
        %135 = sbr.rel (%p132) target = $region12
      $region11: #{tpu_custom_call.1} parent=5 // pred_region
        %s136 = ssub.s32 %s12, 1
        // Predicated region
        $region13: #{tpu_custom_call.1} parent=11 // pred_check
          %p137 = pneg %p71
        $region14: #{tpu_custom_call.1} parent=11 // pred_check_branch
          %139 = sbr.rel (%p137) target = $region16
        $region15: #{tpu_custom_call.1} parent=11 // pred_region
          _
        $region16: #{tpu_custom_call.1} parent=11 // pred_fallthru
          _
        // Predicated region
        $region17: #{tpu_custom_call.1} parent=11 // pred_check
          %p140 = pneg %p92
        $region18: #{tpu_custom_call.1} parent=11 // pred_check_branch
          %142 = sbr.rel (%p140) target = $region20
        $region19: #{tpu_custom_call.1} parent=11 // pred_region
          _
        $region20: #{tpu_custom_call.1} parent=11 // pred_fallthru
          _
      $region12: #{tpu_custom_call.1} parent=5 // pred_fallthru
        _
      %p143 = scmp.lt.s32.totalorder %s12, 4
      // Predicated region
      $region21: #{tpu_custom_call.1} parent=5 // pred_check
        %p144 = pneg %p143
      $region22: #{tpu_custom_call.1} parent=5 // pred_check_branch
        %146 = sbr.rel (%p144) target = $region24
      $region23: #{tpu_custom_call.1} parent=5 // pred_region
        // Predicated region
        $region25: #{tpu_custom_call.1} parent=23 // pred_check
          %p147 = pneg %p44
        $region26: #{tpu_custom_call.1} parent=23 // pred_check_branch
          %149 = sbr.rel (%p147) target = $region28
        $region27: #{tpu_custom_call.1} parent=23 // pred_region
          %s150 = smul.u32 18, %s19
          %p151 = scmp.lt.s32.totalorder %s150, 35
          %s152 = scalar_select %p151, %s150, 35
          %s153 = smul.addr %s152, 3
          %s154 = smul.addr %s153, 8
          %s155 = scalar_lea.vmem %s0, %s154
          %s156 = smul.u32 18, %s19
        $region28: #{tpu_custom_call.1} parent=23 // pred_fallthru
          _
      $region24: #{tpu_custom_call.1} parent=5 // pred_fallthru
        _
      %p157 = scmp.le.s32.totalorder 1, %s12
      %p158 = scmp.lt.s32.totalorder %s12, 5
      %p159 = pnand %p157, %p158
      %p160 = pneg %p159
      // Predicated region
      $region29: #{tpu_custom_call.1} parent=5 // pred_check
        _
      $region30: #{tpu_custom_call.1} parent=5 // pred_check_branch
        %162 = sbr.rel (%p159) target = $region32
      $region31: #{tpu_custom_call.1} parent=5 // pred_region
        %s163 = ssub.s32 %s12, 1
        %s164 = smul.u32 18, %s21
        %p165 = scmp.lt.s32.totalorder %s164, 35
        %s166 = scalar_select %p165, %s164, 35
        %s167 = smul.addr %s166, 3
        %s168 = smul.addr %s167, 8
        %s169 = scalar_lea.vmem %s0, %s168
        %p170 = pneg %p50
        %p171 = pneg %p47
        %p172 = pneg %p71
        %p173 = pneg %p68
        %p174 = pneg %p92
        %p175 = pneg %p89
        %p176 = pneg %p122
        %p177 = pneg %p119
        %s178 = sand.u32 %s109, 1
        %s179 = scalar_lea.sflag [#allocation3], %s178
        %s180 = sand.u32 %s109, 1
        %s181 = smul.addr %s180, 128
        %s182 = scalar_lea.vmem [#allocation2], %s181
        %s183 = smul.u32 18, %s21
        %p184 = scmp.lt.s32.totalorder %s183, 35
        %s185 = scalar_select %p184, %s183, 35
        %s186 = smul.addr %s185, 3
        %s187 = smul.addr %s186, 8
        %s188 = scalar_lea.vmem %s0, %s187
        %s189 = smul.u32 18, %s21
        %s190 = smul.u32 %s21, 2
        %s191 = sadd.s32 %s190, %s22
        %s192 = smul.u32 8, %s191
        %s193 = smul.u32 %s22, 8
        %v194 = vld [vmem:[%s2] sm:$0x1]
        %v195 = vld [vmem:[%s1] sm:$0xf]
        %s196 = scalar_lea.vmem %s1, 4
        %v197 = vld [vmem:[%s196] sm:$0xf]
        %s198 = scalar_lea.vmem %s1, 8
        %v199 = vld [vmem:[%s198] sm:$0xf]
        %s200 = scalar_lea.vmem %s1, 12
        %v201 = vld [vmem:[%s200] sm:$0xf]
        %s202 = scalar_lea.vmem %s1, 16
        %v203 = vld [vmem:[%s202] sm:$0xf]
        %s204 = scalar_lea.vmem %s1, 20
        %v205 = vld [vmem:[%s204] sm:$0xf]
        %s206 = scalar_lea.vmem %s1, 24
        %v207 = vld [vmem:[%s206] sm:$0xf]
        %s208 = scalar_lea.vmem %s1, 28
        %v209 = vld [vmem:[%s208] sm:$0xf]
        %s210 = scalar_lea.vmem %s1, 32
        %v211 = vld [vmem:[%s210] sm:$0xf]
        %s212 = smul.u32 %s193, 24
        %s213 = scalar_lea.vmem %s188, %s212
        %v214 = vld [vmem:[%s213] sm:$0xff]
        %v215 = vld [vmem:[%s213 + $0x8] sm:$0xff]
        %v216 = vld [vmem:[%s213 + $0x1] sm:$0xff]
        %v217 = vld [vmem:[%s213 + $0x9] sm:$0xff]
        %vm218 = vcmask 31744
        %v220 = vsel %vm218, %v216, 0
        %v223 = vsel %vm218, %v217, 0
        %vm225 = vcmask 1043456
        %v227 = vsel %vm225, %v197, 0
        %229 = vmatprep.subr.mxu0 0.0
        %230 = vmatpush1.msra.mxu0 %v227
        %231 = vmatprep.subr.mxu0 0.0
        %232 = vmatpush1.msra.mxu0 0.0
        %233 = vmatprep.subr.mxu0 0.0
        %234 = vmatpush1.msra.mxu0 0.0
        %235 = vmatprep.subr.mxu0 0.0
        %236 = vmatpush1.msra.mxu0 0.0
        %237 = vmatprep.subr.mxu0 0.0
        %238 = vmatpush1.msra.mxu0 0.0
        %239 = vmatprep.subr.mxu0 0.0
        %240 = vmatpush1.msra.mxu0 0.0
        %241 = vmatprep.subr.mxu0 0.0
        %242 = vmatpush1.msra.mxu0 0.0
        %243 = vmatprep.subr.mxu0 0.0
        %244 = vmatpush1.msra.mxu0 0.0
        %245 = vmatprep.subr.mxu0 0.0
        %246 = vmatpush1.msra.mxu0 0.0
        %247 = vmatprep.subr.mxu0 0.0
        %248 = vmatpush1.msra.mxu0 0.0
        %249 = vmatprep.subr.mxu0 0.0
        %250 = vmatpush1.msra.mxu0 0.0
        %251 = vmatprep.subr.mxu0 0.0
        %252 = vmatpush1.msra.mxu0 0.0
        %253 = vmatprep.subr.mxu0 0.0
        %254 = vmatpush1.msra.mxu0 0.0
        %255 = vmatprep.subr.mxu0 0.0
        %256 = vmatpush1.msra.mxu0 0.0
        %257 = vmatprep.subr.mxu0 0.0
        %258 = vmatpush1.msra.mxu0 0.0
        %259 = vmatprep.subr.mxu0 0.0
        %260 = vmatpush1.msra.mxu0 0.0
        %261 = vmatprep.subr.mxu0 0.0
        %262 = vmatpush1.msra.mxu0 0.0
        %263 = vmatprep.subr.mxu0 0.0
        %264 = vmatpush1.msra.mxu0 0.0
        %265 = vmatprep.subr.mxu0 0.0
        %266 = vmatpush1.msra.mxu0 0.0
        %267 = vmatprep.subr.mxu0 0.0
        %268 = vmatpush1.msra.mxu0 0.0
        %269 = vmatprep.subr.mxu0 0.0
        %270 = vmatpush1.msra.mxu0 0.0
        %271 = vmatprep.subr.mxu0 0.0
        %272 = vmatpush1.msra.mxu0 0.0
        %273 = vmatprep.subr.mxu0 0.0
        %274 = vmatpush1.msra.mxu0 0.0
        %275 = vmatprep.subr.mxu0 0.0
        %276 = vmatpush1.msra.mxu0 0.0
        %277 = vmatprep.subr.mxu0 0.0
        %278 = vmatpush1.msra.mxu0 0.0
        %279 = vmatprep.subr.mxu0 0.0
        %280 = vmatpush1.msra.mxu0 0.0
        %281 = vmatprep.subr.mxu0 0.0
        %282 = vmatpush1.msra.mxu0 0.0
        %283 = vmatprep.subr.mxu0 0.0
        %284 = vmatpush1.msra.mxu0 0.0
        %285 = vmatprep.subr.mxu0 0.0
        %286 = vmatpush1.msra.mxu0 0.0
        %287 = vmatprep.subr.mxu0 0.0
        %288 = vmatpush1.msra.mxu0 0.0
        %289 = vmatprep.subr.mxu0 0.0
        %290 = vmatpush1.msra.mxu0 0.0
        %291 = vmatprep.subr.mxu0 0.0
        %292 = vmatpush1.msra.mxu0 0.0
        %293 = vmatprep.mubr.f32.mxu0 0.0
        %294 = vmatmul.mubr.f32.gmra.mrb[0].mxu0 %v220
        %v295 = vpop.f32.mrb[0].mxu0
        %v296 = vadd.f32 0.0, %v295
        %v297 = vpop.f32.mrb[0].mxu0
        %298 = vmatprep.mubr.f32.mxu0 0.0
        %299 = vmatmul.mubr.f32.gmra.mrb[0].mxu0 %v223
        %v300 = vpop.f32.mrb[0].mxu0
        %v301 = vadd.f32 0.0, %v300
        %v302 = vpop.f32.mrb[0].mxu0
        %303 = vdwg.mxu0
        %v305 = vsel %vm218, %v214, 0
        %v308 = vsel %vm218, %v215, 0
        %v311 = vsel %vm225, %v195, 0
        %313 = vmatprep.subr.mxu0 0.0
        %314 = vmatpush1.msra.mxu0 %v311
        %315 = vmatprep.subr.mxu0 0.0
        %316 = vmatpush1.msra.mxu0 0.0
        %317 = vmatprep.subr.mxu0 0.0
        %318 = vmatpush1.msra.mxu0 0.0
        %319 = vmatprep.subr.mxu0 0.0
        %320 = vmatpush1.msra.mxu0 0.0
        %321 = vmatprep.subr.mxu0 0.0
        %322 = vmatpush1.msra.mxu0 0.0
        %323 = vmatprep.subr.mxu0 0.0
        %324 = vmatpush1.msra.mxu0 0.0
        %325 = vmatprep.subr.mxu0 0.0
        %326 = vmatpush1.msra.mxu0 0.0
        %327 = vmatprep.subr.mxu0 0.0
        %328 = vmatpush1.msra.mxu0 0.0
        %329 = vmatprep.subr.mxu0 0.0
        %330 = vmatpush1.msra.mxu0 0.0
        %331 = vmatprep.subr.mxu0 0.0
        %332 = vmatpush1.msra.mxu0 0.0
        %333 = vmatprep.subr.mxu0 0.0
        %334 = vmatpush1.msra.mxu0 0.0
        %335 = vmatprep.subr.mxu0 0.0
        %336 = vmatpush1.msra.mxu0 0.0
        %337 = vmatprep.subr.mxu0 0.0
        %338 = vmatpush1.msra.mxu0 0.0
        %339 = vmatprep.subr.mxu0 0.0
        %340 = vmatpush1.msra.mxu0 0.0
        %341 = vmatprep.subr.mxu0 0.0
        %342 = vmatpush1.msra.mxu0 0.0
        %343 = vmatprep.subr.mxu0 0.0
        %344 = vmatpush1.msra.mxu0 0.0
        %345 = vmatprep.subr.mxu0 0.0
        %346 = vmatpush1.msra.mxu0 0.0
        %347 = vmatprep.subr.mxu0 0.0
        %348 = vmatpush1.msra.mxu0 0.0
        %349 = vmatprep.subr.mxu0 0.0
        %350 = vmatpush1.msra.mxu0 0.0
        %351 = vmatprep.subr.mxu0 0.0
        %352 = vmatpush1.msra.mxu0 0.0
        %353 = vmatprep.subr.mxu0 0.0
        %354 = vmatpush1.msra.mxu0 0.0
        %355 = vmatprep.subr.mxu0 0.0
        %356 = vmatpush1.msra.mxu0 0.0
        %357 = vmatprep.subr.mxu0 0.0
        %358 = vmatpush1.msra.mxu0 0.0
        %359 = vmatprep.subr.mxu0 0.0
        %360 = vmatpush1.msra.mxu0 0.0
        %361 = vmatprep.subr.mxu0 0.0
        %362 = vmatpush1.msra.mxu0 0.0
        %363 = vmatprep.subr.mxu0 0.0
        %364 = vmatpush1.msra.mxu0 0.0
        %365 = vmatprep.subr.mxu0 0.0
        %366 = vmatpush1.msra.mxu0 0.0
        %367 = vmatprep.subr.mxu0 0.0
        %368 = vmatpush1.msra.mxu0 0.0
        %369 = vmatprep.subr.mxu0 0.0
        %370 = vmatpush1.msra.mxu0 0.0
        %371 = vmatprep.subr.mxu0 0.0
        %372 = vmatpush1.msra.mxu0 0.0
        %373 = vmatprep.subr.mxu0 0.0
        %374 = vmatpush1.msra.mxu0 0.0
        %375 = vmatprep.subr.mxu0 0.0
        %376 = vmatpush1.msra.mxu0 0.0
        %377 = vmatprep.mubr.f32.mxu0 0.0
        %378 = vmatmul.mubr.f32.gmra.mrb[0].mxu0 %v305
        %v379 = vpop.f32.mrb[0].mxu0
        %v380 = vadd.f32 %v296, %v379
        %v381 = vpop.f32.mrb[0].mxu0
        %382 = vmatprep.mubr.f32.mxu0 0.0
        %383 = vmatmul.mubr.f32.gmra.mrb[0].mxu0 %v308
        %v384 = vpop.f32.mrb[0].mxu0
        %v385 = vadd.f32 %v301, %v384
        %v386 = vpop.f32.mrb[0].mxu0
        %387 = vdwg.mxu0
        %v388 = vld [vmem:[%s213 + $0x2] sm:$0xff]
        %v389 = vld [vmem:[%s213 + $0xa] sm:$0xff]
        %v391 = vsel %vm218, %v388, 0
        %v394 = vsel %vm218, %v389, 0
        %v397 = vsel %vm225, %v199, 0
        %399 = vmatprep.subr.mxu0 0.0
        %400 = vmatpush1.msra.mxu0 %v397
        %401 = vmatprep.subr.mxu0 0.0
        %402 = vmatpush1.msra.mxu0 0.0
        %403 = vmatprep.subr.mxu0 0.0
        %404 = vmatpush1.msra.mxu0 0.0
        %405 = vmatprep.subr.mxu0 0.0
        %406 = vmatpush1.msra.mxu0 0.0
        %407 = vmatprep.subr.mxu0 0.0
        %408 = vmatpush1.msra.mxu0 0.0
        %409 = vmatprep.subr.mxu0 0.0
        %410 = vmatpush1.msra.mxu0 0.0
        %411 = vmatprep.subr.mxu0 0.0
        %412 = vmatpush1.msra.mxu0 0.0
        %413 = vmatprep.subr.mxu0 0.0
        %414 = vmatpush1.msra.mxu0 0.0
        %415 = vmatprep.subr.mxu0 0.0
        %416 = vmatpush1.msra.mxu0 0.0
        %417 = vmatprep.subr.mxu0 0.0
        %418 = vmatpush1.msra.mxu0 0.0
        %419 = vmatprep.subr.mxu0 0.0
        %420 = vmatpush1.msra.mxu0 0.0
        %421 = vmatprep.subr.mxu0 0.0
        %422 = vmatpush1.msra.mxu0 0.0
        %423 = vmatprep.subr.mxu0 0.0
        %424 = vmatpush1.msra.mxu0 0.0
        %425 = vmatprep.subr.mxu0 0.0
        %426 = vmatpush1.msra.mxu0 0.0
        %427 = vmatprep.subr.mxu0 0.0
        %428 = vmatpush1.msra.mxu0 0.0
        %429 = vmatprep.subr.mxu0 0.0
        %430 = vmatpush1.msra.mxu0 0.0
        %431 = vmatprep.subr.mxu0 0.0
        %432 = vmatpush1.msra.mxu0 0.0
        %433 = vmatprep.subr.mxu0 0.0
        %434 = vmatpush1.msra.mxu0 0.0
        %435 = vmatprep.subr.mxu0 0.0
        %436 = vmatpush1.msra.mxu0 0.0
        %437 = vmatprep.subr.mxu0 0.0
        %438 = vmatpush1.msra.mxu0 0.0
        %439 = vmatprep.subr.mxu0 0.0
        %440 = vmatpush1.msra.mxu0 0.0
        %441 = vmatprep.subr.mxu0 0.0
        %442 = vmatpush1.msra.mxu0 0.0
        %443 = vmatprep.subr.mxu0 0.0
        %444 = vmatpush1.msra.mxu0 0.0
        %445 = vmatprep.subr.mxu0 0.0
        %446 = vmatpush1.msra.mxu0 0.0
        %447 = vmatprep.subr.mxu0 0.0
        %448 = vmatpush1.msra.mxu0 0.0
        %449 = vmatprep.subr.mxu0 0.0
        %450 = vmatpush1.msra.mxu0 0.0
        %451 = vmatprep.subr.mxu0 0.0
        %452 = vmatpush1.msra.mxu0 0.0
        %453 = vmatprep.subr.mxu0 0.0
        %454 = vmatpush1.msra.mxu0 0.0
        %455 = vmatprep.subr.mxu0 0.0
        %456 = vmatpush1.msra.mxu0 0.0
        %457 = vmatprep.subr.mxu0 0.0
        %458 = vmatpush1.msra.mxu0 0.0
        %459 = vmatprep.subr.mxu0 0.0
        %460 = vmatpush1.msra.mxu0 0.0
        %461 = vmatprep.subr.mxu0 0.0
        %462 = vmatpush1.msra.mxu0 0.0
        %463 = vmatprep.mubr.f32.mxu0 0.0
        %464 = vmatmul.mubr.f32.gmra.mrb[0].mxu0 %v391
        %v465 = vpop.f32.mrb[0].mxu0
        %v466 = vadd.f32 0.0, %v465
        %v467 = vpop.f32.mrb[0].mxu0
        %468 = vmatprep.mubr.f32.mxu0 0.0
        %469 = vmatmul.mubr.f32.gmra.mrb[0].mxu0 %v394
        %v470 = vpop.f32.mrb[0].mxu0
        %v471 = vadd.f32 0.0, %v470
        %v472 = vpop.f32.mrb[0].mxu0
        %473 = vdwg.mxu0
        %v474 = vadd.f32 %v380, %v466
        %v475 = vadd.f32 %v385, %v471
        %s476 = sadd.s32 %s193, 1
        %s477 = smul.u32 %s476, 24
        %s478 = scalar_lea.vmem %s188, %s477
        %v479 = vld [vmem:[%s478] sm:$0xff]
        %v480 = vld [vmem:[%s478 + $0x8] sm:$0xff]
        %v482 = vsel %vm218, %v479, 0
        %v485 = vsel %vm218, %v480, 0
        %v488 = vsel %vm225, %v201, 0
        %490 = vmatprep.subr.mxu0 0.0
        %491 = vmatpush1.msra.mxu0 %v488
        %492 = vmatprep.subr.mxu0 0.0
        %493 = vmatpush1.msra.mxu0 0.0
        %494 = vmatprep.subr.mxu0 0.0
        %495 = vmatpush1.msra.mxu0 0.0
        %496 = vmatprep.subr.mxu0 0.0
        %497 = vmatpush1.msra.mxu0 0.0
        %498 = vmatprep.subr.mxu0 0.0
        %499 = vmatpush1.msra.mxu0 0.0
        %500 = vmatprep.subr.mxu0 0.0
        %501 = vmatpush1.msra.mxu0 0.0
        %502 = vmatprep.subr.mxu0 0.0
        %503 = vmatpush1.msra.mxu0 0.0
        %504 = vmatprep.subr.mxu0 0.0
        %505 = vmatpush1.msra.mxu0 0.0
        %506 = vmatprep.subr.mxu0 0.0
        %507 = vmatpush1.msra.mxu0 0.0
        %508 = vmatprep.subr.mxu0 0.0
        %509 = vmatpush1.msra.mxu0 0.0
        %510 = vmatprep.subr.mxu0 0.0
        %511 = vmatpush1.msra.mxu0 0.0
        %512 = vmatprep.subr.mxu0 0.0
        %513 = vmatpush1.msra.mxu0 0.0
        %514 = vmatprep.subr.mxu0 0.0
        %515 = vmatpush1.msra.mxu0 0.0
        %516 = vmatprep.subr.mxu0 0.0
        %517 = vmatpush1.msra.mxu0 0.0
        %518 = vmatprep.subr.mxu0 0.0
        %519 = vmatpush1.msra.mxu0 0.0
        %520 = vmatprep.subr.mxu0 0.0
        %521 = vmatpush1.msra.mxu0 0.0
        %522 = vmatprep.subr.mxu0 0.0
        %523 = vmatpush1.msra.mxu0 0.0
        %524 = vmatprep.subr.mxu0 0.0
        %525 = vmatpush1.msra.mxu0 0.0
        %526 = vmatprep.subr.mxu0 0.0
        %527 = vmatpush1.msra.mxu0 0.0
        %528 = vmatprep.subr.mxu0 0.0
        %529 = vmatpush1.msra.mxu0 0.0
        %530 = vmatprep.subr.mxu0 0.0
        %531 = vmatpush1.msra.mxu0 0.0
        %532 = vmatprep.subr.mxu0 0.0
        %533 = vmatpush1.msra.mxu0 0.0
        %534 = vmatprep.subr.mxu0 0.0
        %535 = vmatpush1.msra.mxu0 0.0
        %536 = vmatprep.subr.mxu0 0.0
        %537 = vmatpush1.msra.mxu0 0.0
        %538 = vmatprep.subr.mxu0 0.0
        %539 = vmatpush1.msra.mxu0 0.0
        %540 = vmatprep.subr.mxu0 0.0
        %541 = vmatpush1.msra.mxu0 0.0
        %542 = vmatprep.subr.mxu0 0.0
        %543 = vmatpush1.msra.mxu0 0.0
        %544 = vmatprep.subr.mxu0 0.0
        %545 = vmatpush1.msra.mxu0 0.0
        %546 = vmatprep.subr.mxu0 0.0
        %547 = vmatpush1.msra.mxu0 0.0
        %548 = vmatprep.subr.mxu0 0.0
        %549 = vmatpush1.msra.mxu0 0.0
        %550 = vmatprep.subr.mxu0 0.0
        %551 = vmatpush1.msra.mxu0 0.0
        %552 = vmatprep.subr.mxu0 0.0
        %553 = vmatpush1.msra.mxu0 0.0
        %554 = vmatprep.mubr.f32.mxu0 0.0
        %555 = vmatmul.mubr.f32.gmra.mrb[0].mxu0 %v482
        %v556 = vpop.f32.mrb[0].mxu0
        %v557 = vadd.f32 0.0, %v556
        %v558 = vpop.f32.mrb[0].mxu0
        %559 = vmatprep.mubr.f32.mxu0 0.0
        %560 = vmatmul.mubr.f32.gmra.mrb[0].mxu0 %v485
        %v561 = vpop.f32.mrb[0].mxu0
        %v562 = vadd.f32 0.0, %v561
        %v563 = vpop.f32.mrb[0].mxu0
        %564 = vdwg.mxu0
        %v565 = vadd.f32 %v474, %v557
        %v566 = vadd.f32 %v475, %v562
        %v567 = vld [vmem:[%s478 + $0x1] sm:$0xff]
        %v568 = vld [vmem:[%s478 + $0x9] sm:$0xff]
        %v570 = vsel %vm218, %v567, 0
        %v573 = vsel %vm218, %v568, 0
        %v576 = vsel %vm225, %v203, 0
        %578 = vmatprep.subr.mxu0 0.0
        %579 = vmatpush1.msra.mxu0 %v576
        %580 = vmatprep.subr.mxu0 0.0
        %581 = vmatpush1.msra.mxu0 0.0
        %582 = vmatprep.subr.mxu0 0.0
        %583 = vmatpush1.msra.mxu0 0.0
        %584 = vmatprep.subr.mxu0 0.0
        %585 = vmatpush1.msra.mxu0 0.0
        %586 = vmatprep.subr.mxu0 0.0
        %587 = vmatpush1.msra.mxu0 0.0
        %588 = vmatprep.subr.mxu0 0.0
        %589 = vmatpush1.msra.mxu0 0.0
        %590 = vmatprep.subr.mxu0 0.0
        %591 = vmatpush1.msra.mxu0 0.0
        %592 = vmatprep.subr.mxu0 0.0
        %593 = vmatpush1.msra.mxu0 0.0
        %594 = vmatprep.subr.mxu0 0.0
        %595 = vmatpush1.msra.mxu0 0.0
        %596 = vmatprep.subr.mxu0 0.0
        %597 = vmatpush1.msra.mxu0 0.0
        %598 = vmatprep.subr.mxu0 0.0
        %599 = vmatpush1.msra.mxu0 0.0
        %600 = vmatprep.subr.mxu0 0.0
        %601 = vmatpush1.msra.mxu0 0.0
        %602 = vmatprep.subr.mxu0 0.0
        %603 = vmatpush1.msra.mxu0 0.0
        %604 = vmatprep.subr.mxu0 0.0
        %605 = vmatpush1.msra.mxu0 0.0
        %606 = vmatprep.subr.mxu0 0.0
        %607 = vmatpush1.msra.mxu0 0.0
        %608 = vmatprep.subr.mxu0 0.0
        %609 = vmatpush1.msra.mxu0 0.0
        %610 = vmatprep.subr.mxu0 0.0
        %611 = vmatpush1.msra.mxu0 0.0
        %612 = vmatprep.subr.mxu0 0.0
        %613 = vmatpush1.msra.mxu0 0.0
        %614 = vmatprep.subr.mxu0 0.0
        %615 = vmatpush1.msra.mxu0 0.0
        %616 = vmatprep.subr.mxu0 0.0
        %617 = vmatpush1.msra.mxu0 0.0
        %618 = vmatprep.subr.mxu0 0.0
        %619 = vmatpush1.msra.mxu0 0.0
        %620 = vmatprep.subr.mxu0 0.0
        %621 = vmatpush1.msra.mxu0 0.0
        %622 = vmatprep.subr.mxu0 0.0
        %623 = vmatpush1.msra.mxu0 0.0
        %624 = vmatprep.subr.mxu0 0.0
        %625 = vmatpush1.msra.mxu0 0.0
        %626 = vmatprep.subr.mxu0 0.0
        %627 = vmatpush1.msra.mxu0 0.0
        %628 = vmatprep.subr.mxu0 0.0
        %629 = vmatpush1.msra.mxu0 0.0
        %630 = vmatprep.subr.mxu0 0.0
        %631 = vmatpush1.msra.mxu0 0.0
        %632 = vmatprep.subr.mxu0 0.0
        %633 = vmatpush1.msra.mxu0 0.0
        %634 = vmatprep.subr.mxu0 0.0
        %635 = vmatpush1.msra.mxu0 0.0
        %636 = vmatprep.subr.mxu0 0.0
        %637 = vmatpush1.msra.mxu0 0.0
        %638 = vmatprep.subr.mxu0 0.0
        %639 = vmatpush1.msra.mxu0 0.0
        %640 = vmatprep.subr.mxu0 0.0
        %641 = vmatpush1.msra.mxu0 0.0
        %642 = vmatprep.mubr.f32.mxu0 0.0
        %643 = vmatmul.mubr.f32.gmra.mrb[0].mxu0 %v570
        %v644 = vpop.f32.mrb[0].mxu0
        %v645 = vadd.f32 0.0, %v644
        %v646 = vpop.f32.mrb[0].mxu0
        %647 = vmatprep.mubr.f32.mxu0 0.0
        %648 = vmatmul.mubr.f32.gmra.mrb[0].mxu0 %v573
        %v649 = vpop.f32.mrb[0].mxu0
        %v650 = vadd.f32 0.0, %v649
        %v651 = vpop.f32.mrb[0].mxu0
        %652 = vdwg.mxu0
        %v653 = vadd.f32 %v565, %v645
        %v654 = vadd.f32 %v566, %v650
        %v655 = vld [vmem:[%s478 + $0x2] sm:$0xff]
        %v656 = vld [vmem:[%s478 + $0xa] sm:$0xff]
        %v658 = vsel %vm218, %v655, 0
        %v661 = vsel %vm218, %v656, 0
        %v664 = vsel %vm225, %v205, 0
        %666 = vmatprep.subr.mxu0 0.0
        %667 = vmatpush1.msra.mxu0 %v664
        %668 = vmatprep.subr.mxu0 0.0
        %669 = vmatpush1.msra.mxu0 0.0
        %670 = vmatprep.subr.mxu0 0.0
        %671 = vmatpush1.msra.mxu0 0.0
        %672 = vmatprep.subr.mxu0 0.0
        %673 = vmatpush1.msra.mxu0 0.0
        %674 = vmatprep.subr.mxu0 0.0
        %675 = vmatpush1.msra.mxu0 0.0
        %676 = vmatprep.subr.mxu0 0.0
        %677 = vmatpush1.msra.mxu0 0.0
        %678 = vmatprep.subr.mxu0 0.0
        %679 = vmatpush1.msra.mxu0 0.0
        %680 = vmatprep.subr.mxu0 0.0
        %681 = vmatpush1.msra.mxu0 0.0
        %682 = vmatprep.subr.mxu0 0.0
        %683 = vmatpush1.msra.mxu0 0.0
        %684 = vmatprep.subr.mxu0 0.0
        %685 = vmatpush1.msra.mxu0 0.0
        %686 = vmatprep.subr.mxu0 0.0
        %687 = vmatpush1.msra.mxu0 0.0
        %688 = vmatprep.subr.mxu0 0.0
        %689 = vmatpush1.msra.mxu0 0.0
        %690 = vmatprep.subr.mxu0 0.0
        %691 = vmatpush1.msra.mxu0 0.0
        %692 = vmatprep.subr.mxu0 0.0
        %693 = vmatpush1.msra.mxu0 0.0
        %694 = vmatprep.subr.mxu0 0.0
        %695 = vmatpush1.msra.mxu0 0.0
        %696 = vmatprep.subr.mxu0 0.0
        %697 = vmatpush1.msra.mxu0 0.0
        %698 = vmatprep.subr.mxu0 0.0
        %699 = vmatpush1.msra.mxu0 0.0
        %700 = vmatprep.subr.mxu0 0.0
        %701 = vmatpush1.msra.mxu0 0.0
        %702 = vmatprep.subr.mxu0 0.0
        %703 = vmatpush1.msra.mxu0 0.0
        %704 = vmatprep.subr.mxu0 0.0
        %705 = vmatpush1.msra.mxu0 0.0
        %706 = vmatprep.subr.mxu0 0.0
        %707 = vmatpush1.msra.mxu0 0.0
        %708 = vmatprep.subr.mxu0 0.0
        %709 = vmatpush1.msra.mxu0 0.0
        %710 = vmatprep.subr.mxu0 0.0
        %711 = vmatpush1.msra.mxu0 0.0
        %712 = vmatprep.subr.mxu0 0.0
        %713 = vmatpush1.msra.mxu0 0.0
        %714 = vmatprep.subr.mxu0 0.0
        %715 = vmatpush1.msra.mxu0 0.0
        %716 = vmatprep.subr.mxu0 0.0
        %717 = vmatpush1.msra.mxu0 0.0
        %718 = vmatprep.subr.mxu0 0.0
        %719 = vmatpush1.msra.mxu0 0.0
        %720 = vmatprep.subr.mxu0 0.0
        %721 = vmatpush1.msra.mxu0 0.0
        %722 = vmatprep.subr.mxu0 0.0
        %723 = vmatpush1.msra.mxu0 0.0
        %724 = vmatprep.subr.mxu0 0.0
        %725 = vmatpush1.msra.mxu0 0.0
        %726 = vmatprep.subr.mxu0 0.0
        %727 = vmatpush1.msra.mxu0 0.0
        %728 = vmatprep.subr.mxu0 0.0
        %729 = vmatpush1.msra.mxu0 0.0
        %730 = vmatprep.mubr.f32.mxu0 0.0
        %731 = vmatmul.mubr.f32.gmra.mrb[0].mxu0 %v658
        %v732 = vpop.f32.mrb[0].mxu0
        %v733 = vadd.f32 0.0, %v732
        %v734 = vpop.f32.mrb[0].mxu0
        %735 = vmatprep.mubr.f32.mxu0 0.0
        %736 = vmatmul.mubr.f32.gmra.mrb[0].mxu0 %v661
        %v737 = vpop.f32.mrb[0].mxu0
        %v738 = vadd.f32 0.0, %v737
        %v739 = vpop.f32.mrb[0].mxu0
        %740 = vdwg.mxu0
        %v741 = vadd.f32 %v653, %v733
        %v742 = vadd.f32 %v654, %v738
        %s743 = sadd.s32 %s193, 2
        %s744 = smul.u32 %s743, 24
        %s745 = scalar_lea.vmem %s188, %s744
        %v746 = vld [vmem:[%s745] sm:$0xff]
        %v747 = vld [vmem:[%s745 + $0x8] sm:$0xff]
        %v749 = vsel %vm218, %v746, 0
        %v752 = vsel %vm218, %v747, 0
        %v755 = vsel %vm225, %v207, 0
        %757 = vmatprep.subr.mxu0 0.0
        %758 = vmatpush1.msra.mxu0 %v755
        %759 = vmatprep.subr.mxu0 0.0
        %760 = vmatpush1.msra.mxu0 0.0
        %761 = vmatprep.subr.mxu0 0.0
        %762 = vmatpush1.msra.mxu0 0.0
        %763 = vmatprep.subr.mxu0 0.0
        %764 = vmatpush1.msra.mxu0 0.0
        %765 = vmatprep.subr.mxu0 0.0
        %766 = vmatpush1.msra.mxu0 0.0
        %767 = vmatprep.subr.mxu0 0.0
        %768 = vmatpush1.msra.mxu0 0.0
        %769 = vmatprep.subr.mxu0 0.0
        %770 = vmatpush1.msra.mxu0 0.0
        %771 = vmatprep.subr.mxu0 0.0
        %772 = vmatpush1.msra.mxu0 0.0
        %773 = vmatprep.subr.mxu0 0.0
        %774 = vmatpush1.msra.mxu0 0.0
        %775 = vmatprep.subr.mxu0 0.0
        %776 = vmatpush1.msra.mxu0 0.0
        %777 = vmatprep.subr.mxu0 0.0
        %778 = vmatpush1.msra.mxu0 0.0
        %779 = vmatprep.subr.mxu0 0.0
        %780 = vmatpush1.msra.mxu0 0.0
        %781 = vmatprep.subr.mxu0 0.0
        %782 = vmatpush1.msra.mxu0 0.0
        %783 = vmatprep.subr.mxu0 0.0
        %784 = vmatpush1.msra.mxu0 0.0
        %785 = vmatprep.subr.mxu0 0.0
        %786 = vmatpush1.msra.mxu0 0.0
        %787 = vmatprep.subr.mxu0 0.0
        %788 = vmatpush1.msra.mxu0 0.0
        %789 = vmatprep.subr.mxu0 0.0
        %790 = vmatpush1.msra.mxu0 0.0
        %791 = vmatprep.subr.mxu0 0.0
        %792 = vmatpush1.msra.mxu0 0.0
        %793 = vmatprep.subr.mxu0 0.0
        %794 = vmatpush1.msra.mxu0 0.0
        %795 = vmatprep.subr.mxu0 0.0
        %796 = vmatpush1.msra.mxu0 0.0
        %797 = vmatprep.subr.mxu0 0.0
        %798 = vmatpush1.msra.mxu0 0.0
        %799 = vmatprep.subr.mxu0 0.0
        %800 = vmatpush1.msra.mxu0 0.0
        %801 = vmatprep.subr.mxu0 0.0
        %802 = vmatpush1.msra.mxu0 0.0
        %803 = vmatprep.subr.mxu0 0.0
        %804 = vmatpush1.msra.mxu0 0.0
        %805 = vmatprep.subr.mxu0 0.0
        %806 = vmatpush1.msra.mxu0 0.0
        %807 = vmatprep.subr.mxu0 0.0
        %808 = vmatpush1.msra.mxu0 0.0
        %809 = vmatprep.subr.mxu0 0.0
        %810 = vmatpush1.msra.mxu0 0.0
        %811 = vmatprep.subr.mxu0 0.0
        %812 = vmatpush1.msra.mxu0 0.0
        %813 = vmatprep.subr.mxu0 0.0
        %814 = vmatpush1.msra.mxu0 0.0
        %815 = vmatprep.subr.mxu0 0.0
        %816 = vmatpush1.msra.mxu0 0.0
        %817 = vmatprep.subr.mxu0 0.0
        %818 = vmatpush1.msra.mxu0 0.0
        %819 = vmatprep.subr.mxu0 0.0
        %820 = vmatpush1.msra.mxu0 0.0
        %821 = vmatprep.mubr.f32.mxu0 0.0
        %822 = vmatmul.mubr.f32.gmra.mrb[0].mxu0 %v749
        %v823 = vpop.f32.mrb[0].mxu0
        %v824 = vadd.f32 0.0, %v823
        %v825 = vpop.f32.mrb[0].mxu0
        %826 = vmatprep.mubr.f32.mxu0 0.0
        %827 = vmatmul.mubr.f32.gmra.mrb[0].mxu0 %v752
        %v828 = vpop.f32.mrb[0].mxu0
        %v829 = vadd.f32 0.0, %v828
        %v830 = vpop.f32.mrb[0].mxu0
        %831 = vdwg.mxu0
        %v832 = vadd.f32 %v741, %v824
        %v833 = vadd.f32 %v742, %v829
        %v834 = vld [vmem:[%s745 + $0x1] sm:$0xff]
        %v835 = vld [vmem:[%s745 + $0x9] sm:$0xff]
        %v837 = vsel %vm218, %v834, 0
        %v840 = vsel %vm218, %v835, 0
        %v843 = vsel %vm225, %v209, 0
        %845 = vmatprep.subr.mxu0 0.0
        %846 = vmatpush1.msra.mxu0 %v843
        %847 = vmatprep.subr.mxu0 0.0
        %848 = vmatpush1.msra.mxu0 0.0
        %849 = vmatprep.subr.mxu0 0.0
        %850 = vmatpush1.msra.mxu0 0.0
        %851 = vmatprep.subr.mxu0 0.0
        %852 = vmatpush1.msra.mxu0 0.0
        %853 = vmatprep.subr.mxu0 0.0
        %854 = vmatpush1.msra.mxu0 0.0
        %855 = vmatprep.subr.mxu0 0.0
        %856 = vmatpush1.msra.mxu0 0.0
        %857 = vmatprep.subr.mxu0 0.0
        %858 = vmatpush1.msra.mxu0 0.0
        %859 = vmatprep.subr.mxu0 0.0
        %860 = vmatpush1.msra.mxu0 0.0
        %861 = vmatprep.subr.mxu0 0.0
        %862 = vmatpush1.msra.mxu0 0.0
        %863 = vmatprep.subr.mxu0 0.0
        %864 = vmatpush1.msra.mxu0 0.0
        %865 = vmatprep.subr.mxu0 0.0
        %866 = vmatpush1.msra.mxu0 0.0
        %867 = vmatprep.subr.mxu0 0.0
        %868 = vmatpush1.msra.mxu0 0.0
        %869 = vmatprep.subr.mxu0 0.0
        %870 = vmatpush1.msra.mxu0 0.0
        %871 = vmatprep.subr.mxu0 0.0
        %872 = vmatpush1.msra.mxu0 0.0
        %873 = vmatprep.subr.mxu0 0.0
        %874 = vmatpush1.msra.mxu0 0.0
        %875 = vmatprep.subr.mxu0 0.0
        %876 = vmatpush1.msra.mxu0 0.0
        %877 = vmatprep.subr.mxu0 0.0
        %878 = vmatpush1.msra.mxu0 0.0
        %879 = vmatprep.subr.mxu0 0.0
        %880 = vmatpush1.msra.mxu0 0.0
        %881 = vmatprep.subr.mxu0 0.0
        %882 = vmatpush1.msra.mxu0 0.0
        %883 = vmatprep.subr.mxu0 0.0
        %884 = vmatpush1.msra.mxu0 0.0
        %885 = vmatprep.subr.mxu0 0.0
        %886 = vmatpush1.msra.mxu0 0.0
        %887 = vmatprep.subr.mxu0 0.0
        %888 = vmatpush1.msra.mxu0 0.0
        %889 = vmatprep.subr.mxu0 0.0
        %890 = vmatpush1.msra.mxu0 0.0
        %891 = vmatprep.subr.mxu0 0.0
        %892 = vmatpush1.msra.mxu0 0.0
        %893 = vmatprep.subr.mxu0 0.0
        %894 = vmatpush1.msra.mxu0 0.0
        %895 = vmatprep.subr.mxu0 0.0
        %896 = vmatpush1.msra.mxu0 0.0
        %897 = vmatprep.subr.mxu0 0.0
        %898 = vmatpush1.msra.mxu0 0.0
        %899 = vmatprep.subr.mxu0 0.0
        %900 = vmatpush1.msra.mxu0 0.0
        %901 = vmatprep.subr.mxu0 0.0
        %902 = vmatpush1.msra.mxu0 0.0
        %903 = vmatprep.subr.mxu0 0.0
        %904 = vmatpush1.msra.mxu0 0.0
        %905 = vmatprep.subr.mxu0 0.0
        %906 = vmatpush1.msra.mxu0 0.0
        %907 = vmatprep.subr.mxu0 0.0
        %908 = vmatpush1.msra.mxu0 0.0
        %909 = vmatprep.mubr.f32.mxu0 0.0
        %910 = vmatmul.mubr.f32.gmra.mrb[0].mxu0 %v837
        %v911 = vpop.f32.mrb[0].mxu0
        %v912 = vadd.f32 0.0, %v911
        %v913 = vpop.f32.mrb[0].mxu0
        %914 = vmatprep.mubr.f32.mxu0 0.0
        %915 = vmatmul.mubr.f32.gmra.mrb[0].mxu0 %v840
        %v916 = vpop.f32.mrb[0].mxu0
        %v917 = vadd.f32 0.0, %v916
        %v918 = vpop.f32.mrb[0].mxu0
        %919 = vdwg.mxu0
        %v920 = vadd.f32 %v832, %v912
        %v921 = vadd.f32 %v833, %v917
        %v922 = vld [vmem:[%s745 + $0x2] sm:$0xff]
        %v923 = vld [vmem:[%s745 + $0xa] sm:$0xff]
        %v925 = vsel %vm218, %v922, 0
        %v928 = vsel %vm218, %v923, 0
        %v931 = vsel %vm225, %v211, 0
        %933 = vmatprep.subr.mxu0 0.0
        %934 = vmatpush1.msra.mxu0 %v931
        %935 = vmatprep.subr.mxu0 0.0
        %936 = vmatpush1.msra.mxu0 0.0
        %937 = vmatprep.subr.mxu0 0.0
        %938 = vmatpush1.msra.mxu0 0.0
        %939 = vmatprep.subr.mxu0 0.0
        %940 = vmatpush1.msra.mxu0 0.0
        %941 = vmatprep.subr.mxu0 0.0
        %942 = vmatpush1.msra.mxu0 0.0
        %943 = vmatprep.subr.mxu0 0.0
        %944 = vmatpush1.msra.mxu0 0.0
        %945 = vmatprep.subr.mxu0 0.0
        %946 = vmatpush1.msra.mxu0 0.0
        %947 = vmatprep.subr.mxu0 0.0
        %948 = vmatpush1.msra.mxu0 0.0
        %949 = vmatprep.subr.mxu0 0.0
        %950 = vmatpush1.msra.mxu0 0.0
        %951 = vmatprep.subr.mxu0 0.0
        %952 = vmatpush1.msra.mxu0 0.0
        %953 = vmatprep.subr.mxu0 0.0
        %954 = vmatpush1.msra.mxu0 0.0
        %955 = vmatprep.subr.mxu0 0.0
        %956 = vmatpush1.msra.mxu0 0.0
        %957 = vmatprep.subr.mxu0 0.0
        %958 = vmatpush1.msra.mxu0 0.0
        %959 = vmatprep.subr.mxu0 0.0
        %960 = vmatpush1.msra.mxu0 0.0
        %961 = vmatprep.subr.mxu0 0.0
        %962 = vmatpush1.msra.mxu0 0.0
        %963 = vmatprep.subr.mxu0 0.0
        %964 = vmatpush1.msra.mxu0 0.0
        %965 = vmatprep.subr.mxu0 0.0
        %966 = vmatpush1.msra.mxu0 0.0
        %967 = vmatprep.subr.mxu0 0.0
        %968 = vmatpush1.msra.mxu0 0.0
        %969 = vmatprep.subr.mxu0 0.0
        %970 = vmatpush1.msra.mxu0 0.0
        %971 = vmatprep.subr.mxu0 0.0
        %972 = vmatpush1.msra.mxu0 0.0
        %973 = vmatprep.subr.mxu0 0.0
        %974 = vmatpush1.msra.mxu0 0.0
        %975 = vmatprep.subr.mxu0 0.0
        %976 = vmatpush1.msra.mxu0 0.0
        %977 = vmatprep.subr.mxu0 0.0
        %978 = vmatpush1.msra.mxu0 0.0
        %979 = vmatprep.subr.mxu0 0.0
        %980 = vmatpush1.msra.mxu0 0.0
        %981 = vmatprep.subr.mxu0 0.0
        %982 = vmatpush1.msra.mxu0 0.0
        %983 = vmatprep.subr.mxu0 0.0
        %984 = vmatpush1.msra.mxu0 0.0
        %985 = vmatprep.subr.mxu0 0.0
        %986 = vmatpush1.msra.mxu0 0.0
        %987 = vmatprep.subr.mxu0 0.0
        %988 = vmatpush1.msra.mxu0 0.0
        %989 = vmatprep.subr.mxu0 0.0
        %990 = vmatpush1.msra.mxu0 0.0
        %991 = vmatprep.subr.mxu0 0.0
        %992 = vmatpush1.msra.mxu0 0.0
        %993 = vmatprep.subr.mxu0 0.0
        %994 = vmatpush1.msra.mxu0 0.0
        %995 = vmatprep.subr.mxu0 0.0
        %996 = vmatpush1.msra.mxu0 0.0
        %997 = vmatprep.mubr.f32.mxu0 0.0
        %998 = vmatmul.mubr.f32.gmra.mrb[0].mxu0 %v925
        %v999 = vpop.f32.mrb[0].mxu0
        %v1000 = vadd.f32 0.0, %v999
        %v1001 = vpop.f32.mrb[0].mxu0
        %1002 = vmatprep.mubr.f32.mxu0 0.0
        %1003 = vmatmul.mubr.f32.gmra.mrb[0].mxu0 %v928
        %v1004 = vpop.f32.mrb[0].mxu0
        %v1005 = vadd.f32 0.0, %v1004
        %v1006 = vpop.f32.mrb[0].mxu0
        %1007 = vdwg.mxu0
        %v1008 = vadd.f32 %v920, %v1000
        %v1009 = vadd.f32 %v921, %v1005
        %v1011 = vlaneseq
        %v1012 = vshrl.u32 %v1011, 7
        %v1013 = vsub.s32 0, %v1012
        %v1014 = vrot.slane %v194, %v1013
        %v1016 = vadd.f32 %v1008, %v1014
        %v1017 = vadd.f32 %v1009, %v1014
        %v1018 = vmax.f32 %v1016, 0.0
        %v1019 = vmax.f32 %v1017, 0.0
        %1020 = vst [vmem:[%s182] sm:$0xff] %v1018
        %1021 = vst [vmem:[%s182 + $0x8] sm:$0xff] %v1019
        %v1022 = vld [vmem:[%s478] sm:$0xff]
        %v1023 = vld [vmem:[%s478 + $0x8] sm:$0xff]
        %v1024 = vld [vmem:[%s478 + $0x1] sm:$0xff]
        %v1025 = vld [vmem:[%s478 + $0x9] sm:$0xff]
        %v1027 = vsel %vm218, %v1024, 0
        %v1030 = vsel %vm218, %v1025, 0
        %1032 = vmatprep.subr.mxu0 0.0
        %1033 = vmatpush1.msra.mxu0 %v227
        %1034 = vmatprep.subr.mxu0 0.0
        %1035 = vmatpush1.msra.mxu0 0.0
        %1036 = vmatprep.subr.mxu0 0.0
        %1037 = vmatpush1.msra.mxu0 0.0
        %1038 = vmatprep.subr.mxu0 0.0
        %1039 = vmatpush1.msra.mxu0 0.0
        %1040 = vmatprep.subr.mxu0 0.0
        %1041 = vmatpush1.msra.mxu0 0.0
        %1042 = vmatprep.subr.mxu0 0.0
        %1043 = vmatpush1.msra.mxu0 0.0
        %1044 = vmatprep.subr.mxu0 0.0
        %1045 = vmatpush1.msra.mxu0 0.0
        %1046 = vmatprep.subr.mxu0 0.0
        %1047 = vmatpush1.msra.mxu0 0.0
        %1048 = vmatprep.subr.mxu0 0.0
        %1049 = vmatpush1.msra.mxu0 0.0
        %1050 = vmatprep.subr.mxu0 0.0
        %1051 = vmatpush1.msra.mxu0 0.0
        %1052 = vmatprep.subr.mxu0 0.0
        %1053 = vmatpush1.msra.mxu0 0.0
        %1054 = vmatprep.subr.mxu0 0.0
        %1055 = vmatpush1.msra.mxu0 0.0
        %1056 = vmatprep.subr.mxu0 0.0
        %1057 = vmatpush1.msra.mxu0 0.0
        %1058 = vmatprep.subr.mxu0 0.0
        %1059 = vmatpush1.msra.mxu0 0.0
        %1060 = vmatprep.subr.mxu0 0.0
        %1061 = vmatpush1.msra.mxu0 0.0
        %1062 = vmatprep.subr.mxu0 0.0
        %1063 = vmatpush1.msra.mxu0 0.0
        %1064 = vmatprep.subr.mxu0 0.0
        %1065 = vmatpush1.msra.mxu0 0.0
        %1066 = vmatprep.subr.mxu0 0.0
        %1067 = vmatpush1.msra.mxu0 0.0
        %1068 = vmatprep.subr.mxu0 0.0
        %1069 = vmatpush1.msra.mxu0 0.0
        %1070 = vmatprep.subr.mxu0 0.0
        %1071 = vmatpush1.msra.mxu0 0.0
        %1072 = vmatprep.subr.mxu0 0.0
        %1073 = vmatpush1.msra.mxu0 0.0
        %1074 = vmatprep.subr.mxu0 0.0
        %1075 = vmatpush1.msra.mxu0 0.0
        %1076 = vmatprep.subr.mxu0 0.0
        %1077 = vmatpush1.msra.mxu0 0.0
        %1078 = vmatprep.subr.mxu0 0.0
        %1079 = vmatpush1.msra.mxu0 0.0
        %1080 = vmatprep.subr.mxu0 0.0
        %1081 = vmatpush1.msra.mxu0 0.0
        %1082 = vmatprep.subr.mxu0 0.0
        %1083 = vmatpush1.msra.mxu0 0.0
        %1084 = vmatprep.subr.mxu0 0.0
        %1085 = vmatpush1.msra.mxu0 0.0
        %1086 = vmatprep.subr.mxu0 0.0
        %1087 = vmatpush1.msra.mxu0 0.0
        %1088 = vmatprep.subr.mxu0 0.0
        %1089 = vmatpush1.msra.mxu0 0.0
        %1090 = vmatprep.subr.mxu0 0.0
        %1091 = vmatpush1.msra.mxu0 0.0
        %1092 = vmatprep.subr.mxu0 0.0
        %1093 = vmatpush1.msra.mxu0 0.0
        %1094 = vmatprep.subr.mxu0 0.0
        %1095 = vmatpush1.msra.mxu0 0.0
        %1096 = vmatprep.mubr.f32.mxu0 0.0
        %1097 = vmatmul.mubr.f32.gmra.mrb[0].mxu0 %v1027
        %v1098 = vpop.f32.mrb[0].mxu0
        %v1099 = vadd.f32 0.0, %v1098
        %v1100 = vpop.f32.mrb[0].mxu0
        %1101 = vmatprep.mubr.f32.mxu0 0.0
        %1102 = vmatmul.mubr.f32.gmra.mrb[0].mxu0 %v1030
        %v1103 = vpop.f32.mrb[0].mxu0
        %v1104 = vadd.f32 0.0, %v1103
        %v1105 = vpop.f32.mrb[0].mxu0
        %1106 = vdwg.mxu0
        %v1108 = vsel %vm218, %v1022, 0
        %v1111 = vsel %vm218, %v1023, 0
        %1113 = vmatprep.subr.mxu0 0.0
        %1114 = vmatpush1.msra.mxu0 %v311
        %1115 = vmatprep.subr.mxu0 0.0
        %1116 = vmatpush1.msra.mxu0 0.0
        %1117 = vmatprep.subr.mxu0 0.0
        %1118 = vmatpush1.msra.mxu0 0.0
        %1119 = vmatprep.subr.mxu0 0.0
        %1120 = vmatpush1.msra.mxu0 0.0
        %1121 = vmatprep.subr.mxu0 0.0
        %1122 = vmatpush1.msra.mxu0 0.0
        %1123 = vmatprep.subr.mxu0 0.0
        %1124 = vmatpush1.msra.mxu0 0.0
        %1125 = vmatprep.subr.mxu0 0.0
        %1126 = vmatpush1.msra.mxu0 0.0
        %1127 = vmatprep.subr.mxu0 0.0
        %1128 = vmatpush1.msra.mxu0 0.0
        %1129 = vmatprep.subr.mxu0 0.0
        %1130 = vmatpush1.msra.mxu0 0.0
        %1131 = vmatprep.subr.mxu0 0.0
        %1132 = vmatpush1.msra.mxu0 0.0
        %1133 = vmatprep.subr.mxu0 0.0
        %1134 = vmatpush1.msra.mxu0 0.0
        %1135 = vmatprep.subr.mxu0 0.0
        %1136 = vmatpush1.msra.mxu0 0.0
        %1137 = vmatprep.subr.mxu0 0.0
        %1138 = vmatpush1.msra.mxu0 0.0
        %1139 = vmatprep.subr.mxu0 0.0
        %1140 = vmatpush1.msra.mxu0 0.0
        %1141 = vmatprep.subr.mxu0 0.0
        %1142 = vmatpush1.msra.mxu0 0.0
        %1143 = vmatprep.subr.mxu0 0.0
        %1144 = vmatpush1.msra.mxu0 0.0
        %1145 = vmatprep.subr.mxu0 0.0
        %1146 = vmatpush1.msra.mxu0 0.0
        %1147 = vmatprep.subr.mxu0 0.0
        %1148 = vmatpush1.msra.mxu0 0.0
        %1149 = vmatprep.subr.mxu0 0.0
        %1150 = vmatpush1.msra.mxu0 0.0
        %1151 = vmatprep.subr.mxu0 0.0
        %1152 = vmatpush1.msra.mxu0 0.0
        %1153 = vmatprep.subr.mxu0 0.0
        %1154 = vmatpush1.msra.mxu0 0.0
        %1155 = vmatprep.subr.mxu0 0.0
        %1156 = vmatpush1.msra.mxu0 0.0
        %1157 = vmatprep.subr.mxu0 0.0
        %1158 = vmatpush1.msra.mxu0 0.0
        %1159 = vmatprep.subr.mxu0 0.0
        %1160 = vmatpush1.msra.mxu0 0.0
        %1161 = vmatprep.subr.mxu0 0.0
        %1162 = vmatpush1.msra.mxu0 0.0
        %1163 = vmatprep.subr.mxu0 0.0
        %1164 = vmatpush1.msra.mxu0 0.0
        %1165 = vmatprep.subr.mxu0 0.0
        %1166 = vmatpush1.msra.mxu0 0.0
        %1167 = vmatprep.subr.mxu0 0.0
        %1168 = vmatpush1.msra.mxu0 0.0
        %1169 = vmatprep.subr.mxu0 0.0
        %1170 = vmatpush1.msra.mxu0 0.0
        %1171 = vmatprep.subr.mxu0 0.0
        %1172 = vmatpush1.msra.mxu0 0.0
        %1173 = vmatprep.subr.mxu0 0.0
        %1174 = vmatpush1.msra.mxu0 0.0
        %1175 = vmatprep.subr.mxu0 0.0
        %1176 = vmatpush1.msra.mxu0 0.0
        %1177 = vmatprep.mubr.f32.mxu0 0.0
        %1178 = vmatmul.mubr.f32.gmra.mrb[0].mxu0 %v1108
        %v1179 = vpop.f32.mrb[0].mxu0
        %v1180 = vadd.f32 %v1099, %v1179
        %v1181 = vpop.f32.mrb[0].mxu0
        %1182 = vmatprep.mubr.f32.mxu0 0.0
        %1183 = vmatmul.mubr.f32.gmra.mrb[0].mxu0 %v1111
        %v1184 = vpop.f32.mrb[0].mxu0
        %v1185 = vadd.f32 %v1104, %v1184
        %v1186 = vpop.f32.mrb[0].mxu0
        %1187 = vdwg.mxu0
        %v1188 = vld [vmem:[%s478 + $0x2] sm:$0xff]
        %v1189 = vld [vmem:[%s478 + $0xa] sm:$0xff]
        %v1191 = vsel %vm218, %v1188, 0
        %v1194 = vsel %vm218, %v1189, 0
        %1196 = vmatprep.subr.mxu0 0.0
        %1197 = vmatpush1.msra.mxu0 %v397
        %1198 = vmatprep.subr.mxu0 0.0
        %1199 = vmatpush1.msra.mxu0 0.0
        %1200 = vmatprep.subr.mxu0 0.0
        %1201 = vmatpush1.msra.mxu0 0.0
        %1202 = vmatprep.subr.mxu0 0.0
        %1203 = vmatpush1.msra.mxu0 0.0
        %1204 = vmatprep.subr.mxu0 0.0
        %1205 = vmatpush1.msra.mxu0 0.0
        %1206 = vmatprep.subr.mxu0 0.0
        %1207 = vmatpush1.msra.mxu0 0.0
        %1208 = vmatprep.subr.mxu0 0.0
        %1209 = vmatpush1.msra.mxu0 0.0
        %1210 = vmatprep.subr.mxu0 0.0
        %1211 = vmatpush1.msra.mxu0 0.0
        %1212 = vmatprep.subr.mxu0 0.0
        %1213 = vmatpush1.msra.mxu0 0.0
        %1214 = vmatprep.subr.mxu0 0.0
        %1215 = vmatpush1.msra.mxu0 0.0
        %1216 = vmatprep.subr.mxu0 0.0
        %1217 = vmatpush1.msra.mxu0 0.0
        %1218 = vmatprep.subr.mxu0 0.0
        %1219 = vmatpush1.msra.mxu0 0.0
        %1220 = vmatprep.subr.mxu0 0.0
        %1221 = vmatpush1.msra.mxu0 0.0
        %1222 = vmatprep.subr.mxu0 0.0
        %1223 = vmatpush1.msra.mxu0 0.0
        %1224 = vmatprep.subr.mxu0 0.0
        %1225 = vmatpush1.msra.mxu0 0.0
        %1226 = vmatprep.subr.mxu0 0.0
        %1227 = vmatpush1.msra.mxu0 0.0
        %1228 = vmatprep.subr.mxu0 0.0
        %1229 = vmatpush1.msra.mxu0 0.0
        %1230 = vmatprep.subr.mxu0 0.0
        %1231 = vmatpush1.msra.mxu0 0.0
        %1232 = vmatprep.subr.mxu0 0.0
        %1233 = vmatpush1.msra.mxu0 0.0
        %1234 = vmatprep.subr.mxu0 0.0
        %1235 = vmatpush1.msra.mxu0 0.0
        %1236 = vmatprep.subr.mxu0 0.0
        %1237 = vmatpush1.msra.mxu0 0.0
        %1238 = vmatprep.subr.mxu0 0.0
        %1239 = vmatpush1.msra.mxu0 0.0
        %1240 = vmatprep.subr.mxu0 0.0
        %1241 = vmatpush1.msra.mxu0 0.0
        %1242 = vmatprep.subr.mxu0 0.0
        %1243 = vmatpush1.msra.mxu0 0.0
        %1244 = vmatprep.subr.mxu0 0.0
        %1245 = vmatpush1.msra.mxu0 0.0
        %1246 = vmatprep.subr.mxu0 0.0
        %1247 = vmatpush1.msra.mxu0 0.0
        %1248 = vmatprep.subr.mxu0 0.0
        %1249 = vmatpush1.msra.mxu0 0.0
        %1250 = vmatprep.subr.mxu0 0.0
        %1251 = vmatpush1.msra.mxu0 0.0
        %1252 = vmatprep.subr.mxu0 0.0
        %1253 = vmatpush1.msra.mxu0 0.0
        %1254 = vmatprep.subr.mxu0 0.0
        %1255 = vmatpush1.msra.mxu0 0.0
        %1256 = vmatprep.subr.mxu0 0.0
        %1257 = vmatpush1.msra.mxu0 0.0
        %1258 = vmatprep.subr.mxu0 0.0
        %1259 = vmatpush1.msra.mxu0 0.0
        %1260 = vmatprep.mubr.f32.mxu0 0.0
        %1261 = vmatmul.mubr.f32.gmra.mrb[0].mxu0 %v1191
        %v1262 = vpop.f32.mrb[0].mxu0
        %v1263 = vadd.f32 0.0, %v1262
        %v1264 = vpop.f32.mrb[0].mxu0
        %1265 = vmatprep.mubr.f32.mxu0 0.0
        %1266 = vmatmul.mubr.f32.gmra.mrb[0].mxu0 %v1194
        %v1267 = vpop.f32.mrb[0].mxu0
        %v1268 = vadd.f32 0.0, %v1267
        %v1269 = vpop.f32.mrb[0].mxu0
        %1270 = vdwg.mxu0
        %v1271 = vadd.f32 %v1180, %v1263
        %v1272 = vadd.f32 %v1185, %v1268
        %v1273 = vld [vmem:[%s745] sm:$0xff]
        %v1274 = vld [vmem:[%s745 + $0x8] sm:$0xff]
        %v1276 = vsel %vm218, %v1273, 0
        %v1279 = vsel %vm218, %v1274, 0
        %1281 = vmatprep.subr.mxu0 0.0
        %1282 = vmatpush1.msra.mxu0 %v488
        %1283 = vmatprep.subr.mxu0 0.0
        %1284 = vmatpush1.msra.mxu0 0.0
        %1285 = vmatprep.subr.mxu0 0.0
        %1286 = vmatpush1.msra.mxu0 0.0
        %1287 = vmatprep.subr.mxu0 0.0
        %1288 = vmatpush1.msra.mxu0 0.0
        %1289 = vmatprep.subr.mxu0 0.0
        %1290 = vmatpush1.msra.mxu0 0.0
        %1291 = vmatprep.subr.mxu0 0.0
        %1292 = vmatpush1.msra.mxu0 0.0
        %1293 = vmatprep.subr.mxu0 0.0
        %1294 = vmatpush1.msra.mxu0 0.0
        %1295 = vmatprep.subr.mxu0 0.0
        %1296 = vmatpush1.msra.mxu0 0.0
        %1297 = vmatprep.subr.mxu0 0.0
        %1298 = vmatpush1.msra.mxu0 0.0
        %1299 = vmatprep.subr.mxu0 0.0
        %1300 = vmatpush1.msra.mxu0 0.0
        %1301 = vmatprep.subr.mxu0 0.0
        %1302 = vmatpush1.msra.mxu0 0.0
        %1303 = vmatprep.subr.mxu0 0.0
        %1304 = vmatpush1.msra.mxu0 0.0
        %1305 = vmatprep.subr.mxu0 0.0
        %1306 = vmatpush1.msra.mxu0 0.0
        %1307 = vmatprep.subr.mxu0 0.0
        %1308 = vmatpush1.msra.mxu0 0.0
        %1309 = vmatprep.subr.mxu0 0.0
        %1310 = vmatpush1.msra.mxu0 0.0
        %1311 = vmatprep.subr.mxu0 0.0
        %1312 = vmatpush1.msra.mxu0 0.0
        %1313 = vmatprep.subr.mxu0 0.0
        %1314 = vmatpush1.msra.mxu0 0.0
        %1315 = vmatprep.subr.mxu0 0.0
        %1316 = vmatpush1.msra.mxu0 0.0
        %1317 = vmatprep.subr.mxu0 0.0
        %1318 = vmatpush1.msra.mxu0 0.0
        %1319 = vmatprep.subr.mxu0 0.0
        %1320 = vmatpush1.msra.mxu0 0.0
        %1321 = vmatprep.subr.mxu0 0.0
        %1322 = vmatpush1.msra.mxu0 0.0
        %1323 = vmatprep.subr.mxu0 0.0
        %1324 = vmatpush1.msra.mxu0 0.0
        %1325 = vmatprep.subr.mxu0 0.0
        %1326 = vmatpush1.msra.mxu0 0.0
        %1327 = vmatprep.subr.mxu0 0.0
        %1328 = vmatpush1.msra.mxu0 0.0
        %1329 = vmatprep.subr.mxu0 0.0
        %1330 = vmatpush1.msra.mxu0 0.0
        %1331 = vmatprep.subr.mxu0 0.0
        %1332 = vmatpush1.msra.mxu0 0.0
        %1333 = vmatprep.subr.mxu0 0.0
        %1334 = vmatpush1.msra.mxu0 0.0
        %1335 = vmatprep.subr.mxu0 0.0
        %1336 = vmatpush1.msra.mxu0 0.0
        %1337 = vmatprep.subr.mxu0 0.0
        %1338 = vmatpush1.msra.mxu0 0.0
        %1339 = vmatprep.subr.mxu0 0.0
        %1340 = vmatpush1.msra.mxu0 0.0
        %1341 = vmatprep.subr.mxu0 0.0
        %1342 = vmatpush1.msra.mxu0 0.0
        %1343 = vmatprep.subr.mxu0 0.0
        %1344 = vmatpush1.msra.mxu0 0.0
        %1345 = vmatprep.mubr.f32.mxu0 0.0
        %1346 = vmatmul.mubr.f32.gmra.mrb[0].mxu0 %v1276
        %v1347 = vpop.f32.mrb[0].mxu0
        %v1348 = vadd.f32 0.0, %v1347
        %v1349 = vpop.f32.mrb[0].mxu0
        %1350 = vmatprep.mubr.f32.mxu0 0.0
        %1351 = vmatmul.mubr.f32.gmra.mrb[0].mxu0 %v1279
        %v1352 = vpop.f32.mrb[0].mxu0
        %v1353 = vadd.f32 0.0, %v1352
        %v1354 = vpop.f32.mrb[0].mxu0
        %1355 = vdwg.mxu0
        %v1356 = vadd.f32 %v1271, %v1348
        %v1357 = vadd.f32 %v1272, %v1353
        %v1358 = vld [vmem:[%s745 + $0x1] sm:$0xff]
        %v1359 = vld [vmem:[%s745 + $0x9] sm:$0xff]
        %v1361 = vsel %vm218, %v1358, 0
        %v1364 = vsel %vm218, %v1359, 0
        %1366 = vmatprep.subr.mxu0 0.0
        %1367 = vmatpush1.msra.mxu0 %v576
        %1368 = vmatprep.subr.mxu0 0.0
        %1369 = vmatpush1.msra.mxu0 0.0
        %1370 = vmatprep.subr.mxu0 0.0
        %1371 = vmatpush1.msra.mxu0 0.0
        %1372 = vmatprep.subr.mxu0 0.0
        %1373 = vmatpush1.msra.mxu0 0.0
        %1374 = vmatprep.subr.mxu0 0.0
        %1375 = vmatpush1.msra.mxu0 0.0
        %1376 = vmatprep.subr.mxu0 0.0
        %1377 = vmatpush1.msra.mxu0 0.0
        %1378 = vmatprep.subr.mxu0 0.0
        %1379 = vmatpush1.msra.mxu0 0.0
        %1380 = vmatprep.subr.mxu0 0.0
        %1381 = vmatpush1.msra.mxu0 0.0
        %1382 = vmatprep.subr.mxu0 0.0
        %1383 = vmatpush1.msra.mxu0 0.0
        %1384 = vmatprep.subr.mxu0 0.0
        %1385 = vmatpush1.msra.mxu0 0.0
        %1386 = vmatprep.subr.mxu0 0.0
        %1387 = vmatpush1.msra.mxu0 0.0
        %1388 = vmatprep.subr.mxu0 0.0
        %1389 = vmatpush1.msra.mxu0 0.0
        %1390 = vmatprep.subr.mxu0 0.0
        %1391 = vmatpush1.msra.mxu0 0.0
        %1392 = vmatprep.subr.mxu0 0.0
        %1393 = vmatpush1.msra.mxu0 0.0
        %1394 = vmatprep.subr.mxu0 0.0
        %1395 = vmatpush1.msra.mxu0 0.0
        %1396 = vmatprep.subr.mxu0 0.0
        %1397 = vmatpush1.msra.mxu0 0.0
        %1398 = vmatprep.subr.mxu0 0.0
        %1399 = vmatpush1.msra.mxu0 0.0
        %1400 = vmatprep.subr.mxu0 0.0
        %1401 = vmatpush1.msra.mxu0 0.0
        %1402 = vmatprep.subr.mxu0 0.0
        %1403 = vmatpush1.msra.mxu0 0.0
        %1404 = vmatprep.subr.mxu0 0.0
        %1405 = vmatpush1.msra.mxu0 0.0
        %1406 = vmatprep.subr.mxu0 0.0
        %1407 = vmatpush1.msra.mxu0 0.0
        %1408 = vmatprep.subr.mxu0 0.0
        %1409 = vmatpush1.msra.mxu0 0.0
        %1410 = vmatprep.subr.mxu0 0.0
        %1411 = vmatpush1.msra.mxu0 0.0
        %1412 = vmatprep.subr.mxu0 0.0
        %1413 = vmatpush1.msra.mxu0 0.0
        %1414 = vmatprep.subr.mxu0 0.0
        %1415 = vmatpush1.msra.mxu0 0.0
        %1416 = vmatprep.subr.mxu0 0.0
        %1417 = vmatpush1.msra.mxu0 0.0
        %1418 = vmatprep.subr.mxu0 0.0
        %1419 = vmatpush1.msra.mxu0 0.0
        %1420 = vmatprep.subr.mxu0 0.0
        %1421 = vmatpush1.msra.mxu0 0.0
        %1422 = vmatprep.subr.mxu0 0.0
        %1423 = vmatpush1.msra.mxu0 0.0
        %1424 = vmatprep.subr.mxu0 0.0
        %1425 = vmatpush1.msra.mxu0 0.0
        %1426 = vmatprep.subr.mxu0 0.0
        %1427 = vmatpush1.msra.mxu0 0.0
        %1428 = vmatprep.subr.mxu0 0.0
        %1429 = vmatpush1.msra.mxu0 0.0
        %1430 = vmatprep.mubr.f32.mxu0 0.0
        %1431 = vmatmul.mubr.f32.gmra.mrb[0].mxu0 %v1361
        %v1432 = vpop.f32.mrb[0].mxu0
        %v1433 = vadd.f32 0.0, %v1432
        %v1434 = vpop.f32.mrb[0].mxu0
        %1435 = vmatprep.mubr.f32.mxu0 0.0
        %1436 = vmatmul.mubr.f32.gmra.mrb[0].mxu0 %v1364
        %v1437 = vpop.f32.mrb[0].mxu0
        %v1438 = vadd.f32 0.0, %v1437
        %v1439 = vpop.f32.mrb[0].mxu0
        %1440 = vdwg.mxu0
        %v1441 = vadd.f32 %v1356, %v1433
        %v1442 = vadd.f32 %v1357, %v1438
        %v1443 = vld [vmem:[%s745 + $0x2] sm:$0xff]
        %v1444 = vld [vmem:[%s745 + $0xa] sm:$0xff]
        %v1446 = vsel %vm218, %v1443, 0
        %v1449 = vsel %vm218, %v1444, 0
        %1451 = vmatprep.subr.mxu0 0.0
        %1452 = vmatpush1.msra.mxu0 %v664
        %1453 = vmatprep.subr.mxu0 0.0
        %1454 = vmatpush1.msra.mxu0 0.0
        %1455 = vmatprep.subr.mxu0 0.0
        %1456 = vmatpush1.msra.mxu0 0.0
        %1457 = vmatprep.subr.mxu0 0.0
        %1458 = vmatpush1.msra.mxu0 0.0
        %1459 = vmatprep.subr.mxu0 0.0
        %1460 = vmatpush1.msra.mxu0 0.0
        %1461 = vmatprep.subr.mxu0 0.0
        %1462 = vmatpush1.msra.mxu0 0.0
        %1463 = vmatprep.subr.mxu0 0.0
        %1464 = vmatpush1.msra.mxu0 0.0
        %1465 = vmatprep.subr.mxu0 0.0
        %1466 = vmatpush1.msra.mxu0 0.0
        %1467 = vmatprep.subr.mxu0 0.0
        %1468 = vmatpush1.msra.mxu0 0.0
        %1469 = vmatprep.subr.mxu0 0.0
        %1470 = vmatpush1.msra.mxu0 0.0
        %1471 = vmatprep.subr.mxu0 0.0
        %1472 = vmatpush1.msra.mxu0 0.0
        %1473 = vmatprep.subr.mxu0 0.0
        %1474 = vmatpush1.msra.mxu0 0.0
        %1475 = vmatprep.subr.mxu0 0.0
        %1476 = vmatpush1.msra.mxu0 0.0
        %1477 = vmatprep.subr.mxu0 0.0
        %1478 = vmatpush1.msra.mxu0 0.0
        %1479 = vmatprep.subr.mxu0 0.0
        %1480 = vmatpush1.msra.mxu0 0.0
        %1481 = vmatprep.subr.mxu0 0.0
        %1482 = vmatpush1.msra.mxu0 0.0
        %1483 = vmatprep.subr.mxu0 0.0
        %1484 = vmatpush1.msra.mxu0 0.0
        %1485 = vmatprep.subr.mxu0 0.0
        %1486 = vmatpush1.msra.mxu0 0.0
        %1487 = vmatprep.subr.mxu0 0.0
        %1488 = vmatpush1.msra.mxu0 0.0
        %1489 = vmatprep.subr.mxu0 0.0
        %1490 = vmatpush1.msra.mxu0 0.0
        %1491 = vmatprep.subr.mxu0 0.0
        %1492 = vmatpush1.msra.mxu0 0.0
        %1493 = vmatprep.subr.mxu0 0.0
        %1494 = vmatpush1.msra.mxu0 0.0
        %1495 = vmatprep.subr.mxu0 0.0
        %1496 = vmatpush1.msra.mxu0 0.0
        %1497 = vmatprep.subr.mxu0 0.0
        %1498 = vmatpush1.msra.mxu0 0.0
        %1499 = vmatprep.subr.mxu0 0.0
        %1500 = vmatpush1.msra.mxu0 0.0
        %1501 = vmatprep.subr.mxu0 0.0
        %1502 = vmatpush1.msra.mxu0 0.0
        %1503 = vmatprep.subr.mxu0 0.0
        %1504 = vmatpush1.msra.mxu0 0.0
        %1505 = vmatprep.subr.mxu0 0.0
        %1506 = vmatpush1.msra.mxu0 0.0
        %1507 = vmatprep.subr.mxu0 0.0
        %1508 = vmatpush1.msra.mxu0 0.0
        %1509 = vmatprep.subr.mxu0 0.0
        %1510 = vmatpush1.msra.mxu0 0.0
        %1511 = vmatprep.subr.mxu0 0.0
        %1512 = vmatpush1.msra.mxu0 0.0
        %1513 = vmatprep.subr.mxu0 0.0
        %1514 = vmatpush1.msra.mxu0 0.0
        %1515 = vmatprep.mubr.f32.mxu0 0.0
        %1516 = vmatmul.mubr.f32.gmra.mrb[0].mxu0 %v1446
        %v1517 = vpop.f32.mrb[0].mxu0
        %v1518 = vadd.f32 0.0, %v1517
        %v1519 = vpop.f32.mrb[0].mxu0
        %1520 = vmatprep.mubr.f32.mxu0 0.0
        %1521 = vmatmul.mubr.f32.gmra.mrb[0].mxu0 %v1449
        %v1522 = vpop.f32.mrb[0].mxu0
        %v1523 = vadd.f32 0.0, %v1522
        %v1524 = vpop.f32.mrb[0].mxu0
        %1525 = vdwg.mxu0
        %v1526 = vadd.f32 %v1441, %v1518
        %v1527 = vadd.f32 %v1442, %v1523
        %s1528 = sadd.s32 %s193, 3
        %s1529 = smul.u32 %s1528, 24
        %s1530 = scalar_lea.vmem %s188, %s1529
        %v1531 = vld [vmem:[%s1530] sm:$0xff]
        %v1532 = vld [vmem:[%s1530 + $0x8] sm:$0xff]
        %v1534 = vsel %vm218, %v1531, 0
        %v1537 = vsel %vm218, %v1532, 0
        %1539 = vmatprep.subr.mxu0 0.0
        %1540 = vmatpush1.msra.mxu0 %v755
        %1541 = vmatprep.subr.mxu0 0.0
        %1542 = vmatpush1.msra.mxu0 0.0
        %1543 = vmatprep.subr.mxu0 0.0
        %1544 = vmatpush1.msra.mxu0 0.0
        %1545 = vmatprep.subr.mxu0 0.0
        %1546 = vmatpush1.msra.mxu0 0.0
        %1547 = vmatprep.subr.mxu0 0.0
        %1548 = vmatpush1.msra.mxu0 0.0
        %1549 = vmatprep.subr.mxu0 0.0
        %1550 = vmatpush1.msra.mxu0 0.0
        %1551 = vmatprep.subr.mxu0 0.0
        %1552 = vmatpush1.msra.mxu0 0.0
        %1553 = vmatprep.subr.mxu0 0.0
        %1554 = vmatpush1.msra.mxu0 0.0
        %1555 = vmatprep.subr.mxu0 0.0
        %1556 = vmatpush1.msra.mxu0 0.0
        %1557 = vmatprep.subr.mxu0 0.0
        %1558 = vmatpush1.msra.mxu0 0.0
        %1559 = vmatprep.subr.mxu0 0.0
        %1560 = vmatpush1.msra.mxu0 0.0
        %1561 = vmatprep.subr.mxu0 0.0
        %1562 = vmatpush1.msra.mxu0 0.0
        %1563 = vmatprep.subr.mxu0 0.0
        %1564 = vmatpush1.msra.mxu0 0.0
        %1565 = vmatprep.subr.mxu0 0.0
        %1566 = vmatpush1.msra.mxu0 0.0
        %1567 = vmatprep.subr.mxu0 0.0
        %1568 = vmatpush1.msra.mxu0 0.0
        %1569 = vmatprep.subr.mxu0 0.0
        %1570 = vmatpush1.msra.mxu0 0.0
        %1571 = vmatprep.subr.mxu0 0.0
        %1572 = vmatpush1.msra.mxu0 0.0
        %1573 = vmatprep.subr.mxu0 0.0
        %1574 = vmatpush1.msra.mxu0 0.0
        %1575 = vmatprep.subr.mxu0 0.0
        %1576 = vmatpush1.msra.mxu0 0.0
        %1577 = vmatprep.subr.mxu0 0.0
        %1578 = vmatpush1.msra.mxu0 0.0
        %1579 = vmatprep.subr.mxu0 0.0
        %1580 = vmatpush1.msra.mxu0 0.0
        %1581 = vmatprep.subr.mxu0 0.0
        %1582 = vmatpush1.msra.mxu0 0.0
        %1583 = vmatprep.subr.mxu0 0.0
        %1584 = vmatpush1.msra.mxu0 0.0
        %1585 = vmatprep.subr.mxu0 0.0
        %1586 = vmatpush1.msra.mxu0 0.0
        %1587 = vmatprep.subr.mxu0 0.0
        %1588 = vmatpush1.msra.mxu0 0.0
        %1589 = vmatprep.subr.mxu0 0.0
        %1590 = vmatpush1.msra.mxu0 0.0
        %1591 = vmatprep.subr.mxu0 0.0
        %1592 = vmatpush1.msra.mxu0 0.0
        %1593 = vmatprep.subr.mxu0 0.0
        %1594 = vmatpush1.msra.mxu0 0.0
        %1595 = vmatprep.subr.mxu0 0.0
        %1596 = vmatpush1.msra.mxu0 0.0
        %1597 = vmatprep.subr.mxu0 0.0
        %1598 = vmatpush1.msra.mxu0 0.0
        %1599 = vmatprep.subr.mxu0 0.0
        %1600 = vmatpush1.msra.mxu0 0.0
        %1601 = vmatprep.subr.mxu0 0.0
        %1602 = vmatpush1.msra.mxu0 0.0
        %1603 = vmatprep.mubr.f32.mxu0 0.0
        %1604 = vmatmul.mubr.f32.gmra.mrb[0].mxu0 %v1534
        %v1605 = vpop.f32.mrb[0].mxu0
        %v1606 = vadd.f32 0.0, %v1605
        %v1607 = vpop.f32.mrb[0].mxu0
        %1608 = vmatprep.mubr.f32.mxu0 0.0
        %1609 = vmatmul.mubr.f32.gmra.mrb[0].mxu0 %v1537
        %v1610 = vpop.f32.mrb[0].mxu0
        %v1611 = vadd.f32 0.0, %v1610
        %v1612 = vpop.f32.mrb[0].mxu0
        %1613 = vdwg.mxu0
        %v1614 = vadd.f32 %v1526, %v1606
        %v1615 = vadd.f32 %v1527, %v1611
        %v1616 = vld [vmem:[%s1530 + $0x1] sm:$0xff]
        %v1617 = vld [vmem:[%s1530 + $0x9] sm:$0xff]
        %v1619 = vsel %vm218, %v1616, 0
        %v1622 = vsel %vm218, %v1617, 0
        %1624 = vmatprep.subr.mxu0 0.0
        %1625 = vmatpush1.msra.mxu0 %v843
        %1626 = vmatprep.subr.mxu0 0.0
        %1627 = vmatpush1.msra.mxu0 0.0
        %1628 = vmatprep.subr.mxu0 0.0
        %1629 = vmatpush1.msra.mxu0 0.0
        %1630 = vmatprep.subr.mxu0 0.0
        %1631 = vmatpush1.msra.mxu0 0.0
        %1632 = vmatprep.subr.mxu0 0.0
        %1633 = vmatpush1.msra.mxu0 0.0
        %1634 = vmatprep.subr.mxu0 0.0
        %1635 = vmatpush1.msra.mxu0 0.0
        %1636 = vmatprep.subr.mxu0 0.0
        %1637 = vmatpush1.msra.mxu0 0.0
        %1638 = vmatprep.subr.mxu0 0.0
        %1639 = vmatpush1.msra.mxu0 0.0
        %1640 = vmatprep.subr.mxu0 0.0
        %1641 = vmatpush1.msra.mxu0 0.0
        %1642 = vmatprep.subr.mxu0 0.0
        %1643 = vmatpush1.msra.mxu0 0.0
        %1644 = vmatprep.subr.mxu0 0.0
        %1645 = vmatpush1.msra.mxu0 0.0
        %1646 = vmatprep.subr.mxu0 0.0
        %1647 = vmatpush1.msra.mxu0 0.0
        %1648 = vmatprep.subr.mxu0 0.0
        %1649 = vmatpush1.msra.mxu0 0.0
        %1650 = vmatprep.subr.mxu0 0.0
        %1651 = vmatpush1.msra.mxu0 0.0
        %1652 = vmatprep.subr.mxu0 0.0
        %1653 = vmatpush1.msra.mxu0 0.0
        %1654 = vmatprep.subr.mxu0 0.0
        %1655 = vmatpush1.msra.mxu0 0.0
        %1656 = vmatprep.subr.mxu0 0.0
        %1657 = vmatpush1.msra.mxu0 0.0
        %1658 = vmatprep.subr.mxu0 0.0
        %1659 = vmatpush1.msra.mxu0 0.0
        %1660 = vmatprep.subr.mxu0 0.0
        %1661 = vmatpush1.msra.mxu0 0.0
        %1662 = vmatprep.subr.mxu0 0.0
        %1663 = vmatpush1.msra.mxu0 0.0
        %1664 = vmatprep.subr.mxu0 0.0
        %1665 = vmatpush1.msra.mxu0 0.0
        %1666 = vmatprep.subr.mxu0 0.0
        %1667 = vmatpush1.msra.mxu0 0.0
        %1668 = vmatprep.subr.mxu0 0.0
        %1669 = vmatpush1.msra.mxu0 0.0
        %1670 = vmatprep.subr.mxu0 0.0
        %1671 = vmatpush1.msra.mxu0 0.0
        %1672 = vmatprep.subr.mxu0 0.0
        %1673 = vmatpush1.msra.mxu0 0.0
        %1674 = vmatprep.subr.mxu0 0.0
        %1675 = vmatpush1.msra.mxu0 0.0
        %1676 = vmatprep.subr.mxu0 0.0
        %1677 = vmatpush1.msra.mxu0 0.0
        %1678 = vmatprep.subr.mxu0 0.0
        %1679 = vmatpush1.msra.mxu0 0.0
        %1680 = vmatprep.subr.mxu0 0.0
        %1681 = vmatpush1.msra.mxu0 0.0
        %1682 = vmatprep.subr.mxu0 0.0
        %1683 = vmatpush1.msra.mxu0 0.0
        %1684 = vmatprep.subr.mxu0 0.0
        %1685 = vmatpush1.msra.mxu0 0.0
        %1686 = vmatprep.subr.mxu0 0.0
        %1687 = vmatpush1.msra.mxu0 0.0
        %1688 = vmatprep.mubr.f32.mxu0 0.0
        %1689 = vmatmul.mubr.f32.gmra.mrb[0].mxu0 %v1619
        %v1690 = vpop.f32.mrb[0].mxu0
        %v1691 = vadd.f32 0.0, %v1690
        %v1692 = vpop.f32.mrb[0].mxu0
        %1693 = vmatprep.mubr.f32.mxu0 0.0
        %1694 = vmatmul.mubr.f32.gmra.mrb[0].mxu0 %v1622
        %v1695 = vpop.f32.mrb[0].mxu0
        %v1696 = vadd.f32 0.0, %v1695
        %v1697 = vpop.f32.mrb[0].mxu0
        %1698 = vdwg.mxu0
        %v1699 = vadd.f32 %v1614, %v1691
        %v1700 = vadd.f32 %v1615, %v1696
        %v1701 = vld [vmem:[%s1530 + $0x2] sm:$0xff]
        %v1702 = vld [vmem:[%s1530 + $0xa] sm:$0xff]
        %v1704 = vsel %vm218, %v1701, 0
        %v1707 = vsel %vm218, %v1702, 0
        %1709 = vmatprep.subr.mxu0 0.0
        %1710 = vmatpush1.msra.mxu0 %v931
        %1711 = vmatprep.subr.mxu0 0.0
        %1712 = vmatpush1.msra.mxu0 0.0
        %1713 = vmatprep.subr.mxu0 0.0
        %1714 = vmatpush1.msra.mxu0 0.0
        %1715 = vmatprep.subr.mxu0 0.0
        %1716 = vmatpush1.msra.mxu0 0.0
        %1717 = vmatprep.subr.mxu0 0.0
        %1718 = vmatpush1.msra.mxu0 0.0
        %1719 = vmatprep.subr.mxu0 0.0
        %1720 = vmatpush1.msra.mxu0 0.0
        %1721 = vmatprep.subr.mxu0 0.0
        %1722 = vmatpush1.msra.mxu0 0.0
        %1723 = vmatprep.subr.mxu0 0.0
        %1724 = vmatpush1.msra.mxu0 0.0
        %1725 = vmatprep.subr.mxu0 0.0
        %1726 = vmatpush1.msra.mxu0 0.0
        %1727 = vmatprep.subr.mxu0 0.0
        %1728 = vmatpush1.msra.mxu0 0.0
        %1729 = vmatprep.subr.mxu0 0.0
        %1730 = vmatpush1.msra.mxu0 0.0
        %1731 = vmatprep.subr.mxu0 0.0
        %1732 = vmatpush1.msra.mxu0 0.0
        %1733 = vmatprep.subr.mxu0 0.0
        %1734 = vmatpush1.msra.mxu0 0.0
        %1735 = vmatprep.subr.mxu0 0.0
        %1736 = vmatpush1.msra.mxu0 0.0
        %1737 = vmatprep.subr.mxu0 0.0
        %1738 = vmatpush1.msra.mxu0 0.0
        %1739 = vmatprep.subr.mxu0 0.0
        %1740 = vmatpush1.msra.mxu0 0.0
        %1741 = vmatprep.subr.mxu0 0.0
        %1742 = vmatpush1.msra.mxu0 0.0
        %1743 = vmatprep.subr.mxu0 0.0
        %1744 = vmatpush1.msra.mxu0 0.0
        %1745 = vmatprep.subr.mxu0 0.0
        %1746 = vmatpush1.msra.mxu0 0.0
        %1747 = vmatprep.subr.mxu0 0.0
        %1748 = vmatpush1.msra.mxu0 0.0
        %1749 = vmatprep.subr.mxu0 0.0
        %1750 = vmatpush1.msra.mxu0 0.0
        %1751 = vmatprep.subr.mxu0 0.0
        %1752 = vmatpush1.msra.mxu0 0.0
        %1753 = vmatprep.subr.mxu0 0.0
        %1754 = vmatpush1.msra.mxu0 0.0
        %1755 = vmatprep.subr.mxu0 0.0
        %1756 = vmatpush1.msra.mxu0 0.0
        %1757 = vmatprep.subr.mxu0 0.0
        %1758 = vmatpush1.msra.mxu0 0.0
        %1759 = vmatprep.subr.mxu0 0.0
        %1760 = vmatpush1.msra.mxu0 0.0
        %1761 = vmatprep.subr.mxu0 0.0
        %1762 = vmatpush1.msra.mxu0 0.0
        %1763 = vmatprep.subr.mxu0 0.0
        %1764 = vmatpush1.msra.mxu0 0.0
        %1765 = vmatprep.subr.mxu0 0.0
        %1766 = vmatpush1.msra.mxu0 0.0
        %1767 = vmatprep.subr.mxu0 0.0
        %1768 = vmatpush1.msra.mxu0 0.0
        %1769 = vmatprep.subr.mxu0 0.0
        %1770 = vmatpush1.msra.mxu0 0.0
        %1771 = vmatprep.subr.mxu0 0.0
        %1772 = vmatpush1.msra.mxu0 0.0
        %1773 = vmatprep.mubr.f32.mxu0 0.0
        %1774 = vmatmul.mubr.f32.gmra.mrb[0].mxu0 %v1704
        %v1775 = vpop.f32.mrb[0].mxu0
        %v1776 = vadd.f32 0.0, %v1775
        %v1777 = vpop.f32.mrb[0].mxu0
        %1778 = vmatprep.mubr.f32.mxu0 0.0
        %1779 = vmatmul.mubr.f32.gmra.mrb[0].mxu0 %v1707
        %v1780 = vpop.f32.mrb[0].mxu0
        %v1781 = vadd.f32 0.0, %v1780
        %v1782 = vpop.f32.mrb[0].mxu0
        %1783 = vdwg.mxu0
        %v1784 = vadd.f32 %v1699, %v1776
        %v1785 = vadd.f32 %v1700, %v1781
        %v1786 = vadd.f32 %v1784, %v1014
        %v1787 = vadd.f32 %v1785, %v1014
        %v1788 = vmax.f32 %v1786, 0.0
        %v1789 = vmax.f32 %v1787, 0.0
        %s1790 = scalar_lea.vmem %s182, 16 [#allocation2]
        %1791 = vst [vmem:[%s1790] sm:$0xff] %v1788
        %1792 = vst [vmem:[%s1790 + $0x8] sm:$0xff] %v1789
        %v1793 = vld [vmem:[%s745] sm:$0xff]
        %v1794 = vld [vmem:[%s745 + $0x8] sm:$0xff]
        %v1795 = vld [vmem:[%s745 + $0x1] sm:$0xff]
        %v1796 = vld [vmem:[%s745 + $0x9] sm:$0xff]
        %v1798 = vsel %vm218, %v1795, 0
        %v1801 = vsel %vm218, %v1796, 0
        %1803 = vmatprep.subr.mxu0 0.0
        %1804 = vmatpush1.msra.mxu0 %v227
        %1805 = vmatprep.subr.mxu0 0.0
        %1806 = vmatpush1.msra.mxu0 0.0
        %1807 = vmatprep.subr.mxu0 0.0
        %1808 = vmatpush1.msra.mxu0 0.0
        %1809 = vmatprep.subr.mxu0 0.0
        %1810 = vmatpush1.msra.mxu0 0.0
        %1811 = vmatprep.subr.mxu0 0.0
        %1812 = vmatpush1.msra.mxu0 0.0
        %1813 = vmatprep.subr.mxu0 0.0
        %1814 = vmatpush1.msra.mxu0 0.0
        %1815 = vmatprep.subr.mxu0 0.0
        %1816 = vmatpush1.msra.mxu0 0.0
        %1817 = vmatprep.subr.mxu0 0.0
        %1818 = vmatpush1.msra.mxu0 0.0
        %1819 = vmatprep.subr.mxu0 0.0
        %1820 = vmatpush1.msra.mxu0 0.0
        %1821 = vmatprep.subr.mxu0 0.0
        %1822 = vmatpush1.msra.mxu0 0.0
        %1823 = vmatprep.subr.mxu0 0.0
        %1824 = vmatpush1.msra.mxu0 0.0
        %1825 = vmatprep.subr.mxu0 0.0
        %1826 = vmatpush1.msra.mxu0 0.0
        %1827 = vmatprep.subr.mxu0 0.0
        %1828 = vmatpush1.msra.mxu0 0.0
        %1829 = vmatprep.subr.mxu0 0.0
        %1830 = vmatpush1.msra.mxu0 0.0
        %1831 = vmatprep.subr.mxu0 0.0
        %1832 = vmatpush1.msra.mxu0 0.0
        %1833 = vmatprep.subr.mxu0 0.0
        %1834 = vmatpush1.msra.mxu0 0.0
        %1835 = vmatprep.subr.mxu0 0.0
        %1836 = vmatpush1.msra.mxu0 0.0
        %1837 = vmatprep.subr.mxu0 0.0
        %1838 = vmatpush1.msra.mxu0 0.0
        %1839 = vmatprep.subr.mxu0 0.0
        %1840 = vmatpush1.msra.mxu0 0.0
        %1841 = vmatprep.subr.mxu0 0.0
        %1842 = vmatpush1.msra.mxu0 0.0
        %1843 = vmatprep.subr.mxu0 0.0
        %1844 = vmatpush1.msra.mxu0 0.0
        %1845 = vmatprep.subr.mxu0 0.0
        %1846 = vmatpush1.msra.mxu0 0.0
        %1847 = vmatprep.subr.mxu0 0.0
        %1848 = vmatpush1.msra.mxu0 0.0
        %1849 = vmatprep.subr.mxu0 0.0
        %1850 = vmatpush1.msra.mxu0 0.0
        %1851 = vmatprep.subr.mxu0 0.0
        %1852 = vmatpush1.msra.mxu0 0.0
        %1853 = vmatprep.subr.mxu0 0.0
        %1854 = vmatpush1.msra.mxu0 0.0
        %1855 = vmatprep.subr.mxu0 0.0
        %1856 = vmatpush1.msra.mxu0 0.0
        %1857 = vmatprep.subr.mxu0 0.0
        %1858 = vmatpush1.msra.mxu0 0.0
        %1859 = vmatprep.subr.mxu0 0.0
        %1860 = vmatpush1.msra.mxu0 0.0
        %1861 = vmatprep.subr.mxu0 0.0
        %1862 = vmatpush1.msra.mxu0 0.0
        %1863 = vmatprep.subr.mxu0 0.0
        %1864 = vmatpush1.msra.mxu0 0.0
        %1865 = vmatprep.subr.mxu0 0.0
        %1866 = vmatpush1.msra.mxu0 0.0
        %1867 = vmatprep.mubr.f32.mxu0 0.0
        %1868 = vmatmul.mubr.f32.gmra.mrb[0].mxu0 %v1798
        %v1869 = vpop.f32.mrb[0].mxu0
        %v1870 = vadd.f32 0.0, %v1869
        %v1871 = vpop.f32.mrb[0].mxu0
        %1872 = vmatprep.mubr.f32.mxu0 0.0
        %1873 = vmatmul.mubr.f32.gmra.mrb[0].mxu0 %v1801
        %v1874 = vpop.f32.mrb[0].mxu0
        %v1875 = vadd.f32 0.0, %v1874
        %v1876 = vpop.f32.mrb[0].mxu0
        %1877 = vdwg.mxu0
        %v1879 = vsel %vm218, %v1793, 0
        %v1882 = vsel %vm218, %v1794, 0
        %1884 = vmatprep.subr.mxu0 0.0
        %1885 = vmatpush1.msra.mxu0 %v311
        %1886 = vmatprep.subr.mxu0 0.0
        %1887 = vmatpush1.msra.mxu0 0.0
        %1888 = vmatprep.subr.mxu0 0.0
        %1889 = vmatpush1.msra.mxu0 0.0
        %1890 = vmatprep.subr.mxu0 0.0
        %1891 = vmatpush1.msra.mxu0 0.0
        %1892 = vmatprep.subr.mxu0 0.0
        %1893 = vmatpush1.msra.mxu0 0.0
        %1894 = vmatprep.subr.mxu0 0.0
        %1895 = vmatpush1.msra.mxu0 0.0
        %1896 = vmatprep.subr.mxu0 0.0
        %1897 = vmatpush1.msra.mxu0 0.0
        %1898 = vmatprep.subr.mxu0 0.0
        %1899 = vmatpush1.msra.mxu0 0.0
        %1900 = vmatprep.subr.mxu0 0.0
        %1901 = vmatpush1.msra.mxu0 0.0
        %1902 = vmatprep.subr.mxu0 0.0
        %1903 = vmatpush1.msra.mxu0 0.0
        %1904 = vmatprep.subr.mxu0 0.0
        %1905 = vmatpush1.msra.mxu0 0.0
        %1906 = vmatprep.subr.mxu0 0.0
        %1907 = vmatpush1.msra.mxu0 0.0
        %1908 = vmatprep.subr.mxu0 0.0
        %1909 = vmatpush1.msra.mxu0 0.0
        %1910 = vmatprep.subr.mxu0 0.0
        %1911 = vmatpush1.msra.mxu0 0.0
        %1912 = vmatprep.subr.mxu0 0.0
        %1913 = vmatpush1.msra.mxu0 0.0
        %1914 = vmatprep.subr.mxu0 0.0
        %1915 = vmatpush1.msra.mxu0 0.0
        %1916 = vmatprep.subr.mxu0 0.0
        %1917 = vmatpush1.msra.mxu0 0.0
        %1918 = vmatprep.subr.mxu0 0.0
        %1919 = vmatpush1.msra.mxu0 0.0
        %1920 = vmatprep.subr.mxu0 0.0
        %1921 = vmatpush1.msra.mxu0 0.0
        %1922 = vmatprep.subr.mxu0 0.0
        %1923 = vmatpush1.msra.mxu0 0.0
        %1924 = vmatprep.subr.mxu0 0.0
        %1925 = vmatpush1.msra.mxu0 0.0
        %1926 = vmatprep.subr.mxu0 0.0
        %1927 = vmatpush1.msra.mxu0 0.0
        %1928 = vmatprep.subr.mxu0 0.0
        %1929 = vmatpush1.msra.mxu0 0.0
        %1930 = vmatprep.subr.mxu0 0.0
        %1931 = vmatpush1.msra.mxu0 0.0
        %1932 = vmatprep.subr.mxu0 0.0
        %1933 = vmatpush1.msra.mxu0 0.0
        %1934 = vmatprep.subr.mxu0 0.0
        %1935 = vmatpush1.msra.mxu0 0.0
        %1936 = vmatprep.subr.mxu0 0.0
        %1937 = vmatpush1.msra.mxu0 0.0
        %1938 = vmatprep.subr.mxu0 0.0
        %1939 = vmatpush1.msra.mxu0 0.0
        %1940 = vmatprep.subr.mxu0 0.0
        %1941 = vmatpush1.msra.mxu0 0.0
        %1942 = vmatprep.subr.mxu0 0.0
        %1943 = vmatpush1.msra.mxu0 0.0
        %1944 = vmatprep.subr.mxu0 0.0
        %1945 = vmatpush1.msra.mxu0 0.0
        %1946 = vmatprep.subr.mxu0 0.0
        %1947 = vmatpush1.msra.mxu0 0.0
        %1948 = vmatprep.mubr.f32.mxu0 0.0
        %1949 = vmatmul.mubr.f32.gmra.mrb[0].mxu0 %v1879
        %v1950 = vpop.f32.mrb[0].mxu0
        %v1951 = vadd.f32 %v1870, %v1950
        %v1952 = vpop.f32.mrb[0].mxu0
        %1953 = vmatprep.mubr.f32.mxu0 0.0
        %1954 = vmatmul.mubr.f32.gmra.mrb[0].mxu0 %v1882
        %v1955 = vpop.f32.mrb[0].mxu0
        %v1956 = vadd.f32 %v1875, %v1955
        %v1957 = vpop.f32.mrb[0].mxu0
        %1958 = vdwg.mxu0
        %v1959 = vld [vmem:[%s745 + $0x2] sm:$0xff]
        %v1960 = vld [vmem:[%s745 + $0xa] sm:$0xff]
        %v1962 = vsel %vm218, %v1959, 0
        %v1965 = vsel %vm218, %v1960, 0
        %1967 = vmatprep.subr.mxu0 0.0
        %1968 = vmatpush1.msra.mxu0 %v397
        %1969 = vmatprep.subr.mxu0 0.0
        %1970 = vmatpush1.msra.mxu0 0.0
        %1971 = vmatprep.subr.mxu0 0.0
        %1972 = vmatpush1.msra.mxu0 0.0
        %1973 = vmatprep.subr.mxu0 0.0
        %1974 = vmatpush1.msra.mxu0 0.0
        %1975 = vmatprep.subr.mxu0 0.0
        %1976 = vmatpush1.msra.mxu0 0.0
        %1977 = vmatprep.subr.mxu0 0.0
        %1978 = vmatpush1.msra.mxu0 0.0
        %1979 = vmatprep.subr.mxu0 0.0
        %1980 = vmatpush1.msra.mxu0 0.0
        %1981 = vmatprep.subr.mxu0 0.0
        %1982 = vmatpush1.msra.mxu0 0.0
        %1983 = vmatprep.subr.mxu0 0.0
        %1984 = vmatpush1.msra.mxu0 0.0
        %1985 = vmatprep.subr.mxu0 0.0
        %1986 = vmatpush1.msra.mxu0 0.0
        %1987 = vmatprep.subr.mxu0 0.0
        %1988 = vmatpush1.msra.mxu0 0.0
        %1989 = vmatprep.subr.mxu0 0.0
        %1990 = vmatpush1.msra.mxu0 0.0
        %1991 = vmatprep.subr.mxu0 0.0
        %1992 = vmatpush1.msra.mxu0 0.0
        %1993 = vmatprep.subr.mxu0 0.0
        %1994 = vmatpush1.msra.mxu0 0.0
        %1995 = vmatprep.subr.mxu0 0.0
        %1996 = vmatpush1.msra.mxu0 0.0
        %1997 = vmatprep.subr.mxu0 0.0
        %1998 = vmatpush1.msra.mxu0 0.0
        %1999 = vmatprep.subr.mxu0 0.0
        %2000 = vmatpush1.msra.mxu0 0.0
        %2001 = vmatprep.subr.mxu0 0.0
        %2002 = vmatpush1.msra.mxu0 0.0
        %2003 = vmatprep.subr.mxu0 0.0
        %2004 = vmatpush1.msra.mxu0 0.0
        %2005 = vmatprep.subr.mxu0 0.0
        %2006 = vmatpush1.msra.mxu0 0.0
        %2007 = vmatprep.subr.mxu0 0.0
        %2008 = vmatpush1.msra.mxu0 0.0
        %2009 = vmatprep.subr.mxu0 0.0
        %2010 = vmatpush1.msra.mxu0 0.0
        %2011 = vmatprep.subr.mxu0 0.0
        %2012 = vmatpush1.msra.mxu0 0.0
        %2013 = vmatprep.subr.mxu0 0.0
        %2014 = vmatpush1.msra.mxu0 0.0
        %2015 = vmatprep.subr.mxu0 0.0
        %2016 = vmatpush1.msra.mxu0 0.0
        %2017 = vmatprep.subr.mxu0 0.0
        %2018 = vmatpush1.msra.mxu0 0.0
        %2019 = vmatprep.subr.mxu0 0.0
        %2020 = vmatpush1.msra.mxu0 0.0
        %2021 = vmatprep.subr.mxu0 0.0
        %2022 = vmatpush1.msra.mxu0 0.0
        %2023 = vmatprep.subr.mxu0 0.0
        %2024 = vmatpush1.msra.mxu0 0.0
        %2025 = vmatprep.subr.mxu0 0.0
        %2026 = vmatpush1.msra.mxu0 0.0
        %2027 = vmatprep.subr.mxu0 0.0
        %2028 = vmatpush1.msra.mxu0 0.0
        %2029 = vmatprep.subr.mxu0 0.0
        %2030 = vmatpush1.msra.mxu0 0.0
        %2031 = vmatprep.mubr.f32.mxu0 0.0
        %2032 = vmatmul.mubr.f32.gmra.mrb[0].mxu0 %v1962
        %v2033 = vpop.f32.mrb[0].mxu0
        %v2034 = vadd.f32 0.0, %v2033
        %v2035 = vpop.f32.mrb[0].mxu0
        %2036 = vmatprep.mubr.f32.mxu0 0.0
        %2037 = vmatmul.mubr.f32.gmra.mrb[0].mxu0 %v1965
        %v2038 = vpop.f32.mrb[0].mxu0
        %v2039 = vadd.f32 0.0, %v2038
        %v2040 = vpop.f32.mrb[0].mxu0
        %2041 = vdwg.mxu0
        %v2042 = vadd.f32 %v1951, %v2034
        %v2043 = vadd.f32 %v1956, %v2039
        %v2044 = vld [vmem:[%s1530] sm:$0xff]
        %v2045 = vld [vmem:[%s1530 + $0x8] sm:$0xff]
        %v2047 = vsel %vm218, %v2044, 0
        %v2050 = vsel %vm218, %v2045, 0
        %2052 = vmatprep.subr.mxu0 0.0
        %2053 = vmatpush1.msra.mxu0 %v488
        %2054 = vmatprep.subr.mxu0 0.0
        %2055 = vmatpush1.msra.mxu0 0.0
        %2056 = vmatprep.subr.mxu0 0.0
        %2057 = vmatpush1.msra.mxu0 0.0
        %2058 = vmatprep.subr.mxu0 0.0
        %2059 = vmatpush1.msra.mxu0 0.0
        %2060 = vmatprep.subr.mxu0 0.0
        %2061 = vmatpush1.msra.mxu0 0.0
        %2062 = vmatprep.subr.mxu0 0.0
        %2063 = vmatpush1.msra.mxu0 0.0
        %2064 = vmatprep.subr.mxu0 0.0
        %2065 = vmatpush1.msra.mxu0 0.0
        %2066 = vmatprep.subr.mxu0 0.0
        %2067 = vmatpush1.msra.mxu0 0.0
        %2068 = vmatprep.subr.mxu0 0.0
        %2069 = vmatpush1.msra.mxu0 0.0
        %2070 = vmatprep.subr.mxu0 0.0
        %2071 = vmatpush1.msra.mxu0 0.0
        %2072 = vmatprep.subr.mxu0 0.0
        %2073 = vmatpush1.msra.mxu0 0.0
        %2074 = vmatprep.subr.mxu0 0.0
        %2075 = vmatpush1.msra.mxu0 0.0
        %2076 = vmatprep.subr.mxu0 0.0
        %2077 = vmatpush1.msra.mxu0 0.0
        %2078 = vmatprep.subr.mxu0 0.0
        %2079 = vmatpush1.msra.mxu0 0.0
        %2080 = vmatprep.subr.mxu0 0.0
        %2081 = vmatpush1.msra.mxu0 0.0
        %2082 = vmatprep.subr.mxu0 0.0
        %2083 = vmatpush1.msra.mxu0 0.0
        %2084 = vmatprep.subr.mxu0 0.0
        %2085 = vmatpush1.msra.mxu0 0.0
        %2086 = vmatprep.subr.mxu0 0.0
        %2087 = vmatpush1.msra.mxu0 0.0
        %2088 = vmatprep.subr.mxu0 0.0
        %2089 = vmatpush1.msra.mxu0 0.0
        %2090 = vmatprep.subr.mxu0 0.0
        %2091 = vmatpush1.msra.mxu0 0.0
        %2092 = vmatprep.subr.mxu0 0.0
        %2093 = vmatpush1.msra.mxu0 0.0
        %2094 = vmatprep.subr.mxu0 0.0
        %2095 = vmatpush1.msra.mxu0 0.0
        %2096 = vmatprep.subr.mxu0 0.0
        %2097 = vmatpush1.msra.mxu0 0.0
        %2098 = vmatprep.subr.mxu0 0.0
        %2099 = vmatpush1.msra.mxu0 0.0
        %2100 = vmatprep.subr.mxu0 0.0
        %2101 = vmatpush1.msra.mxu0 0.0
        %2102 = vmatprep.subr.mxu0 0.0
        %2103 = vmatpush1.msra.mxu0 0.0
        %2104 = vmatprep.subr.mxu0 0.0
        %2105 = vmatpush1.msra.mxu0 0.0
        %2106 = vmatprep.subr.mxu0 0.0
        %2107 = vmatpush1.msra.mxu0 0.0
        %2108 = vmatprep.subr.mxu0 0.0
        %2109 = vmatpush1.msra.mxu0 0.0
        %2110 = vmatprep.subr.mxu0 0.0
        %2111 = vmatpush1.msra.mxu0 0.0
        %2112 = vmatprep.subr.mxu0 0.0
        %2113 = vmatpush1.msra.mxu0 0.0
        %2114 = vmatprep.subr.mxu0 0.0
        %2115 = vmatpush1.msra.mxu0 0.0
        %2116 = vmatprep.mubr.f32.mxu0 0.0
        %2117 = vmatmul.mubr.f32.gmra.mrb[0].mxu0 %v2047
        %v2118 = vpop.f32.mrb[0].mxu0
        %v2119 = vadd.f32 0.0, %v2118
        %v2120 = vpop.f32.mrb[0].mxu0
        %2121 = vmatprep.mubr.f32.mxu0 0.0
        %2122 = vmatmul.mubr.f32.gmra.mrb[0].mxu0 %v2050
        %v2123 = vpop.f32.mrb[0].mxu0
        %v2124 = vadd.f32 0.0, %v2123
        %v2125 = vpop.f32.mrb[0].mxu0
        %2126 = vdwg.mxu0
        %v2127 = vadd.f32 %v2042, %v2119
        %v2128 = vadd.f32 %v2043, %v2124
        %v2129 = vld [vmem:[%s1530 + $0x1] sm:$0xff]
        %v2130 = vld [vmem:[%s1530 + $0x9] sm:$0xff]
        %v2132 = vsel %vm218, %v2129, 0
        %v2135 = vsel %vm218, %v2130, 0
        %2137 = vmatprep.subr.mxu0 0.0
        %2138 = vmatpush1.msra.mxu0 %v576
        %2139 = vmatprep.subr.mxu0 0.0
        %2140 = vmatpush1.msra.mxu0 0.0
        %2141 = vmatprep.subr.mxu0 0.0
        %2142 = vmatpush1.msra.mxu0 0.0
        %2143 = vmatprep.subr.mxu0 0.0
        %2144 = vmatpush1.msra.mxu0 0.0
        %2145 = vmatprep.subr.mxu0 0.0
        %2146 = vmatpush1.msra.mxu0 0.0
        %2147 = vmatprep.subr.mxu0 0.0
        %2148 = vmatpush1.msra.mxu0 0.0
        %2149 = vmatprep.subr.mxu0 0.0
        %2150 = vmatpush1.msra.mxu0 0.0
        %2151 = vmatprep.subr.mxu0 0.0
        %2152 = vmatpush1.msra.mxu0 0.0
        %2153 = vmatprep.subr.mxu0 0.0
        %2154 = vmatpush1.msra.mxu0 0.0
        %2155 = vmatprep.subr.mxu0 0.0
        %2156 = vmatpush1.msra.mxu0 0.0
        %2157 = vmatprep.subr.mxu0 0.0
        %2158 = vmatpush1.msra.mxu0 0.0
        %2159 = vmatprep.subr.mxu0 0.0
        %2160 = vmatpush1.msra.mxu0 0.0
        %2161 = vmatprep.subr.mxu0 0.0
        %2162 = vmatpush1.msra.mxu0 0.0
        %2163 = vmatprep.subr.mxu0 0.0
        %2164 = vmatpush1.msra.mxu0 0.0
        %2165 = vmatprep.subr.mxu0 0.0
        %2166 = vmatpush1.msra.mxu0 0.0
        %2167 = vmatprep.subr.mxu0 0.0
        %2168 = vmatpush1.msra.mxu0 0.0
        %2169 = vmatprep.subr.mxu0 0.0
        %2170 = vmatpush1.msra.mxu0 0.0
        %2171 = vmatprep.subr.mxu0 0.0
        %2172 = vmatpush1.msra.mxu0 0.0
        %2173 = vmatprep.subr.mxu0 0.0
        %2174 = vmatpush1.msra.mxu0 0.0
        %2175 = vmatprep.subr.mxu0 0.0
        %2176 = vmatpush1.msra.mxu0 0.0
        %2177 = vmatprep.subr.mxu0 0.0
        %2178 = vmatpush1.msra.mxu0 0.0
        %2179 = vmatprep.subr.mxu0 0.0
        %2180 = vmatpush1.msra.mxu0 0.0
        %2181 = vmatprep.subr.mxu0 0.0
        %2182 = vmatpush1.msra.mxu0 0.0
        %2183 = vmatprep.subr.mxu0 0.0
        %2184 = vmatpush1.msra.mxu0 0.0
        %2185 = vmatprep.subr.mxu0 0.0
        %2186 = vmatpush1.msra.mxu0 0.0
        %2187 = vmatprep.subr.mxu0 0.0
        %2188 = vmatpush1.msra.mxu0 0.0
        %2189 = vmatprep.subr.mxu0 0.0
        %2190 = vmatpush1.msra.mxu0 0.0
        %2191 = vmatprep.subr.mxu0 0.0
        %2192 = vmatpush1.msra.mxu0 0.0
        %2193 = vmatprep.subr.mxu0 0.0
        %2194 = vmatpush1.msra.mxu0 0.0
        %2195 = vmatprep.subr.mxu0 0.0
        %2196 = vmatpush1.msra.mxu0 0.0
        %2197 = vmatprep.subr.mxu0 0.0
        %2198 = vmatpush1.msra.mxu0 0.0
        %2199 = vmatprep.subr.mxu0 0.0
        %2200 = vmatpush1.msra.mxu0 0.0
        %2201 = vmatprep.mubr.f32.mxu0 0.0
        %2202 = vmatmul.mubr.f32.gmra.mrb[0].mxu0 %v2132
        %v2203 = vpop.f32.mrb[0].mxu0
        %v2204 = vadd.f32 0.0, %v2203
        %v2205 = vpop.f32.mrb[0].mxu0
        %2206 = vmatprep.mubr.f32.mxu0 0.0
        %2207 = vmatmul.mubr.f32.gmra.mrb[0].mxu0 %v2135
        %v2208 = vpop.f32.mrb[0].mxu0
        %v2209 = vadd.f32 0.0, %v2208
        %v2210 = vpop.f32.mrb[0].mxu0
        %2211 = vdwg.mxu0
        %v2212 = vadd.f32 %v2127, %v2204
        %v2213 = vadd.f32 %v2128, %v2209
        %v2214 = vld [vmem:[%s1530 + $0x2] sm:$0xff]
        %v2215 = vld [vmem:[%s1530 + $0xa] sm:$0xff]
        %v2217 = vsel %vm218, %v2214, 0
        %v2220 = vsel %vm218, %v2215, 0
        %2222 = vmatprep.subr.mxu0 0.0
        %2223 = vmatpush1.msra.mxu0 %v664
        %2224 = vmatprep.subr.mxu0 0.0
        %2225 = vmatpush1.msra.mxu0 0.0
        %2226 = vmatprep.subr.mxu0 0.0
        %2227 = vmatpush1.msra.mxu0 0.0
        %2228 = vmatprep.subr.mxu0 0.0
        %2229 = vmatpush1.msra.mxu0 0.0
        %2230 = vmatprep.subr.mxu0 0.0
        %2231 = vmatpush1.msra.mxu0 0.0
        %2232 = vmatprep.subr.mxu0 0.0
        %2233 = vmatpush1.msra.mxu0 0.0
        %2234 = vmatprep.subr.mxu0 0.0
        %2235 = vmatpush1.msra.mxu0 0.0
        %2236 = vmatprep.subr.mxu0 0.0
        %2237 = vmatpush1.msra.mxu0 0.0
        %2238 = vmatprep.subr.mxu0 0.0
        %2239 = vmatpush1.msra.mxu0 0.0
        %2240 = vmatprep.subr.mxu0 0.0
        %2241 = vmatpush1.msra.mxu0 0.0
        %2242 = vmatprep.subr.mxu0 0.0
        %2243 = vmatpush1.msra.mxu0 0.0
        %2244 = vmatprep.subr.mxu0 0.0
        %2245 = vmatpush1.msra.mxu0 0.0
        %2246 = vmatprep.subr.mxu0 0.0
        %2247 = vmatpush1.msra.mxu0 0.0
        %2248 = vmatprep.subr.mxu0 0.0
        %2249 = vmatpush1.msra.mxu0 0.0
        %2250 = vmatprep.subr.mxu0 0.0
        %2251 = vmatpush1.msra.mxu0 0.0
        %2252 = vmatprep.subr.mxu0 0.0
        %2253 = vmatpush1.msra.mxu0 0.0
        %2254 = vmatprep.subr.mxu0 0.0
        %2255 = vmatpush1.msra.mxu0 0.0
        %2256 = vmatprep.subr.mxu0 0.0
        %2257 = vmatpush1.msra.mxu0 0.0
        %2258 = vmatprep.subr.mxu0 0.0
        %2259 = vmatpush1.msra.mxu0 0.0
        %2260 = vmatprep.subr.mxu0 0.0
        %2261 = vmatpush1.msra.mxu0 0.0
        %2262 = vmatprep.subr.mxu0 0.0
        %2263 = vmatpush1.msra.mxu0 0.0
        %2264 = vmatprep.subr.mxu0 0.0
        %2265 = vmatpush1.msra.mxu0 0.0
        %2266 = vmatprep.subr.mxu0 0.0
        %2267 = vmatpush1.msra.mxu0 0.0
        %2268 = vmatprep.subr.mxu0 0.0
        %2269 = vmatpush1.msra.mxu0 0.0
        %2270 = vmatprep.subr.mxu0 0.0
        %2271 = vmatpush1.msra.mxu0 0.0
        %2272 = vmatprep.subr.mxu0 0.0
        %2273 = vmatpush1.msra.mxu0 0.0
        %2274 = vmatprep.subr.mxu0 0.0
        %2275 = vmatpush1.msra.mxu0 0.0
        %2276 = vmatprep.subr.mxu0 0.0
        %2277 = vmatpush1.msra.mxu0 0.0
        %2278 = vmatprep.subr.mxu0 0.0
        %2279 = vmatpush1.msra.mxu0 0.0
        %2280 = vmatprep.subr.mxu0 0.0
        %2281 = vmatpush1.msra.mxu0 0.0
        %2282 = vmatprep.subr.mxu0 0.0
        %2283 = vmatpush1.msra.mxu0 0.0
        %2284 = vmatprep.subr.mxu0 0.0
        %2285 = vmatpush1.msra.mxu0 0.0
        %2286 = vmatprep.mubr.f32.mxu0 0.0
        %2287 = vmatmul.mubr.f32.gmra.mrb[0].mxu0 %v2217
        %v2288 = vpop.f32.mrb[0].mxu0
        %v2289 = vadd.f32 0.0, %v2288
        %v2290 = vpop.f32.mrb[0].mxu0
        %2291 = vmatprep.mubr.f32.mxu0 0.0
        %2292 = vmatmul.mubr.f32.gmra.mrb[0].mxu0 %v2220
        %v2293 = vpop.f32.mrb[0].mxu0
        %v2294 = vadd.f32 0.0, %v2293
        %v2295 = vpop.f32.mrb[0].mxu0
        %2296 = vdwg.mxu0
        %v2297 = vadd.f32 %v2212, %v2289
        %v2298 = vadd.f32 %v2213, %v2294
        %s2299 = sadd.s32 %s193, 4
        %s2300 = smul.u32 %s2299, 24
        %s2301 = scalar_lea.vmem %s188, %s2300
        %v2302 = vld [vmem:[%s2301] sm:$0xff]
        %v2303 = vld [vmem:[%s2301 + $0x8] sm:$0xff]
        %v2305 = vsel %vm218, %v2302, 0
        %v2308 = vsel %vm218, %v2303, 0
        %2310 = vmatprep.subr.mxu0 0.0
        %2311 = vmatpush1.msra.mxu0 %v755
        %2312 = vmatprep.subr.mxu0 0.0
        %2313 = vmatpush1.msra.mxu0 0.0
        %2314 = vmatprep.subr.mxu0 0.0
        %2315 = vmatpush1.msra.mxu0 0.0
        %2316 = vmatprep.subr.mxu0 0.0
        %2317 = vmatpush1.msra.mxu0 0.0
        %2318 = vmatprep.subr.mxu0 0.0
        %2319 = vmatpush1.msra.mxu0 0.0
        %2320 = vmatprep.subr.mxu0 0.0
        %2321 = vmatpush1.msra.mxu0 0.0
        %2322 = vmatprep.subr.mxu0 0.0
        %2323 = vmatpush1.msra.mxu0 0.0
        %2324 = vmatprep.subr.mxu0 0.0
        %2325 = vmatpush1.msra.mxu0 0.0
        %2326 = vmatprep.subr.mxu0 0.0
        %2327 = vmatpush1.msra.mxu0 0.0
        %2328 = vmatprep.subr.mxu0 0.0
        %2329 = vmatpush1.msra.mxu0 0.0
        %2330 = vmatprep.subr.mxu0 0.0
        %2331 = vmatpush1.msra.mxu0 0.0
        %2332 = vmatprep.subr.mxu0 0.0
        %2333 = vmatpush1.msra.mxu0 0.0
        %2334 = vmatprep.subr.mxu0 0.0
        %2335 = vmatpush1.msra.mxu0 0.0
        %2336 = vmatprep.subr.mxu0 0.0
        %2337 = vmatpush1.msra.mxu0 0.0
        %2338 = vmatprep.subr.mxu0 0.0
        %2339 = vmatpush1.msra.mxu0 0.0
        %2340 = vmatprep.subr.mxu0 0.0
        %2341 = vmatpush1.msra.mxu0 0.0
        %2342 = vmatprep.subr.mxu0 0.0
        %2343 = vmatpush1.msra.mxu0 0.0
        %2344 = vmatprep.subr.mxu0 0.0
        %2345 = vmatpush1.msra.mxu0 0.0
        %2346 = vmatprep.subr.mxu0 0.0
        %2347 = vmatpush1.msra.mxu0 0.0
        %2348 = vmatprep.subr.mxu0 0.0
        %2349 = vmatpush1.msra.mxu0 0.0
        %2350 = vmatprep.subr.mxu0 0.0
        %2351 = vmatpush1.msra.mxu0 0.0
        %2352 = vmatprep.subr.mxu0 0.0
        %2353 = vmatpush1.msra.mxu0 0.0
        %2354 = vmatprep.subr.mxu0 0.0
        %2355 = vmatpush1.msra.mxu0 0.0
        %2356 = vmatprep.subr.mxu0 0.0
        %2357 = vmatpush1.msra.mxu0 0.0
        %2358 = vmatprep.subr.mxu0 0.0
        %2359 = vmatpush1.msra.mxu0 0.0
        %2360 = vmatprep.subr.mxu0 0.0
        %2361 = vmatpush1.msra.mxu0 0.0
        %2362 = vmatprep.subr.mxu0 0.0
        %2363 = vmatpush1.msra.mxu0 0.0
        %2364 = vmatprep.subr.mxu0 0.0
        %2365 = vmatpush1.msra.mxu0 0.0
        %2366 = vmatprep.subr.mxu0 0.0
        %2367 = vmatpush1.msra.mxu0 0.0
        %2368 = vmatprep.subr.mxu0 0.0
        %2369 = vmatpush1.msra.mxu0 0.0
        %2370 = vmatprep.subr.mxu0 0.0
        %2371 = vmatpush1.msra.mxu0 0.0
        %2372 = vmatprep.subr.mxu0 0.0
        %2373 = vmatpush1.msra.mxu0 0.0
        %2374 = vmatprep.mubr.f32.mxu0 0.0
        %2375 = vmatmul.mubr.f32.gmra.mrb[0].mxu0 %v2305
        %v2376 = vpop.f32.mrb[0].mxu0
        %v2377 = vadd.f32 0.0, %v2376
        %v2378 = vpop.f32.mrb[0].mxu0
        %2379 = vmatprep.mubr.f32.mxu0 0.0
        %2380 = vmatmul.mubr.f32.gmra.mrb[0].mxu0 %v2308
        %v2381 = vpop.f32.mrb[0].mxu0
        %v2382 = vadd.f32 0.0, %v2381
        %v2383 = vpop.f32.mrb[0].mxu0
        %2384 = vdwg.mxu0
        %v2385 = vadd.f32 %v2297, %v2377
        %v2386 = vadd.f32 %v2298, %v2382
        %v2387 = vld [vmem:[%s2301 + $0x1] sm:$0xff]
        %v2388 = vld [vmem:[%s2301 + $0x9] sm:$0xff]
        %v2390 = vsel %vm218, %v2387, 0
        %v2393 = vsel %vm218, %v2388, 0
        %2395 = vmatprep.subr.mxu0 0.0
        %2396 = vmatpush1.msra.mxu0 %v843
        %2397 = vmatprep.subr.mxu0 0.0
        %2398 = vmatpush1.msra.mxu0 0.0
        %2399 = vmatprep.subr.mxu0 0.0
        %2400 = vmatpush1.msra.mxu0 0.0
        %2401 = vmatprep.subr.mxu0 0.0
        %2402 = vmatpush1.msra.mxu0 0.0
        %2403 = vmatprep.subr.mxu0 0.0
        %2404 = vmatpush1.msra.mxu0 0.0
        %2405 = vmatprep.subr.mxu0 0.0
        %2406 = vmatpush1.msra.mxu0 0.0
        %2407 = vmatprep.subr.mxu0 0.0
        %2408 = vmatpush1.msra.mxu0 0.0
        %2409 = vmatprep.subr.mxu0 0.0
        %2410 = vmatpush1.msra.mxu0 0.0
        %2411 = vmatprep.subr.mxu0 0.0
        %2412 = vmatpush1.msra.mxu0 0.0
        %2413 = vmatprep.subr.mxu0 0.0
        %2414 = vmatpush1.msra.mxu0 0.0
        %2415 = vmatprep.subr.mxu0 0.0
        %2416 = vmatpush1.msra.mxu0 0.0
        %2417 = vmatprep.subr.mxu0 0.0
        %2418 = vmatpush1.msra.mxu0 0.0
        %2419 = vmatprep.subr.mxu0 0.0
        %2420 = vmatpush1.msra.mxu0 0.0
        %2421 = vmatprep.subr.mxu0 0.0
        %2422 = vmatpush1.msra.mxu0 0.0
        %2423 = vmatprep.subr.mxu0 0.0
        %2424 = vmatpush1.msra.mxu0 0.0
        %2425 = vmatprep.subr.mxu0 0.0
        %2426 = vmatpush1.msra.mxu0 0.0
        %2427 = vmatprep.subr.mxu0 0.0
        %2428 = vmatpush1.msra.mxu0 0.0
        %2429 = vmatprep.subr.mxu0 0.0
        %2430 = vmatpush1.msra.mxu0 0.0
        %2431 = vmatprep.subr.mxu0 0.0
        %2432 = vmatpush1.msra.mxu0 0.0
        %2433 = vmatprep.subr.mxu0 0.0
        %2434 = vmatpush1.msra.mxu0 0.0
        %2435 = vmatprep.subr.mxu0 0.0
        %2436 = vmatpush1.msra.mxu0 0.0
        %2437 = vmatprep.subr.mxu0 0.0
        %2438 = vmatpush1.msra.mxu0 0.0
        %2439 = vmatprep.subr.mxu0 0.0
        %2440 = vmatpush1.msra.mxu0 0.0
        %2441 = vmatprep.subr.mxu0 0.0
        %2442 = vmatpush1.msra.mxu0 0.0
        %2443 = vmatprep.subr.mxu0 0.0
        %2444 = vmatpush1.msra.mxu0 0.0
        %2445 = vmatprep.subr.mxu0 0.0
        %2446 = vmatpush1.msra.mxu0 0.0
        %2447 = vmatprep.subr.mxu0 0.0
        %2448 = vmatpush1.msra.mxu0 0.0
        %2449 = vmatprep.subr.mxu0 0.0
        %2450 = vmatpush1.msra.mxu0 0.0
        %2451 = vmatprep.subr.mxu0 0.0
        %2452 = vmatpush1.msra.mxu0 0.0
        %2453 = vmatprep.subr.mxu0 0.0
        %2454 = vmatpush1.msra.mxu0 0.0
        %2455 = vmatprep.subr.mxu0 0.0
        %2456 = vmatpush1.msra.mxu0 0.0
        %2457 = vmatprep.subr.mxu0 0.0
        %2458 = vmatpush1.msra.mxu0 0.0
        %2459 = vmatprep.mubr.f32.mxu0 0.0
        %2460 = vmatmul.mubr.f32.gmra.mrb[0].mxu0 %v2390
        %v2461 = vpop.f32.mrb[0].mxu0
        %v2462 = vadd.f32 0.0, %v2461
        %v2463 = vpop.f32.mrb[0].mxu0
        %2464 = vmatprep.mubr.f32.mxu0 0.0
        %2465 = vmatmul.mubr.f32.gmra.mrb[0].mxu0 %v2393
        %v2466 = vpop.f32.mrb[0].mxu0
        %v2467 = vadd.f32 0.0, %v2466
        %v2468 = vpop.f32.mrb[0].mxu0
        %2469 = vdwg.mxu0
        %v2470 = vadd.f32 %v2385, %v2462
        %v2471 = vadd.f32 %v2386, %v2467
        %v2472 = vld [vmem:[%s2301 + $0x2] sm:$0xff]
        %v2473 = vld [vmem:[%s2301 + $0xa] sm:$0xff]
        %v2475 = vsel %vm218, %v2472, 0
        %v2478 = vsel %vm218, %v2473, 0
        %2480 = vmatprep.subr.mxu0 0.0
        %2481 = vmatpush1.msra.mxu0 %v931
        %2482 = vmatprep.subr.mxu0 0.0
        %2483 = vmatpush1.msra.mxu0 0.0
        %2484 = vmatprep.subr.mxu0 0.0
        %2485 = vmatpush1.msra.mxu0 0.0
        %2486 = vmatprep.subr.mxu0 0.0
        %2487 = vmatpush1.msra.mxu0 0.0
        %2488 = vmatprep.subr.mxu0 0.0
        %2489 = vmatpush1.msra.mxu0 0.0
        %2490 = vmatprep.subr.mxu0 0.0
        %2491 = vmatpush1.msra.mxu0 0.0
        %2492 = vmatprep.subr.mxu0 0.0
        %2493 = vmatpush1.msra.mxu0 0.0
        %2494 = vmatprep.subr.mxu0 0.0
        %2495 = vmatpush1.msra.mxu0 0.0
        %2496 = vmatprep.subr.mxu0 0.0
        %2497 = vmatpush1.msra.mxu0 0.0
        %2498 = vmatprep.subr.mxu0 0.0
        %2499 = vmatpush1.msra.mxu0 0.0
        %2500 = vmatprep.subr.mxu0 0.0
        %2501 = vmatpush1.msra.mxu0 0.0
        %2502 = vmatprep.subr.mxu0 0.0
        %2503 = vmatpush1.msra.mxu0 0.0
        %2504 = vmatprep.subr.mxu0 0.0
        %2505 = vmatpush1.msra.mxu0 0.0
        %2506 = vmatprep.subr.mxu0 0.0
        %2507 = vmatpush1.msra.mxu0 0.0
        %2508 = vmatprep.subr.mxu0 0.0
        %2509 = vmatpush1.msra.mxu0 0.0
        %2510 = vmatprep.subr.mxu0 0.0
        %2511 = vmatpush1.msra.mxu0 0.0
        %2512 = vmatprep.subr.mxu0 0.0
        %2513 = vmatpush1.msra.mxu0 0.0
        %2514 = vmatprep.subr.mxu0 0.0
        %2515 = vmatpush1.msra.mxu0 0.0
        %2516 = vmatprep.subr.mxu0 0.0
        %2517 = vmatpush1.msra.mxu0 0.0
        %2518 = vmatprep.subr.mxu0 0.0
        %2519 = vmatpush1.msra.mxu0 0.0
        %2520 = vmatprep.subr.mxu0 0.0
        %2521 = vmatpush1.msra.mxu0 0.0
        %2522 = vmatprep.subr.mxu0 0.0
        %2523 = vmatpush1.msra.mxu0 0.0
        %2524 = vmatprep.subr.mxu0 0.0
        %2525 = vmatpush1.msra.mxu0 0.0
        %2526 = vmatprep.subr.mxu0 0.0
        %2527 = vmatpush1.msra.mxu0 0.0
        %2528 = vmatprep.subr.mxu0 0.0
        %2529 = vmatpush1.msra.mxu0 0.0
        %2530 = vmatprep.subr.mxu0 0.0
        %2531 = vmatpush1.msra.mxu0 0.0
        %2532 = vmatprep.subr.mxu0 0.0
        %2533 = vmatpush1.msra.mxu0 0.0
        %2534 = vmatprep.subr.mxu0 0.0
        %2535 = vmatpush1.msra.mxu0 0.0
        %2536 = vmatprep.subr.mxu0 0.0
        %2537 = vmatpush1.msra.mxu0 0.0
        %2538 = vmatprep.subr.mxu0 0.0
        %2539 = vmatpush1.msra.mxu0 0.0
        %2540 = vmatprep.subr.mxu0 0.0
        %2541 = vmatpush1.msra.mxu0 0.0
        %2542 = vmatprep.subr.mxu0 0.0
        %2543 = vmatpush1.msra.mxu0 0.0
        %2544 = vmatprep.mubr.f32.mxu0 0.0
        %2545 = vmatmul.mubr.f32.gmra.mrb[0].mxu0 %v2475
        %v2546 = vpop.f32.mrb[0].mxu0
        %v2547 = vadd.f32 0.0, %v2546
        %v2548 = vpop.f32.mrb[0].mxu0
        %2549 = vmatprep.mubr.f32.mxu0 0.0
        %2550 = vmatmul.mubr.f32.gmra.mrb[0].mxu0 %v2478
        %v2551 = vpop.f32.mrb[0].mxu0
        %v2552 = vadd.f32 0.0, %v2551
        %v2553 = vpop.f32.mrb[0].mxu0
        %2554 = vdwg.mxu0
        %v2555 = vadd.f32 %v2470, %v2547
        %v2556 = vadd.f32 %v2471, %v2552
        %v2557 = vadd.f32 %v2555, %v1014
        %v2558 = vadd.f32 %v2556, %v1014
        %v2559 = vmax.f32 %v2557, 0.0
        %v2560 = vmax.f32 %v2558, 0.0
        %s2561 = scalar_lea.vmem %s182, 32 [#allocation2]
        %2562 = vst [vmem:[%s2561] sm:$0xff] %v2559
        %2563 = vst [vmem:[%s2561 + $0x8] sm:$0xff] %v2560
        %v2564 = vld [vmem:[%s1530] sm:$0xff]
        %v2565 = vld [vmem:[%s1530 + $0x8] sm:$0xff]
        %v2566 = vld [vmem:[%s1530 + $0x1] sm:$0xff]
        %v2567 = vld [vmem:[%s1530 + $0x9] sm:$0xff]
        %v2569 = vsel %vm218, %v2566, 0
        %v2572 = vsel %vm218, %v2567, 0
        %2574 = vmatprep.subr.mxu0 0.0
        %2575 = vmatpush1.msra.mxu0 %v227
        %2576 = vmatprep.subr.mxu0 0.0
        %2577 = vmatpush1.msra.mxu0 0.0
        %2578 = vmatprep.subr.mxu0 0.0
        %2579 = vmatpush1.msra.mxu0 0.0
        %2580 = vmatprep.subr.mxu0 0.0
        %2581 = vmatpush1.msra.mxu0 0.0
        %2582 = vmatprep.subr.mxu0 0.0
        %2583 = vmatpush1.msra.mxu0 0.0
        %2584 = vmatprep.subr.mxu0 0.0
        %2585 = vmatpush1.msra.mxu0 0.0
        %2586 = vmatprep.subr.mxu0 0.0
        %2587 = vmatpush1.msra.mxu0 0.0
        %2588 = vmatprep.subr.mxu0 0.0
        %2589 = vmatpush1.msra.mxu0 0.0
        %2590 = vmatprep.subr.mxu0 0.0
        %2591 = vmatpush1.msra.mxu0 0.0
        %2592 = vmatprep.subr.mxu0 0.0
        %2593 = vmatpush1.msra.mxu0 0.0
        %2594 = vmatprep.subr.mxu0 0.0
        %2595 = vmatpush1.msra.mxu0 0.0
        %2596 = vmatprep.subr.mxu0 0.0
        %2597 = vmatpush1.msra.mxu0 0.0
        %2598 = vmatprep.subr.mxu0 0.0
        %2599 = vmatpush1.msra.mxu0 0.0
        %2600 = vmatprep.subr.mxu0 0.0
        %2601 = vmatpush1.msra.mxu0 0.0
        %2602 = vmatprep.subr.mxu0 0.0
        %2603 = vmatpush1.msra.mxu0 0.0
        %2604 = vmatprep.subr.mxu0 0.0
        %2605 = vmatpush1.msra.mxu0 0.0
        %2606 = vmatprep.subr.mxu0 0.0
        %2607 = vmatpush1.msra.mxu0 0.0
        %2608 = vmatprep.subr.mxu0 0.0
        %2609 = vmatpush1.msra.mxu0 0.0
        %2610 = vmatprep.subr.mxu0 0.0
        %2611 = vmatpush1.msra.mxu0 0.0
        %2612 = vmatprep.subr.mxu0 0.0
        %2613 = vmatpush1.msra.mxu0 0.0
        %2614 = vmatprep.subr.mxu0 0.0
        %2615 = vmatpush1.msra.mxu0 0.0
        %2616 = vmatprep.subr.mxu0 0.0
        %2617 = vmatpush1.msra.mxu0 0.0
        %2618 = vmatprep.subr.mxu0 0.0
        %2619 = vmatpush1.msra.mxu0 0.0
        %2620 = vmatprep.subr.mxu0 0.0
        %2621 = vmatpush1.msra.mxu0 0.0
        %2622 = vmatprep.subr.mxu0 0.0
        %2623 = vmatpush1.msra.mxu0 0.0
        %2624 = vmatprep.subr.mxu0 0.0
        %2625 = vmatpush1.msra.mxu0 0.0
        %2626 = vmatprep.subr.mxu0 0.0
        %2627 = vmatpush1.msra.mxu0 0.0
        %2628 = vmatprep.subr.mxu0 0.0
        %2629 = vmatpush1.msra.mxu0 0.0
        %2630 = vmatprep.subr.mxu0 0.0
        %2631 = vmatpush1.msra.mxu0 0.0
        %2632 = vmatprep.subr.mxu0 0.0
        %2633 = vmatpush1.msra.mxu0 0.0
        %2634 = vmatprep.subr.mxu0 0.0
        %2635 = vmatpush1.msra.mxu0 0.0
        %2636 = vmatprep.subr.mxu0 0.0
        %2637 = vmatpush1.msra.mxu0 0.0
        %2638 = vmatprep.mubr.f32.mxu0 0.0
        %2639 = vmatmul.mubr.f32.gmra.mrb[0].mxu0 %v2569
        %v2640 = vpop.f32.mrb[0].mxu0
        %v2641 = vadd.f32 0.0, %v2640
        %v2642 = vpop.f32.mrb[0].mxu0
        %2643 = vmatprep.mubr.f32.mxu0 0.0
        %2644 = vmatmul.mubr.f32.gmra.mrb[0].mxu0 %v2572
        %v2645 = vpop.f32.mrb[0].mxu0
        %v2646 = vadd.f32 0.0, %v2645
        %v2647 = vpop.f32.mrb[0].mxu0
        %2648 = vdwg.mxu0
        %v2650 = vsel %vm218, %v2564, 0
        %v2653 = vsel %vm218, %v2565, 0
        %2655 = vmatprep.subr.mxu0 0.0
        %2656 = vmatpush1.msra.mxu0 %v311
        %2657 = vmatprep.subr.mxu0 0.0
        %2658 = vmatpush1.msra.mxu0 0.0
        %2659 = vmatprep.subr.mxu0 0.0
        %2660 = vmatpush1.msra.mxu0 0.0
        %2661 = vmatprep.subr.mxu0 0.0
        %2662 = vmatpush1.msra.mxu0 0.0
        %2663 = vmatprep.subr.mxu0 0.0
        %2664 = vmatpush1.msra.mxu0 0.0
        %2665 = vmatprep.subr.mxu0 0.0
        %2666 = vmatpush1.msra.mxu0 0.0
        %2667 = vmatprep.subr.mxu0 0.0
        %2668 = vmatpush1.msra.mxu0 0.0
        %2669 = vmatprep.subr.mxu0 0.0
        %2670 = vmatpush1.msra.mxu0 0.0
        %2671 = vmatprep.subr.mxu0 0.0
        %2672 = vmatpush1.msra.mxu0 0.0
        %2673 = vmatprep.subr.mxu0 0.0
        %2674 = vmatpush1.msra.mxu0 0.0
        %2675 = vmatprep.subr.mxu0 0.0
        %2676 = vmatpush1.msra.mxu0 0.0
        %2677 = vmatprep.subr.mxu0 0.0
        %2678 = vmatpush1.msra.mxu0 0.0
        %2679 = vmatprep.subr.mxu0 0.0
        %2680 = vmatpush1.msra.mxu0 0.0
        %2681 = vmatprep.subr.mxu0 0.0
        %2682 = vmatpush1.msra.mxu0 0.0
        %2683 = vmatprep.subr.mxu0 0.0
        %2684 = vmatpush1.msra.mxu0 0.0
        %2685 = vmatprep.subr.mxu0 0.0
        %2686 = vmatpush1.msra.mxu0 0.0
        %2687 = vmatprep.subr.mxu0 0.0
        %2688 = vmatpush1.msra.mxu0 0.0
        %2689 = vmatprep.subr.mxu0 0.0
        %2690 = vmatpush1.msra.mxu0 0.0
        %2691 = vmatprep.subr.mxu0 0.0
        %2692 = vmatpush1.msra.mxu0 0.0
        %2693 = vmatprep.subr.mxu0 0.0
        %2694 = vmatpush1.msra.mxu0 0.0
        %2695 = vmatprep.subr.mxu0 0.0
        %2696 = vmatpush1.msra.mxu0 0.0
        %2697 = vmatprep.subr.mxu0 0.0
        %2698 = vmatpush1.msra.mxu0 0.0
        %2699 = vmatprep.subr.mxu0 0.0
        %2700 = vmatpush1.msra.mxu0 0.0
        %2701 = vmatprep.subr.mxu0 0.0
        %2702 = vmatpush1.msra.mxu0 0.0
        %2703 = vmatprep.subr.mxu0 0.0
        %2704 = vmatpush1.msra.mxu0 0.0
        %2705 = vmatprep.subr.mxu0 0.0
        %2706 = vmatpush1.msra.mxu0 0.0
        %2707 = vmatprep.subr.mxu0 0.0
        %2708 = vmatpush1.msra.mxu0 0.0
        %2709 = vmatprep.subr.mxu0 0.0
        %2710 = vmatpush1.msra.mxu0 0.0
        %2711 = vmatprep.subr.mxu0 0.0
        %2712 = vmatpush1.msra.mxu0 0.0
        %2713 = vmatprep.subr.mxu0 0.0
        %2714 = vmatpush1.msra.mxu0 0.0
        %2715 = vmatprep.subr.mxu0 0.0
        %2716 = vmatpush1.msra.mxu0 0.0
        %2717 = vmatprep.subr.mxu0 0.0
        %2718 = vmatpush1.msra.mxu0 0.0
        %2719 = vmatprep.mubr.f32.mxu0 0.0
        %2720 = vmatmul.mubr.f32.gmra.mrb[0].mxu0 %v2650
        %v2721 = vpop.f32.mrb[0].mxu0
        %v2722 = vadd.f32 %v2641, %v2721
        %v2723 = vpop.f32.mrb[0].mxu0
        %2724 = vmatprep.mubr.f32.mxu0 0.0
        %2725 = vmatmul.mubr.f32.gmra.mrb[0].mxu0 %v2653
        %v2726 = vpop.f32.mrb[0].mxu0
        %v2727 = vadd.f32 %v2646, %v2726
        %v2728 = vpop.f32.mrb[0].mxu0
        %2729 = vdwg.mxu0
        %v2730 = vld [vmem:[%s1530 + $0x2] sm:$0xff]
        %v2731 = vld [vmem:[%s1530 + $0xa] sm:$0xff]
        %v2733 = vsel %vm218, %v2730, 0
        %v2736 = vsel %vm218, %v2731, 0
        %2738 = vmatprep.subr.mxu0 0.0
        %2739 = vmatpush1.msra.mxu0 %v397
        %2740 = vmatprep.subr.mxu0 0.0
        %2741 = vmatpush1.msra.mxu0 0.0
        %2742 = vmatprep.subr.mxu0 0.0
        %2743 = vmatpush1.msra.mxu0 0.0
        %2744 = vmatprep.subr.mxu0 0.0
        %2745 = vmatpush1.msra.mxu0 0.0
        %2746 = vmatprep.subr.mxu0 0.0
        %2747 = vmatpush1.msra.mxu0 0.0
        %2748 = vmatprep.subr.mxu0 0.0
        %2749 = vmatpush1.msra.mxu0 0.0
        %2750 = vmatprep.subr.mxu0 0.0
        %2751 = vmatpush1.msra.mxu0 0.0
        %2752 = vmatprep.subr.mxu0 0.0
        %2753 = vmatpush1.msra.mxu0 0.0
        %2754 = vmatprep.subr.mxu0 0.0
        %2755 = vmatpush1.msra.mxu0 0.0
        %2756 = vmatprep.subr.mxu0 0.0
        %2757 = vmatpush1.msra.mxu0 0.0
        %2758 = vmatprep.subr.mxu0 0.0
        %2759 = vmatpush1.msra.mxu0 0.0
        %2760 = vmatprep.subr.mxu0 0.0
        %2761 = vmatpush1.msra.mxu0 0.0
        %2762 = vmatprep.subr.mxu0 0.0
        %2763 = vmatpush1.msra.mxu0 0.0
        %2764 = vmatprep.subr.mxu0 0.0
        %2765 = vmatpush1.msra.mxu0 0.0
        %2766 = vmatprep.subr.mxu0 0.0
        %2767 = vmatpush1.msra.mxu0 0.0
        %2768 = vmatprep.subr.mxu0 0.0
        %2769 = vmatpush1.msra.mxu0 0.0
        %2770 = vmatprep.subr.mxu0 0.0
        %2771 = vmatpush1.msra.mxu0 0.0
        %2772 = vmatprep.subr.mxu0 0.0
        %2773 = vmatpush1.msra.mxu0 0.0
        %2774 = vmatprep.subr.mxu0 0.0
        %2775 = vmatpush1.msra.mxu0 0.0
        %2776 = vmatprep.subr.mxu0 0.0
        %2777 = vmatpush1.msra.mxu0 0.0
        %2778 = vmatprep.subr.mxu0 0.0
        %2779 = vmatpush1.msra.mxu0 0.0
        %2780 = vmatprep.subr.mxu0 0.0
        %2781 = vmatpush1.msra.mxu0 0.0
        %2782 = vmatprep.subr.mxu0 0.0
        %2783 = vmatpush1.msra.mxu0 0.0
        %2784 = vmatprep.subr.mxu0 0.0
        %2785 = vmatpush1.msra.mxu0 0.0
        %2786 = vmatprep.subr.mxu0 0.0
        %2787 = vmatpush1.msra.mxu0 0.0
        %2788 = vmatprep.subr.mxu0 0.0
        %2789 = vmatpush1.msra.mxu0 0.0
        %2790 = vmatprep.subr.mxu0 0.0
        %2791 = vmatpush1.msra.mxu0 0.0
        %2792 = vmatprep.subr.mxu0 0.0
        %2793 = vmatpush1.msra.mxu0 0.0
        %2794 = vmatprep.subr.mxu0 0.0
        %2795 = vmatpush1.msra.mxu0 0.0
        %2796 = vmatprep.subr.mxu0 0.0
        %2797 = vmatpush1.msra.mxu0 0.0
        %2798 = vmatprep.subr.mxu0 0.0
        %2799 = vmatpush1.msra.mxu0 0.0
        %2800 = vmatprep.subr.mxu0 0.0
        %2801 = vmatpush1.msra.mxu0 0.0
        %2802 = vmatprep.mubr.f32.mxu0 0.0
        %2803 = vmatmul.mubr.f32.gmra.mrb[0].mxu0 %v2733
        %v2804 = vpop.f32.mrb[0].mxu0
        %v2805 = vadd.f32 0.0, %v2804
        %v2806 = vpop.f32.mrb[0].mxu0
        %2807 = vmatprep.mubr.f32.mxu0 0.0
        %2808 = vmatmul.mubr.f32.gmra.mrb[0].mxu0 %v2736
        %v2809 = vpop.f32.mrb[0].mxu0
        %v2810 = vadd.f32 0.0, %v2809
        %v2811 = vpop.f32.mrb[0].mxu0
        %2812 = vdwg.mxu0
        %v2813 = vadd.f32 %v2722, %v2805
        %v2814 = vadd.f32 %v2727, %v2810
        %v2815 = vld [vmem:[%s2301] sm:$0xff]
        %v2816 = vld [vmem:[%s2301 + $0x8] sm:$0xff]
        %v2818 = vsel %vm218, %v2815, 0
        %v2821 = vsel %vm218, %v2816, 0
        %2823 = vmatprep.subr.mxu0 0.0
        %2824 = vmatpush1.msra.mxu0 %v488
        %2825 = vmatprep.subr.mxu0 0.0
        %2826 = vmatpush1.msra.mxu0 0.0
        %2827 = vmatprep.subr.mxu0 0.0
        %2828 = vmatpush1.msra.mxu0 0.0
        %2829 = vmatprep.subr.mxu0 0.0
        %2830 = vmatpush1.msra.mxu0 0.0
        %2831 = vmatprep.subr.mxu0 0.0
        %2832 = vmatpush1.msra.mxu0 0.0
        %2833 = vmatprep.subr.mxu0 0.0
        %2834 = vmatpush1.msra.mxu0 0.0
        %2835 = vmatprep.subr.mxu0 0.0
        %2836 = vmatpush1.msra.mxu0 0.0
        %2837 = vmatprep.subr.mxu0 0.0
        %2838 = vmatpush1.msra.mxu0 0.0
        %2839 = vmatprep.subr.mxu0 0.0
        %2840 = vmatpush1.msra.mxu0 0.0
        %2841 = vmatprep.subr.mxu0 0.0
        %2842 = vmatpush1.msra.mxu0 0.0
        %2843 = vmatprep.subr.mxu0 0.0
        %2844 = vmatpush1.msra.mxu0 0.0
        %2845 = vmatprep.subr.mxu0 0.0
        %2846 = vmatpush1.msra.mxu0 0.0
        %2847 = vmatprep.subr.mxu0 0.0
        %2848 = vmatpush1.msra.mxu0 0.0
        %2849 = vmatprep.subr.mxu0 0.0
        %2850 = vmatpush1.msra.mxu0 0.0
        %2851 = vmatprep.subr.mxu0 0.0
        %2852 = vmatpush1.msra.mxu0 0.0
        %2853 = vmatprep.subr.mxu0 0.0
        %2854 = vmatpush1.msra.mxu0 0.0
        %2855 = vmatprep.subr.mxu0 0.0
        %2856 = vmatpush1.msra.mxu0 0.0
        %2857 = vmatprep.subr.mxu0 0.0
        %2858 = vmatpush1.msra.mxu0 0.0
        %2859 = vmatprep.subr.mxu0 0.0
        %2860 = vmatpush1.msra.mxu0 0.0
        %2861 = vmatprep.subr.mxu0 0.0
        %2862 = vmatpush1.msra.mxu0 0.0
        %2863 = vmatprep.subr.mxu0 0.0
        %2864 = vmatpush1.msra.mxu0 0.0
        %2865 = vmatprep.subr.mxu0 0.0
        %2866 = vmatpush1.msra.mxu0 0.0
        %2867 = vmatprep.subr.mxu0 0.0
        %2868 = vmatpush1.msra.mxu0 0.0
        %2869 = vmatprep.subr.mxu0 0.0
        %2870 = vmatpush1.msra.mxu0 0.0
        %2871 = vmatprep.subr.mxu0 0.0
        %2872 = vmatpush1.msra.mxu0 0.0
        %2873 = vmatprep.subr.mxu0 0.0
        %2874 = vmatpush1.msra.mxu0 0.0
        %2875 = vmatprep.subr.mxu0 0.0
        %2876 = vmatpush1.msra.mxu0 0.0
        %2877 = vmatprep.subr.mxu0 0.0
        %2878 = vmatpush1.msra.mxu0 0.0
        %2879 = vmatprep.subr.mxu0 0.0
        %2880 = vmatpush1.msra.mxu0 0.0
        %2881 = vmatprep.subr.mxu0 0.0
        %2882 = vmatpush1.msra.mxu0 0.0
        %2883 = vmatprep.subr.mxu0 0.0
        %2884 = vmatpush1.msra.mxu0 0.0
        %2885 = vmatprep.subr.mxu0 0.0
        %2886 = vmatpush1.msra.mxu0 0.0
        %2887 = vmatprep.mubr.f32.mxu0 0.0
        %2888 = vmatmul.mubr.f32.gmra.mrb[0].mxu0 %v2818
        %v2889 = vpop.f32.mrb[0].mxu0
        %v2890 = vadd.f32 0.0, %v2889
        %v2891 = vpop.f32.mrb[0].mxu0
        %2892 = vmatprep.mubr.f32.mxu0 0.0
        %2893 = vmatmul.mubr.f32.gmra.mrb[0].mxu0 %v2821
        %v2894 = vpop.f32.mrb[0].mxu0
        %v2895 = vadd.f32 0.0, %v2894
        %v2896 = vpop.f32.mrb[0].mxu0
        %2897 = vdwg.mxu0
        %v2898 = vadd.f32 %v2813, %v2890
        %v2899 = vadd.f32 %v2814, %v2895
        %v2900 = vld [vmem:[%s2301 + $0x1] sm:$0xff]
        %v2901 = vld [vmem:[%s2301 + $0x9] sm:$0xff]
        %v2903 = vsel %vm218, %v2900, 0
        %v2906 = vsel %vm218, %v2901, 0
        %2908 = vmatprep.subr.mxu0 0.0
        %2909 = vmatpush1.msra.mxu0 %v576
        %2910 = vmatprep.subr.mxu0 0.0
        %2911 = vmatpush1.msra.mxu0 0.0
        %2912 = vmatprep.subr.mxu0 0.0
        %2913 = vmatpush1.msra.mxu0 0.0
        %2914 = vmatprep.subr.mxu0 0.0
        %2915 = vmatpush1.msra.mxu0 0.0
        %2916 = vmatprep.subr.mxu0 0.0
        %2917 = vmatpush1.msra.mxu0 0.0
        %2918 = vmatprep.subr.mxu0 0.0
        %2919 = vmatpush1.msra.mxu0 0.0
        %2920 = vmatprep.subr.mxu0 0.0
        %2921 = vmatpush1.msra.mxu0 0.0
        %2922 = vmatprep.subr.mxu0 0.0
        %2923 = vmatpush1.msra.mxu0 0.0
        %2924 = vmatprep.subr.mxu0 0.0
        %2925 = vmatpush1.msra.mxu0 0.0
        %2926 = vmatprep.subr.mxu0 0.0
        %2927 = vmatpush1.msra.mxu0 0.0
        %2928 = vmatprep.subr.mxu0 0.0
        %2929 = vmatpush1.msra.mxu0 0.0
        %2930 = vmatprep.subr.mxu0 0.0
        %2931 = vmatpush1.msra.mxu0 0.0
        %2932 = vmatprep.subr.mxu0 0.0
        %2933 = vmatpush1.msra.mxu0 0.0
        %2934 = vmatprep.subr.mxu0 0.0
        %2935 = vmatpush1.msra.mxu0 0.0
        %2936 = vmatprep.subr.mxu0 0.0
        %2937 = vmatpush1.msra.mxu0 0.0
        %2938 = vmatprep.subr.mxu0 0.0
        %2939 = vmatpush1.msra.mxu0 0.0
        %2940 = vmatprep.subr.mxu0 0.0
        %2941 = vmatpush1.msra.mxu0 0.0
        %2942 = vmatprep.subr.mxu0 0.0
        %2943 = vmatpush1.msra.mxu0 0.0
        %2944 = vmatprep.subr.mxu0 0.0
        %2945 = vmatpush1.msra.mxu0 0.0
        %2946 = vmatprep.subr.mxu0 0.0
        %2947 = vmatpush1.msra.mxu0 0.0
        %2948 = vmatprep.subr.mxu0 0.0
        %2949 = vmatpush1.msra.mxu0 0.0
        %2950 = vmatprep.subr.mxu0 0.0
        %2951 = vmatpush1.msra.mxu0 0.0
        %2952 = vmatprep.subr.mxu0 0.0
        %2953 = vmatpush1.msra.mxu0 0.0
        %2954 = vmatprep.subr.mxu0 0.0
        %2955 = vmatpush1.msra.mxu0 0.0
        %2956 = vmatprep.subr.mxu0 0.0
        %2957 = vmatpush1.msra.mxu0 0.0
        %2958 = vmatprep.subr.mxu0 0.0
        %2959 = vmatpush1.msra.mxu0 0.0
        %2960 = vmatprep.subr.mxu0 0.0
        %2961 = vmatpush1.msra.mxu0 0.0
        %2962 = vmatprep.subr.mxu0 0.0
        %2963 = vmatpush1.msra.mxu0 0.0
        %2964 = vmatprep.subr.mxu0 0.0
        %2965 = vmatpush1.msra.mxu0 0.0
        %2966 = vmatprep.subr.mxu0 0.0
        %2967 = vmatpush1.msra.mxu0 0.0
        %2968 = vmatprep.subr.mxu0 0.0
        %2969 = vmatpush1.msra.mxu0 0.0
        %2970 = vmatprep.subr.mxu0 0.0
        %2971 = vmatpush1.msra.mxu0 0.0
        %2972 = vmatprep.mubr.f32.mxu0 0.0
        %2973 = vmatmul.mubr.f32.gmra.mrb[0].mxu0 %v2903
        %v2974 = vpop.f32.mrb[0].mxu0
        %v2975 = vadd.f32 0.0, %v2974
        %v2976 = vpop.f32.mrb[0].mxu0
        %2977 = vmatprep.mubr.f32.mxu0 0.0
        %2978 = vmatmul.mubr.f32.gmra.mrb[0].mxu0 %v2906
        %v2979 = vpop.f32.mrb[0].mxu0
        %v2980 = vadd.f32 0.0, %v2979
        %v2981 = vpop.f32.mrb[0].mxu0
        %2982 = vdwg.mxu0
        %v2983 = vadd.f32 %v2898, %v2975
        %v2984 = vadd.f32 %v2899, %v2980
        %v2985 = vld [vmem:[%s2301 + $0x2] sm:$0xff]
        %v2986 = vld [vmem:[%s2301 + $0xa] sm:$0xff]
        %v2988 = vsel %vm218, %v2985, 0
        %v2991 = vsel %vm218, %v2986, 0
        %2993 = vmatprep.subr.mxu0 0.0
        %2994 = vmatpush1.msra.mxu0 %v664
        %2995 = vmatprep.subr.mxu0 0.0
        %2996 = vmatpush1.msra.mxu0 0.0
        %2997 = vmatprep.subr.mxu0 0.0
        %2998 = vmatpush1.msra.mxu0 0.0
        %2999 = vmatprep.subr.mxu0 0.0
        %3000 = vmatpush1.msra.mxu0 0.0
        %3001 = vmatprep.subr.mxu0 0.0
        %3002 = vmatpush1.msra.mxu0 0.0
        %3003 = vmatprep.subr.mxu0 0.0
        %3004 = vmatpush1.msra.mxu0 0.0
        %3005 = vmatprep.subr.mxu0 0.0
        %3006 = vmatpush1.msra.mxu0 0.0
        %3007 = vmatprep.subr.mxu0 0.0
        %3008 = vmatpush1.msra.mxu0 0.0
        %3009 = vmatprep.subr.mxu0 0.0
        %3010 = vmatpush1.msra.mxu0 0.0
        %3011 = vmatprep.subr.mxu0 0.0
        %3012 = vmatpush1.msra.mxu0 0.0
        %3013 = vmatprep.subr.mxu0 0.0
        %3014 = vmatpush1.msra.mxu0 0.0
        %3015 = vmatprep.subr.mxu0 0.0
        %3016 = vmatpush1.msra.mxu0 0.0
        %3017 = vmatprep.subr.mxu0 0.0
        %3018 = vmatpush1.msra.mxu0 0.0
        %3019 = vmatprep.subr.mxu0 0.0
        %3020 = vmatpush1.msra.mxu0 0.0
        %3021 = vmatprep.subr.mxu0 0.0
        %3022 = vmatpush1.msra.mxu0 0.0
        %3023 = vmatprep.subr.mxu0 0.0
        %3024 = vmatpush1.msra.mxu0 0.0
        %3025 = vmatprep.subr.mxu0 0.0
        %3026 = vmatpush1.msra.mxu0 0.0
        %3027 = vmatprep.subr.mxu0 0.0
        %3028 = vmatpush1.msra.mxu0 0.0
        %3029 = vmatprep.subr.mxu0 0.0
        %3030 = vmatpush1.msra.mxu0 0.0
        %3031 = vmatprep.subr.mxu0 0.0
        %3032 = vmatpush1.msra.mxu0 0.0
        %3033 = vmatprep.subr.mxu0 0.0
        %3034 = vmatpush1.msra.mxu0 0.0
        %3035 = vmatprep.subr.mxu0 0.0
        %3036 = vmatpush1.msra.mxu0 0.0
        %3037 = vmatprep.subr.mxu0 0.0
        %3038 = vmatpush1.msra.mxu0 0.0
        %3039 = vmatprep.subr.mxu0 0.0
        %3040 = vmatpush1.msra.mxu0 0.0
        %3041 = vmatprep.subr.mxu0 0.0
        %3042 = vmatpush1.msra.mxu0 0.0
        %3043 = vmatprep.subr.mxu0 0.0
        %3044 = vmatpush1.msra.mxu0 0.0
        %3045 = vmatprep.subr.mxu0 0.0
        %3046 = vmatpush1.msra.mxu0 0.0
        %3047 = vmatprep.subr.mxu0 0.0
        %3048 = vmatpush1.msra.mxu0 0.0
        %3049 = vmatprep.subr.mxu0 0.0
        %3050 = vmatpush1.msra.mxu0 0.0
        %3051 = vmatprep.subr.mxu0 0.0
        %3052 = vmatpush1.msra.mxu0 0.0
        %3053 = vmatprep.subr.mxu0 0.0
        %3054 = vmatpush1.msra.mxu0 0.0
        %3055 = vmatprep.subr.mxu0 0.0
        %3056 = vmatpush1.msra.mxu0 0.0
        %3057 = vmatprep.mubr.f32.mxu0 0.0
        %3058 = vmatmul.mubr.f32.gmra.mrb[0].mxu0 %v2988
        %v3059 = vpop.f32.mrb[0].mxu0
        %v3060 = vadd.f32 0.0, %v3059
        %v3061 = vpop.f32.mrb[0].mxu0
        %3062 = vmatprep.mubr.f32.mxu0 0.0
        %3063 = vmatmul.mubr.f32.gmra.mrb[0].mxu0 %v2991
        %v3064 = vpop.f32.mrb[0].mxu0
        %v3065 = vadd.f32 0.0, %v3064
        %v3066 = vpop.f32.mrb[0].mxu0
        %3067 = vdwg.mxu0
        %v3068 = vadd.f32 %v2983, %v3060
        %v3069 = vadd.f32 %v2984, %v3065
        %s3070 = sadd.s32 %s193, 5
        %s3071 = smul.u32 %s3070, 24
        %s3072 = scalar_lea.vmem %s188, %s3071
        %v3073 = vld [vmem:[%s3072] sm:$0xff]
        %v3074 = vld [vmem:[%s3072 + $0x8] sm:$0xff]
        %v3076 = vsel %vm218, %v3073, 0
        %v3079 = vsel %vm218, %v3074, 0
        %3081 = vmatprep.subr.mxu0 0.0
        %3082 = vmatpush1.msra.mxu0 %v755
        %3083 = vmatprep.subr.mxu0 0.0
        %3084 = vmatpush1.msra.mxu0 0.0
        %3085 = vmatprep.subr.mxu0 0.0
        %3086 = vmatpush1.msra.mxu0 0.0
        %3087 = vmatprep.subr.mxu0 0.0
        %3088 = vmatpush1.msra.mxu0 0.0
        %3089 = vmatprep.subr.mxu0 0.0
        %3090 = vmatpush1.msra.mxu0 0.0
        %3091 = vmatprep.subr.mxu0 0.0
        %3092 = vmatpush1.msra.mxu0 0.0
        %3093 = vmatprep.subr.mxu0 0.0
        %3094 = vmatpush1.msra.mxu0 0.0
        %3095 = vmatprep.subr.mxu0 0.0
        %3096 = vmatpush1.msra.mxu0 0.0
        %3097 = vmatprep.subr.mxu0 0.0
        %3098 = vmatpush1.msra.mxu0 0.0
        %3099 = vmatprep.subr.mxu0 0.0
        %3100 = vmatpush1.msra.mxu0 0.0
        %3101 = vmatprep.subr.mxu0 0.0
        %3102 = vmatpush1.msra.mxu0 0.0
        %3103 = vmatprep.subr.mxu0 0.0
        %3104 = vmatpush1.msra.mxu0 0.0
        %3105 = vmatprep.subr.mxu0 0.0
        %3106 = vmatpush1.msra.mxu0 0.0
        %3107 = vmatprep.subr.mxu0 0.0
        %3108 = vmatpush1.msra.mxu0 0.0
        %3109 = vmatprep.subr.mxu0 0.0
        %3110 = vmatpush1.msra.mxu0 0.0
        %3111 = vmatprep.subr.mxu0 0.0
        %3112 = vmatpush1.msra.mxu0 0.0
        %3113 = vmatprep.subr.mxu0 0.0
        %3114 = vmatpush1.msra.mxu0 0.0
        %3115 = vmatprep.subr.mxu0 0.0
        %3116 = vmatpush1.msra.mxu0 0.0
        %3117 = vmatprep.subr.mxu0 0.0
        %3118 = vmatpush1.msra.mxu0 0.0
        %3119 = vmatprep.subr.mxu0 0.0
        %3120 = vmatpush1.msra.mxu0 0.0
        %3121 = vmatprep.subr.mxu0 0.0
        %3122 = vmatpush1.msra.mxu0 0.0
        %3123 = vmatprep.subr.mxu0 0.0
        %3124 = vmatpush1.msra.mxu0 0.0
        %3125 = vmatprep.subr.mxu0 0.0
        %3126 = vmatpush1.msra.mxu0 0.0
        %3127 = vmatprep.subr.mxu0 0.0
        %3128 = vmatpush1.msra.mxu0 0.0
        %3129 = vmatprep.subr.mxu0 0.0
        %3130 = vmatpush1.msra.mxu0 0.0
        %3131 = vmatprep.subr.mxu0 0.0
        %3132 = vmatpush1.msra.mxu0 0.0
        %3133 = vmatprep.subr.mxu0 0.0
        %3134 = vmatpush1.msra.mxu0 0.0
        %3135 = vmatprep.subr.mxu0 0.0
        %3136 = vmatpush1.msra.mxu0 0.0
        %3137 = vmatprep.subr.mxu0 0.0
        %3138 = vmatpush1.msra.mxu0 0.0
        %3139 = vmatprep.subr.mxu0 0.0
        %3140 = vmatpush1.msra.mxu0 0.0
        %3141 = vmatprep.subr.mxu0 0.0
        %3142 = vmatpush1.msra.mxu0 0.0
        %3143 = vmatprep.subr.mxu0 0.0
        %3144 = vmatpush1.msra.mxu0 0.0
        %3145 = vmatprep.mubr.f32.mxu0 0.0
        %3146 = vmatmul.mubr.f32.gmra.mrb[0].mxu0 %v3076
        %v3147 = vpop.f32.mrb[0].mxu0
        %v3148 = vadd.f32 0.0, %v3147
        %v3149 = vpop.f32.mrb[0].mxu0
        %3150 = vmatprep.mubr.f32.mxu0 0.0
        %3151 = vmatmul.mubr.f32.gmra.mrb[0].mxu0 %v3079
        %v3152 = vpop.f32.mrb[0].mxu0
        %v3153 = vadd.f32 0.0, %v3152
        %v3154 = vpop.f32.mrb[0].mxu0
        %3155 = vdwg.mxu0
        %v3156 = vadd.f32 %v3068, %v3148
        %v3157 = vadd.f32 %v3069, %v3153
        %v3158 = vld [vmem:[%s3072 + $0x1] sm:$0xff]
        %v3159 = vld [vmem:[%s3072 + $0x9] sm:$0xff]
        %v3161 = vsel %vm218, %v3158, 0
        %v3164 = vsel %vm218, %v3159, 0
        %3166 = vmatprep.subr.mxu0 0.0
        %3167 = vmatpush1.msra.mxu0 %v843
        %3168 = vmatprep.subr.mxu0 0.0
        %3169 = vmatpush1.msra.mxu0 0.0
        %3170 = vmatprep.subr.mxu0 0.0
        %3171 = vmatpush1.msra.mxu0 0.0
        %3172 = vmatprep.subr.mxu0 0.0
        %3173 = vmatpush1.msra.mxu0 0.0
        %3174 = vmatprep.subr.mxu0 0.0
        %3175 = vmatpush1.msra.mxu0 0.0
        %3176 = vmatprep.subr.mxu0 0.0
        %3177 = vmatpush1.msra.mxu0 0.0
        %3178 = vmatprep.subr.mxu0 0.0
        %3179 = vmatpush1.msra.mxu0 0.0
        %3180 = vmatprep.subr.mxu0 0.0
        %3181 = vmatpush1.msra.mxu0 0.0
        %3182 = vmatprep.subr.mxu0 0.0
        %3183 = vmatpush1.msra.mxu0 0.0
        %3184 = vmatprep.subr.mxu0 0.0
        %3185 = vmatpush1.msra.mxu0 0.0
        %3186 = vmatprep.subr.mxu0 0.0
        %3187 = vmatpush1.msra.mxu0 0.0
        %3188 = vmatprep.subr.mxu0 0.0
        %3189 = vmatpush1.msra.mxu0 0.0
        %3190 = vmatprep.subr.mxu0 0.0
        %3191 = vmatpush1.msra.mxu0 0.0
        %3192 = vmatprep.subr.mxu0 0.0
        %3193 = vmatpush1.msra.mxu0 0.0
        %3194 = vmatprep.subr.mxu0 0.0
        %3195 = vmatpush1.msra.mxu0 0.0
        %3196 = vmatprep.subr.mxu0 0.0
        %3197 = vmatpush1.msra.mxu0 0.0
        %3198 = vmatprep.subr.mxu0 0.0
        %3199 = vmatpush1.msra.mxu0 0.0
        %3200 = vmatprep.subr.mxu0 0.0
        %3201 = vmatpush1.msra.mxu0 0.0
        %3202 = vmatprep.subr.mxu0 0.0
        %3203 = vmatpush1.msra.mxu0 0.0
        %3204 = vmatprep.subr.mxu0 0.0
        %3205 = vmatpush1.msra.mxu0 0.0
        %3206 = vmatprep.subr.mxu0 0.0
        %3207 = vmatpush1.msra.mxu0 0.0
        %3208 = vmatprep.subr.mxu0 0.0
        %3209 = vmatpush1.msra.mxu0 0.0
        %3210 = vmatprep.subr.mxu0 0.0
        %3211 = vmatpush1.msra.mxu0 0.0
        %3212 = vmatprep.subr.mxu0 0.0
        %3213 = vmatpush1.msra.mxu0 0.0
        %3214 = vmatprep.subr.mxu0 0.0
        %3215 = vmatpush1.msra.mxu0 0.0
        %3216 = vmatprep.subr.mxu0 0.0
        %3217 = vmatpush1.msra.mxu0 0.0
        %3218 = vmatprep.subr.mxu0 0.0
        %3219 = vmatpush1.msra.mxu0 0.0
        %3220 = vmatprep.subr.mxu0 0.0
        %3221 = vmatpush1.msra.mxu0 0.0
        %3222 = vmatprep.subr.mxu0 0.0
        %3223 = vmatpush1.msra.mxu0 0.0
        %3224 = vmatprep.subr.mxu0 0.0
        %3225 = vmatpush1.msra.mxu0 0.0
        %3226 = vmatprep.subr.mxu0 0.0
        %3227 = vmatpush1.msra.mxu0 0.0
        %3228 = vmatprep.subr.mxu0 0.0
        %3229 = vmatpush1.msra.mxu0 0.0
        %3230 = vmatprep.mubr.f32.mxu0 0.0
        %3231 = vmatmul.mubr.f32.gmra.mrb[0].mxu0 %v3161
        %v3232 = vpop.f32.mrb[0].mxu0
        %v3233 = vadd.f32 0.0, %v3232
        %v3234 = vpop.f32.mrb[0].mxu0
        %3235 = vmatprep.mubr.f32.mxu0 0.0
        %3236 = vmatmul.mubr.f32.gmra.mrb[0].mxu0 %v3164
        %v3237 = vpop.f32.mrb[0].mxu0
        %v3238 = vadd.f32 0.0, %v3237
        %v3239 = vpop.f32.mrb[0].mxu0
        %3240 = vdwg.mxu0
        %v3241 = vadd.f32 %v3156, %v3233
        %v3242 = vadd.f32 %v3157, %v3238
        %v3243 = vld [vmem:[%s3072 + $0x2] sm:$0xff]
        %v3244 = vld [vmem:[%s3072 + $0xa] sm:$0xff]
        %v3246 = vsel %vm218, %v3243, 0
        %v3249 = vsel %vm218, %v3244, 0
        %3251 = vmatprep.subr.mxu0 0.0
        %3252 = vmatpush1.msra.mxu0 %v931
        %3253 = vmatprep.subr.mxu0 0.0
        %3254 = vmatpush1.msra.mxu0 0.0
        %3255 = vmatprep.subr.mxu0 0.0
        %3256 = vmatpush1.msra.mxu0 0.0
        %3257 = vmatprep.subr.mxu0 0.0
        %3258 = vmatpush1.msra.mxu0 0.0
        %3259 = vmatprep.subr.mxu0 0.0
        %3260 = vmatpush1.msra.mxu0 0.0
        %3261 = vmatprep.subr.mxu0 0.0
        %3262 = vmatpush1.msra.mxu0 0.0
        %3263 = vmatprep.subr.mxu0 0.0
        %3264 = vmatpush1.msra.mxu0 0.0
        %3265 = vmatprep.subr.mxu0 0.0
        %3266 = vmatpush1.msra.mxu0 0.0
        %3267 = vmatprep.subr.mxu0 0.0
        %3268 = vmatpush1.msra.mxu0 0.0
        %3269 = vmatprep.subr.mxu0 0.0
        %3270 = vmatpush1.msra.mxu0 0.0
        %3271 = vmatprep.subr.mxu0 0.0
        %3272 = vmatpush1.msra.mxu0 0.0
        %3273 = vmatprep.subr.mxu0 0.0
        %3274 = vmatpush1.msra.mxu0 0.0
        %3275 = vmatprep.subr.mxu0 0.0
        %3276 = vmatpush1.msra.mxu0 0.0
        %3277 = vmatprep.subr.mxu0 0.0
        %3278 = vmatpush1.msra.mxu0 0.0
        %3279 = vmatprep.subr.mxu0 0.0
        %3280 = vmatpush1.msra.mxu0 0.0
        %3281 = vmatprep.subr.mxu0 0.0
        %3282 = vmatpush1.msra.mxu0 0.0
        %3283 = vmatprep.subr.mxu0 0.0
        %3284 = vmatpush1.msra.mxu0 0.0
        %3285 = vmatprep.subr.mxu0 0.0
        %3286 = vmatpush1.msra.mxu0 0.0
        %3287 = vmatprep.subr.mxu0 0.0
        %3288 = vmatpush1.msra.mxu0 0.0
        %3289 = vmatprep.subr.mxu0 0.0
        %3290 = vmatpush1.msra.mxu0 0.0
        %3291 = vmatprep.subr.mxu0 0.0
        %3292 = vmatpush1.msra.mxu0 0.0
        %3293 = vmatprep.subr.mxu0 0.0
        %3294 = vmatpush1.msra.mxu0 0.0
        %3295 = vmatprep.subr.mxu0 0.0
        %3296 = vmatpush1.msra.mxu0 0.0
        %3297 = vmatprep.subr.mxu0 0.0
        %3298 = vmatpush1.msra.mxu0 0.0
        %3299 = vmatprep.subr.mxu0 0.0
        %3300 = vmatpush1.msra.mxu0 0.0
        %3301 = vmatprep.subr.mxu0 0.0
        %3302 = vmatpush1.msra.mxu0 0.0
        %3303 = vmatprep.subr.mxu0 0.0
        %3304 = vmatpush1.msra.mxu0 0.0
        %3305 = vmatprep.subr.mxu0 0.0
        %3306 = vmatpush1.msra.mxu0 0.0
        %3307 = vmatprep.subr.mxu0 0.0
        %3308 = vmatpush1.msra.mxu0 0.0
        %3309 = vmatprep.subr.mxu0 0.0
        %3310 = vmatpush1.msra.mxu0 0.0
        %3311 = vmatprep.subr.mxu0 0.0
        %3312 = vmatpush1.msra.mxu0 0.0
        %3313 = vmatprep.subr.mxu0 0.0
        %3314 = vmatpush1.msra.mxu0 0.0
        %3315 = vmatprep.mubr.f32.mxu0 0.0
        %3316 = vmatmul.mubr.f32.gmra.mrb[0].mxu0 %v3246
        %v3317 = vpop.f32.mrb[0].mxu0
        %v3318 = vadd.f32 0.0, %v3317
        %v3319 = vpop.f32.mrb[0].mxu0
        %3320 = vmatprep.mubr.f32.mxu0 0.0
        %3321 = vmatmul.mubr.f32.gmra.mrb[0].mxu0 %v3249
        %v3322 = vpop.f32.mrb[0].mxu0
        %v3323 = vadd.f32 0.0, %v3322
        %v3324 = vpop.f32.mrb[0].mxu0
        %3325 = vdwg.mxu0
        %v3326 = vadd.f32 %v3241, %v3318
        %v3327 = vadd.f32 %v3242, %v3323
        %v3328 = vadd.f32 %v3326, %v1014
        %v3329 = vadd.f32 %v3327, %v1014
        %v3330 = vmax.f32 %v3328, 0.0
        %v3331 = vmax.f32 %v3329, 0.0
        %s3332 = scalar_lea.vmem %s182, 48 [#allocation2]
        %3333 = vst [vmem:[%s3332] sm:$0xff] %v3330
        %3334 = vst [vmem:[%s3332 + $0x8] sm:$0xff] %v3331
        %v3335 = vld [vmem:[%s2301] sm:$0xff]
        %v3336 = vld [vmem:[%s2301 + $0x8] sm:$0xff]
        %v3337 = vld [vmem:[%s2301 + $0x1] sm:$0xff]
        %v3338 = vld [vmem:[%s2301 + $0x9] sm:$0xff]
        %v3340 = vsel %vm218, %v3337, 0
        %v3343 = vsel %vm218, %v3338, 0
        %3345 = vmatprep.subr.mxu0 0.0
        %3346 = vmatpush1.msra.mxu0 %v227
        %3347 = vmatprep.subr.mxu0 0.0
        %3348 = vmatpush1.msra.mxu0 0.0
        %3349 = vmatprep.subr.mxu0 0.0
        %3350 = vmatpush1.msra.mxu0 0.0
        %3351 = vmatprep.subr.mxu0 0.0
        %3352 = vmatpush1.msra.mxu0 0.0
        %3353 = vmatprep.subr.mxu0 0.0
        %3354 = vmatpush1.msra.mxu0 0.0
        %3355 = vmatprep.subr.mxu0 0.0
        %3356 = vmatpush1.msra.mxu0 0.0
        %3357 = vmatprep.subr.mxu0 0.0
        %3358 = vmatpush1.msra.mxu0 0.0
        %3359 = vmatprep.subr.mxu0 0.0
        %3360 = vmatpush1.msra.mxu0 0.0
        %3361 = vmatprep.subr.mxu0 0.0
        %3362 = vmatpush1.msra.mxu0 0.0
        %3363 = vmatprep.subr.mxu0 0.0
        %3364 = vmatpush1.msra.mxu0 0.0
        %3365 = vmatprep.subr.mxu0 0.0
        %3366 = vmatpush1.msra.mxu0 0.0
        %3367 = vmatprep.subr.mxu0 0.0
        %3368 = vmatpush1.msra.mxu0 0.0
        %3369 = vmatprep.subr.mxu0 0.0
        %3370 = vmatpush1.msra.mxu0 0.0
        %3371 = vmatprep.subr.mxu0 0.0
        %3372 = vmatpush1.msra.mxu0 0.0
        %3373 = vmatprep.subr.mxu0 0.0
        %3374 = vmatpush1.msra.mxu0 0.0
        %3375 = vmatprep.subr.mxu0 0.0
        %3376 = vmatpush1.msra.mxu0 0.0
        %3377 = vmatprep.subr.mxu0 0.0
        %3378 = vmatpush1.msra.mxu0 0.0
        %3379 = vmatprep.subr.mxu0 0.0
        %3380 = vmatpush1.msra.mxu0 0.0
        %3381 = vmatprep.subr.mxu0 0.0
        %3382 = vmatpush1.msra.mxu0 0.0
        %3383 = vmatprep.subr.mxu0 0.0
        %3384 = vmatpush1.msra.mxu0 0.0
        %3385 = vmatprep.subr.mxu0 0.0
        %3386 = vmatpush1.msra.mxu0 0.0
        %3387 = vmatprep.subr.mxu0 0.0
        %3388 = vmatpush1.msra.mxu0 0.0
        %3389 = vmatprep.subr.mxu0 0.0
        %3390 = vmatpush1.msra.mxu0 0.0
        %3391 = vmatprep.subr.mxu0 0.0
        %3392 = vmatpush1.msra.mxu0 0.0
        %3393 = vmatprep.subr.mxu0 0.0
        %3394 = vmatpush1.msra.mxu0 0.0
        %3395 = vmatprep.subr.mxu0 0.0
        %3396 = vmatpush1.msra.mxu0 0.0
        %3397 = vmatprep.subr.mxu0 0.0
        %3398 = vmatpush1.msra.mxu0 0.0
        %3399 = vmatprep.subr.mxu0 0.0
        %3400 = vmatpush1.msra.mxu0 0.0
        %3401 = vmatprep.subr.mxu0 0.0
        %3402 = vmatpush1.msra.mxu0 0.0
        %3403 = vmatprep.subr.mxu0 0.0
        %3404 = vmatpush1.msra.mxu0 0.0
        %3405 = vmatprep.subr.mxu0 0.0
        %3406 = vmatpush1.msra.mxu0 0.0
        %3407 = vmatprep.subr.mxu0 0.0
        %3408 = vmatpush1.msra.mxu0 0.0
        %3409 = vmatprep.mubr.f32.mxu0 0.0
        %3410 = vmatmul.mubr.f32.gmra.mrb[0].mxu0 %v3340
        %v3411 = vpop.f32.mrb[0].mxu0
        %v3412 = vadd.f32 0.0, %v3411
        %v3413 = vpop.f32.mrb[0].mxu0
        %3414 = vmatprep.mubr.f32.mxu0 0.0
        %3415 = vmatmul.mubr.f32.gmra.mrb[0].mxu0 %v3343
        %v3416 = vpop.f32.mrb[0].mxu0
        %v3417 = vadd.f32 0.0, %v3416
        %v3418 = vpop.f32.mrb[0].mxu0
        %3419 = vdwg.mxu0
        %v3421 = vsel %vm218, %v3335, 0
        %v3424 = vsel %vm218, %v3336, 0
        %3426 = vmatprep.subr.mxu0 0.0
        %3427 = vmatpush1.msra.mxu0 %v311
        %3428 = vmatprep.subr.mxu0 0.0
        %3429 = vmatpush1.msra.mxu0 0.0
        %3430 = vmatprep.subr.mxu0 0.0
        %3431 = vmatpush1.msra.mxu0 0.0
        %3432 = vmatprep.subr.mxu0 0.0
        %3433 = vmatpush1.msra.mxu0 0.0
        %3434 = vmatprep.subr.mxu0 0.0
        %3435 = vmatpush1.msra.mxu0 0.0
        %3436 = vmatprep.subr.mxu0 0.0
        %3437 = vmatpush1.msra.mxu0 0.0
        %3438 = vmatprep.subr.mxu0 0.0
        %3439 = vmatpush1.msra.mxu0 0.0
        %3440 = vmatprep.subr.mxu0 0.0
        %3441 = vmatpush1.msra.mxu0 0.0
        %3442 = vmatprep.subr.mxu0 0.0
        %3443 = vmatpush1.msra.mxu0 0.0
        %3444 = vmatprep.subr.mxu0 0.0
        %3445 = vmatpush1.msra.mxu0 0.0
        %3446 = vmatprep.subr.mxu0 0.0
        %3447 = vmatpush1.msra.mxu0 0.0
        %3448 = vmatprep.subr.mxu0 0.0
        %3449 = vmatpush1.msra.mxu0 0.0
        %3450 = vmatprep.subr.mxu0 0.0
        %3451 = vmatpush1.msra.mxu0 0.0
        %3452 = vmatprep.subr.mxu0 0.0
        %3453 = vmatpush1.msra.mxu0 0.0
        %3454 = vmatprep.subr.mxu0 0.0
        %3455 = vmatpush1.msra.mxu0 0.0
        %3456 = vmatprep.subr.mxu0 0.0
        %3457 = vmatpush1.msra.mxu0 0.0
        %3458 = vmatprep.subr.mxu0 0.0
        %3459 = vmatpush1.msra.mxu0 0.0
        %3460 = vmatprep.subr.mxu0 0.0
        %3461 = vmatpush1.msra.mxu0 0.0
        %3462 = vmatprep.subr.mxu0 0.0
        %3463 = vmatpush1.msra.mxu0 0.0
        %3464 = vmatprep.subr.mxu0 0.0
        %3465 = vmatpush1.msra.mxu0 0.0
        %3466 = vmatprep.subr.mxu0 0.0
        %3467 = vmatpush1.msra.mxu0 0.0
        %3468 = vmatprep.subr.mxu0 0.0
        %3469 = vmatpush1.msra.mxu0 0.0
        %3470 = vmatprep.subr.mxu0 0.0
        %3471 = vmatpush1.msra.mxu0 0.0
        %3472 = vmatprep.subr.mxu0 0.0
        %3473 = vmatpush1.msra.mxu0 0.0
        %3474 = vmatprep.subr.mxu0 0.0
        %3475 = vmatpush1.msra.mxu0 0.0
        %3476 = vmatprep.subr.mxu0 0.0
        %3477 = vmatpush1.msra.mxu0 0.0
        %3478 = vmatprep.subr.mxu0 0.0
        %3479 = vmatpush1.msra.mxu0 0.0
        %3480 = vmatprep.subr.mxu0 0.0
        %3481 = vmatpush1.msra.mxu0 0.0
        %3482 = vmatprep.subr.mxu0 0.0
        %3483 = vmatpush1.msra.mxu0 0.0
        %3484 = vmatprep.subr.mxu0 0.0
        %3485 = vmatpush1.msra.mxu0 0.0
        %3486 = vmatprep.subr.mxu0 0.0
        %3487 = vmatpush1.msra.mxu0 0.0
        %3488 = vmatprep.subr.mxu0 0.0
        %3489 = vmatpush1.msra.mxu0 0.0
        %3490 = vmatprep.mubr.f32.mxu0 0.0
        %3491 = vmatmul.mubr.f32.gmra.mrb[0].mxu0 %v3421
        %v3492 = vpop.f32.mrb[0].mxu0
        %v3493 = vadd.f32 %v3412, %v3492
        %v3494 = vpop.f32.mrb[0].mxu0
        %3495 = vmatprep.mubr.f32.mxu0 0.0
        %3496 = vmatmul.mubr.f32.gmra.mrb[0].mxu0 %v3424
        %v3497 = vpop.f32.mrb[0].mxu0
        %v3498 = vadd.f32 %v3417, %v3497
        %v3499 = vpop.f32.mrb[0].mxu0
        %3500 = vdwg.mxu0
        %v3501 = vld [vmem:[%s2301 + $0x2] sm:$0xff]
        %v3502 = vld [vmem:[%s2301 + $0xa] sm:$0xff]
        %v3504 = vsel %vm218, %v3501, 0
        %v3507 = vsel %vm218, %v3502, 0
        %3509 = vmatprep.subr.mxu0 0.0
        %3510 = vmatpush1.msra.mxu0 %v397
        %3511 = vmatprep.subr.mxu0 0.0
        %3512 = vmatpush1.msra.mxu0 0.0
        %3513 = vmatprep.subr.mxu0 0.0
        %3514 = vmatpush1.msra.mxu0 0.0
        %3515 = vmatprep.subr.mxu0 0.0
        %3516 = vmatpush1.msra.mxu0 0.0
        %3517 = vmatprep.subr.mxu0 0.0
        %3518 = vmatpush1.msra.mxu0 0.0
        %3519 = vmatprep.subr.mxu0 0.0
        %3520 = vmatpush1.msra.mxu0 0.0
        %3521 = vmatprep.subr.mxu0 0.0
        %3522 = vmatpush1.msra.mxu0 0.0
        %3523 = vmatprep.subr.mxu0 0.0
        %3524 = vmatpush1.msra.mxu0 0.0
        %3525 = vmatprep.subr.mxu0 0.0
        %3526 = vmatpush1.msra.mxu0 0.0
        %3527 = vmatprep.subr.mxu0 0.0
        %3528 = vmatpush1.msra.mxu0 0.0
        %3529 = vmatprep.subr.mxu0 0.0
        %3530 = vmatpush1.msra.mxu0 0.0
        %3531 = vmatprep.subr.mxu0 0.0
        %3532 = vmatpush1.msra.mxu0 0.0
        %3533 = vmatprep.subr.mxu0 0.0
        %3534 = vmatpush1.msra.mxu0 0.0
        %3535 = vmatprep.subr.mxu0 0.0
        %3536 = vmatpush1.msra.mxu0 0.0
        %3537 = vmatprep.subr.mxu0 0.0
        %3538 = vmatpush1.msra.mxu0 0.0
        %3539 = vmatprep.subr.mxu0 0.0
        %3540 = vmatpush1.msra.mxu0 0.0
        %3541 = vmatprep.subr.mxu0 0.0
        %3542 = vmatpush1.msra.mxu0 0.0
        %3543 = vmatprep.subr.mxu0 0.0
        %3544 = vmatpush1.msra.mxu0 0.0
        %3545 = vmatprep.subr.mxu0 0.0
        %3546 = vmatpush1.msra.mxu0 0.0
        %3547 = vmatprep.subr.mxu0 0.0
        %3548 = vmatpush1.msra.mxu0 0.0
        %3549 = vmatprep.subr.mxu0 0.0
        %3550 = vmatpush1.msra.mxu0 0.0
        %3551 = vmatprep.subr.mxu0 0.0
        %3552 = vmatpush1.msra.mxu0 0.0
        %3553 = vmatprep.subr.mxu0 0.0
        %3554 = vmatpush1.msra.mxu0 0.0
        %3555 = vmatprep.subr.mxu0 0.0
        %3556 = vmatpush1.msra.mxu0 0.0
        %3557 = vmatprep.subr.mxu0 0.0
        %3558 = vmatpush1.msra.mxu0 0.0
        %3559 = vmatprep.subr.mxu0 0.0
        %3560 = vmatpush1.msra.mxu0 0.0
        %3561 = vmatprep.subr.mxu0 0.0
        %3562 = vmatpush1.msra.mxu0 0.0
        %3563 = vmatprep.subr.mxu0 0.0
        %3564 = vmatpush1.msra.mxu0 0.0
        %3565 = vmatprep.subr.mxu0 0.0
        %3566 = vmatpush1.msra.mxu0 0.0
        %3567 = vmatprep.subr.mxu0 0.0
        %3568 = vmatpush1.msra.mxu0 0.0
        %3569 = vmatprep.subr.mxu0 0.0
        %3570 = vmatpush1.msra.mxu0 0.0
        %3571 = vmatprep.subr.mxu0 0.0
        %3572 = vmatpush1.msra.mxu0 0.0
        %3573 = vmatprep.mubr.f32.mxu0 0.0
        %3574 = vmatmul.mubr.f32.gmra.mrb[0].mxu0 %v3504
        %v3575 = vpop.f32.mrb[0].mxu0
        %v3576 = vadd.f32 0.0, %v3575
        %v3577 = vpop.f32.mrb[0].mxu0
        %3578 = vmatprep.mubr.f32.mxu0 0.0
        %3579 = vmatmul.mubr.f32.gmra.mrb[0].mxu0 %v3507
        %v3580 = vpop.f32.mrb[0].mxu0
        %v3581 = vadd.f32 0.0, %v3580
        %v3582 = vpop.f32.mrb[0].mxu0
        %3583 = vdwg.mxu0
        %v3584 = vadd.f32 %v3493, %v3576
        %v3585 = vadd.f32 %v3498, %v3581
        %v3586 = vld [vmem:[%s3072] sm:$0xff]
        %v3587 = vld [vmem:[%s3072 + $0x8] sm:$0xff]
        %v3589 = vsel %vm218, %v3586, 0
        %v3592 = vsel %vm218, %v3587, 0
        %3594 = vmatprep.subr.mxu0 0.0
        %3595 = vmatpush1.msra.mxu0 %v488
        %3596 = vmatprep.subr.mxu0 0.0
        %3597 = vmatpush1.msra.mxu0 0.0
        %3598 = vmatprep.subr.mxu0 0.0
        %3599 = vmatpush1.msra.mxu0 0.0
        %3600 = vmatprep.subr.mxu0 0.0
        %3601 = vmatpush1.msra.mxu0 0.0
        %3602 = vmatprep.subr.mxu0 0.0
        %3603 = vmatpush1.msra.mxu0 0.0
        %3604 = vmatprep.subr.mxu0 0.0
        %3605 = vmatpush1.msra.mxu0 0.0
        %3606 = vmatprep.subr.mxu0 0.0
        %3607 = vmatpush1.msra.mxu0 0.0
        %3608 = vmatprep.subr.mxu0 0.0
        %3609 = vmatpush1.msra.mxu0 0.0
        %3610 = vmatprep.subr.mxu0 0.0
        %3611 = vmatpush1.msra.mxu0 0.0
        %3612 = vmatprep.subr.mxu0 0.0
        %3613 = vmatpush1.msra.mxu0 0.0
        %3614 = vmatprep.subr.mxu0 0.0
        %3615 = vmatpush1.msra.mxu0 0.0
        %3616 = vmatprep.subr.mxu0 0.0
        %3617 = vmatpush1.msra.mxu0 0.0
        %3618 = vmatprep.subr.mxu0 0.0
        %3619 = vmatpush1.msra.mxu0 0.0
        %3620 = vmatprep.subr.mxu0 0.0
        %3621 = vmatpush1.msra.mxu0 0.0
        %3622 = vmatprep.subr.mxu0 0.0
        %3623 = vmatpush1.msra.mxu0 0.0
        %3624 = vmatprep.subr.mxu0 0.0
        %3625 = vmatpush1.msra.mxu0 0.0
        %3626 = vmatprep.subr.mxu0 0.0
        %3627 = vmatpush1.msra.mxu0 0.0
        %3628 = vmatprep.subr.mxu0 0.0
        %3629 = vmatpush1.msra.mxu0 0.0
        %3630 = vmatprep.subr.mxu0 0.0
        %3631 = vmatpush1.msra.mxu0 0.0
        %3632 = vmatprep.subr.mxu0 0.0
        %3633 = vmatpush1.msra.mxu0 0.0
        %3634 = vmatprep.subr.mxu0 0.0
        %3635 = vmatpush1.msra.mxu0 0.0
        %3636 = vmatprep.subr.mxu0 0.0
        %3637 = vmatpush1.msra.mxu0 0.0
        %3638 = vmatprep.subr.mxu0 0.0
        %3639 = vmatpush1.msra.mxu0 0.0
        %3640 = vmatprep.subr.mxu0 0.0
        %3641 = vmatpush1.msra.mxu0 0.0
        %3642 = vmatprep.subr.mxu0 0.0
        %3643 = vmatpush1.msra.mxu0 0.0
        %3644 = vmatprep.subr.mxu0 0.0
        %3645 = vmatpush1.msra.mxu0 0.0
        %3646 = vmatprep.subr.mxu0 0.0
        %3647 = vmatpush1.msra.mxu0 0.0
        %3648 = vmatprep.subr.mxu0 0.0
        %3649 = vmatpush1.msra.mxu0 0.0
        %3650 = vmatprep.subr.mxu0 0.0
        %3651 = vmatpush1.msra.mxu0 0.0
        %3652 = vmatprep.subr.mxu0 0.0
        %3653 = vmatpush1.msra.mxu0 0.0
        %3654 = vmatprep.subr.mxu0 0.0
        %3655 = vmatpush1.msra.mxu0 0.0
        %3656 = vmatprep.subr.mxu0 0.0
        %3657 = vmatpush1.msra.mxu0 0.0
        %3658 = vmatprep.mubr.f32.mxu0 0.0
        %3659 = vmatmul.mubr.f32.gmra.mrb[0].mxu0 %v3589
        %v3660 = vpop.f32.mrb[0].mxu0
        %v3661 = vadd.f32 0.0, %v3660
        %v3662 = vpop.f32.mrb[0].mxu0
        %3663 = vmatprep.mubr.f32.mxu0 0.0
        %3664 = vmatmul.mubr.f32.gmra.mrb[0].mxu0 %v3592
        %v3665 = vpop.f32.mrb[0].mxu0
        %v3666 = vadd.f32 0.0, %v3665
        %v3667 = vpop.f32.mrb[0].mxu0
        %3668 = vdwg.mxu0
        %v3669 = vadd.f32 %v3584, %v3661
        %v3670 = vadd.f32 %v3585, %v3666
        %v3671 = vld [vmem:[%s3072 + $0x1] sm:$0xff]
        %v3672 = vld [vmem:[%s3072 + $0x9] sm:$0xff]
        %v3674 = vsel %vm218, %v3671, 0
        %v3677 = vsel %vm218, %v3672, 0
        %3679 = vmatprep.subr.mxu0 0.0
        %3680 = vmatpush1.msra.mxu0 %v576
        %3681 = vmatprep.subr.mxu0 0.0
        %3682 = vmatpush1.msra.mxu0 0.0
        %3683 = vmatprep.subr.mxu0 0.0
        %3684 = vmatpush1.msra.mxu0 0.0
        %3685 = vmatprep.subr.mxu0 0.0
        %3686 = vmatpush1.msra.mxu0 0.0
        %3687 = vmatprep.subr.mxu0 0.0
        %3688 = vmatpush1.msra.mxu0 0.0
        %3689 = vmatprep.subr.mxu0 0.0
        %3690 = vmatpush1.msra.mxu0 0.0
        %3691 = vmatprep.subr.mxu0 0.0
        %3692 = vmatpush1.msra.mxu0 0.0
        %3693 = vmatprep.subr.mxu0 0.0
        %3694 = vmatpush1.msra.mxu0 0.0
        %3695 = vmatprep.subr.mxu0 0.0
        %3696 = vmatpush1.msra.mxu0 0.0
        %3697 = vmatprep.subr.mxu0 0.0
        %3698 = vmatpush1.msra.mxu0 0.0
        %3699 = vmatprep.subr.mxu0 0.0
        %3700 = vmatpush1.msra.mxu0 0.0
        %3701 = vmatprep.subr.mxu0 0.0
        %3702 = vmatpush1.msra.mxu0 0.0
        %3703 = vmatprep.subr.mxu0 0.0
        %3704 = vmatpush1.msra.mxu0 0.0
        %3705 = vmatprep.subr.mxu0 0.0
        %3706 = vmatpush1.msra.mxu0 0.0
        %3707 = vmatprep.subr.mxu0 0.0
        %3708 = vmatpush1.msra.mxu0 0.0
        %3709 = vmatprep.subr.mxu0 0.0
        %3710 = vmatpush1.msra.mxu0 0.0
        %3711 = vmatprep.subr.mxu0 0.0
        %3712 = vmatpush1.msra.mxu0 0.0
        %3713 = vmatprep.subr.mxu0 0.0
        %3714 = vmatpush1.msra.mxu0 0.0
        %3715 = vmatprep.subr.mxu0 0.0
        %3716 = vmatpush1.msra.mxu0 0.0
        %3717 = vmatprep.subr.mxu0 0.0
        %3718 = vmatpush1.msra.mxu0 0.0
        %3719 = vmatprep.subr.mxu0 0.0
        %3720 = vmatpush1.msra.mxu0 0.0
        %3721 = vmatprep.subr.mxu0 0.0
        %3722 = vmatpush1.msra.mxu0 0.0
        %3723 = vmatprep.subr.mxu0 0.0
        %3724 = vmatpush1.msra.mxu0 0.0
        %3725 = vmatprep.subr.mxu0 0.0
        %3726 = vmatpush1.msra.mxu0 0.0
        %3727 = vmatprep.subr.mxu0 0.0
        %3728 = vmatpush1.msra.mxu0 0.0
        %3729 = vmatprep.subr.mxu0 0.0
        %3730 = vmatpush1.msra.mxu0 0.0
        %3731 = vmatprep.subr.mxu0 0.0
        %3732 = vmatpush1.msra.mxu0 0.0
        %3733 = vmatprep.subr.mxu0 0.0
        %3734 = vmatpush1.msra.mxu0 0.0
        %3735 = vmatprep.subr.mxu0 0.0
        %3736 = vmatpush1.msra.mxu0 0.0
        %3737 = vmatprep.subr.mxu0 0.0
        %3738 = vmatpush1.msra.mxu0 0.0
        %3739 = vmatprep.subr.mxu0 0.0
        %3740 = vmatpush1.msra.mxu0 0.0
        %3741 = vmatprep.subr.mxu0 0.0
        %3742 = vmatpush1.msra.mxu0 0.0
        %3743 = vmatprep.mubr.f32.mxu0 0.0
        %3744 = vmatmul.mubr.f32.gmra.mrb[0].mxu0 %v3674
        %v3745 = vpop.f32.mrb[0].mxu0
        %v3746 = vadd.f32 0.0, %v3745
        %v3747 = vpop.f32.mrb[0].mxu0
        %3748 = vmatprep.mubr.f32.mxu0 0.0
        %3749 = vmatmul.mubr.f32.gmra.mrb[0].mxu0 %v3677
        %v3750 = vpop.f32.mrb[0].mxu0
        %v3751 = vadd.f32 0.0, %v3750
        %v3752 = vpop.f32.mrb[0].mxu0
        %3753 = vdwg.mxu0
        %v3754 = vadd.f32 %v3669, %v3746
        %v3755 = vadd.f32 %v3670, %v3751
        %v3756 = vld [vmem:[%s3072 + $0x2] sm:$0xff]
        %v3757 = vld [vmem:[%s3072 + $0xa] sm:$0xff]
        %v3759 = vsel %vm218, %v3756, 0
        %v3762 = vsel %vm218, %v3757, 0
        %3764 = vmatprep.subr.mxu0 0.0
        %3765 = vmatpush1.msra.mxu0 %v664
        %3766 = vmatprep.subr.mxu0 0.0
        %3767 = vmatpush1.msra.mxu0 0.0
        %3768 = vmatprep.subr.mxu0 0.0
        %3769 = vmatpush1.msra.mxu0 0.0
        %3770 = vmatprep.subr.mxu0 0.0
        %3771 = vmatpush1.msra.mxu0 0.0
        %3772 = vmatprep.subr.mxu0 0.0
        %3773 = vmatpush1.msra.mxu0 0.0
        %3774 = vmatprep.subr.mxu0 0.0
        %3775 = vmatpush1.msra.mxu0 0.0
        %3776 = vmatprep.subr.mxu0 0.0
        %3777 = vmatpush1.msra.mxu0 0.0
        %3778 = vmatprep.subr.mxu0 0.0
        %3779 = vmatpush1.msra.mxu0 0.0
        %3780 = vmatprep.subr.mxu0 0.0
        %3781 = vmatpush1.msra.mxu0 0.0
        %3782 = vmatprep.subr.mxu0 0.0
        %3783 = vmatpush1.msra.mxu0 0.0
        %3784 = vmatprep.subr.mxu0 0.0
        %3785 = vmatpush1.msra.mxu0 0.0
        %3786 = vmatprep.subr.mxu0 0.0
        %3787 = vmatpush1.msra.mxu0 0.0
        %3788 = vmatprep.subr.mxu0 0.0
        %3789 = vmatpush1.msra.mxu0 0.0
        %3790 = vmatprep.subr.mxu0 0.0
        %3791 = vmatpush1.msra.mxu0 0.0
        %3792 = vmatprep.subr.mxu0 0.0
        %3793 = vmatpush1.msra.mxu0 0.0
        %3794 = vmatprep.subr.mxu0 0.0
        %3795 = vmatpush1.msra.mxu0 0.0
        %3796 = vmatprep.subr.mxu0 0.0
        %3797 = vmatpush1.msra.mxu0 0.0
        %3798 = vmatprep.subr.mxu0 0.0
        %3799 = vmatpush1.msra.mxu0 0.0
        %3800 = vmatprep.subr.mxu0 0.0
        %3801 = vmatpush1.msra.mxu0 0.0
        %3802 = vmatprep.subr.mxu0 0.0
        %3803 = vmatpush1.msra.mxu0 0.0
        %3804 = vmatprep.subr.mxu0 0.0
        %3805 = vmatpush1.msra.mxu0 0.0
        %3806 = vmatprep.subr.mxu0 0.0
        %3807 = vmatpush1.msra.mxu0 0.0
        %3808 = vmatprep.subr.mxu0 0.0
        %3809 = vmatpush1.msra.mxu0 0.0
        %3810 = vmatprep.subr.mxu0 0.0
        %3811 = vmatpush1.msra.mxu0 0.0
        %3812 = vmatprep.subr.mxu0 0.0
        %3813 = vmatpush1.msra.mxu0 0.0
        %3814 = vmatprep.subr.mxu0 0.0
        %3815 = vmatpush1.msra.mxu0 0.0
        %3816 = vmatprep.subr.mxu0 0.0
        %3817 = vmatpush1.msra.mxu0 0.0
        %3818 = vmatprep.subr.mxu0 0.0
        %3819 = vmatpush1.msra.mxu0 0.0
        %3820 = vmatprep.subr.mxu0 0.0
        %3821 = vmatpush1.msra.mxu0 0.0
        %3822 = vmatprep.subr.mxu0 0.0
        %3823 = vmatpush1.msra.mxu0 0.0
        %3824 = vmatprep.subr.mxu0 0.0
        %3825 = vmatpush1.msra.mxu0 0.0
        %3826 = vmatprep.subr.mxu0 0.0
        %3827 = vmatpush1.msra.mxu0 0.0
        %3828 = vmatprep.mubr.f32.mxu0 0.0
        %3829 = vmatmul.mubr.f32.gmra.mrb[0].mxu0 %v3759
        %v3830 = vpop.f32.mrb[0].mxu0
        %v3831 = vadd.f32 0.0, %v3830
        %v3832 = vpop.f32.mrb[0].mxu0
        %3833 = vmatprep.mubr.f32.mxu0 0.0
        %3834 = vmatmul.mubr.f32.gmra.mrb[0].mxu0 %v3762
        %v3835 = vpop.f32.mrb[0].mxu0
        %v3836 = vadd.f32 0.0, %v3835
        %v3837 = vpop.f32.mrb[0].mxu0
        %3838 = vdwg.mxu0
        %v3839 = vadd.f32 %v3754, %v3831
        %v3840 = vadd.f32 %v3755, %v3836
        %s3841 = sadd.s32 %s193, 6
        %s3842 = smul.u32 %s3841, 24
        %s3843 = scalar_lea.vmem %s188, %s3842
        %v3844 = vld [vmem:[%s3843] sm:$0xff]
        %v3845 = vld [vmem:[%s3843 + $0x8] sm:$0xff]
        %v3847 = vsel %vm218, %v3844, 0
        %v3850 = vsel %vm218, %v3845, 0
        %3852 = vmatprep.subr.mxu0 0.0
        %3853 = vmatpush1.msra.mxu0 %v755
        %3854 = vmatprep.subr.mxu0 0.0
        %3855 = vmatpush1.msra.mxu0 0.0
        %3856 = vmatprep.subr.mxu0 0.0
        %3857 = vmatpush1.msra.mxu0 0.0
        %3858 = vmatprep.subr.mxu0 0.0
        %3859 = vmatpush1.msra.mxu0 0.0
        %3860 = vmatprep.subr.mxu0 0.0
        %3861 = vmatpush1.msra.mxu0 0.0
        %3862 = vmatprep.subr.mxu0 0.0
        %3863 = vmatpush1.msra.mxu0 0.0
        %3864 = vmatprep.subr.mxu0 0.0
        %3865 = vmatpush1.msra.mxu0 0.0
        %3866 = vmatprep.subr.mxu0 0.0
        %3867 = vmatpush1.msra.mxu0 0.0
        %3868 = vmatprep.subr.mxu0 0.0
        %3869 = vmatpush1.msra.mxu0 0.0
        %3870 = vmatprep.subr.mxu0 0.0
        %3871 = vmatpush1.msra.mxu0 0.0
        %3872 = vmatprep.subr.mxu0 0.0
        %3873 = vmatpush1.msra.mxu0 0.0
        %3874 = vmatprep.subr.mxu0 0.0
        %3875 = vmatpush1.msra.mxu0 0.0
        %3876 = vmatprep.subr.mxu0 0.0
        %3877 = vmatpush1.msra.mxu0 0.0
        %3878 = vmatprep.subr.mxu0 0.0
        %3879 = vmatpush1.msra.mxu0 0.0
        %3880 = vmatprep.subr.mxu0 0.0
        %3881 = vmatpush1.msra.mxu0 0.0
        %3882 = vmatprep.subr.mxu0 0.0
        %3883 = vmatpush1.msra.mxu0 0.0
        %3884 = vmatprep.subr.mxu0 0.0
        %3885 = vmatpush1.msra.mxu0 0.0
        %3886 = vmatprep.subr.mxu0 0.0
        %3887 = vmatpush1.msra.mxu0 0.0
        %3888 = vmatprep.subr.mxu0 0.0
        %3889 = vmatpush1.msra.mxu0 0.0
        %3890 = vmatprep.subr.mxu0 0.0
        %3891 = vmatpush1.msra.mxu0 0.0
        %3892 = vmatprep.subr.mxu0 0.0
        %3893 = vmatpush1.msra.mxu0 0.0
        %3894 = vmatprep.subr.mxu0 0.0
        %3895 = vmatpush1.msra.mxu0 0.0
        %3896 = vmatprep.subr.mxu0 0.0
        %3897 = vmatpush1.msra.mxu0 0.0
        %3898 = vmatprep.subr.mxu0 0.0
        %3899 = vmatpush1.msra.mxu0 0.0
        %3900 = vmatprep.subr.mxu0 0.0
        %3901 = vmatpush1.msra.mxu0 0.0
        %3902 = vmatprep.subr.mxu0 0.0
        %3903 = vmatpush1.msra.mxu0 0.0
        %3904 = vmatprep.subr.mxu0 0.0
        %3905 = vmatpush1.msra.mxu0 0.0
        %3906 = vmatprep.subr.mxu0 0.0
        %3907 = vmatpush1.msra.mxu0 0.0
        %3908 = vmatprep.subr.mxu0 0.0
        %3909 = vmatpush1.msra.mxu0 0.0
        %3910 = vmatprep.subr.mxu0 0.0
        %3911 = vmatpush1.msra.mxu0 0.0
        %3912 = vmatprep.subr.mxu0 0.0
        %3913 = vmatpush1.msra.mxu0 0.0
        %3914 = vmatprep.subr.mxu0 0.0
        %3915 = vmatpush1.msra.mxu0 0.0
        %3916 = vmatprep.mubr.f32.mxu0 0.0
        %3917 = vmatmul.mubr.f32.gmra.mrb[0].mxu0 %v3847
        %v3918 = vpop.f32.mrb[0].mxu0
        %v3919 = vadd.f32 0.0, %v3918
        %v3920 = vpop.f32.mrb[0].mxu0
        %3921 = vmatprep.mubr.f32.mxu0 0.0
        %3922 = vmatmul.mubr.f32.gmra.mrb[0].mxu0 %v3850
        %v3923 = vpop.f32.mrb[0].mxu0
        %v3924 = vadd.f32 0.0, %v3923
        %v3925 = vpop.f32.mrb[0].mxu0
        %3926 = vdwg.mxu0
        %v3927 = vadd.f32 %v3839, %v3919
        %v3928 = vadd.f32 %v3840, %v3924
        %v3929 = vld [vmem:[%s3843 + $0x1] sm:$0xff]
        %v3930 = vld [vmem:[%s3843 + $0x9] sm:$0xff]
        %v3932 = vsel %vm218, %v3929, 0
        %v3935 = vsel %vm218, %v3930, 0
        %3937 = vmatprep.subr.mxu0 0.0
        %3938 = vmatpush1.msra.mxu0 %v843
        %3939 = vmatprep.subr.mxu0 0.0
        %3940 = vmatpush1.msra.mxu0 0.0
        %3941 = vmatprep.subr.mxu0 0.0
        %3942 = vmatpush1.msra.mxu0 0.0
        %3943 = vmatprep.subr.mxu0 0.0
        %3944 = vmatpush1.msra.mxu0 0.0
        %3945 = vmatprep.subr.mxu0 0.0
        %3946 = vmatpush1.msra.mxu0 0.0
        %3947 = vmatprep.subr.mxu0 0.0
        %3948 = vmatpush1.msra.mxu0 0.0
        %3949 = vmatprep.subr.mxu0 0.0
        %3950 = vmatpush1.msra.mxu0 0.0
        %3951 = vmatprep.subr.mxu0 0.0
        %3952 = vmatpush1.msra.mxu0 0.0
        %3953 = vmatprep.subr.mxu0 0.0
        %3954 = vmatpush1.msra.mxu0 0.0
        %3955 = vmatprep.subr.mxu0 0.0
        %3956 = vmatpush1.msra.mxu0 0.0
        %3957 = vmatprep.subr.mxu0 0.0
        %3958 = vmatpush1.msra.mxu0 0.0
        %3959 = vmatprep.subr.mxu0 0.0
        %3960 = vmatpush1.msra.mxu0 0.0
        %3961 = vmatprep.subr.mxu0 0.0
        %3962 = vmatpush1.msra.mxu0 0.0
        %3963 = vmatprep.subr.mxu0 0.0
        %3964 = vmatpush1.msra.mxu0 0.0
        %3965 = vmatprep.subr.mxu0 0.0
        %3966 = vmatpush1.msra.mxu0 0.0
        %3967 = vmatprep.subr.mxu0 0.0
        %3968 = vmatpush1.msra.mxu0 0.0
        %3969 = vmatprep.subr.mxu0 0.0
        %3970 = vmatpush1.msra.mxu0 0.0
        %3971 = vmatprep.subr.mxu0 0.0
        %3972 = vmatpush1.msra.mxu0 0.0
        %3973 = vmatprep.subr.mxu0 0.0
        %3974 = vmatpush1.msra.mxu0 0.0
        %3975 = vmatprep.subr.mxu0 0.0
        %3976 = vmatpush1.msra.mxu0 0.0
        %3977 = vmatprep.subr.mxu0 0.0
        %3978 = vmatpush1.msra.mxu0 0.0
        %3979 = vmatprep.subr.mxu0 0.0
        %3980 = vmatpush1.msra.mxu0 0.0
        %3981 = vmatprep.subr.mxu0 0.0
        %3982 = vmatpush1.msra.mxu0 0.0
        %3983 = vmatprep.subr.mxu0 0.0
        %3984 = vmatpush1.msra.mxu0 0.0
        %3985 = vmatprep.subr.mxu0 0.0
        %3986 = vmatpush1.msra.mxu0 0.0
        %3987 = vmatprep.subr.mxu0 0.0
        %3988 = vmatpush1.msra.mxu0 0.0
        %3989 = vmatprep.subr.mxu0 0.0
        %3990 = vmatpush1.msra.mxu0 0.0
        %3991 = vmatprep.subr.mxu0 0.0
        %3992 = vmatpush1.msra.mxu0 0.0
        %3993 = vmatprep.subr.mxu0 0.0
        %3994 = vmatpush1.msra.mxu0 0.0
        %3995 = vmatprep.subr.mxu0 0.0
        %3996 = vmatpush1.msra.mxu0 0.0
        %3997 = vmatprep.subr.mxu0 0.0
        %3998 = vmatpush1.msra.mxu0 0.0
        %3999 = vmatprep.subr.mxu0 0.0
        %4000 = vmatpush1.msra.mxu0 0.0
        %4001 = vmatprep.mubr.f32.mxu0 0.0
        %4002 = vmatmul.mubr.f32.gmra.mrb[0].mxu0 %v3932
        %v4003 = vpop.f32.mrb[0].mxu0
        %v4004 = vadd.f32 0.0, %v4003
        %v4005 = vpop.f32.mrb[0].mxu0
        %4006 = vmatprep.mubr.f32.mxu0 0.0
        %4007 = vmatmul.mubr.f32.gmra.mrb[0].mxu0 %v3935
        %v4008 = vpop.f32.mrb[0].mxu0
        %v4009 = vadd.f32 0.0, %v4008
        %v4010 = vpop.f32.mrb[0].mxu0
        %4011 = vdwg.mxu0
        %v4012 = vadd.f32 %v3927, %v4004
        %v4013 = vadd.f32 %v3928, %v4009
        %v4014 = vld [vmem:[%s3843 + $0x2] sm:$0xff]
        %v4015 = vld [vmem:[%s3843 + $0xa] sm:$0xff]
        %v4017 = vsel %vm218, %v4014, 0
        %v4020 = vsel %vm218, %v4015, 0
        %4022 = vmatprep.subr.mxu0 0.0
        %4023 = vmatpush1.msra.mxu0 %v931
        %4024 = vmatprep.subr.mxu0 0.0
        %4025 = vmatpush1.msra.mxu0 0.0
        %4026 = vmatprep.subr.mxu0 0.0
        %4027 = vmatpush1.msra.mxu0 0.0
        %4028 = vmatprep.subr.mxu0 0.0
        %4029 = vmatpush1.msra.mxu0 0.0
        %4030 = vmatprep.subr.mxu0 0.0
        %4031 = vmatpush1.msra.mxu0 0.0
        %4032 = vmatprep.subr.mxu0 0.0
        %4033 = vmatpush1.msra.mxu0 0.0
        %4034 = vmatprep.subr.mxu0 0.0
        %4035 = vmatpush1.msra.mxu0 0.0
        %4036 = vmatprep.subr.mxu0 0.0
        %4037 = vmatpush1.msra.mxu0 0.0
        %4038 = vmatprep.subr.mxu0 0.0
        %4039 = vmatpush1.msra.mxu0 0.0
        %4040 = vmatprep.subr.mxu0 0.0
        %4041 = vmatpush1.msra.mxu0 0.0
        %4042 = vmatprep.subr.mxu0 0.0
        %4043 = vmatpush1.msra.mxu0 0.0
        %4044 = vmatprep.subr.mxu0 0.0
        %4045 = vmatpush1.msra.mxu0 0.0
        %4046 = vmatprep.subr.mxu0 0.0
        %4047 = vmatpush1.msra.mxu0 0.0
        %4048 = vmatprep.subr.mxu0 0.0
        %4049 = vmatpush1.msra.mxu0 0.0
        %4050 = vmatprep.subr.mxu0 0.0
        %4051 = vmatpush1.msra.mxu0 0.0
        %4052 = vmatprep.subr.mxu0 0.0
        %4053 = vmatpush1.msra.mxu0 0.0
        %4054 = vmatprep.subr.mxu0 0.0
        %4055 = vmatpush1.msra.mxu0 0.0
        %4056 = vmatprep.subr.mxu0 0.0
        %4057 = vmatpush1.msra.mxu0 0.0
        %4058 = vmatprep.subr.mxu0 0.0
        %4059 = vmatpush1.msra.mxu0 0.0
        %4060 = vmatprep.subr.mxu0 0.0
        %4061 = vmatpush1.msra.mxu0 0.0
        %4062 = vmatprep.subr.mxu0 0.0
        %4063 = vmatpush1.msra.mxu0 0.0
        %4064 = vmatprep.subr.mxu0 0.0
        %4065 = vmatpush1.msra.mxu0 0.0
        %4066 = vmatprep.subr.mxu0 0.0
        %4067 = vmatpush1.msra.mxu0 0.0
        %4068 = vmatprep.subr.mxu0 0.0
        %4069 = vmatpush1.msra.mxu0 0.0
        %4070 = vmatprep.subr.mxu0 0.0
        %4071 = vmatpush1.msra.mxu0 0.0
        %4072 = vmatprep.subr.mxu0 0.0
        %4073 = vmatpush1.msra.mxu0 0.0
        %4074 = vmatprep.subr.mxu0 0.0
        %4075 = vmatpush1.msra.mxu0 0.0
        %4076 = vmatprep.subr.mxu0 0.0
        %4077 = vmatpush1.msra.mxu0 0.0
        %4078 = vmatprep.subr.mxu0 0.0
        %4079 = vmatpush1.msra.mxu0 0.0
        %4080 = vmatprep.subr.mxu0 0.0
        %4081 = vmatpush1.msra.mxu0 0.0
        %4082 = vmatprep.subr.mxu0 0.0
        %4083 = vmatpush1.msra.mxu0 0.0
        %4084 = vmatprep.subr.mxu0 0.0
        %4085 = vmatpush1.msra.mxu0 0.0
        %4086 = vmatprep.mubr.f32.mxu0 0.0
        %4087 = vmatmul.mubr.f32.gmra.mrb[0].mxu0 %v4017
        %v4088 = vpop.f32.mrb[0].mxu0
        %v4089 = vadd.f32 0.0, %v4088
        %v4090 = vpop.f32.mrb[0].mxu0
        %4091 = vmatprep.mubr.f32.mxu0 0.0
        %4092 = vmatmul.mubr.f32.gmra.mrb[0].mxu0 %v4020
        %v4093 = vpop.f32.mrb[0].mxu0
        %v4094 = vadd.f32 0.0, %v4093
        %v4095 = vpop.f32.mrb[0].mxu0
        %4096 = vdwg.mxu0
        %v4097 = vadd.f32 %v4012, %v4089
        %v4098 = vadd.f32 %v4013, %v4094
        %v4099 = vadd.f32 %v4097, %v1014
        %v4100 = vadd.f32 %v4098, %v1014
        %v4101 = vmax.f32 %v4099, 0.0
        %v4102 = vmax.f32 %v4100, 0.0
        %s4103 = scalar_lea.vmem %s182, 64 [#allocation2]
        %4104 = vst [vmem:[%s4103] sm:$0xff] %v4101
        %4105 = vst [vmem:[%s4103 + $0x8] sm:$0xff] %v4102
        %v4106 = vld [vmem:[%s3072] sm:$0xff]
        %v4107 = vld [vmem:[%s3072 + $0x8] sm:$0xff]
        %v4108 = vld [vmem:[%s3072 + $0x1] sm:$0xff]
        %v4109 = vld [vmem:[%s3072 + $0x9] sm:$0xff]
        %v4111 = vsel %vm218, %v4108, 0
        %v4114 = vsel %vm218, %v4109, 0
        %4116 = vmatprep.subr.mxu0 0.0
        %4117 = vmatpush1.msra.mxu0 %v227
        %4118 = vmatprep.subr.mxu0 0.0
        %4119 = vmatpush1.msra.mxu0 0.0
        %4120 = vmatprep.subr.mxu0 0.0
        %4121 = vmatpush1.msra.mxu0 0.0
        %4122 = vmatprep.subr.mxu0 0.0
        %4123 = vmatpush1.msra.mxu0 0.0
        %4124 = vmatprep.subr.mxu0 0.0
        %4125 = vmatpush1.msra.mxu0 0.0
        %4126 = vmatprep.subr.mxu0 0.0
        %4127 = vmatpush1.msra.mxu0 0.0
        %4128 = vmatprep.subr.mxu0 0.0
        %4129 = vmatpush1.msra.mxu0 0.0
        %4130 = vmatprep.subr.mxu0 0.0
        %4131 = vmatpush1.msra.mxu0 0.0
        %4132 = vmatprep.subr.mxu0 0.0
        %4133 = vmatpush1.msra.mxu0 0.0
        %4134 = vmatprep.subr.mxu0 0.0
        %4135 = vmatpush1.msra.mxu0 0.0
        %4136 = vmatprep.subr.mxu0 0.0
        %4137 = vmatpush1.msra.mxu0 0.0
        %4138 = vmatprep.subr.mxu0 0.0
        %4139 = vmatpush1.msra.mxu0 0.0
        %4140 = vmatprep.subr.mxu0 0.0
        %4141 = vmatpush1.msra.mxu0 0.0
        %4142 = vmatprep.subr.mxu0 0.0
        %4143 = vmatpush1.msra.mxu0 0.0
        %4144 = vmatprep.subr.mxu0 0.0
        %4145 = vmatpush1.msra.mxu0 0.0
        %4146 = vmatprep.subr.mxu0 0.0
        %4147 = vmatpush1.msra.mxu0 0.0
        %4148 = vmatprep.subr.mxu0 0.0
        %4149 = vmatpush1.msra.mxu0 0.0
        %4150 = vmatprep.subr.mxu0 0.0
        %4151 = vmatpush1.msra.mxu0 0.0
        %4152 = vmatprep.subr.mxu0 0.0
        %4153 = vmatpush1.msra.mxu0 0.0
        %4154 = vmatprep.subr.mxu0 0.0
        %4155 = vmatpush1.msra.mxu0 0.0
        %4156 = vmatprep.subr.mxu0 0.0
        %4157 = vmatpush1.msra.mxu0 0.0
        %4158 = vmatprep.subr.mxu0 0.0
        %4159 = vmatpush1.msra.mxu0 0.0
        %4160 = vmatprep.subr.mxu0 0.0
        %4161 = vmatpush1.msra.mxu0 0.0
        %4162 = vmatprep.subr.mxu0 0.0
        %4163 = vmatpush1.msra.mxu0 0.0
        %4164 = vmatprep.subr.mxu0 0.0
        %4165 = vmatpush1.msra.mxu0 0.0
        %4166 = vmatprep.subr.mxu0 0.0
        %4167 = vmatpush1.msra.mxu0 0.0
        %4168 = vmatprep.subr.mxu0 0.0
        %4169 = vmatpush1.msra.mxu0 0.0
        %4170 = vmatprep.subr.mxu0 0.0
        %4171 = vmatpush1.msra.mxu0 0.0
        %4172 = vmatprep.subr.mxu0 0.0
        %4173 = vmatpush1.msra.mxu0 0.0
        %4174 = vmatprep.subr.mxu0 0.0
        %4175 = vmatpush1.msra.mxu0 0.0
        %4176 = vmatprep.subr.mxu0 0.0
        %4177 = vmatpush1.msra.mxu0 0.0
        %4178 = vmatprep.subr.mxu0 0.0
        %4179 = vmatpush1.msra.mxu0 0.0
        %4180 = vmatprep.mubr.f32.mxu0 0.0
        %4181 = vmatmul.mubr.f32.gmra.mrb[0].mxu0 %v4111
        %v4182 = vpop.f32.mrb[0].mxu0
        %v4183 = vadd.f32 0.0, %v4182
        %v4184 = vpop.f32.mrb[0].mxu0
        %4185 = vmatprep.mubr.f32.mxu0 0.0
        %4186 = vmatmul.mubr.f32.gmra.mrb[0].mxu0 %v4114
        %v4187 = vpop.f32.mrb[0].mxu0
        %v4188 = vadd.f32 0.0, %v4187
        %v4189 = vpop.f32.mrb[0].mxu0
        %4190 = vdwg.mxu0
        %v4192 = vsel %vm218, %v4106, 0
        %v4195 = vsel %vm218, %v4107, 0
        %4197 = vmatprep.subr.mxu0 0.0
        %4198 = vmatpush1.msra.mxu0 %v311
        %4199 = vmatprep.subr.mxu0 0.0
        %4200 = vmatpush1.msra.mxu0 0.0
        %4201 = vmatprep.subr.mxu0 0.0
        %4202 = vmatpush1.msra.mxu0 0.0
        %4203 = vmatprep.subr.mxu0 0.0
        %4204 = vmatpush1.msra.mxu0 0.0
        %4205 = vmatprep.subr.mxu0 0.0
        %4206 = vmatpush1.msra.mxu0 0.0
        %4207 = vmatprep.subr.mxu0 0.0
        %4208 = vmatpush1.msra.mxu0 0.0
        %4209 = vmatprep.subr.mxu0 0.0
        %4210 = vmatpush1.msra.mxu0 0.0
        %4211 = vmatprep.subr.mxu0 0.0
        %4212 = vmatpush1.msra.mxu0 0.0
        %4213 = vmatprep.subr.mxu0 0.0
        %4214 = vmatpush1.msra.mxu0 0.0
        %4215 = vmatprep.subr.mxu0 0.0
        %4216 = vmatpush1.msra.mxu0 0.0
        %4217 = vmatprep.subr.mxu0 0.0
        %4218 = vmatpush1.msra.mxu0 0.0
        %4219 = vmatprep.subr.mxu0 0.0
        %4220 = vmatpush1.msra.mxu0 0.0
        %4221 = vmatprep.subr.mxu0 0.0
        %4222 = vmatpush1.msra.mxu0 0.0
        %4223 = vmatprep.subr.mxu0 0.0
        %4224 = vmatpush1.msra.mxu0 0.0
        %4225 = vmatprep.subr.mxu0 0.0
        %4226 = vmatpush1.msra.mxu0 0.0
        %4227 = vmatprep.subr.mxu0 0.0
        %4228 = vmatpush1.msra.mxu0 0.0
        %4229 = vmatprep.subr.mxu0 0.0
        %4230 = vmatpush1.msra.mxu0 0.0
        %4231 = vmatprep.subr.mxu0 0.0
        %4232 = vmatpush1.msra.mxu0 0.0
        %4233 = vmatprep.subr.mxu0 0.0
        %4234 = vmatpush1.msra.mxu0 0.0
        %4235 = vmatprep.subr.mxu0 0.0
        %4236 = vmatpush1.msra.mxu0 0.0
        %4237 = vmatprep.subr.mxu0 0.0
        %4238 = vmatpush1.msra.mxu0 0.0
        %4239 = vmatprep.subr.mxu0 0.0
        %4240 = vmatpush1.msra.mxu0 0.0
        %4241 = vmatprep.subr.mxu0 0.0
        %4242 = vmatpush1.msra.mxu0 0.0
        %4243 = vmatprep.subr.mxu0 0.0
        %4244 = vmatpush1.msra.mxu0 0.0
        %4245 = vmatprep.subr.mxu0 0.0
        %4246 = vmatpush1.msra.mxu0 0.0
        %4247 = vmatprep.subr.mxu0 0.0
        %4248 = vmatpush1.msra.mxu0 0.0
        %4249 = vmatprep.subr.mxu0 0.0
        %4250 = vmatpush1.msra.mxu0 0.0
        %4251 = vmatprep.subr.mxu0 0.0
        %4252 = vmatpush1.msra.mxu0 0.0
        %4253 = vmatprep.subr.mxu0 0.0
        %4254 = vmatpush1.msra.mxu0 0.0
        %4255 = vmatprep.subr.mxu0 0.0
        %4256 = vmatpush1.msra.mxu0 0.0
        %4257 = vmatprep.subr.mxu0 0.0
        %4258 = vmatpush1.msra.mxu0 0.0
        %4259 = vmatprep.subr.mxu0 0.0
        %4260 = vmatpush1.msra.mxu0 0.0
        %4261 = vmatprep.mubr.f32.mxu0 0.0
        %4262 = vmatmul.mubr.f32.gmra.mrb[0].mxu0 %v4192
        %v4263 = vpop.f32.mrb[0].mxu0
        %v4264 = vadd.f32 %v4183, %v4263
        %v4265 = vpop.f32.mrb[0].mxu0
        %4266 = vmatprep.mubr.f32.mxu0 0.0
        %4267 = vmatmul.mubr.f32.gmra.mrb[0].mxu0 %v4195
        %v4268 = vpop.f32.mrb[0].mxu0
        %v4269 = vadd.f32 %v4188, %v4268
        %v4270 = vpop.f32.mrb[0].mxu0
        %4271 = vdwg.mxu0
        %v4272 = vld [vmem:[%s3072 + $0x2] sm:$0xff]
        %v4273 = vld [vmem:[%s3072 + $0xa] sm:$0xff]
        %v4275 = vsel %vm218, %v4272, 0
        %v4278 = vsel %vm218, %v4273, 0
        %4280 = vmatprep.subr.mxu0 0.0
        %4281 = vmatpush1.msra.mxu0 %v397
        %4282 = vmatprep.subr.mxu0 0.0
        %4283 = vmatpush1.msra.mxu0 0.0
        %4284 = vmatprep.subr.mxu0 0.0
        %4285 = vmatpush1.msra.mxu0 0.0
        %4286 = vmatprep.subr.mxu0 0.0
        %4287 = vmatpush1.msra.mxu0 0.0
        %4288 = vmatprep.subr.mxu0 0.0
        %4289 = vmatpush1.msra.mxu0 0.0
        %4290 = vmatprep.subr.mxu0 0.0
        %4291 = vmatpush1.msra.mxu0 0.0
        %4292 = vmatprep.subr.mxu0 0.0
        %4293 = vmatpush1.msra.mxu0 0.0
        %4294 = vmatprep.subr.mxu0 0.0
        %4295 = vmatpush1.msra.mxu0 0.0
        %4296 = vmatprep.subr.mxu0 0.0
        %4297 = vmatpush1.msra.mxu0 0.0
        %4298 = vmatprep.subr.mxu0 0.0
        %4299 = vmatpush1.msra.mxu0 0.0
        %4300 = vmatprep.subr.mxu0 0.0
        %4301 = vmatpush1.msra.mxu0 0.0
        %4302 = vmatprep.subr.mxu0 0.0
        %4303 = vmatpush1.msra.mxu0 0.0
        %4304 = vmatprep.subr.mxu0 0.0
        %4305 = vmatpush1.msra.mxu0 0.0
        %4306 = vmatprep.subr.mxu0 0.0
        %4307 = vmatpush1.msra.mxu0 0.0
        %4308 = vmatprep.subr.mxu0 0.0
        %4309 = vmatpush1.msra.mxu0 0.0
        %4310 = vmatprep.subr.mxu0 0.0
        %4311 = vmatpush1.msra.mxu0 0.0
        %4312 = vmatprep.subr.mxu0 0.0
        %4313 = vmatpush1.msra.mxu0 0.0
        %4314 = vmatprep.subr.mxu0 0.0
        %4315 = vmatpush1.msra.mxu0 0.0
        %4316 = vmatprep.subr.mxu0 0.0
        %4317 = vmatpush1.msra.mxu0 0.0
        %4318 = vmatprep.subr.mxu0 0.0
        %4319 = vmatpush1.msra.mxu0 0.0
        %4320 = vmatprep.subr.mxu0 0.0
        %4321 = vmatpush1.msra.mxu0 0.0
        %4322 = vmatprep.subr.mxu0 0.0
        %4323 = vmatpush1.msra.mxu0 0.0
        %4324 = vmatprep.subr.mxu0 0.0
        %4325 = vmatpush1.msra.mxu0 0.0
        %4326 = vmatprep.subr.mxu0 0.0
        %4327 = vmatpush1.msra.mxu0 0.0
        %4328 = vmatprep.subr.mxu0 0.0
        %4329 = vmatpush1.msra.mxu0 0.0
        %4330 = vmatprep.subr.mxu0 0.0
        %4331 = vmatpush1.msra.mxu0 0.0
        %4332 = vmatprep.subr.mxu0 0.0
        %4333 = vmatpush1.msra.mxu0 0.0
        %4334 = vmatprep.subr.mxu0 0.0
        %4335 = vmatpush1.msra.mxu0 0.0
        %4336 = vmatprep.subr.mxu0 0.0
        %4337 = vmatpush1.msra.mxu0 0.0
        %4338 = vmatprep.subr.mxu0 0.0
        %4339 = vmatpush1.msra.mxu0 0.0
        %4340 = vmatprep.subr.mxu0 0.0
        %4341 = vmatpush1.msra.mxu0 0.0
        %4342 = vmatprep.subr.mxu0 0.0
        %4343 = vmatpush1.msra.mxu0 0.0
        %4344 = vmatprep.mubr.f32.mxu0 0.0
        %4345 = vmatmul.mubr.f32.gmra.mrb[0].mxu0 %v4275
        %v4346 = vpop.f32.mrb[0].mxu0
        %v4347 = vadd.f32 0.0, %v4346
        %v4348 = vpop.f32.mrb[0].mxu0
        %4349 = vmatprep.mubr.f32.mxu0 0.0
        %4350 = vmatmul.mubr.f32.gmra.mrb[0].mxu0 %v4278
        %v4351 = vpop.f32.mrb[0].mxu0
        %v4352 = vadd.f32 0.0, %v4351
        %v4353 = vpop.f32.mrb[0].mxu0
        %4354 = vdwg.mxu0
        %v4355 = vadd.f32 %v4264, %v4347
        %v4356 = vadd.f32 %v4269, %v4352
        %v4357 = vld [vmem:[%s3843] sm:$0xff]
        %v4358 = vld [vmem:[%s3843 + $0x8] sm:$0xff]
        %v4360 = vsel %vm218, %v4357, 0
        %v4363 = vsel %vm218, %v4358, 0
        %4365 = vmatprep.subr.mxu0 0.0
        %4366 = vmatpush1.msra.mxu0 %v488
        %4367 = vmatprep.subr.mxu0 0.0
        %4368 = vmatpush1.msra.mxu0 0.0
        %4369 = vmatprep.subr.mxu0 0.0
        %4370 = vmatpush1.msra.mxu0 0.0
        %4371 = vmatprep.subr.mxu0 0.0
        %4372 = vmatpush1.msra.mxu0 0.0
        %4373 = vmatprep.subr.mxu0 0.0
        %4374 = vmatpush1.msra.mxu0 0.0
        %4375 = vmatprep.subr.mxu0 0.0
        %4376 = vmatpush1.msra.mxu0 0.0
        %4377 = vmatprep.subr.mxu0 0.0
        %4378 = vmatpush1.msra.mxu0 0.0
        %4379 = vmatprep.subr.mxu0 0.0
        %4380 = vmatpush1.msra.mxu0 0.0
        %4381 = vmatprep.subr.mxu0 0.0
        %4382 = vmatpush1.msra.mxu0 0.0
        %4383 = vmatprep.subr.mxu0 0.0
        %4384 = vmatpush1.msra.mxu0 0.0
        %4385 = vmatprep.subr.mxu0 0.0
        %4386 = vmatpush1.msra.mxu0 0.0
        %4387 = vmatprep.subr.mxu0 0.0
        %4388 = vmatpush1.msra.mxu0 0.0
        %4389 = vmatprep.subr.mxu0 0.0
        %4390 = vmatpush1.msra.mxu0 0.0
        %4391 = vmatprep.subr.mxu0 0.0
        %4392 = vmatpush1.msra.mxu0 0.0
        %4393 = vmatprep.subr.mxu0 0.0
        %4394 = vmatpush1.msra.mxu0 0.0
        %4395 = vmatprep.subr.mxu0 0.0
        %4396 = vmatpush1.msra.mxu0 0.0
        %4397 = vmatprep.subr.mxu0 0.0
        %4398 = vmatpush1.msra.mxu0 0.0
        %4399 = vmatprep.subr.mxu0 0.0
        %4400 = vmatpush1.msra.mxu0 0.0
        %4401 = vmatprep.subr.mxu0 0.0
        %4402 = vmatpush1.msra.mxu0 0.0
        %4403 = vmatprep.subr.mxu0 0.0
        %4404 = vmatpush1.msra.mxu0 0.0
        %4405 = vmatprep.subr.mxu0 0.0
        %4406 = vmatpush1.msra.mxu0 0.0
        %4407 = vmatprep.subr.mxu0 0.0
        %4408 = vmatpush1.msra.mxu0 0.0
        %4409 = vmatprep.subr.mxu0 0.0
        %4410 = vmatpush1.msra.mxu0 0.0
        %4411 = vmatprep.subr.mxu0 0.0
        %4412 = vmatpush1.msra.mxu0 0.0
        %4413 = vmatprep.subr.mxu0 0.0
        %4414 = vmatpush1.msra.mxu0 0.0
        %4415 = vmatprep.subr.mxu0 0.0
        %4416 = vmatpush1.msra.mxu0 0.0
        %4417 = vmatprep.subr.mxu0 0.0
        %4418 = vmatpush1.msra.mxu0 0.0
        %4419 = vmatprep.subr.mxu0 0.0
        %4420 = vmatpush1.msra.mxu0 0.0
        %4421 = vmatprep.subr.mxu0 0.0
        %4422 = vmatpush1.msra.mxu0 0.0
        %4423 = vmatprep.subr.mxu0 0.0
        %4424 = vmatpush1.msra.mxu0 0.0
        %4425 = vmatprep.subr.mxu0 0.0
        %4426 = vmatpush1.msra.mxu0 0.0
        %4427 = vmatprep.subr.mxu0 0.0
        %4428 = vmatpush1.msra.mxu0 0.0
        %4429 = vmatprep.mubr.f32.mxu0 0.0
        %4430 = vmatmul.mubr.f32.gmra.mrb[0].mxu0 %v4360
        %v4431 = vpop.f32.mrb[0].mxu0
        %v4432 = vadd.f32 0.0, %v4431
        %v4433 = vpop.f32.mrb[0].mxu0
        %4434 = vmatprep.mubr.f32.mxu0 0.0
        %4435 = vmatmul.mubr.f32.gmra.mrb[0].mxu0 %v4363
        %v4436 = vpop.f32.mrb[0].mxu0
        %v4437 = vadd.f32 0.0, %v4436
        %v4438 = vpop.f32.mrb[0].mxu0
        %4439 = vdwg.mxu0
        %v4440 = vadd.f32 %v4355, %v4432
        %v4441 = vadd.f32 %v4356, %v4437
        %v4442 = vld [vmem:[%s3843 + $0x1] sm:$0xff]
        %v4443 = vld [vmem:[%s3843 + $0x9] sm:$0xff]
        %v4445 = vsel %vm218, %v4442, 0
        %v4448 = vsel %vm218, %v4443, 0
        %4450 = vmatprep.subr.mxu0 0.0
        %4451 = vmatpush1.msra.mxu0 %v576
        %4452 = vmatprep.subr.mxu0 0.0
        %4453 = vmatpush1.msra.mxu0 0.0
        %4454 = vmatprep.subr.mxu0 0.0
        %4455 = vmatpush1.msra.mxu0 0.0
        %4456 = vmatprep.subr.mxu0 0.0
        %4457 = vmatpush1.msra.mxu0 0.0
        %4458 = vmatprep.subr.mxu0 0.0
        %4459 = vmatpush1.msra.mxu0 0.0
        %4460 = vmatprep.subr.mxu0 0.0
        %4461 = vmatpush1.msra.mxu0 0.0
        %4462 = vmatprep.subr.mxu0 0.0
        %4463 = vmatpush1.msra.mxu0 0.0
        %4464 = vmatprep.subr.mxu0 0.0
        %4465 = vmatpush1.msra.mxu0 0.0
        %4466 = vmatprep.subr.mxu0 0.0
        %4467 = vmatpush1.msra.mxu0 0.0
        %4468 = vmatprep.subr.mxu0 0.0
        %4469 = vmatpush1.msra.mxu0 0.0
        %4470 = vmatprep.subr.mxu0 0.0
        %4471 = vmatpush1.msra.mxu0 0.0
        %4472 = vmatprep.subr.mxu0 0.0
        %4473 = vmatpush1.msra.mxu0 0.0
        %4474 = vmatprep.subr.mxu0 0.0
        %4475 = vmatpush1.msra.mxu0 0.0
        %4476 = vmatprep.subr.mxu0 0.0
        %4477 = vmatpush1.msra.mxu0 0.0
        %4478 = vmatprep.subr.mxu0 0.0
        %4479 = vmatpush1.msra.mxu0 0.0
        %4480 = vmatprep.subr.mxu0 0.0
        %4481 = vmatpush1.msra.mxu0 0.0
        %4482 = vmatprep.subr.mxu0 0.0
        %4483 = vmatpush1.msra.mxu0 0.0
        %4484 = vmatprep.subr.mxu0 0.0
        %4485 = vmatpush1.msra.mxu0 0.0
        %4486 = vmatprep.subr.mxu0 0.0
        %4487 = vmatpush1.msra.mxu0 0.0
        %4488 = vmatprep.subr.mxu0 0.0
        %4489 = vmatpush1.msra.mxu0 0.0
        %4490 = vmatprep.subr.mxu0 0.0
        %4491 = vmatpush1.msra.mxu0 0.0
        %4492 = vmatprep.subr.mxu0 0.0
        %4493 = vmatpush1.msra.mxu0 0.0
        %4494 = vmatprep.subr.mxu0 0.0
        %4495 = vmatpush1.msra.mxu0 0.0
        %4496 = vmatprep.subr.mxu0 0.0
        %4497 = vmatpush1.msra.mxu0 0.0
        %4498 = vmatprep.subr.mxu0 0.0
        %4499 = vmatpush1.msra.mxu0 0.0
        %4500 = vmatprep.subr.mxu0 0.0
        %4501 = vmatpush1.msra.mxu0 0.0
        %4502 = vmatprep.subr.mxu0 0.0
        %4503 = vmatpush1.msra.mxu0 0.0
        %4504 = vmatprep.subr.mxu0 0.0
        %4505 = vmatpush1.msra.mxu0 0.0
        %4506 = vmatprep.subr.mxu0 0.0
        %4507 = vmatpush1.msra.mxu0 0.0
        %4508 = vmatprep.subr.mxu0 0.0
        %4509 = vmatpush1.msra.mxu0 0.0
        %4510 = vmatprep.subr.mxu0 0.0
        %4511 = vmatpush1.msra.mxu0 0.0
        %4512 = vmatprep.subr.mxu0 0.0
        %4513 = vmatpush1.msra.mxu0 0.0
        %4514 = vmatprep.mubr.f32.mxu0 0.0
        %4515 = vmatmul.mubr.f32.gmra.mrb[0].mxu0 %v4445
        %v4516 = vpop.f32.mrb[0].mxu0
        %v4517 = vadd.f32 0.0, %v4516
        %v4518 = vpop.f32.mrb[0].mxu0
        %4519 = vmatprep.mubr.f32.mxu0 0.0
        %4520 = vmatmul.mubr.f32.gmra.mrb[0].mxu0 %v4448
        %v4521 = vpop.f32.mrb[0].mxu0
        %v4522 = vadd.f32 0.0, %v4521
        %v4523 = vpop.f32.mrb[0].mxu0
        %4524 = vdwg.mxu0
        %v4525 = vadd.f32 %v4440, %v4517
        %v4526 = vadd.f32 %v4441, %v4522
        %v4527 = vld [vmem:[%s3843 + $0x2] sm:$0xff]
        %v4528 = vld [vmem:[%s3843 + $0xa] sm:$0xff]
        %v4530 = vsel %vm218, %v4527, 0
        %v4533 = vsel %vm218, %v4528, 0
        %4535 = vmatprep.subr.mxu0 0.0
        %4536 = vmatpush1.msra.mxu0 %v664
        %4537 = vmatprep.subr.mxu0 0.0
        %4538 = vmatpush1.msra.mxu0 0.0
        %4539 = vmatprep.subr.mxu0 0.0
        %4540 = vmatpush1.msra.mxu0 0.0
        %4541 = vmatprep.subr.mxu0 0.0
        %4542 = vmatpush1.msra.mxu0 0.0
        %4543 = vmatprep.subr.mxu0 0.0
        %4544 = vmatpush1.msra.mxu0 0.0
        %4545 = vmatprep.subr.mxu0 0.0
        %4546 = vmatpush1.msra.mxu0 0.0
        %4547 = vmatprep.subr.mxu0 0.0
        %4548 = vmatpush1.msra.mxu0 0.0
        %4549 = vmatprep.subr.mxu0 0.0
        %4550 = vmatpush1.msra.mxu0 0.0
        %4551 = vmatprep.subr.mxu0 0.0
        %4552 = vmatpush1.msra.mxu0 0.0
        %4553 = vmatprep.subr.mxu0 0.0
        %4554 = vmatpush1.msra.mxu0 0.0
        %4555 = vmatprep.subr.mxu0 0.0
        %4556 = vmatpush1.msra.mxu0 0.0
        %4557 = vmatprep.subr.mxu0 0.0
        %4558 = vmatpush1.msra.mxu0 0.0
        %4559 = vmatprep.subr.mxu0 0.0
        %4560 = vmatpush1.msra.mxu0 0.0
        %4561 = vmatprep.subr.mxu0 0.0
        %4562 = vmatpush1.msra.mxu0 0.0
        %4563 = vmatprep.subr.mxu0 0.0
        %4564 = vmatpush1.msra.mxu0 0.0
        %4565 = vmatprep.subr.mxu0 0.0
        %4566 = vmatpush1.msra.mxu0 0.0
        %4567 = vmatprep.subr.mxu0 0.0
        %4568 = vmatpush1.msra.mxu0 0.0
        %4569 = vmatprep.subr.mxu0 0.0
        %4570 = vmatpush1.msra.mxu0 0.0
        %4571 = vmatprep.subr.mxu0 0.0
        %4572 = vmatpush1.msra.mxu0 0.0
        %4573 = vmatprep.subr.mxu0 0.0
        %4574 = vmatpush1.msra.mxu0 0.0
        %4575 = vmatprep.subr.mxu0 0.0
        %4576 = vmatpush1.msra.mxu0 0.0
        %4577 = vmatprep.subr.mxu0 0.0
        %4578 = vmatpush1.msra.mxu0 0.0
        %4579 = vmatprep.subr.mxu0 0.0
        %4580 = vmatpush1.msra.mxu0 0.0
        %4581 = vmatprep.subr.mxu0 0.0
        %4582 = vmatpush1.msra.mxu0 0.0
        %4583 = vmatprep.subr.mxu0 0.0
        %4584 = vmatpush1.msra.mxu0 0.0
        %4585 = vmatprep.subr.mxu0 0.0
        %4586 = vmatpush1.msra.mxu0 0.0
        %4587 = vmatprep.subr.mxu0 0.0
        %4588 = vmatpush1.msra.mxu0 0.0
        %4589 = vmatprep.subr.mxu0 0.0
        %4590 = vmatpush1.msra.mxu0 0.0
        %4591 = vmatprep.subr.mxu0 0.0
        %4592 = vmatpush1.msra.mxu0 0.0
        %4593 = vmatprep.subr.mxu0 0.0
        %4594 = vmatpush1.msra.mxu0 0.0
        %4595 = vmatprep.subr.mxu0 0.0
        %4596 = vmatpush1.msra.mxu0 0.0
        %4597 = vmatprep.subr.mxu0 0.0
        %4598 = vmatpush1.msra.mxu0 0.0
        %4599 = vmatprep.mubr.f32.mxu0 0.0
        %4600 = vmatmul.mubr.f32.gmra.mrb[0].mxu0 %v4530
        %v4601 = vpop.f32.mrb[0].mxu0
        %v4602 = vadd.f32 0.0, %v4601
        %v4603 = vpop.f32.mrb[0].mxu0
        %4604 = vmatprep.mubr.f32.mxu0 0.0
        %4605 = vmatmul.mubr.f32.gmra.mrb[0].mxu0 %v4533
        %v4606 = vpop.f32.mrb[0].mxu0
        %v4607 = vadd.f32 0.0, %v4606
        %v4608 = vpop.f32.mrb[0].mxu0
        %4609 = vdwg.mxu0
        %v4610 = vadd.f32 %v4525, %v4602
        %v4611 = vadd.f32 %v4526, %v4607
        %s4612 = sadd.s32 %s193, 7
        %s4613 = smul.u32 %s4612, 24
        %s4614 = scalar_lea.vmem %s188, %s4613
        %v4615 = vld [vmem:[%s4614] sm:$0xff]
        %v4616 = vld [vmem:[%s4614 + $0x8] sm:$0xff]
        %v4618 = vsel %vm218, %v4615, 0
        %v4621 = vsel %vm218, %v4616, 0
        %4623 = vmatprep.subr.mxu0 0.0
        %4624 = vmatpush1.msra.mxu0 %v755
        %4625 = vmatprep.subr.mxu0 0.0
        %4626 = vmatpush1.msra.mxu0 0.0
        %4627 = vmatprep.subr.mxu0 0.0
        %4628 = vmatpush1.msra.mxu0 0.0
        %4629 = vmatprep.subr.mxu0 0.0
        %4630 = vmatpush1.msra.mxu0 0.0
        %4631 = vmatprep.subr.mxu0 0.0
        %4632 = vmatpush1.msra.mxu0 0.0
        %4633 = vmatprep.subr.mxu0 0.0
        %4634 = vmatpush1.msra.mxu0 0.0
        %4635 = vmatprep.subr.mxu0 0.0
        %4636 = vmatpush1.msra.mxu0 0.0
        %4637 = vmatprep.subr.mxu0 0.0
        %4638 = vmatpush1.msra.mxu0 0.0
        %4639 = vmatprep.subr.mxu0 0.0
        %4640 = vmatpush1.msra.mxu0 0.0
        %4641 = vmatprep.subr.mxu0 0.0
        %4642 = vmatpush1.msra.mxu0 0.0
        %4643 = vmatprep.subr.mxu0 0.0
        %4644 = vmatpush1.msra.mxu0 0.0
        %4645 = vmatprep.subr.mxu0 0.0
        %4646 = vmatpush1.msra.mxu0 0.0
        %4647 = vmatprep.subr.mxu0 0.0
        %4648 = vmatpush1.msra.mxu0 0.0
        %4649 = vmatprep.subr.mxu0 0.0
        %4650 = vmatpush1.msra.mxu0 0.0
        %4651 = vmatprep.subr.mxu0 0.0
        %4652 = vmatpush1.msra.mxu0 0.0
        %4653 = vmatprep.subr.mxu0 0.0
        %4654 = vmatpush1.msra.mxu0 0.0
        %4655 = vmatprep.subr.mxu0 0.0
        %4656 = vmatpush1.msra.mxu0 0.0
        %4657 = vmatprep.subr.mxu0 0.0
        %4658 = vmatpush1.msra.mxu0 0.0
        %4659 = vmatprep.subr.mxu0 0.0
        %4660 = vmatpush1.msra.mxu0 0.0
        %4661 = vmatprep.subr.mxu0 0.0
        %4662 = vmatpush1.msra.mxu0 0.0
        %4663 = vmatprep.subr.mxu0 0.0
        %4664 = vmatpush1.msra.mxu0 0.0
        %4665 = vmatprep.subr.mxu0 0.0
        %4666 = vmatpush1.msra.mxu0 0.0
        %4667 = vmatprep.subr.mxu0 0.0
        %4668 = vmatpush1.msra.mxu0 0.0
        %4669 = vmatprep.subr.mxu0 0.0
        %4670 = vmatpush1.msra.mxu0 0.0
        %4671 = vmatprep.subr.mxu0 0.0
        %4672 = vmatpush1.msra.mxu0 0.0
        %4673 = vmatprep.subr.mxu0 0.0
        %4674 = vmatpush1.msra.mxu0 0.0
        %4675 = vmatprep.subr.mxu0 0.0
        %4676 = vmatpush1.msra.mxu0 0.0
        %4677 = vmatprep.subr.mxu0 0.0
        %4678 = vmatpush1.msra.mxu0 0.0
        %4679 = vmatprep.subr.mxu0 0.0
        %4680 = vmatpush1.msra.mxu0 0.0
        %4681 = vmatprep.subr.mxu0 0.0
        %4682 = vmatpush1.msra.mxu0 0.0
        %4683 = vmatprep.subr.mxu0 0.0
        %4684 = vmatpush1.msra.mxu0 0.0
        %4685 = vmatprep.subr.mxu0 0.0
        %4686 = vmatpush1.msra.mxu0 0.0
        %4687 = vmatprep.mubr.f32.mxu0 0.0
        %4688 = vmatmul.mubr.f32.gmra.mrb[0].mxu0 %v4618
        %v4689 = vpop.f32.mrb[0].mxu0
        %v4690 = vadd.f32 0.0, %v4689
        %v4691 = vpop.f32.mrb[0].mxu0
        %4692 = vmatprep.mubr.f32.mxu0 0.0
        %4693 = vmatmul.mubr.f32.gmra.mrb[0].mxu0 %v4621
        %v4694 = vpop.f32.mrb[0].mxu0
        %v4695 = vadd.f32 0.0, %v4694
        %v4696 = vpop.f32.mrb[0].mxu0
        %4697 = vdwg.mxu0
        %v4698 = vadd.f32 %v4610, %v4690
        %v4699 = vadd.f32 %v4611, %v4695
        %v4700 = vld [vmem:[%s4614 + $0x1] sm:$0xff]
        %v4701 = vld [vmem:[%s4614 + $0x9] sm:$0xff]
        %v4703 = vsel %vm218, %v4700, 0
        %v4706 = vsel %vm218, %v4701, 0
        %4708 = vmatprep.subr.mxu0 0.0
        %4709 = vmatpush1.msra.mxu0 %v843
        %4710 = vmatprep.subr.mxu0 0.0
        %4711 = vmatpush1.msra.mxu0 0.0
        %4712 = vmatprep.subr.mxu0 0.0
        %4713 = vmatpush1.msra.mxu0 0.0
        %4714 = vmatprep.subr.mxu0 0.0
        %4715 = vmatpush1.msra.mxu0 0.0
        %4716 = vmatprep.subr.mxu0 0.0
        %4717 = vmatpush1.msra.mxu0 0.0
        %4718 = vmatprep.subr.mxu0 0.0
        %4719 = vmatpush1.msra.mxu0 0.0
        %4720 = vmatprep.subr.mxu0 0.0
        %4721 = vmatpush1.msra.mxu0 0.0
        %4722 = vmatprep.subr.mxu0 0.0
        %4723 = vmatpush1.msra.mxu0 0.0
        %4724 = vmatprep.subr.mxu0 0.0
        %4725 = vmatpush1.msra.mxu0 0.0
        %4726 = vmatprep.subr.mxu0 0.0
        %4727 = vmatpush1.msra.mxu0 0.0
        %4728 = vmatprep.subr.mxu0 0.0
        %4729 = vmatpush1.msra.mxu0 0.0
        %4730 = vmatprep.subr.mxu0 0.0
        %4731 = vmatpush1.msra.mxu0 0.0
        %4732 = vmatprep.subr.mxu0 0.0
        %4733 = vmatpush1.msra.mxu0 0.0
        %4734 = vmatprep.subr.mxu0 0.0
        %4735 = vmatpush1.msra.mxu0 0.0
        %4736 = vmatprep.subr.mxu0 0.0
        %4737 = vmatpush1.msra.mxu0 0.0
        %4738 = vmatprep.subr.mxu0 0.0
        %4739 = vmatpush1.msra.mxu0 0.0
        %4740 = vmatprep.subr.mxu0 0.0
        %4741 = vmatpush1.msra.mxu0 0.0
        %4742 = vmatprep.subr.mxu0 0.0
        %4743 = vmatpush1.msra.mxu0 0.0
        %4744 = vmatprep.subr.mxu0 0.0
        %4745 = vmatpush1.msra.mxu0 0.0
        %4746 = vmatprep.subr.mxu0 0.0
        %4747 = vmatpush1.msra.mxu0 0.0
        %4748 = vmatprep.subr.mxu0 0.0
        %4749 = vmatpush1.msra.mxu0 0.0
        %4750 = vmatprep.subr.mxu0 0.0
        %4751 = vmatpush1.msra.mxu0 0.0
        %4752 = vmatprep.subr.mxu0 0.0
        %4753 = vmatpush1.msra.mxu0 0.0
        %4754 = vmatprep.subr.mxu0 0.0
        %4755 = vmatpush1.msra.mxu0 0.0
        %4756 = vmatprep.subr.mxu0 0.0
        %4757 = vmatpush1.msra.mxu0 0.0
        %4758 = vmatprep.subr.mxu0 0.0
        %4759 = vmatpush1.msra.mxu0 0.0
        %4760 = vmatprep.subr.mxu0 0.0
        %4761 = vmatpush1.msra.mxu0 0.0
        %4762 = vmatprep.subr.mxu0 0.0
        %4763 = vmatpush1.msra.mxu0 0.0
        %4764 = vmatprep.subr.mxu0 0.0
        %4765 = vmatpush1.msra.mxu0 0.0
        %4766 = vmatprep.subr.mxu0 0.0
        %4767 = vmatpush1.msra.mxu0 0.0
        %4768 = vmatprep.subr.mxu0 0.0
        %4769 = vmatpush1.msra.mxu0 0.0
        %4770 = vmatprep.subr.mxu0 0.0
        %4771 = vmatpush1.msra.mxu0 0.0
        %4772 = vmatprep.mubr.f32.mxu0 0.0
        %4773 = vmatmul.mubr.f32.gmra.mrb[0].mxu0 %v4703
        %v4774 = vpop.f32.mrb[0].mxu0
        %v4775 = vadd.f32 0.0, %v4774
        %v4776 = vpop.f32.mrb[0].mxu0
        %4777 = vmatprep.mubr.f32.mxu0 0.0
        %4778 = vmatmul.mubr.f32.gmra.mrb[0].mxu0 %v4706
        %v4779 = vpop.f32.mrb[0].mxu0
        %v4780 = vadd.f32 0.0, %v4779
        %v4781 = vpop.f32.mrb[0].mxu0
        %4782 = vdwg.mxu0
        %v4783 = vadd.f32 %v4698, %v4775
        %v4784 = vadd.f32 %v4699, %v4780
        %v4785 = vld [vmem:[%s4614 + $0x2] sm:$0xff]
        %v4786 = vld [vmem:[%s4614 + $0xa] sm:$0xff]
        %v4788 = vsel %vm218, %v4785, 0
        %v4791 = vsel %vm218, %v4786, 0
        %4793 = vmatprep.subr.mxu0 0.0
        %4794 = vmatpush1.msra.mxu0 %v931
        %4795 = vmatprep.subr.mxu0 0.0
        %4796 = vmatpush1.msra.mxu0 0.0
        %4797 = vmatprep.subr.mxu0 0.0
        %4798 = vmatpush1.msra.mxu0 0.0
        %4799 = vmatprep.subr.mxu0 0.0
        %4800 = vmatpush1.msra.mxu0 0.0
        %4801 = vmatprep.subr.mxu0 0.0
        %4802 = vmatpush1.msra.mxu0 0.0
        %4803 = vmatprep.subr.mxu0 0.0
        %4804 = vmatpush1.msra.mxu0 0.0
        %4805 = vmatprep.subr.mxu0 0.0
        %4806 = vmatpush1.msra.mxu0 0.0
        %4807 = vmatprep.subr.mxu0 0.0
        %4808 = vmatpush1.msra.mxu0 0.0
        %4809 = vmatprep.subr.mxu0 0.0
        %4810 = vmatpush1.msra.mxu0 0.0
        %4811 = vmatprep.subr.mxu0 0.0
        %4812 = vmatpush1.msra.mxu0 0.0
        %4813 = vmatprep.subr.mxu0 0.0
        %4814 = vmatpush1.msra.mxu0 0.0
        %4815 = vmatprep.subr.mxu0 0.0
        %4816 = vmatpush1.msra.mxu0 0.0
        %4817 = vmatprep.subr.mxu0 0.0
        %4818 = vmatpush1.msra.mxu0 0.0
        %4819 = vmatprep.subr.mxu0 0.0
        %4820 = vmatpush1.msra.mxu0 0.0
        %4821 = vmatprep.subr.mxu0 0.0
        %4822 = vmatpush1.msra.mxu0 0.0
        %4823 = vmatprep.subr.mxu0 0.0
        %4824 = vmatpush1.msra.mxu0 0.0
        %4825 = vmatprep.subr.mxu0 0.0
        %4826 = vmatpush1.msra.mxu0 0.0
        %4827 = vmatprep.subr.mxu0 0.0
        %4828 = vmatpush1.msra.mxu0 0.0
        %4829 = vmatprep.subr.mxu0 0.0
        %4830 = vmatpush1.msra.mxu0 0.0
        %4831 = vmatprep.subr.mxu0 0.0
        %4832 = vmatpush1.msra.mxu0 0.0
        %4833 = vmatprep.subr.mxu0 0.0
        %4834 = vmatpush1.msra.mxu0 0.0
        %4835 = vmatprep.subr.mxu0 0.0
        %4836 = vmatpush1.msra.mxu0 0.0
        %4837 = vmatprep.subr.mxu0 0.0
        %4838 = vmatpush1.msra.mxu0 0.0
        %4839 = vmatprep.subr.mxu0 0.0
        %4840 = vmatpush1.msra.mxu0 0.0
        %4841 = vmatprep.subr.mxu0 0.0
        %4842 = vmatpush1.msra.mxu0 0.0
        %4843 = vmatprep.subr.mxu0 0.0
        %4844 = vmatpush1.msra.mxu0 0.0
        %4845 = vmatprep.subr.mxu0 0.0
        %4846 = vmatpush1.msra.mxu0 0.0
        %4847 = vmatprep.subr.mxu0 0.0
        %4848 = vmatpush1.msra.mxu0 0.0
        %4849 = vmatprep.subr.mxu0 0.0
        %4850 = vmatpush1.msra.mxu0 0.0
        %4851 = vmatprep.subr.mxu0 0.0
        %4852 = vmatpush1.msra.mxu0 0.0
        %4853 = vmatprep.subr.mxu0 0.0
        %4854 = vmatpush1.msra.mxu0 0.0
        %4855 = vmatprep.subr.mxu0 0.0
        %4856 = vmatpush1.msra.mxu0 0.0
        %4857 = vmatprep.mubr.f32.mxu0 0.0
        %4858 = vmatmul.mubr.f32.gmra.mrb[0].mxu0 %v4788
        %v4859 = vpop.f32.mrb[0].mxu0
        %v4860 = vadd.f32 0.0, %v4859
        %v4861 = vpop.f32.mrb[0].mxu0
        %4862 = vmatprep.mubr.f32.mxu0 0.0
        %4863 = vmatmul.mubr.f32.gmra.mrb[0].mxu0 %v4791
        %v4864 = vpop.f32.mrb[0].mxu0
        %v4865 = vadd.f32 0.0, %v4864
        %v4866 = vpop.f32.mrb[0].mxu0
        %4867 = vdwg.mxu0
        %v4868 = vadd.f32 %v4783, %v4860
        %v4869 = vadd.f32 %v4784, %v4865
        %v4870 = vadd.f32 %v4868, %v1014
        %v4871 = vadd.f32 %v4869, %v1014
        %v4872 = vmax.f32 %v4870, 0.0
        %v4873 = vmax.f32 %v4871, 0.0
        %s4874 = scalar_lea.vmem %s182, 80 [#allocation2]
        %4875 = vst [vmem:[%s4874] sm:$0xff] %v4872
        %4876 = vst [vmem:[%s4874 + $0x8] sm:$0xff] %v4873
        %v4877 = vld [vmem:[%s3843] sm:$0xff]
        %v4878 = vld [vmem:[%s3843 + $0x8] sm:$0xff]
        %v4879 = vld [vmem:[%s3843 + $0x1] sm:$0xff]
        %v4880 = vld [vmem:[%s3843 + $0x9] sm:$0xff]
        %v4882 = vsel %vm218, %v4879, 0
        %v4885 = vsel %vm218, %v4880, 0
        %4887 = vmatprep.subr.mxu0 0.0
        %4888 = vmatpush1.msra.mxu0 %v227
        %4889 = vmatprep.subr.mxu0 0.0
        %4890 = vmatpush1.msra.mxu0 0.0
        %4891 = vmatprep.subr.mxu0 0.0
        %4892 = vmatpush1.msra.mxu0 0.0
        %4893 = vmatprep.subr.mxu0 0.0
        %4894 = vmatpush1.msra.mxu0 0.0
        %4895 = vmatprep.subr.mxu0 0.0
        %4896 = vmatpush1.msra.mxu0 0.0
        %4897 = vmatprep.subr.mxu0 0.0
        %4898 = vmatpush1.msra.mxu0 0.0
        %4899 = vmatprep.subr.mxu0 0.0
        %4900 = vmatpush1.msra.mxu0 0.0
        %4901 = vmatprep.subr.mxu0 0.0
        %4902 = vmatpush1.msra.mxu0 0.0
        %4903 = vmatprep.subr.mxu0 0.0
        %4904 = vmatpush1.msra.mxu0 0.0
        %4905 = vmatprep.subr.mxu0 0.0
        %4906 = vmatpush1.msra.mxu0 0.0
        %4907 = vmatprep.subr.mxu0 0.0
        %4908 = vmatpush1.msra.mxu0 0.0
        %4909 = vmatprep.subr.mxu0 0.0
        %4910 = vmatpush1.msra.mxu0 0.0
        %4911 = vmatprep.subr.mxu0 0.0
        %4912 = vmatpush1.msra.mxu0 0.0
        %4913 = vmatprep.subr.mxu0 0.0
        %4914 = vmatpush1.msra.mxu0 0.0
        %4915 = vmatprep.subr.mxu0 0.0
        %4916 = vmatpush1.msra.mxu0 0.0
        %4917 = vmatprep.subr.mxu0 0.0
        %4918 = vmatpush1.msra.mxu0 0.0
        %4919 = vmatprep.subr.mxu0 0.0
        %4920 = vmatpush1.msra.mxu0 0.0
        %4921 = vmatprep.subr.mxu0 0.0
        %4922 = vmatpush1.msra.mxu0 0.0
        %4923 = vmatprep.subr.mxu0 0.0
        %4924 = vmatpush1.msra.mxu0 0.0
        %4925 = vmatprep.subr.mxu0 0.0
        %4926 = vmatpush1.msra.mxu0 0.0
        %4927 = vmatprep.subr.mxu0 0.0
        %4928 = vmatpush1.msra.mxu0 0.0
        %4929 = vmatprep.subr.mxu0 0.0
        %4930 = vmatpush1.msra.mxu0 0.0
        %4931 = vmatprep.subr.mxu0 0.0
        %4932 = vmatpush1.msra.mxu0 0.0
        %4933 = vmatprep.subr.mxu0 0.0
        %4934 = vmatpush1.msra.mxu0 0.0
        %4935 = vmatprep.subr.mxu0 0.0
        %4936 = vmatpush1.msra.mxu0 0.0
        %4937 = vmatprep.subr.mxu0 0.0
        %4938 = vmatpush1.msra.mxu0 0.0
        %4939 = vmatprep.subr.mxu0 0.0
        %4940 = vmatpush1.msra.mxu0 0.0
        %4941 = vmatprep.subr.mxu0 0.0
        %4942 = vmatpush1.msra.mxu0 0.0
        %4943 = vmatprep.subr.mxu0 0.0
        %4944 = vmatpush1.msra.mxu0 0.0
        %4945 = vmatprep.subr.mxu0 0.0
        %4946 = vmatpush1.msra.mxu0 0.0
        %4947 = vmatprep.subr.mxu0 0.0
        %4948 = vmatpush1.msra.mxu0 0.0
        %4949 = vmatprep.subr.mxu0 0.0
        %4950 = vmatpush1.msra.mxu0 0.0
        %4951 = vmatprep.mubr.f32.mxu0 0.0
        %4952 = vmatmul.mubr.f32.gmra.mrb[0].mxu0 %v4882
        %v4953 = vpop.f32.mrb[0].mxu0
        %v4954 = vadd.f32 0.0, %v4953
        %v4955 = vpop.f32.mrb[0].mxu0
        %4956 = vmatprep.mubr.f32.mxu0 0.0
        %4957 = vmatmul.mubr.f32.gmra.mrb[0].mxu0 %v4885
        %v4958 = vpop.f32.mrb[0].mxu0
        %v4959 = vadd.f32 0.0, %v4958
        %v4960 = vpop.f32.mrb[0].mxu0
        %4961 = vdwg.mxu0
        %v4963 = vsel %vm218, %v4877, 0
        %v4966 = vsel %vm218, %v4878, 0
        %4968 = vmatprep.subr.mxu0 0.0
        %4969 = vmatpush1.msra.mxu0 %v311
        %4970 = vmatprep.subr.mxu0 0.0
        %4971 = vmatpush1.msra.mxu0 0.0
        %4972 = vmatprep.subr.mxu0 0.0
        %4973 = vmatpush1.msra.mxu0 0.0
        %4974 = vmatprep.subr.mxu0 0.0
        %4975 = vmatpush1.msra.mxu0 0.0
        %4976 = vmatprep.subr.mxu0 0.0
        %4977 = vmatpush1.msra.mxu0 0.0
        %4978 = vmatprep.subr.mxu0 0.0
        %4979 = vmatpush1.msra.mxu0 0.0
        %4980 = vmatprep.subr.mxu0 0.0
        %4981 = vmatpush1.msra.mxu0 0.0
        %4982 = vmatprep.subr.mxu0 0.0
        %4983 = vmatpush1.msra.mxu0 0.0
        %4984 = vmatprep.subr.mxu0 0.0
        %4985 = vmatpush1.msra.mxu0 0.0
        %4986 = vmatprep.subr.mxu0 0.0
        %4987 = vmatpush1.msra.mxu0 0.0
        %4988 = vmatprep.subr.mxu0 0.0
        %4989 = vmatpush1.msra.mxu0 0.0
        %4990 = vmatprep.subr.mxu0 0.0
        %4991 = vmatpush1.msra.mxu0 0.0
        %4992 = vmatprep.subr.mxu0 0.0
        %4993 = vmatpush1.msra.mxu0 0.0
        %4994 = vmatprep.subr.mxu0 0.0
        %4995 = vmatpush1.msra.mxu0 0.0
        %4996 = vmatprep.subr.mxu0 0.0
        %4997 = vmatpush1.msra.mxu0 0.0
        %4998 = vmatprep.subr.mxu0 0.0
        %4999 = vmatpush1.msra.mxu0 0.0
        %5000 = vmatprep.subr.mxu0 0.0
        %5001 = vmatpush1.msra.mxu0 0.0
        %5002 = vmatprep.subr.mxu0 0.0
        %5003 = vmatpush1.msra.mxu0 0.0
        %5004 = vmatprep.subr.mxu0 0.0
        %5005 = vmatpush1.msra.mxu0 0.0
        %5006 = vmatprep.subr.mxu0 0.0
        %5007 = vmatpush1.msra.mxu0 0.0
        %5008 = vmatprep.subr.mxu0 0.0
        %5009 = vmatpush1.msra.mxu0 0.0
        %5010 = vmatprep.subr.mxu0 0.0
        %5011 = vmatpush1.msra.mxu0 0.0
        %5012 = vmatprep.subr.mxu0 0.0
        %5013 = vmatpush1.msra.mxu0 0.0
        %5014 = vmatprep.subr.mxu0 0.0
        %5015 = vmatpush1.msra.mxu0 0.0
        %5016 = vmatprep.subr.mxu0 0.0
        %5017 = vmatpush1.msra.mxu0 0.0
        %5018 = vmatprep.subr.mxu0 0.0
        %5019 = vmatpush1.msra.mxu0 0.0
        %5020 = vmatprep.subr.mxu0 0.0
        %5021 = vmatpush1.msra.mxu0 0.0
        %5022 = vmatprep.subr.mxu0 0.0
        %5023 = vmatpush1.msra.mxu0 0.0
        %5024 = vmatprep.subr.mxu0 0.0
        %5025 = vmatpush1.msra.mxu0 0.0
        %5026 = vmatprep.subr.mxu0 0.0
        %5027 = vmatpush1.msra.mxu0 0.0
        %5028 = vmatprep.subr.mxu0 0.0
        %5029 = vmatpush1.msra.mxu0 0.0
        %5030 = vmatprep.subr.mxu0 0.0
        %5031 = vmatpush1.msra.mxu0 0.0
        %5032 = vmatprep.mubr.f32.mxu0 0.0
        %5033 = vmatmul.mubr.f32.gmra.mrb[0].mxu0 %v4963
        %v5034 = vpop.f32.mrb[0].mxu0
        %v5035 = vadd.f32 %v4954, %v5034
        %v5036 = vpop.f32.mrb[0].mxu0
        %5037 = vmatprep.mubr.f32.mxu0 0.0
        %5038 = vmatmul.mubr.f32.gmra.mrb[0].mxu0 %v4966
        %v5039 = vpop.f32.mrb[0].mxu0
        %v5040 = vadd.f32 %v4959, %v5039
        %v5041 = vpop.f32.mrb[0].mxu0
        %5042 = vdwg.mxu0
        %v5043 = vld [vmem:[%s3843 + $0x2] sm:$0xff]
        %v5044 = vld [vmem:[%s3843 + $0xa] sm:$0xff]
        %v5046 = vsel %vm218, %v5043, 0
        %v5049 = vsel %vm218, %v5044, 0
        %5051 = vmatprep.subr.mxu0 0.0
        %5052 = vmatpush1.msra.mxu0 %v397
        %5053 = vmatprep.subr.mxu0 0.0
        %5054 = vmatpush1.msra.mxu0 0.0
        %5055 = vmatprep.subr.mxu0 0.0
        %5056 = vmatpush1.msra.mxu0 0.0
        %5057 = vmatprep.subr.mxu0 0.0
        %5058 = vmatpush1.msra.mxu0 0.0
        %5059 = vmatprep.subr.mxu0 0.0
        %5060 = vmatpush1.msra.mxu0 0.0
        %5061 = vmatprep.subr.mxu0 0.0
        %5062 = vmatpush1.msra.mxu0 0.0
        %5063 = vmatprep.subr.mxu0 0.0
        %5064 = vmatpush1.msra.mxu0 0.0
        %5065 = vmatprep.subr.mxu0 0.0
        %5066 = vmatpush1.msra.mxu0 0.0
        %5067 = vmatprep.subr.mxu0 0.0
        %5068 = vmatpush1.msra.mxu0 0.0
        %5069 = vmatprep.subr.mxu0 0.0
        %5070 = vmatpush1.msra.mxu0 0.0
        %5071 = vmatprep.subr.mxu0 0.0
        %5072 = vmatpush1.msra.mxu0 0.0
        %5073 = vmatprep.subr.mxu0 0.0
        %5074 = vmatpush1.msra.mxu0 0.0
        %5075 = vmatprep.subr.mxu0 0.0
        %5076 = vmatpush1.msra.mxu0 0.0
        %5077 = vmatprep.subr.mxu0 0.0
        %5078 = vmatpush1.msra.mxu0 0.0
        %5079 = vmatprep.subr.mxu0 0.0
        %5080 = vmatpush1.msra.mxu0 0.0
        %5081 = vmatprep.subr.mxu0 0.0
        %5082 = vmatpush1.msra.mxu0 0.0
        %5083 = vmatprep.subr.mxu0 0.0
        %5084 = vmatpush1.msra.mxu0 0.0
        %5085 = vmatprep.subr.mxu0 0.0
        %5086 = vmatpush1.msra.mxu0 0.0
        %5087 = vmatprep.subr.mxu0 0.0
        %5088 = vmatpush1.msra.mxu0 0.0
        %5089 = vmatprep.subr.mxu0 0.0
        %5090 = vmatpush1.msra.mxu0 0.0
        %5091 = vmatprep.subr.mxu0 0.0
        %5092 = vmatpush1.msra.mxu0 0.0
        %5093 = vmatprep.subr.mxu0 0.0
        %5094 = vmatpush1.msra.mxu0 0.0
        %5095 = vmatprep.subr.mxu0 0.0
        %5096 = vmatpush1.msra.mxu0 0.0
        %5097 = vmatprep.subr.mxu0 0.0
        %5098 = vmatpush1.msra.mxu0 0.0
        %5099 = vmatprep.subr.mxu0 0.0
        %5100 = vmatpush1.msra.mxu0 0.0
        %5101 = vmatprep.subr.mxu0 0.0
        %5102 = vmatpush1.msra.mxu0 0.0
        %5103 = vmatprep.subr.mxu0 0.0
        %5104 = vmatpush1.msra.mxu0 0.0
        %5105 = vmatprep.subr.mxu0 0.0
        %5106 = vmatpush1.msra.mxu0 0.0
        %5107 = vmatprep.subr.mxu0 0.0
        %5108 = vmatpush1.msra.mxu0 0.0
        %5109 = vmatprep.subr.mxu0 0.0
        %5110 = vmatpush1.msra.mxu0 0.0
        %5111 = vmatprep.subr.mxu0 0.0
        %5112 = vmatpush1.msra.mxu0 0.0
        %5113 = vmatprep.subr.mxu0 0.0
        %5114 = vmatpush1.msra.mxu0 0.0
        %5115 = vmatprep.mubr.f32.mxu0 0.0
        %5116 = vmatmul.mubr.f32.gmra.mrb[0].mxu0 %v5046
        %v5117 = vpop.f32.mrb[0].mxu0
        %v5118 = vadd.f32 0.0, %v5117
        %v5119 = vpop.f32.mrb[0].mxu0
        %5120 = vmatprep.mubr.f32.mxu0 0.0
        %5121 = vmatmul.mubr.f32.gmra.mrb[0].mxu0 %v5049
        %v5122 = vpop.f32.mrb[0].mxu0
        %v5123 = vadd.f32 0.0, %v5122
        %v5124 = vpop.f32.mrb[0].mxu0
        %5125 = vdwg.mxu0
        %v5126 = vadd.f32 %v5035, %v5118
        %v5127 = vadd.f32 %v5040, %v5123
        %v5128 = vld [vmem:[%s4614] sm:$0xff]
        %v5129 = vld [vmem:[%s4614 + $0x8] sm:$0xff]
        %v5131 = vsel %vm218, %v5128, 0
        %v5134 = vsel %vm218, %v5129, 0
        %5136 = vmatprep.subr.mxu0 0.0
        %5137 = vmatpush1.msra.mxu0 %v488
        %5138 = vmatprep.subr.mxu0 0.0
        %5139 = vmatpush1.msra.mxu0 0.0
        %5140 = vmatprep.subr.mxu0 0.0
        %5141 = vmatpush1.msra.mxu0 0.0
        %5142 = vmatprep.subr.mxu0 0.0
        %5143 = vmatpush1.msra.mxu0 0.0
        %5144 = vmatprep.subr.mxu0 0.0
        %5145 = vmatpush1.msra.mxu0 0.0
        %5146 = vmatprep.subr.mxu0 0.0
        %5147 = vmatpush1.msra.mxu0 0.0
        %5148 = vmatprep.subr.mxu0 0.0
        %5149 = vmatpush1.msra.mxu0 0.0
        %5150 = vmatprep.subr.mxu0 0.0
        %5151 = vmatpush1.msra.mxu0 0.0
        %5152 = vmatprep.subr.mxu0 0.0
        %5153 = vmatpush1.msra.mxu0 0.0
        %5154 = vmatprep.subr.mxu0 0.0
        %5155 = vmatpush1.msra.mxu0 0.0
        %5156 = vmatprep.subr.mxu0 0.0
        %5157 = vmatpush1.msra.mxu0 0.0
        %5158 = vmatprep.subr.mxu0 0.0
        %5159 = vmatpush1.msra.mxu0 0.0
        %5160 = vmatprep.subr.mxu0 0.0
        %5161 = vmatpush1.msra.mxu0 0.0
        %5162 = vmatprep.subr.mxu0 0.0
        %5163 = vmatpush1.msra.mxu0 0.0
        %5164 = vmatprep.subr.mxu0 0.0
        %5165 = vmatpush1.msra.mxu0 0.0
        %5166 = vmatprep.subr.mxu0 0.0
        %5167 = vmatpush1.msra.mxu0 0.0
        %5168 = vmatprep.subr.mxu0 0.0
        %5169 = vmatpush1.msra.mxu0 0.0
        %5170 = vmatprep.subr.mxu0 0.0
        %5171 = vmatpush1.msra.mxu0 0.0
        %5172 = vmatprep.subr.mxu0 0.0
        %5173 = vmatpush1.msra.mxu0 0.0
        %5174 = vmatprep.subr.mxu0 0.0
        %5175 = vmatpush1.msra.mxu0 0.0
        %5176 = vmatprep.subr.mxu0 0.0
        %5177 = vmatpush1.msra.mxu0 0.0
        %5178 = vmatprep.subr.mxu0 0.0
        %5179 = vmatpush1.msra.mxu0 0.0
        %5180 = vmatprep.subr.mxu0 0.0
        %5181 = vmatpush1.msra.mxu0 0.0
        %5182 = vmatprep.subr.mxu0 0.0
        %5183 = vmatpush1.msra.mxu0 0.0
        %5184 = vmatprep.subr.mxu0 0.0
        %5185 = vmatpush1.msra.mxu0 0.0
        %5186 = vmatprep.subr.mxu0 0.0
        %5187 = vmatpush1.msra.mxu0 0.0
        %5188 = vmatprep.subr.mxu0 0.0
        %5189 = vmatpush1.msra.mxu0 0.0
        %5190 = vmatprep.subr.mxu0 0.0
        %5191 = vmatpush1.msra.mxu0 0.0
        %5192 = vmatprep.subr.mxu0 0.0
        %5193 = vmatpush1.msra.mxu0 0.0
        %5194 = vmatprep.subr.mxu0 0.0
        %5195 = vmatpush1.msra.mxu0 0.0
        %5196 = vmatprep.subr.mxu0 0.0
        %5197 = vmatpush1.msra.mxu0 0.0
        %5198 = vmatprep.subr.mxu0 0.0
        %5199 = vmatpush1.msra.mxu0 0.0
        %5200 = vmatprep.mubr.f32.mxu0 0.0
        %5201 = vmatmul.mubr.f32.gmra.mrb[0].mxu0 %v5131
        %v5202 = vpop.f32.mrb[0].mxu0
        %v5203 = vadd.f32 0.0, %v5202
        %v5204 = vpop.f32.mrb[0].mxu0
        %5205 = vmatprep.mubr.f32.mxu0 0.0
        %5206 = vmatmul.mubr.f32.gmra.mrb[0].mxu0 %v5134
        %v5207 = vpop.f32.mrb[0].mxu0
        %v5208 = vadd.f32 0.0, %v5207
        %v5209 = vpop.f32.mrb[0].mxu0
        %5210 = vdwg.mxu0
        %v5211 = vadd.f32 %v5126, %v5203
        %v5212 = vadd.f32 %v5127, %v5208
        %v5213 = vld [vmem:[%s4614 + $0x1] sm:$0xff]
        %v5214 = vld [vmem:[%s4614 + $0x9] sm:$0xff]
        %v5216 = vsel %vm218, %v5213, 0
        %v5219 = vsel %vm218, %v5214, 0
        %5221 = vmatprep.subr.mxu0 0.0
        %5222 = vmatpush1.msra.mxu0 %v576
        %5223 = vmatprep.subr.mxu0 0.0
        %5224 = vmatpush1.msra.mxu0 0.0
        %5225 = vmatprep.subr.mxu0 0.0
        %5226 = vmatpush1.msra.mxu0 0.0
        %5227 = vmatprep.subr.mxu0 0.0
        %5228 = vmatpush1.msra.mxu0 0.0
        %5229 = vmatprep.subr.mxu0 0.0
        %5230 = vmatpush1.msra.mxu0 0.0
        %5231 = vmatprep.subr.mxu0 0.0
        %5232 = vmatpush1.msra.mxu0 0.0
        %5233 = vmatprep.subr.mxu0 0.0
        %5234 = vmatpush1.msra.mxu0 0.0
        %5235 = vmatprep.subr.mxu0 0.0
        %5236 = vmatpush1.msra.mxu0 0.0
        %5237 = vmatprep.subr.mxu0 0.0
        %5238 = vmatpush1.msra.mxu0 0.0
        %5239 = vmatprep.subr.mxu0 0.0
        %5240 = vmatpush1.msra.mxu0 0.0
        %5241 = vmatprep.subr.mxu0 0.0
        %5242 = vmatpush1.msra.mxu0 0.0
        %5243 = vmatprep.subr.mxu0 0.0
        %5244 = vmatpush1.msra.mxu0 0.0
        %5245 = vmatprep.subr.mxu0 0.0
        %5246 = vmatpush1.msra.mxu0 0.0
        %5247 = vmatprep.subr.mxu0 0.0
        %5248 = vmatpush1.msra.mxu0 0.0
        %5249 = vmatprep.subr.mxu0 0.0
        %5250 = vmatpush1.msra.mxu0 0.0
        %5251 = vmatprep.subr.mxu0 0.0
        %5252 = vmatpush1.msra.mxu0 0.0
        %5253 = vmatprep.subr.mxu0 0.0
        %5254 = vmatpush1.msra.mxu0 0.0
        %5255 = vmatprep.subr.mxu0 0.0
        %5256 = vmatpush1.msra.mxu0 0.0
        %5257 = vmatprep.subr.mxu0 0.0
        %5258 = vmatpush1.msra.mxu0 0.0
        %5259 = vmatprep.subr.mxu0 0.0
        %5260 = vmatpush1.msra.mxu0 0.0
        %5261 = vmatprep.subr.mxu0 0.0
        %5262 = vmatpush1.msra.mxu0 0.0
        %5263 = vmatprep.subr.mxu0 0.0
        %5264 = vmatpush1.msra.mxu0 0.0
        %5265 = vmatprep.subr.mxu0 0.0
        %5266 = vmatpush1.msra.mxu0 0.0
        %5267 = vmatprep.subr.mxu0 0.0
        %5268 = vmatpush1.msra.mxu0 0.0
        %5269 = vmatprep.subr.mxu0 0.0
        %5270 = vmatpush1.msra.mxu0 0.0
        %5271 = vmatprep.subr.mxu0 0.0
        %5272 = vmatpush1.msra.mxu0 0.0
        %5273 = vmatprep.subr.mxu0 0.0
        %5274 = vmatpush1.msra.mxu0 0.0
        %5275 = vmatprep.subr.mxu0 0.0
        %5276 = vmatpush1.msra.mxu0 0.0
        %5277 = vmatprep.subr.mxu0 0.0
        %5278 = vmatpush1.msra.mxu0 0.0
        %5279 = vmatprep.subr.mxu0 0.0
        %5280 = vmatpush1.msra.mxu0 0.0
        %5281 = vmatprep.subr.mxu0 0.0
        %5282 = vmatpush1.msra.mxu0 0.0
        %5283 = vmatprep.subr.mxu0 0.0
        %5284 = vmatpush1.msra.mxu0 0.0
        %5285 = vmatprep.mubr.f32.mxu0 0.0
        %5286 = vmatmul.mubr.f32.gmra.mrb[0].mxu0 %v5216
        %v5287 = vpop.f32.mrb[0].mxu0
        %v5288 = vadd.f32 0.0, %v5287
        %v5289 = vpop.f32.mrb[0].mxu0
        %5290 = vmatprep.mubr.f32.mxu0 0.0
        %5291 = vmatmul.mubr.f32.gmra.mrb[0].mxu0 %v5219
        %v5292 = vpop.f32.mrb[0].mxu0
        %v5293 = vadd.f32 0.0, %v5292
        %v5294 = vpop.f32.mrb[0].mxu0
        %5295 = vdwg.mxu0
        %v5296 = vadd.f32 %v5211, %v5288
        %v5297 = vadd.f32 %v5212, %v5293
        %v5298 = vld [vmem:[%s4614 + $0x2] sm:$0xff]
        %v5299 = vld [vmem:[%s4614 + $0xa] sm:$0xff]
        %v5301 = vsel %vm218, %v5298, 0
        %v5304 = vsel %vm218, %v5299, 0
        %5306 = vmatprep.subr.mxu0 0.0
        %5307 = vmatpush1.msra.mxu0 %v664
        %5308 = vmatprep.subr.mxu0 0.0
        %5309 = vmatpush1.msra.mxu0 0.0
        %5310 = vmatprep.subr.mxu0 0.0
        %5311 = vmatpush1.msra.mxu0 0.0
        %5312 = vmatprep.subr.mxu0 0.0
        %5313 = vmatpush1.msra.mxu0 0.0
        %5314 = vmatprep.subr.mxu0 0.0
        %5315 = vmatpush1.msra.mxu0 0.0
        %5316 = vmatprep.subr.mxu0 0.0
        %5317 = vmatpush1.msra.mxu0 0.0
        %5318 = vmatprep.subr.mxu0 0.0
        %5319 = vmatpush1.msra.mxu0 0.0
        %5320 = vmatprep.subr.mxu0 0.0
        %5321 = vmatpush1.msra.mxu0 0.0
        %5322 = vmatprep.subr.mxu0 0.0
        %5323 = vmatpush1.msra.mxu0 0.0
        %5324 = vmatprep.subr.mxu0 0.0
        %5325 = vmatpush1.msra.mxu0 0.0
        %5326 = vmatprep.subr.mxu0 0.0
        %5327 = vmatpush1.msra.mxu0 0.0
        %5328 = vmatprep.subr.mxu0 0.0
        %5329 = vmatpush1.msra.mxu0 0.0
        %5330 = vmatprep.subr.mxu0 0.0
        %5331 = vmatpush1.msra.mxu0 0.0
        %5332 = vmatprep.subr.mxu0 0.0
        %5333 = vmatpush1.msra.mxu0 0.0
        %5334 = vmatprep.subr.mxu0 0.0
        %5335 = vmatpush1.msra.mxu0 0.0
        %5336 = vmatprep.subr.mxu0 0.0
        %5337 = vmatpush1.msra.mxu0 0.0
        %5338 = vmatprep.subr.mxu0 0.0
        %5339 = vmatpush1.msra.mxu0 0.0
        %5340 = vmatprep.subr.mxu0 0.0
        %5341 = vmatpush1.msra.mxu0 0.0
        %5342 = vmatprep.subr.mxu0 0.0
        %5343 = vmatpush1.msra.mxu0 0.0
        %5344 = vmatprep.subr.mxu0 0.0
        %5345 = vmatpush1.msra.mxu0 0.0
        %5346 = vmatprep.subr.mxu0 0.0
        %5347 = vmatpush1.msra.mxu0 0.0
        %5348 = vmatprep.subr.mxu0 0.0
        %5349 = vmatpush1.msra.mxu0 0.0
        %5350 = vmatprep.subr.mxu0 0.0
        %5351 = vmatpush1.msra.mxu0 0.0
        %5352 = vmatprep.subr.mxu0 0.0
        %5353 = vmatpush1.msra.mxu0 0.0
        %5354 = vmatprep.subr.mxu0 0.0
        %5355 = vmatpush1.msra.mxu0 0.0
        %5356 = vmatprep.subr.mxu0 0.0
        %5357 = vmatpush1.msra.mxu0 0.0
        %5358 = vmatprep.subr.mxu0 0.0
        %5359 = vmatpush1.msra.mxu0 0.0
        %5360 = vmatprep.subr.mxu0 0.0
        %5361 = vmatpush1.msra.mxu0 0.0
        %5362 = vmatprep.subr.mxu0 0.0
        %5363 = vmatpush1.msra.mxu0 0.0
        %5364 = vmatprep.subr.mxu0 0.0
        %5365 = vmatpush1.msra.mxu0 0.0
        %5366 = vmatprep.subr.mxu0 0.0
        %5367 = vmatpush1.msra.mxu0 0.0
        %5368 = vmatprep.subr.mxu0 0.0
        %5369 = vmatpush1.msra.mxu0 0.0
        %5370 = vmatprep.mubr.f32.mxu0 0.0
        %5371 = vmatmul.mubr.f32.gmra.mrb[0].mxu0 %v5301
        %v5372 = vpop.f32.mrb[0].mxu0
        %v5373 = vadd.f32 0.0, %v5372
        %v5374 = vpop.f32.mrb[0].mxu0
        %5375 = vmatprep.mubr.f32.mxu0 0.0
        %5376 = vmatmul.mubr.f32.gmra.mrb[0].mxu0 %v5304
        %v5377 = vpop.f32.mrb[0].mxu0
        %v5378 = vadd.f32 0.0, %v5377
        %v5379 = vpop.f32.mrb[0].mxu0
        %5380 = vdwg.mxu0
        %v5381 = vadd.f32 %v5296, %v5373
        %v5382 = vadd.f32 %v5297, %v5378
        %s5383 = sadd.s32 %s193, 8
        %s5384 = smul.u32 %s5383, 24
        %s5385 = scalar_lea.vmem %s188, %s5384
        %v5386 = vld [vmem:[%s5385] sm:$0xff]
        %v5387 = vld [vmem:[%s5385 + $0x8] sm:$0xff]
        %v5389 = vsel %vm218, %v5386, 0
        %v5392 = vsel %vm218, %v5387, 0
        %5394 = vmatprep.subr.mxu0 0.0
        %5395 = vmatpush1.msra.mxu0 %v755
        %5396 = vmatprep.subr.mxu0 0.0
        %5397 = vmatpush1.msra.mxu0 0.0
        %5398 = vmatprep.subr.mxu0 0.0
        %5399 = vmatpush1.msra.mxu0 0.0
        %5400 = vmatprep.subr.mxu0 0.0
        %5401 = vmatpush1.msra.mxu0 0.0
        %5402 = vmatprep.subr.mxu0 0.0
        %5403 = vmatpush1.msra.mxu0 0.0
        %5404 = vmatprep.subr.mxu0 0.0
        %5405 = vmatpush1.msra.mxu0 0.0
        %5406 = vmatprep.subr.mxu0 0.0
        %5407 = vmatpush1.msra.mxu0 0.0
        %5408 = vmatprep.subr.mxu0 0.0
        %5409 = vmatpush1.msra.mxu0 0.0
        %5410 = vmatprep.subr.mxu0 0.0
        %5411 = vmatpush1.msra.mxu0 0.0
        %5412 = vmatprep.subr.mxu0 0.0
        %5413 = vmatpush1.msra.mxu0 0.0
        %5414 = vmatprep.subr.mxu0 0.0
        %5415 = vmatpush1.msra.mxu0 0.0
        %5416 = vmatprep.subr.mxu0 0.0
        %5417 = vmatpush1.msra.mxu0 0.0
        %5418 = vmatprep.subr.mxu0 0.0
        %5419 = vmatpush1.msra.mxu0 0.0
        %5420 = vmatprep.subr.mxu0 0.0
        %5421 = vmatpush1.msra.mxu0 0.0
        %5422 = vmatprep.subr.mxu0 0.0
        %5423 = vmatpush1.msra.mxu0 0.0
        %5424 = vmatprep.subr.mxu0 0.0
        %5425 = vmatpush1.msra.mxu0 0.0
        %5426 = vmatprep.subr.mxu0 0.0
        %5427 = vmatpush1.msra.mxu0 0.0
        %5428 = vmatprep.subr.mxu0 0.0
        %5429 = vmatpush1.msra.mxu0 0.0
        %5430 = vmatprep.subr.mxu0 0.0
        %5431 = vmatpush1.msra.mxu0 0.0
        %5432 = vmatprep.subr.mxu0 0.0
        %5433 = vmatpush1.msra.mxu0 0.0
        %5434 = vmatprep.subr.mxu0 0.0
        %5435 = vmatpush1.msra.mxu0 0.0
        %5436 = vmatprep.subr.mxu0 0.0
        %5437 = vmatpush1.msra.mxu0 0.0
        %5438 = vmatprep.subr.mxu0 0.0
        %5439 = vmatpush1.msra.mxu0 0.0
        %5440 = vmatprep.subr.mxu0 0.0
        %5441 = vmatpush1.msra.mxu0 0.0
        %5442 = vmatprep.subr.mxu0 0.0
        %5443 = vmatpush1.msra.mxu0 0.0
        %5444 = vmatprep.subr.mxu0 0.0
        %5445 = vmatpush1.msra.mxu0 0.0
        %5446 = vmatprep.subr.mxu0 0.0
        %5447 = vmatpush1.msra.mxu0 0.0
        %5448 = vmatprep.subr.mxu0 0.0
        %5449 = vmatpush1.msra.mxu0 0.0
        %5450 = vmatprep.subr.mxu0 0.0
        %5451 = vmatpush1.msra.mxu0 0.0
        %5452 = vmatprep.subr.mxu0 0.0
        %5453 = vmatpush1.msra.mxu0 0.0
        %5454 = vmatprep.subr.mxu0 0.0
        %5455 = vmatpush1.msra.mxu0 0.0
        %5456 = vmatprep.subr.mxu0 0.0
        %5457 = vmatpush1.msra.mxu0 0.0
        %5458 = vmatprep.mubr.f32.mxu0 0.0
        %5459 = vmatmul.mubr.f32.gmra.mrb[0].mxu0 %v5389
        %v5460 = vpop.f32.mrb[0].mxu0
        %v5461 = vadd.f32 0.0, %v5460
        %v5462 = vpop.f32.mrb[0].mxu0
        %5463 = vmatprep.mubr.f32.mxu0 0.0
        %5464 = vmatmul.mubr.f32.gmra.mrb[0].mxu0 %v5392
        %v5465 = vpop.f32.mrb[0].mxu0
        %v5466 = vadd.f32 0.0, %v5465
        %v5467 = vpop.f32.mrb[0].mxu0
        %5468 = vdwg.mxu0
        %v5469 = vadd.f32 %v5381, %v5461
        %v5470 = vadd.f32 %v5382, %v5466
        %v5471 = vld [vmem:[%s5385 + $0x1] sm:$0xff]
        %v5472 = vld [vmem:[%s5385 + $0x9] sm:$0xff]
        %v5474 = vsel %vm218, %v5471, 0
        %v5477 = vsel %vm218, %v5472, 0
        %5479 = vmatprep.subr.mxu0 0.0
        %5480 = vmatpush1.msra.mxu0 %v843
        %5481 = vmatprep.subr.mxu0 0.0
        %5482 = vmatpush1.msra.mxu0 0.0
        %5483 = vmatprep.subr.mxu0 0.0
        %5484 = vmatpush1.msra.mxu0 0.0
        %5485 = vmatprep.subr.mxu0 0.0
        %5486 = vmatpush1.msra.mxu0 0.0
        %5487 = vmatprep.subr.mxu0 0.0
        %5488 = vmatpush1.msra.mxu0 0.0
        %5489 = vmatprep.subr.mxu0 0.0
        %5490 = vmatpush1.msra.mxu0 0.0
        %5491 = vmatprep.subr.mxu0 0.0
        %5492 = vmatpush1.msra.mxu0 0.0
        %5493 = vmatprep.subr.mxu0 0.0
        %5494 = vmatpush1.msra.mxu0 0.0
        %5495 = vmatprep.subr.mxu0 0.0
        %5496 = vmatpush1.msra.mxu0 0.0
        %5497 = vmatprep.subr.mxu0 0.0
        %5498 = vmatpush1.msra.mxu0 0.0
        %5499 = vmatprep.subr.mxu0 0.0
        %5500 = vmatpush1.msra.mxu0 0.0
        %5501 = vmatprep.subr.mxu0 0.0
        %5502 = vmatpush1.msra.mxu0 0.0
        %5503 = vmatprep.subr.mxu0 0.0
        %5504 = vmatpush1.msra.mxu0 0.0
        %5505 = vmatprep.subr.mxu0 0.0
        %5506 = vmatpush1.msra.mxu0 0.0
        %5507 = vmatprep.subr.mxu0 0.0
        %5508 = vmatpush1.msra.mxu0 0.0
        %5509 = vmatprep.subr.mxu0 0.0
        %5510 = vmatpush1.msra.mxu0 0.0
        %5511 = vmatprep.subr.mxu0 0.0
        %5512 = vmatpush1.msra.mxu0 0.0
        %5513 = vmatprep.subr.mxu0 0.0
        %5514 = vmatpush1.msra.mxu0 0.0
        %5515 = vmatprep.subr.mxu0 0.0
        %5516 = vmatpush1.msra.mxu0 0.0
        %5517 = vmatprep.subr.mxu0 0.0
        %5518 = vmatpush1.msra.mxu0 0.0
        %5519 = vmatprep.subr.mxu0 0.0
        %5520 = vmatpush1.msra.mxu0 0.0
        %5521 = vmatprep.subr.mxu0 0.0
        %5522 = vmatpush1.msra.mxu0 0.0
        %5523 = vmatprep.subr.mxu0 0.0
        %5524 = vmatpush1.msra.mxu0 0.0
        %5525 = vmatprep.subr.mxu0 0.0
        %5526 = vmatpush1.msra.mxu0 0.0
        %5527 = vmatprep.subr.mxu0 0.0
        %5528 = vmatpush1.msra.mxu0 0.0
        %5529 = vmatprep.subr.mxu0 0.0
        %5530 = vmatpush1.msra.mxu0 0.0
        %5531 = vmatprep.subr.mxu0 0.0
        %5532 = vmatpush1.msra.mxu0 0.0
        %5533 = vmatprep.subr.mxu0 0.0
        %5534 = vmatpush1.msra.mxu0 0.0
        %5535 = vmatprep.subr.mxu0 0.0
        %5536 = vmatpush1.msra.mxu0 0.0
        %5537 = vmatprep.subr.mxu0 0.0
        %5538 = vmatpush1.msra.mxu0 0.0
        %5539 = vmatprep.subr.mxu0 0.0
        %5540 = vmatpush1.msra.mxu0 0.0
        %5541 = vmatprep.subr.mxu0 0.0
        %5542 = vmatpush1.msra.mxu0 0.0
        %5543 = vmatprep.mubr.f32.mxu0 0.0
        %5544 = vmatmul.mubr.f32.gmra.mrb[0].mxu0 %v5474
        %v5545 = vpop.f32.mrb[0].mxu0
        %v5546 = vadd.f32 0.0, %v5545
        %v5547 = vpop.f32.mrb[0].mxu0
        %5548 = vmatprep.mubr.f32.mxu0 0.0
        %5549 = vmatmul.mubr.f32.gmra.mrb[0].mxu0 %v5477
        %v5550 = vpop.f32.mrb[0].mxu0
        %v5551 = vadd.f32 0.0, %v5550
        %v5552 = vpop.f32.mrb[0].mxu0
        %5553 = vdwg.mxu0
        %v5554 = vadd.f32 %v5469, %v5546
        %v5555 = vadd.f32 %v5470, %v5551
        %v5556 = vld [vmem:[%s5385 + $0x2] sm:$0xff]
        %v5557 = vld [vmem:[%s5385 + $0xa] sm:$0xff]
        %v5559 = vsel %vm218, %v5556, 0
        %v5562 = vsel %vm218, %v5557, 0
        %5564 = vmatprep.subr.mxu0 0.0
        %5565 = vmatpush1.msra.mxu0 %v931
        %5566 = vmatprep.subr.mxu0 0.0
        %5567 = vmatpush1.msra.mxu0 0.0
        %5568 = vmatprep.subr.mxu0 0.0
        %5569 = vmatpush1.msra.mxu0 0.0
        %5570 = vmatprep.subr.mxu0 0.0
        %5571 = vmatpush1.msra.mxu0 0.0
        %5572 = vmatprep.subr.mxu0 0.0
        %5573 = vmatpush1.msra.mxu0 0.0
        %5574 = vmatprep.subr.mxu0 0.0
        %5575 = vmatpush1.msra.mxu0 0.0
        %5576 = vmatprep.subr.mxu0 0.0
        %5577 = vmatpush1.msra.mxu0 0.0
        %5578 = vmatprep.subr.mxu0 0.0
        %5579 = vmatpush1.msra.mxu0 0.0
        %5580 = vmatprep.subr.mxu0 0.0
        %5581 = vmatpush1.msra.mxu0 0.0
        %5582 = vmatprep.subr.mxu0 0.0
        %5583 = vmatpush1.msra.mxu0 0.0
        %5584 = vmatprep.subr.mxu0 0.0
        %5585 = vmatpush1.msra.mxu0 0.0
        %5586 = vmatprep.subr.mxu0 0.0
        %5587 = vmatpush1.msra.mxu0 0.0
        %5588 = vmatprep.subr.mxu0 0.0
        %5589 = vmatpush1.msra.mxu0 0.0
        %5590 = vmatprep.subr.mxu0 0.0
        %5591 = vmatpush1.msra.mxu0 0.0
        %5592 = vmatprep.subr.mxu0 0.0
        %5593 = vmatpush1.msra.mxu0 0.0
        %5594 = vmatprep.subr.mxu0 0.0
        %5595 = vmatpush1.msra.mxu0 0.0
        %5596 = vmatprep.subr.mxu0 0.0
        %5597 = vmatpush1.msra.mxu0 0.0
        %5598 = vmatprep.subr.mxu0 0.0
        %5599 = vmatpush1.msra.mxu0 0.0
        %5600 = vmatprep.subr.mxu0 0.0
        %5601 = vmatpush1.msra.mxu0 0.0
        %5602 = vmatprep.subr.mxu0 0.0
        %5603 = vmatpush1.msra.mxu0 0.0
        %5604 = vmatprep.subr.mxu0 0.0
        %5605 = vmatpush1.msra.mxu0 0.0
        %5606 = vmatprep.subr.mxu0 0.0
        %5607 = vmatpush1.msra.mxu0 0.0
        %5608 = vmatprep.subr.mxu0 0.0
        %5609 = vmatpush1.msra.mxu0 0.0
        %5610 = vmatprep.subr.mxu0 0.0
        %5611 = vmatpush1.msra.mxu0 0.0
        %5612 = vmatprep.subr.mxu0 0.0
        %5613 = vmatpush1.msra.mxu0 0.0
        %5614 = vmatprep.subr.mxu0 0.0
        %5615 = vmatpush1.msra.mxu0 0.0
        %5616 = vmatprep.subr.mxu0 0.0
        %5617 = vmatpush1.msra.mxu0 0.0
        %5618 = vmatprep.subr.mxu0 0.0
        %5619 = vmatpush1.msra.mxu0 0.0
        %5620 = vmatprep.subr.mxu0 0.0
        %5621 = vmatpush1.msra.mxu0 0.0
        %5622 = vmatprep.subr.mxu0 0.0
        %5623 = vmatpush1.msra.mxu0 0.0
        %5624 = vmatprep.subr.mxu0 0.0
        %5625 = vmatpush1.msra.mxu0 0.0
        %5626 = vmatprep.subr.mxu0 0.0
        %5627 = vmatpush1.msra.mxu0 0.0
        %5628 = vmatprep.mubr.f32.mxu0 0.0
        %5629 = vmatmul.mubr.f32.gmra.mrb[0].mxu0 %v5559
        %v5630 = vpop.f32.mrb[0].mxu0
        %v5631 = vadd.f32 0.0, %v5630
        %v5632 = vpop.f32.mrb[0].mxu0
        %5633 = vmatprep.mubr.f32.mxu0 0.0
        %5634 = vmatmul.mubr.f32.gmra.mrb[0].mxu0 %v5562
        %v5635 = vpop.f32.mrb[0].mxu0
        %v5636 = vadd.f32 0.0, %v5635
        %v5637 = vpop.f32.mrb[0].mxu0
        %5638 = vdwg.mxu0
        %v5639 = vadd.f32 %v5554, %v5631
        %v5640 = vadd.f32 %v5555, %v5636
        %v5641 = vadd.f32 %v5639, %v1014
        %v5642 = vadd.f32 %v5640, %v1014
        %v5643 = vmax.f32 %v5641, 0.0
        %v5644 = vmax.f32 %v5642, 0.0
        %s5645 = scalar_lea.vmem %s182, 96 [#allocation2]
        %5646 = vst [vmem:[%s5645] sm:$0xff] %v5643
        %5647 = vst [vmem:[%s5645 + $0x8] sm:$0xff] %v5644
        %v5648 = vld [vmem:[%s4614] sm:$0xff]
        %v5649 = vld [vmem:[%s4614 + $0x8] sm:$0xff]
        %v5650 = vld [vmem:[%s4614 + $0x1] sm:$0xff]
        %v5651 = vld [vmem:[%s4614 + $0x9] sm:$0xff]
        %v5653 = vsel %vm218, %v5650, 0
        %v5656 = vsel %vm218, %v5651, 0
        %5658 = vmatprep.subr.mxu0 0.0
        %5659 = vmatpush1.msra.mxu0 %v227
        %5660 = vmatprep.subr.mxu0 0.0
        %5661 = vmatpush1.msra.mxu0 0.0
        %5662 = vmatprep.subr.mxu0 0.0
        %5663 = vmatpush1.msra.mxu0 0.0
        %5664 = vmatprep.subr.mxu0 0.0
        %5665 = vmatpush1.msra.mxu0 0.0
        %5666 = vmatprep.subr.mxu0 0.0
        %5667 = vmatpush1.msra.mxu0 0.0
        %5668 = vmatprep.subr.mxu0 0.0
        %5669 = vmatpush1.msra.mxu0 0.0
        %5670 = vmatprep.subr.mxu0 0.0
        %5671 = vmatpush1.msra.mxu0 0.0
        %5672 = vmatprep.subr.mxu0 0.0
        %5673 = vmatpush1.msra.mxu0 0.0
        %5674 = vmatprep.subr.mxu0 0.0
        %5675 = vmatpush1.msra.mxu0 0.0
        %5676 = vmatprep.subr.mxu0 0.0
        %5677 = vmatpush1.msra.mxu0 0.0
        %5678 = vmatprep.subr.mxu0 0.0
        %5679 = vmatpush1.msra.mxu0 0.0
        %5680 = vmatprep.subr.mxu0 0.0
        %5681 = vmatpush1.msra.mxu0 0.0
        %5682 = vmatprep.subr.mxu0 0.0
        %5683 = vmatpush1.msra.mxu0 0.0
        %5684 = vmatprep.subr.mxu0 0.0
        %5685 = vmatpush1.msra.mxu0 0.0
        %5686 = vmatprep.subr.mxu0 0.0
        %5687 = vmatpush1.msra.mxu0 0.0
        %5688 = vmatprep.subr.mxu0 0.0
        %5689 = vmatpush1.msra.mxu0 0.0
        %5690 = vmatprep.subr.mxu0 0.0
        %5691 = vmatpush1.msra.mxu0 0.0
        %5692 = vmatprep.subr.mxu0 0.0
        %5693 = vmatpush1.msra.mxu0 0.0
        %5694 = vmatprep.subr.mxu0 0.0
        %5695 = vmatpush1.msra.mxu0 0.0
        %5696 = vmatprep.subr.mxu0 0.0
        %5697 = vmatpush1.msra.mxu0 0.0
        %5698 = vmatprep.subr.mxu0 0.0
        %5699 = vmatpush1.msra.mxu0 0.0
        %5700 = vmatprep.subr.mxu0 0.0
        %5701 = vmatpush1.msra.mxu0 0.0
        %5702 = vmatprep.subr.mxu0 0.0
        %5703 = vmatpush1.msra.mxu0 0.0
        %5704 = vmatprep.subr.mxu0 0.0
        %5705 = vmatpush1.msra.mxu0 0.0
        %5706 = vmatprep.subr.mxu0 0.0
        %5707 = vmatpush1.msra.mxu0 0.0
        %5708 = vmatprep.subr.mxu0 0.0
        %5709 = vmatpush1.msra.mxu0 0.0
        %5710 = vmatprep.subr.mxu0 0.0
        %5711 = vmatpush1.msra.mxu0 0.0
        %5712 = vmatprep.subr.mxu0 0.0
        %5713 = vmatpush1.msra.mxu0 0.0
        %5714 = vmatprep.subr.mxu0 0.0
        %5715 = vmatpush1.msra.mxu0 0.0
        %5716 = vmatprep.subr.mxu0 0.0
        %5717 = vmatpush1.msra.mxu0 0.0
        %5718 = vmatprep.subr.mxu0 0.0
        %5719 = vmatpush1.msra.mxu0 0.0
        %5720 = vmatprep.subr.mxu0 0.0
        %5721 = vmatpush1.msra.mxu0 0.0
        %5722 = vmatprep.mubr.f32.mxu0 0.0
        %5723 = vmatmul.mubr.f32.gmra.mrb[0].mxu0 %v5653
        %v5724 = vpop.f32.mrb[0].mxu0
        %v5725 = vadd.f32 0.0, %v5724
        %v5726 = vpop.f32.mrb[0].mxu0
        %5727 = vmatprep.mubr.f32.mxu0 0.0
        %5728 = vmatmul.mubr.f32.gmra.mrb[0].mxu0 %v5656
        %v5729 = vpop.f32.mrb[0].mxu0
        %v5730 = vadd.f32 0.0, %v5729
        %v5731 = vpop.f32.mrb[0].mxu0
        %5732 = vdwg.mxu0
        %v5734 = vsel %vm218, %v5648, 0
        %v5737 = vsel %vm218, %v5649, 0
        %5739 = vmatprep.subr.mxu0 0.0
        %5740 = vmatpush1.msra.mxu0 %v311
        %5741 = vmatprep.subr.mxu0 0.0
        %5742 = vmatpush1.msra.mxu0 0.0
        %5743 = vmatprep.subr.mxu0 0.0
        %5744 = vmatpush1.msra.mxu0 0.0
        %5745 = vmatprep.subr.mxu0 0.0
        %5746 = vmatpush1.msra.mxu0 0.0
        %5747 = vmatprep.subr.mxu0 0.0
        %5748 = vmatpush1.msra.mxu0 0.0
        %5749 = vmatprep.subr.mxu0 0.0
        %5750 = vmatpush1.msra.mxu0 0.0
        %5751 = vmatprep.subr.mxu0 0.0
        %5752 = vmatpush1.msra.mxu0 0.0
        %5753 = vmatprep.subr.mxu0 0.0
        %5754 = vmatpush1.msra.mxu0 0.0
        %5755 = vmatprep.subr.mxu0 0.0
        %5756 = vmatpush1.msra.mxu0 0.0
        %5757 = vmatprep.subr.mxu0 0.0
        %5758 = vmatpush1.msra.mxu0 0.0
        %5759 = vmatprep.subr.mxu0 0.0
        %5760 = vmatpush1.msra.mxu0 0.0
        %5761 = vmatprep.subr.mxu0 0.0
        %5762 = vmatpush1.msra.mxu0 0.0
        %5763 = vmatprep.subr.mxu0 0.0
        %5764 = vmatpush1.msra.mxu0 0.0
        %5765 = vmatprep.subr.mxu0 0.0
        %5766 = vmatpush1.msra.mxu0 0.0
        %5767 = vmatprep.subr.mxu0 0.0
        %5768 = vmatpush1.msra.mxu0 0.0
        %5769 = vmatprep.subr.mxu0 0.0
        %5770 = vmatpush1.msra.mxu0 0.0
        %5771 = vmatprep.subr.mxu0 0.0
        %5772 = vmatpush1.msra.mxu0 0.0
        %5773 = vmatprep.subr.mxu0 0.0
        %5774 = vmatpush1.msra.mxu0 0.0
        %5775 = vmatprep.subr.mxu0 0.0
        %5776 = vmatpush1.msra.mxu0 0.0
        %5777 = vmatprep.subr.mxu0 0.0
        %5778 = vmatpush1.msra.mxu0 0.0
        %5779 = vmatprep.subr.mxu0 0.0
        %5780 = vmatpush1.msra.mxu0 0.0
        %5781 = vmatprep.subr.mxu0 0.0
        %5782 = vmatpush1.msra.mxu0 0.0
        %5783 = vmatprep.subr.mxu0 0.0
        %5784 = vmatpush1.msra.mxu0 0.0
        %5785 = vmatprep.subr.mxu0 0.0
        %5786 = vmatpush1.msra.mxu0 0.0
        %5787 = vmatprep.subr.mxu0 0.0
        %5788 = vmatpush1.msra.mxu0 0.0
        %5789 = vmatprep.subr.mxu0 0.0
        %5790 = vmatpush1.msra.mxu0 0.0
        %5791 = vmatprep.subr.mxu0 0.0
        %5792 = vmatpush1.msra.mxu0 0.0
        %5793 = vmatprep.subr.mxu0 0.0
        %5794 = vmatpush1.msra.mxu0 0.0
        %5795 = vmatprep.subr.mxu0 0.0
        %5796 = vmatpush1.msra.mxu0 0.0
        %5797 = vmatprep.subr.mxu0 0.0
        %5798 = vmatpush1.msra.mxu0 0.0
        %5799 = vmatprep.subr.mxu0 0.0
        %5800 = vmatpush1.msra.mxu0 0.0
        %5801 = vmatprep.subr.mxu0 0.0
        %5802 = vmatpush1.msra.mxu0 0.0
        %5803 = vmatprep.mubr.f32.mxu0 0.0
        %5804 = vmatmul.mubr.f32.gmra.mrb[0].mxu0 %v5734
        %v5805 = vpop.f32.mrb[0].mxu0
        %v5806 = vadd.f32 %v5725, %v5805
        %v5807 = vpop.f32.mrb[0].mxu0
        %5808 = vmatprep.mubr.f32.mxu0 0.0
        %5809 = vmatmul.mubr.f32.gmra.mrb[0].mxu0 %v5737
        %v5810 = vpop.f32.mrb[0].mxu0
        %v5811 = vadd.f32 %v5730, %v5810
        %v5812 = vpop.f32.mrb[0].mxu0
        %5813 = vdwg.mxu0
        %v5814 = vld [vmem:[%s4614 + $0x2] sm:$0xff]
        %v5815 = vld [vmem:[%s4614 + $0xa] sm:$0xff]
        %v5817 = vsel %vm218, %v5814, 0
        %v5820 = vsel %vm218, %v5815, 0
        %5822 = vmatprep.subr.mxu0 0.0
        %5823 = vmatpush1.msra.mxu0 %v397
        %5824 = vmatprep.subr.mxu0 0.0
        %5825 = vmatpush1.msra.mxu0 0.0
        %5826 = vmatprep.subr.mxu0 0.0
        %5827 = vmatpush1.msra.mxu0 0.0
        %5828 = vmatprep.subr.mxu0 0.0
        %5829 = vmatpush1.msra.mxu0 0.0
        %5830 = vmatprep.subr.mxu0 0.0
        %5831 = vmatpush1.msra.mxu0 0.0
        %5832 = vmatprep.subr.mxu0 0.0
        %5833 = vmatpush1.msra.mxu0 0.0
        %5834 = vmatprep.subr.mxu0 0.0
        %5835 = vmatpush1.msra.mxu0 0.0
        %5836 = vmatprep.subr.mxu0 0.0
        %5837 = vmatpush1.msra.mxu0 0.0
        %5838 = vmatprep.subr.mxu0 0.0
        %5839 = vmatpush1.msra.mxu0 0.0
        %5840 = vmatprep.subr.mxu0 0.0
        %5841 = vmatpush1.msra.mxu0 0.0
        %5842 = vmatprep.subr.mxu0 0.0
        %5843 = vmatpush1.msra.mxu0 0.0
        %5844 = vmatprep.subr.mxu0 0.0
        %5845 = vmatpush1.msra.mxu0 0.0
        %5846 = vmatprep.subr.mxu0 0.0
        %5847 = vmatpush1.msra.mxu0 0.0
        %5848 = vmatprep.subr.mxu0 0.0
        %5849 = vmatpush1.msra.mxu0 0.0
        %5850 = vmatprep.subr.mxu0 0.0
        %5851 = vmatpush1.msra.mxu0 0.0
        %5852 = vmatprep.subr.mxu0 0.0
        %5853 = vmatpush1.msra.mxu0 0.0
        %5854 = vmatprep.subr.mxu0 0.0
        %5855 = vmatpush1.msra.mxu0 0.0
        %5856 = vmatprep.subr.mxu0 0.0
        %5857 = vmatpush1.msra.mxu0 0.0
        %5858 = vmatprep.subr.mxu0 0.0
        %5859 = vmatpush1.msra.mxu0 0.0
        %5860 = vmatprep.subr.mxu0 0.0
        %5861 = vmatpush1.msra.mxu0 0.0
        %5862 = vmatprep.subr.mxu0 0.0
        %5863 = vmatpush1.msra.mxu0 0.0
        %5864 = vmatprep.subr.mxu0 0.0
        %5865 = vmatpush1.msra.mxu0 0.0
        %5866 = vmatprep.subr.mxu0 0.0
        %5867 = vmatpush1.msra.mxu0 0.0
        %5868 = vmatprep.subr.mxu0 0.0
        %5869 = vmatpush1.msra.mxu0 0.0
        %5870 = vmatprep.subr.mxu0 0.0
        %5871 = vmatpush1.msra.mxu0 0.0
        %5872 = vmatprep.subr.mxu0 0.0
        %5873 = vmatpush1.msra.mxu0 0.0
        %5874 = vmatprep.subr.mxu0 0.0
        %5875 = vmatpush1.msra.mxu0 0.0
        %5876 = vmatprep.subr.mxu0 0.0
        %5877 = vmatpush1.msra.mxu0 0.0
        %5878 = vmatprep.subr.mxu0 0.0
        %5879 = vmatpush1.msra.mxu0 0.0
        %5880 = vmatprep.subr.mxu0 0.0
        %5881 = vmatpush1.msra.mxu0 0.0
        %5882 = vmatprep.subr.mxu0 0.0
        %5883 = vmatpush1.msra.mxu0 0.0
        %5884 = vmatprep.subr.mxu0 0.0
        %5885 = vmatpush1.msra.mxu0 0.0
        %5886 = vmatprep.mubr.f32.mxu0 0.0
        %5887 = vmatmul.mubr.f32.gmra.mrb[0].mxu0 %v5817
        %v5888 = vpop.f32.mrb[0].mxu0
        %v5889 = vadd.f32 0.0, %v5888
        %v5890 = vpop.f32.mrb[0].mxu0
        %5891 = vmatprep.mubr.f32.mxu0 0.0
        %5892 = vmatmul.mubr.f32.gmra.mrb[0].mxu0 %v5820
        %v5893 = vpop.f32.mrb[0].mxu0
        %v5894 = vadd.f32 0.0, %v5893
        %v5895 = vpop.f32.mrb[0].mxu0
        %5896 = vdwg.mxu0
        %v5897 = vadd.f32 %v5806, %v5889
        %v5898 = vadd.f32 %v5811, %v5894
        %v5899 = vld [vmem:[%s5385] sm:$0xff]
        %v5900 = vld [vmem:[%s5385 + $0x8] sm:$0xff]
        %v5902 = vsel %vm218, %v5899, 0
        %v5905 = vsel %vm218, %v5900, 0
        %5907 = vmatprep.subr.mxu0 0.0
        %5908 = vmatpush1.msra.mxu0 %v488
        %5909 = vmatprep.subr.mxu0 0.0
        %5910 = vmatpush1.msra.mxu0 0.0
        %5911 = vmatprep.subr.mxu0 0.0
        %5912 = vmatpush1.msra.mxu0 0.0
        %5913 = vmatprep.subr.mxu0 0.0
        %5914 = vmatpush1.msra.mxu0 0.0
        %5915 = vmatprep.subr.mxu0 0.0
        %5916 = vmatpush1.msra.mxu0 0.0
        %5917 = vmatprep.subr.mxu0 0.0
        %5918 = vmatpush1.msra.mxu0 0.0
        %5919 = vmatprep.subr.mxu0 0.0
        %5920 = vmatpush1.msra.mxu0 0.0
        %5921 = vmatprep.subr.mxu0 0.0
        %5922 = vmatpush1.msra.mxu0 0.0
        %5923 = vmatprep.subr.mxu0 0.0
        %5924 = vmatpush1.msra.mxu0 0.0
        %5925 = vmatprep.subr.mxu0 0.0
        %5926 = vmatpush1.msra.mxu0 0.0
        %5927 = vmatprep.subr.mxu0 0.0
        %5928 = vmatpush1.msra.mxu0 0.0
        %5929 = vmatprep.subr.mxu0 0.0
        %5930 = vmatpush1.msra.mxu0 0.0
        %5931 = vmatprep.subr.mxu0 0.0
        %5932 = vmatpush1.msra.mxu0 0.0
        %5933 = vmatprep.subr.mxu0 0.0
        %5934 = vmatpush1.msra.mxu0 0.0
        %5935 = vmatprep.subr.mxu0 0.0
        %5936 = vmatpush1.msra.mxu0 0.0
        %5937 = vmatprep.subr.mxu0 0.0
        %5938 = vmatpush1.msra.mxu0 0.0
        %5939 = vmatprep.subr.mxu0 0.0
        %5940 = vmatpush1.msra.mxu0 0.0
        %5941 = vmatprep.subr.mxu0 0.0
        %5942 = vmatpush1.msra.mxu0 0.0
        %5943 = vmatprep.subr.mxu0 0.0
        %5944 = vmatpush1.msra.mxu0 0.0
        %5945 = vmatprep.subr.mxu0 0.0
        %5946 = vmatpush1.msra.mxu0 0.0
        %5947 = vmatprep.subr.mxu0 0.0
        %5948 = vmatpush1.msra.mxu0 0.0
        %5949 = vmatprep.subr.mxu0 0.0
        %5950 = vmatpush1.msra.mxu0 0.0
        %5951 = vmatprep.subr.mxu0 0.0
        %5952 = vmatpush1.msra.mxu0 0.0
        %5953 = vmatprep.subr.mxu0 0.0
        %5954 = vmatpush1.msra.mxu0 0.0
        %5955 = vmatprep.subr.mxu0 0.0
        %5956 = vmatpush1.msra.mxu0 0.0
        %5957 = vmatprep.subr.mxu0 0.0
        %5958 = vmatpush1.msra.mxu0 0.0
        %5959 = vmatprep.subr.mxu0 0.0
        %5960 = vmatpush1.msra.mxu0 0.0
        %5961 = vmatprep.subr.mxu0 0.0
        %5962 = vmatpush1.msra.mxu0 0.0
        %5963 = vmatprep.subr.mxu0 0.0
        %5964 = vmatpush1.msra.mxu0 0.0
        %5965 = vmatprep.subr.mxu0 0.0
        %5966 = vmatpush1.msra.mxu0 0.0
        %5967 = vmatprep.subr.mxu0 0.0
        %5968 = vmatpush1.msra.mxu0 0.0
        %5969 = vmatprep.subr.mxu0 0.0
        %5970 = vmatpush1.msra.mxu0 0.0
        %5971 = vmatprep.mubr.f32.mxu0 0.0
        %5972 = vmatmul.mubr.f32.gmra.mrb[0].mxu0 %v5902
        %v5973 = vpop.f32.mrb[0].mxu0
        %v5974 = vadd.f32 0.0, %v5973
        %v5975 = vpop.f32.mrb[0].mxu0
        %5976 = vmatprep.mubr.f32.mxu0 0.0
        %5977 = vmatmul.mubr.f32.gmra.mrb[0].mxu0 %v5905
        %v5978 = vpop.f32.mrb[0].mxu0
        %v5979 = vadd.f32 0.0, %v5978
        %v5980 = vpop.f32.mrb[0].mxu0
        %5981 = vdwg.mxu0
        %v5982 = vadd.f32 %v5897, %v5974
        %v5983 = vadd.f32 %v5898, %v5979
        %v5984 = vld [vmem:[%s5385 + $0x1] sm:$0xff]
        %v5985 = vld [vmem:[%s5385 + $0x9] sm:$0xff]
        %v5987 = vsel %vm218, %v5984, 0
        %v5990 = vsel %vm218, %v5985, 0
        %5992 = vmatprep.subr.mxu0 0.0
        %5993 = vmatpush1.msra.mxu0 %v576
        %5994 = vmatprep.subr.mxu0 0.0
        %5995 = vmatpush1.msra.mxu0 0.0
        %5996 = vmatprep.subr.mxu0 0.0
        %5997 = vmatpush1.msra.mxu0 0.0
        %5998 = vmatprep.subr.mxu0 0.0
        %5999 = vmatpush1.msra.mxu0 0.0
        %6000 = vmatprep.subr.mxu0 0.0
        %6001 = vmatpush1.msra.mxu0 0.0
        %6002 = vmatprep.subr.mxu0 0.0
        %6003 = vmatpush1.msra.mxu0 0.0
        %6004 = vmatprep.subr.mxu0 0.0
        %6005 = vmatpush1.msra.mxu0 0.0
        %6006 = vmatprep.subr.mxu0 0.0
        %6007 = vmatpush1.msra.mxu0 0.0
        %6008 = vmatprep.subr.mxu0 0.0
        %6009 = vmatpush1.msra.mxu0 0.0
        %6010 = vmatprep.subr.mxu0 0.0
        %6011 = vmatpush1.msra.mxu0 0.0
        %6012 = vmatprep.subr.mxu0 0.0
        %6013 = vmatpush1.msra.mxu0 0.0
        %6014 = vmatprep.subr.mxu0 0.0
        %6015 = vmatpush1.msra.mxu0 0.0
        %6016 = vmatprep.subr.mxu0 0.0
        %6017 = vmatpush1.msra.mxu0 0.0
        %6018 = vmatprep.subr.mxu0 0.0
        %6019 = vmatpush1.msra.mxu0 0.0
        %6020 = vmatprep.subr.mxu0 0.0
        %6021 = vmatpush1.msra.mxu0 0.0
        %6022 = vmatprep.subr.mxu0 0.0
        %6023 = vmatpush1.msra.mxu0 0.0
        %6024 = vmatprep.subr.mxu0 0.0
        %6025 = vmatpush1.msra.mxu0 0.0
        %6026 = vmatprep.subr.mxu0 0.0
        %6027 = vmatpush1.msra.mxu0 0.0
        %6028 = vmatprep.subr.mxu0 0.0
        %6029 = vmatpush1.msra.mxu0 0.0
        %6030 = vmatprep.subr.mxu0 0.0
        %6031 = vmatpush1.msra.mxu0 0.0
        %6032 = vmatprep.subr.mxu0 0.0
        %6033 = vmatpush1.msra.mxu0 0.0
        %6034 = vmatprep.subr.mxu0 0.0
        %6035 = vmatpush1.msra.mxu0 0.0
        %6036 = vmatprep.subr.mxu0 0.0
        %6037 = vmatpush1.msra.mxu0 0.0
        %6038 = vmatprep.subr.mxu0 0.0
        %6039 = vmatpush1.msra.mxu0 0.0
        %6040 = vmatprep.subr.mxu0 0.0
        %6041 = vmatpush1.msra.mxu0 0.0
        %6042 = vmatprep.subr.mxu0 0.0
        %6043 = vmatpush1.msra.mxu0 0.0
        %6044 = vmatprep.subr.mxu0 0.0
        %6045 = vmatpush1.msra.mxu0 0.0
        %6046 = vmatprep.subr.mxu0 0.0
        %6047 = vmatpush1.msra.mxu0 0.0
        %6048 = vmatprep.subr.mxu0 0.0
        %6049 = vmatpush1.msra.mxu0 0.0
        %6050 = vmatprep.subr.mxu0 0.0
        %6051 = vmatpush1.msra.mxu0 0.0
        %6052 = vmatprep.subr.mxu0 0.0
        %6053 = vmatpush1.msra.mxu0 0.0
        %6054 = vmatprep.subr.mxu0 0.0
        %6055 = vmatpush1.msra.mxu0 0.0
        %6056 = vmatprep.mubr.f32.mxu0 0.0
        %6057 = vmatmul.mubr.f32.gmra.mrb[0].mxu0 %v5987
        %v6058 = vpop.f32.mrb[0].mxu0
        %v6059 = vadd.f32 0.0, %v6058
        %v6060 = vpop.f32.mrb[0].mxu0
        %6061 = vmatprep.mubr.f32.mxu0 0.0
        %6062 = vmatmul.mubr.f32.gmra.mrb[0].mxu0 %v5990
        %v6063 = vpop.f32.mrb[0].mxu0
        %v6064 = vadd.f32 0.0, %v6063
        %v6065 = vpop.f32.mrb[0].mxu0
        %6066 = vdwg.mxu0
        %v6067 = vadd.f32 %v5982, %v6059
        %v6068 = vadd.f32 %v5983, %v6064
        %v6069 = vld [vmem:[%s5385 + $0x2] sm:$0xff]
        %v6070 = vld [vmem:[%s5385 + $0xa] sm:$0xff]
        %v6072 = vsel %vm218, %v6069, 0
        %v6075 = vsel %vm218, %v6070, 0
        %6077 = vmatprep.subr.mxu0 0.0
        %6078 = vmatpush1.msra.mxu0 %v664
        %6079 = vmatprep.subr.mxu0 0.0
        %6080 = vmatpush1.msra.mxu0 0.0
        %6081 = vmatprep.subr.mxu0 0.0
        %6082 = vmatpush1.msra.mxu0 0.0
        %6083 = vmatprep.subr.mxu0 0.0
        %6084 = vmatpush1.msra.mxu0 0.0
        %6085 = vmatprep.subr.mxu0 0.0
        %6086 = vmatpush1.msra.mxu0 0.0
        %6087 = vmatprep.subr.mxu0 0.0
        %6088 = vmatpush1.msra.mxu0 0.0
        %6089 = vmatprep.subr.mxu0 0.0
        %6090 = vmatpush1.msra.mxu0 0.0
        %6091 = vmatprep.subr.mxu0 0.0
        %6092 = vmatpush1.msra.mxu0 0.0
        %6093 = vmatprep.subr.mxu0 0.0
        %6094 = vmatpush1.msra.mxu0 0.0
        %6095 = vmatprep.subr.mxu0 0.0
        %6096 = vmatpush1.msra.mxu0 0.0
        %6097 = vmatprep.subr.mxu0 0.0
        %6098 = vmatpush1.msra.mxu0 0.0
        %6099 = vmatprep.subr.mxu0 0.0
        %6100 = vmatpush1.msra.mxu0 0.0
        %6101 = vmatprep.subr.mxu0 0.0
        %6102 = vmatpush1.msra.mxu0 0.0
        %6103 = vmatprep.subr.mxu0 0.0
        %6104 = vmatpush1.msra.mxu0 0.0
        %6105 = vmatprep.subr.mxu0 0.0
        %6106 = vmatpush1.msra.mxu0 0.0
        %6107 = vmatprep.subr.mxu0 0.0
        %6108 = vmatpush1.msra.mxu0 0.0
        %6109 = vmatprep.subr.mxu0 0.0
        %6110 = vmatpush1.msra.mxu0 0.0
        %6111 = vmatprep.subr.mxu0 0.0
        %6112 = vmatpush1.msra.mxu0 0.0
        %6113 = vmatprep.subr.mxu0 0.0
        %6114 = vmatpush1.msra.mxu0 0.0
        %6115 = vmatprep.subr.mxu0 0.0
        %6116 = vmatpush1.msra.mxu0 0.0
        %6117 = vmatprep.subr.mxu0 0.0
        %6118 = vmatpush1.msra.mxu0 0.0
        %6119 = vmatprep.subr.mxu0 0.0
        %6120 = vmatpush1.msra.mxu0 0.0
        %6121 = vmatprep.subr.mxu0 0.0
        %6122 = vmatpush1.msra.mxu0 0.0
        %6123 = vmatprep.subr.mxu0 0.0
        %6124 = vmatpush1.msra.mxu0 0.0
        %6125 = vmatprep.subr.mxu0 0.0
        %6126 = vmatpush1.msra.mxu0 0.0
        %6127 = vmatprep.subr.mxu0 0.0
        %6128 = vmatpush1.msra.mxu0 0.0
        %6129 = vmatprep.subr.mxu0 0.0
        %6130 = vmatpush1.msra.mxu0 0.0
        %6131 = vmatprep.subr.mxu0 0.0
        %6132 = vmatpush1.msra.mxu0 0.0
        %6133 = vmatprep.subr.mxu0 0.0
        %6134 = vmatpush1.msra.mxu0 0.0
        %6135 = vmatprep.subr.mxu0 0.0
        %6136 = vmatpush1.msra.mxu0 0.0
        %6137 = vmatprep.subr.mxu0 0.0
        %6138 = vmatpush1.msra.mxu0 0.0
        %6139 = vmatprep.subr.mxu0 0.0
        %6140 = vmatpush1.msra.mxu0 0.0
        %6141 = vmatprep.mubr.f32.mxu0 0.0
        %6142 = vmatmul.mubr.f32.gmra.mrb[0].mxu0 %v6072
        %v6143 = vpop.f32.mrb[0].mxu0
        %v6144 = vadd.f32 0.0, %v6143
        %v6145 = vpop.f32.mrb[0].mxu0
        %6146 = vmatprep.mubr.f32.mxu0 0.0
        %6147 = vmatmul.mubr.f32.gmra.mrb[0].mxu0 %v6075
        %v6148 = vpop.f32.mrb[0].mxu0
        %v6149 = vadd.f32 0.0, %v6148
        %v6150 = vpop.f32.mrb[0].mxu0
        %6151 = vdwg.mxu0
        %v6152 = vadd.f32 %v6067, %v6144
        %v6153 = vadd.f32 %v6068, %v6149
        %s6154 = sadd.s32 %s193, 9
        %s6155 = smul.u32 %s6154, 24
        %s6156 = scalar_lea.vmem %s188, %s6155
        %v6157 = vld [vmem:[%s6156] sm:$0xff]
        %v6158 = vld [vmem:[%s6156 + $0x8] sm:$0xff]
        %v6160 = vsel %vm218, %v6157, 0
        %v6163 = vsel %vm218, %v6158, 0
        %6165 = vmatprep.subr.mxu0 0.0
        %6166 = vmatpush1.msra.mxu0 %v755
        %6167 = vmatprep.subr.mxu0 0.0
        %6168 = vmatpush1.msra.mxu0 0.0
        %6169 = vmatprep.subr.mxu0 0.0
        %6170 = vmatpush1.msra.mxu0 0.0
        %6171 = vmatprep.subr.mxu0 0.0
        %6172 = vmatpush1.msra.mxu0 0.0
        %6173 = vmatprep.subr.mxu0 0.0
        %6174 = vmatpush1.msra.mxu0 0.0
        %6175 = vmatprep.subr.mxu0 0.0
        %6176 = vmatpush1.msra.mxu0 0.0
        %6177 = vmatprep.subr.mxu0 0.0
        %6178 = vmatpush1.msra.mxu0 0.0
        %6179 = vmatprep.subr.mxu0 0.0
        %6180 = vmatpush1.msra.mxu0 0.0
        %6181 = vmatprep.subr.mxu0 0.0
        %6182 = vmatpush1.msra.mxu0 0.0
        %6183 = vmatprep.subr.mxu0 0.0
        %6184 = vmatpush1.msra.mxu0 0.0
        %6185 = vmatprep.subr.mxu0 0.0
        %6186 = vmatpush1.msra.mxu0 0.0
        %6187 = vmatprep.subr.mxu0 0.0
        %6188 = vmatpush1.msra.mxu0 0.0
        %6189 = vmatprep.subr.mxu0 0.0
        %6190 = vmatpush1.msra.mxu0 0.0
        %6191 = vmatprep.subr.mxu0 0.0
        %6192 = vmatpush1.msra.mxu0 0.0
        %6193 = vmatprep.subr.mxu0 0.0
        %6194 = vmatpush1.msra.mxu0 0.0
        %6195 = vmatprep.subr.mxu0 0.0
        %6196 = vmatpush1.msra.mxu0 0.0
        %6197 = vmatprep.subr.mxu0 0.0
        %6198 = vmatpush1.msra.mxu0 0.0
        %6199 = vmatprep.subr.mxu0 0.0
        %6200 = vmatpush1.msra.mxu0 0.0
        %6201 = vmatprep.subr.mxu0 0.0
        %6202 = vmatpush1.msra.mxu0 0.0
        %6203 = vmatprep.subr.mxu0 0.0
        %6204 = vmatpush1.msra.mxu0 0.0
        %6205 = vmatprep.subr.mxu0 0.0
        %6206 = vmatpush1.msra.mxu0 0.0
        %6207 = vmatprep.subr.mxu0 0.0
        %6208 = vmatpush1.msra.mxu0 0.0
        %6209 = vmatprep.subr.mxu0 0.0
        %6210 = vmatpush1.msra.mxu0 0.0
        %6211 = vmatprep.subr.mxu0 0.0
        %6212 = vmatpush1.msra.mxu0 0.0
        %6213 = vmatprep.subr.mxu0 0.0
        %6214 = vmatpush1.msra.mxu0 0.0
        %6215 = vmatprep.subr.mxu0 0.0
        %6216 = vmatpush1.msra.mxu0 0.0
        %6217 = vmatprep.subr.mxu0 0.0
        %6218 = vmatpush1.msra.mxu0 0.0
        %6219 = vmatprep.subr.mxu0 0.0
        %6220 = vmatpush1.msra.mxu0 0.0
        %6221 = vmatprep.subr.mxu0 0.0
        %6222 = vmatpush1.msra.mxu0 0.0
        %6223 = vmatprep.subr.mxu0 0.0
        %6224 = vmatpush1.msra.mxu0 0.0
        %6225 = vmatprep.subr.mxu0 0.0
        %6226 = vmatpush1.msra.mxu0 0.0
        %6227 = vmatprep.subr.mxu0 0.0
        %6228 = vmatpush1.msra.mxu0 0.0
        %6229 = vmatprep.mubr.f32.mxu0 0.0
        %6230 = vmatmul.mubr.f32.gmra.mrb[0].mxu0 %v6160
        %v6231 = vpop.f32.mrb[0].mxu0
        %v6232 = vadd.f32 0.0, %v6231
        %v6233 = vpop.f32.mrb[0].mxu0
        %6234 = vmatprep.mubr.f32.mxu0 0.0
        %6235 = vmatmul.mubr.f32.gmra.mrb[0].mxu0 %v6163
        %v6236 = vpop.f32.mrb[0].mxu0
        %v6237 = vadd.f32 0.0, %v6236
        %v6238 = vpop.f32.mrb[0].mxu0
        %6239 = vdwg.mxu0
        %v6240 = vadd.f32 %v6152, %v6232
        %v6241 = vadd.f32 %v6153, %v6237
        %v6242 = vld [vmem:[%s6156 + $0x1] sm:$0xff]
        %v6243 = vld [vmem:[%s6156 + $0x9] sm:$0xff]
        %v6245 = vsel %vm218, %v6242, 0
        %v6248 = vsel %vm218, %v6243, 0
        %6250 = vmatprep.subr.mxu0 0.0
        %6251 = vmatpush1.msra.mxu0 %v843
        %6252 = vmatprep.subr.mxu0 0.0
        %6253 = vmatpush1.msra.mxu0 0.0
        %6254 = vmatprep.subr.mxu0 0.0
        %6255 = vmatpush1.msra.mxu0 0.0
        %6256 = vmatprep.subr.mxu0 0.0
        %6257 = vmatpush1.msra.mxu0 0.0
        %6258 = vmatprep.subr.mxu0 0.0
        %6259 = vmatpush1.msra.mxu0 0.0
        %6260 = vmatprep.subr.mxu0 0.0
        %6261 = vmatpush1.msra.mxu0 0.0
        %6262 = vmatprep.subr.mxu0 0.0
        %6263 = vmatpush1.msra.mxu0 0.0
        %6264 = vmatprep.subr.mxu0 0.0
        %6265 = vmatpush1.msra.mxu0 0.0
        %6266 = vmatprep.subr.mxu0 0.0
        %6267 = vmatpush1.msra.mxu0 0.0
        %6268 = vmatprep.subr.mxu0 0.0
        %6269 = vmatpush1.msra.mxu0 0.0
        %6270 = vmatprep.subr.mxu0 0.0
        %6271 = vmatpush1.msra.mxu0 0.0
        %6272 = vmatprep.subr.mxu0 0.0
        %6273 = vmatpush1.msra.mxu0 0.0
        %6274 = vmatprep.subr.mxu0 0.0
        %6275 = vmatpush1.msra.mxu0 0.0
        %6276 = vmatprep.subr.mxu0 0.0
        %6277 = vmatpush1.msra.mxu0 0.0
        %6278 = vmatprep.subr.mxu0 0.0
        %6279 = vmatpush1.msra.mxu0 0.0
        %6280 = vmatprep.subr.mxu0 0.0
        %6281 = vmatpush1.msra.mxu0 0.0
        %6282 = vmatprep.subr.mxu0 0.0
        %6283 = vmatpush1.msra.mxu0 0.0
        %6284 = vmatprep.subr.mxu0 0.0
        %6285 = vmatpush1.msra.mxu0 0.0
        %6286 = vmatprep.subr.mxu0 0.0
        %6287 = vmatpush1.msra.mxu0 0.0
        %6288 = vmatprep.subr.mxu0 0.0
        %6289 = vmatpush1.msra.mxu0 0.0
        %6290 = vmatprep.subr.mxu0 0.0
        %6291 = vmatpush1.msra.mxu0 0.0
        %6292 = vmatprep.subr.mxu0 0.0
        %6293 = vmatpush1.msra.mxu0 0.0
        %6294 = vmatprep.subr.mxu0 0.0
        %6295 = vmatpush1.msra.mxu0 0.0
        %6296 = vmatprep.subr.mxu0 0.0
        %6297 = vmatpush1.msra.mxu0 0.0
        %6298 = vmatprep.subr.mxu0 0.0
        %6299 = vmatpush1.msra.mxu0 0.0
        %6300 = vmatprep.subr.mxu0 0.0
        %6301 = vmatpush1.msra.mxu0 0.0
        %6302 = vmatprep.subr.mxu0 0.0
        %6303 = vmatpush1.msra.mxu0 0.0
        %6304 = vmatprep.subr.mxu0 0.0
        %6305 = vmatpush1.msra.mxu0 0.0
        %6306 = vmatprep.subr.mxu0 0.0
        %6307 = vmatpush1.msra.mxu0 0.0
        %6308 = vmatprep.subr.mxu0 0.0
        %6309 = vmatpush1.msra.mxu0 0.0
        %6310 = vmatprep.subr.mxu0 0.0
        %6311 = vmatpush1.msra.mxu0 0.0
        %6312 = vmatprep.subr.mxu0 0.0
        %6313 = vmatpush1.msra.mxu0 0.0
        %6314 = vmatprep.mubr.f32.mxu0 0.0
        %6315 = vmatmul.mubr.f32.gmra.mrb[0].mxu0 %v6245
        %v6316 = vpop.f32.mrb[0].mxu0
        %v6317 = vadd.f32 0.0, %v6316
        %v6318 = vpop.f32.mrb[0].mxu0
        %6319 = vmatprep.mubr.f32.mxu0 0.0
        %6320 = vmatmul.mubr.f32.gmra.mrb[0].mxu0 %v6248
        %v6321 = vpop.f32.mrb[0].mxu0
        %v6322 = vadd.f32 0.0, %v6321
        %v6323 = vpop.f32.mrb[0].mxu0
        %6324 = vdwg.mxu0
        %v6325 = vadd.f32 %v6240, %v6317
        %v6326 = vadd.f32 %v6241, %v6322
        %v6327 = vld [vmem:[%s6156 + $0x2] sm:$0xff]
        %v6328 = vld [vmem:[%s6156 + $0xa] sm:$0xff]
        %v6330 = vsel %vm218, %v6327, 0
        %v6333 = vsel %vm218, %v6328, 0
        %6335 = vmatprep.subr.mxu0 0.0
        %6336 = vmatpush1.msra.mxu0 %v931
        %6337 = vmatprep.subr.mxu0 0.0
        %6338 = vmatpush1.msra.mxu0 0.0
        %6339 = vmatprep.subr.mxu0 0.0
        %6340 = vmatpush1.msra.mxu0 0.0
        %6341 = vmatprep.subr.mxu0 0.0
        %6342 = vmatpush1.msra.mxu0 0.0
        %6343 = vmatprep.subr.mxu0 0.0
        %6344 = vmatpush1.msra.mxu0 0.0
        %6345 = vmatprep.subr.mxu0 0.0
        %6346 = vmatpush1.msra.mxu0 0.0
        %6347 = vmatprep.subr.mxu0 0.0
        %6348 = vmatpush1.msra.mxu0 0.0
        %6349 = vmatprep.subr.mxu0 0.0
        %6350 = vmatpush1.msra.mxu0 0.0
        %6351 = vmatprep.subr.mxu0 0.0
        %6352 = vmatpush1.msra.mxu0 0.0
        %6353 = vmatprep.subr.mxu0 0.0
        %6354 = vmatpush1.msra.mxu0 0.0
        %6355 = vmatprep.subr.mxu0 0.0
        %6356 = vmatpush1.msra.mxu0 0.0
        %6357 = vmatprep.subr.mxu0 0.0
        %6358 = vmatpush1.msra.mxu0 0.0
        %6359 = vmatprep.subr.mxu0 0.0
        %6360 = vmatpush1.msra.mxu0 0.0
        %6361 = vmatprep.subr.mxu0 0.0
        %6362 = vmatpush1.msra.mxu0 0.0
        %6363 = vmatprep.subr.mxu0 0.0
        %6364 = vmatpush1.msra.mxu0 0.0
        %6365 = vmatprep.subr.mxu0 0.0
        %6366 = vmatpush1.msra.mxu0 0.0
        %6367 = vmatprep.subr.mxu0 0.0
        %6368 = vmatpush1.msra.mxu0 0.0
        %6369 = vmatprep.subr.mxu0 0.0
        %6370 = vmatpush1.msra.mxu0 0.0
        %6371 = vmatprep.subr.mxu0 0.0
        %6372 = vmatpush1.msra.mxu0 0.0
        %6373 = vmatprep.subr.mxu0 0.0
        %6374 = vmatpush1.msra.mxu0 0.0
        %6375 = vmatprep.subr.mxu0 0.0
        %6376 = vmatpush1.msra.mxu0 0.0
        %6377 = vmatprep.subr.mxu0 0.0
        %6378 = vmatpush1.msra.mxu0 0.0
        %6379 = vmatprep.subr.mxu0 0.0
        %6380 = vmatpush1.msra.mxu0 0.0
        %6381 = vmatprep.subr.mxu0 0.0
        %6382 = vmatpush1.msra.mxu0 0.0
        %6383 = vmatprep.subr.mxu0 0.0
        %6384 = vmatpush1.msra.mxu0 0.0
        %6385 = vmatprep.subr.mxu0 0.0
        %6386 = vmatpush1.msra.mxu0 0.0
        %6387 = vmatprep.subr.mxu0 0.0
        %6388 = vmatpush1.msra.mxu0 0.0
        %6389 = vmatprep.subr.mxu0 0.0
        %6390 = vmatpush1.msra.mxu0 0.0
        %6391 = vmatprep.subr.mxu0 0.0
        %6392 = vmatpush1.msra.mxu0 0.0
        %6393 = vmatprep.subr.mxu0 0.0
        %6394 = vmatpush1.msra.mxu0 0.0
        %6395 = vmatprep.subr.mxu0 0.0
        %6396 = vmatpush1.msra.mxu0 0.0
        %6397 = vmatprep.subr.mxu0 0.0
        %6398 = vmatpush1.msra.mxu0 0.0
        %6399 = vmatprep.mubr.f32.mxu0 0.0
        %6400 = vmatmul.mubr.f32.gmra.mrb[0].mxu0 %v6330
        %v6401 = vpop.f32.mrb[0].mxu0
        %v6402 = vadd.f32 0.0, %v6401
        %v6403 = vpop.f32.mrb[0].mxu0
        %6404 = vmatprep.mubr.f32.mxu0 0.0
        %6405 = vmatmul.mubr.f32.gmra.mrb[0].mxu0 %v6333
        %v6406 = vpop.f32.mrb[0].mxu0
        %v6407 = vadd.f32 0.0, %v6406
        %v6408 = vpop.f32.mrb[0].mxu0
        %6409 = vdwg.mxu0
        %v6410 = vadd.f32 %v6325, %v6402
        %v6411 = vadd.f32 %v6326, %v6407
        %v6412 = vadd.f32 %v6410, %v1014
        %v6413 = vadd.f32 %v6411, %v1014
        %v6414 = vmax.f32 %v6412, 0.0
        %v6415 = vmax.f32 %v6413, 0.0
        %s6416 = scalar_lea.vmem %s182, 112 [#allocation2]
        %6417 = vst [vmem:[%s6416] sm:$0xff] %v6414
        %6418 = vst [vmem:[%s6416 + $0x8] sm:$0xff] %v6415
        %s6419 = sand.u32 %s109, 1
        %s6420 = scalar_lea.sflag [#allocation3], %s6419
        %s6421 = sand.u32 %s109, 1
        %s6422 = smul.addr %s6421, 128
        %s6423 = scalar_lea.vmem [#allocation2], %s6422
        // Predicated region
        $region33: #{tpu_custom_call.1} parent=31 // pred_check
          %p6424 = pneg %p119
        $region34: #{tpu_custom_call.1} parent=31 // pred_check_branch
          %6426 = sbr.rel (%p6424) target = $region36
        $region35: #{tpu_custom_call.1} parent=31 // pred_region
          %s6427 = smul.u32 %s21, 2
          %s6428 = sadd.s32 %s6427, %s22
          %s6429 = smul.u32 8, %s6428
          %s6431 = ssub.s32 2048, 2048
          %6432 = vsyncadd %s6420, %s6431
          %s6433 = smul.addr %s6429, 2
          %s6434 = smul.addr %s6433, 128
          %s6435 = scalar_lea.hbm %s3, %s6434
          %s6436 = sshll.u32 %s6423, 4
          %s6437 = int_to_ptr.vmem [resolvable:$true] %s6436
          %6442 = dma.vmem_to_hbm [thread:$0]  %s6437, 2048, %s6435, %s6420, 128, 128, 8
        $region36: #{tpu_custom_call.1} parent=31 // pred_fallthru
          _
      $region32: #{tpu_custom_call.1} parent=5 // pred_fallthru
        _
      %p6443 = scmp.le.s32.totalorder 2, %s12
      // Predicated region
      $region37: #{tpu_custom_call.1} parent=5 // pred_check
        %p6444 = pneg %p6443
      $region38: #{tpu_custom_call.1} parent=5 // pred_check_branch
        %6446 = sbr.rel (%p6444) target = $region40
      $region39: #{tpu_custom_call.1} parent=5 // pred_region
        %s6447 = ssub.s32 %s12, 2
        // Predicated region
        $region41: #{tpu_custom_call.1} parent=39 // pred_check
          %p6448 = pneg %p125
        $region42: #{tpu_custom_call.1} parent=39 // pred_check_branch
          %6450 = sbr.rel (%p6448) target = $region44
        $region43: #{tpu_custom_call.1} parent=39 // pred_region
          %s6451 = sand.u32 %s110, 1
          %s6452 = scalar_lea.sflag [#allocation3], %s6451
          %s6453 = sand.u32 %s110, 1
          %s6454 = smul.addr %s6453, 128
          %s6455 = scalar_lea.vmem [#allocation2], %s6454
          %6456 = dma.done %s6452, 2048
        $region44: #{tpu_custom_call.1} parent=39 // pred_fallthru
          _
      $region40: #{tpu_custom_call.1} parent=5 // pred_fallthru
        _
    $region6: #{tpu_custom_call.1} parent=1 // loop_footer
      %s16 = sadd.s32 1, %s12
    $region7: #{tpu_custom_call.1} parent=1 // loop_footer_branch
      %11 = sbr.rel target = $region3
    $region8: #{tpu_custom_call.1} parent=1 // loop_exit
      _
    %6457 = vsyncpa [#allocation3], 1
    %s6458 = scalar_lea.sflag [#allocation3], 1
    %6459 = vsyncpa %s6458, 1

</llo_original>
